<compile_context>
chip_gen: v5e
topology: v5e:2x2
jax: 0.10.0
libtpu: 0.0.40
codegen_flags: <defaults>
</compile_context>

<pallas_src>
import functools

import numpy as np
import jax
import jax.numpy as jnp
from jax.experimental import pallas as pl
from jax.experimental.pallas import tpu as pltpu


_COL0 = 8  # sublane-aligned column offset of the padded interior (zero halo at cols 7, W+8)


def _disc_block_kernel(x_ref, w1_ref, b1_ref, w2_ref, b2_ref, out_ref,
                       xpad_ref, y1pad_ref, y2s_ref, *,
                       H, W, C_in, C_out, NB, R, fuse_im2col):
    """One grid step: NB images -> conv3x3+LReLU -> conv3x3+LReLU -> 2x2 mean pool."""
    WO = W // 2
    RO = R // 2
    Wp = W + 16
    n_strips = H // R
    cdt = xpad_ref.dtype

    # ---- zero halo of the padded staging buffers (4 aligned strips each; interiors are fully
    # overwritten below). Re-done every step: megacore-safe under "parallel" batch sharding.
    zrow = jnp.zeros((1, Wp, C_in), cdt)
    zcol = jnp.zeros((H + 2, 8, C_in), cdt)
    for ref in (xpad_ref, y1pad_ref):
        ref[0:1, :, :] = zrow                      # top halo row
        ref[H + 1:H + 2, :, :] = zrow              # bottom halo row
        ref[:, 0:8, :] = zcol                      # left strip (covers halo col _COL0-1)
        ref[:, W + 8:W + 16, :] = zcol             # right strip (covers halo col _COL0+W)

    def conv_strip(src_ref, w_ref, b_ref, r0):
        """3x3 'same' conv for output rows [r0, r0+R); returns f32 (R*W, n_out) pre-activation."""
        def tap(dy, dx):
            return src_ref[pl.ds(r0 + dy, R),
                           pl.ds(_COL0 - 1 + dx, W), :].reshape(R * W, C_in)

        if fuse_im2col:
            # One fused K = 9*C_in MXU matmul (keeps the 256-tall v6e/v7x MXU busy).
            col = jnp.concatenate([tap(dy, dx) for dy in range(3) for dx in range(3)],
                                  axis=-1)                                  # (R*W, 9*C_in)
            acc = jnp.dot(col, w_ref[...], preferred_element_type=jnp.float32)
        else:
            # v5e-friendly: 9 accumulating K = C_in matmuls, no concatenate copies.
            acc = jnp.zeros((R * W, w_ref.shape[1]), jnp.float32)
            for dy in range(3):
                for dx in range(3):
                    wslab = w_ref[pl.ds((dy * 3 + dx) * C_in, C_in), :]
                    acc = acc + jnp.dot(tap(dy, dx), wslab,
                                        preferred_element_type=jnp.float32)
        return acc + b_ref[...]                                             # f32

    def run_strips(body):
        if n_strips == 1:
            body(0)                      # static indices (small-image / demo path)
        else:
            pl.loop(0, n_strips)(body)   # bounded live ranges for the per-strip temporaries

    for nb in range(NB):  # NB is small; images per grid step amortize per-step overhead
        # stage image nb into the zero-bordered scratch (sublane-aligned interior store)
        xpad_ref[1:H + 1, _COL0:_COL0 + W, :] = x_ref[nb]

        # ---- conv1 + LeakyReLU(0.2), M-tiled over row strips --------------------------------
        def conv1_strip(s):
            r0 = s * R
            a1 = conv_strip(xpad_ref, w1_ref, b1_ref, r0)                   # f32 (R*W, C_in)
            y1 = jnp.where(a1 > 0, a1, 0.2 * a1)
            y1pad_ref[pl.ds(r0 + 1, R), pl.ds(_COL0, W), :] = (
                y1.reshape(R, W, C_in).astype(cdt))
        run_strips(conv1_strip)

        # ---- conv2 + LeakyReLU(0.2) + bilinear x0.5 (== exact 2x2 mean), M-tiled ------------
        def conv2_pool_strip(s):
            r0 = s * R
            a2 = conv_strip(y1pad_ref, w2_ref, b2_ref, r0)                  # f32 (R*W, C_out)
            y2 = jnp.where(a2 > 0, a2, 0.2 * a2)
            y2s_ref[...] = y2.reshape(R, W, C_out)                          # tiny per-strip buf
            # pool W with two stride-2 loads (VPU only), then pool H via leading-dim split.
            wsum = (y2s_ref[:, pl.ds(0, WO, stride=2), :] +
                    y2s_ref[:, pl.ds(1, WO, stride=2), :])                  # (R, WO, C_out)
            wsum = wsum.reshape(RO, 2, WO, C_out)
            pooled = (wsum[:, 0] + wsum[:, 1]) * 0.25                       # (RO, WO, C_out)
            out_ref[nb, pl.ds(s * RO, RO), :, :] = pooled.astype(out_ref.dtype)
        run_strips(conv2_pool_strip)


def _default_conv_mode():
    try:
        kind = jax.devices()[0].device_kind.lower()
    except Exception:
        kind = ""
    return "per_tap" if "v5" in kind else "fused"


def _pick_nb(n, per_image_bytes, budget_bytes=2 << 20, cap=8):
    nb = 1
    for d in range(1, min(n, cap) + 1):
        if n % d == 0 and d * per_image_bytes <= budget_bytes:
            nb = d
    return nb


def _pick_row_tile(h, w, m_target=512):
    r = 2
    for cand in range(2, h + 1, 2):
        if h % cand == 0 and cand * w <= m_target:
            r = cand
    return r


def discriminator_block(x_nchw, w1, b1, w2, b2, *,
                        compute_dtype=jnp.bfloat16, conv_mode=None, row_tile=None):
    """DiscriminatorBlock forward.

    x_nchw: (N, C_in, H, W) f32; w: (C_out, C_in, 3, 3) OIHW; returns (N, C_out, H/2, W/2) f32.

    compute_dtype: MXU-operand / staging dtype. bf16 by default on ALL generations (the MXU is
      bf16-native everywhere; all VPU work — bias, LeakyReLU, pooling — stays f32). Pass
      jnp.float32 for the exact path. Note: with bf16 the inter-conv activation y1 is stored in
      bf16, so quantization error compounds slightly through conv2 (fine for a discriminator).
    conv_mode: "fused" (one K=9*C_in matmul; best on v6e/v7x) or "per_tap" (9 K=C_in matmuls,
      no concatenate copies; best on v5e). None = auto-detect from the device kind.
    row_tile: override the M-tile height (even, divides H); None = auto (~512-row matmul M).
    """
    N, C_in, H, W = x_nchw.shape
    C_out = w2.shape[0]
    assert H % 2 == 0 and W % 2 == 0, "bilinear x0.5 == 2x2 mean needs even H, W"
    HO, WO = H // 2, W // 2

    if conv_mode is None:
        conv_mode = _default_conv_mode()
    fuse_im2col = (conv_mode == "fused")

    cd_bytes = jnp.dtype(compute_dtype).itemsize
    NB = _pick_nb(N, H * W * C_in * cd_bytes)
    R = _pick_row_tile(H, W) if row_tile is None else int(row_tile)
    assert R % 2 == 0 and H % R == 0, "row_tile must be even and divide H"
    Wp = W + 16

    # glue: layout conversion + weight repacking only (NO HBM-level padding pass).
    x = jnp.transpose(x_nchw, (0, 2, 3, 1)).astype(compute_dtype)                   # NHWC
    # weights as 2-D (9*C_in, C) slabs; row index = (dy*3 + dx)*C_in + ci (matches im2col order)
    w1k = jnp.transpose(w1, (2, 3, 1, 0)).reshape(9 * C_in, C_in).astype(compute_dtype)
    w2k = jnp.transpose(w2, (2, 3, 1, 0)).reshape(9 * C_in, C_out).astype(compute_dtype)
    b1r = b1.reshape(1, C_in).astype(jnp.float32)
    b2r = b2.reshape(1, C_out).astype(jnp.float32)

    # explicit scoped-VMEM budget (scratches + double-buffered blocks + per-strip temporaries),
    # with 2x headroom, capped to stay under v7x's 64 MiB physical VMEM.
    est = (2 * (H + 2) * Wp * C_in * cd_bytes            # padded staging buffers
           + R * W * C_out * 4                           # per-strip conv2 output scratch
           + 2 * NB * H * W * C_in * cd_bytes            # double-buffered input blocks
           + 2 * NB * HO * WO * C_out * 4                # double-buffered output blocks
           + 2 * 9 * C_in * (C_in + C_out) * cd_bytes    # double-buffered weight slabs
           + 2 * R * W * (9 * C_in * cd_bytes + (C_in + C_out) * 4))  # in-flight col + acc
    vmem_limit = int(min(max(2 * est, 32 * 2 ** 20), 56 * 2 ** 20))

    kernel = functools.partial(_disc_block_kernel, H=H, W=W, C_in=C_in, C_out=C_out,
                               NB=NB, R=R, fuse_im2col=fuse_im2col)

    out = pl.pallas_call(
        kernel,
        out_shape=jax.ShapeDtypeStruct((N, HO, WO, C_out), jnp.float32),
        grid_spec=pltpu.PrefetchScalarGridSpec(
            num_scalar_prefetch=0,
            grid=(N // NB,),
            in_specs=[
                pl.BlockSpec((NB, H, W, C_in), lambda n: (n, 0, 0, 0)),
                pl.BlockSpec((9 * C_in, C_in), lambda n: (0, 0)),
                pl.BlockSpec((1, C_in), lambda n: (0, 0)),
                pl.BlockSpec((9 * C_in, C_out), lambda n: (0, 0)),
                pl.BlockSpec((1, C_out), lambda n: (0, 0)),
            ],
            out_specs=pl.BlockSpec((NB, HO, WO, C_out), lambda n: (n, 0, 0, 0)),
            scratch_shapes=[
                pltpu.VMEM((H + 2, Wp, C_in), compute_dtype),   # zero-bordered input staging
                pltpu.VMEM((H + 2, Wp, C_in), compute_dtype),   # zero-bordered conv1-out staging
                pltpu.VMEM((R, W, C_out), jnp.float32),         # per-strip conv2 output
            ],
        ),
        compiler_params=pltpu.CompilerParams(
            dimension_semantics=("parallel",),
            vmem_limit_bytes=vmem_limit),
    )(x, w1k, b1r, w2k, b2r)

    return jnp.transpose(out, (0, 3, 1, 2))                                          # NCHW


def _reference(x_nchw, w1, b1, w2, b2):
    """Pure-JAX reference matching the PyTorch forward."""
    def conv(y, w, b):
        dn = jax.lax.conv_dimension_numbers(y.shape, w.shape, ('NCHW', 'OIHW', 'NCHW'))
        return jax.lax.conv_general_dilated(y, w, (1, 1), 'SAME',
                                            dimension_numbers=dn) + b[None, :, None, None]
    y = conv(x_nchw, w1, b1)
    y = jnp.where(y > 0, y, 0.2 * y)
    y = conv(y, w2, b2)
    y = jnp.where(y > 0, y, 0.2 * y)
    N, C, H, W = y.shape
    return y.reshape(N, C, H // 2, 2, W // 2, 2).mean(axis=(3, 5))   # exact bilinear x0.5


if __name__ == "__main__":
    key = jax.random.PRNGKey(0)
    N, C_in, C_out, H, W = 2, 4, 8, 16, 16

    k_x, k_w1, k_b1, k_w2, k_b2 = jax.random.split(key, 5)
    x = jax.random.normal(k_x, (N, C_in, H, W), jnp.float32)
    # deterministic "Normal" conv init (NormalConv2d)
    w1 = 0.1 * jax.random.normal(k_w1, (C_in, C_in, 3, 3), jnp.float32)
    b1 = 0.1 * jax.random.normal(k_b1, (C_in,), jnp.float32)
    w2 = 0.1 * jax.random.normal(k_w2, (C_out, C_in, 3, 3), jnp.float32)
    b2 = 0.1 * jax.random.normal(k_b2, (C_out,), jnp.float32)

    ref = jax.block_until_ready(_reference(x, w1, b1, w2, b2))

    # Default path: bf16 MXU operands (fast on v5e/v6e/v7x), auto conv mode, f32 accumulation.
    out_bf16 = jax.block_until_ready(discriminator_block(x, w1, b1, w2, b2))
    assert out_bf16.shape == (N, C_out, H // 2, W // 2), out_bf16.shape
    np.testing.assert_allclose(np.asarray(out_bf16), np.asarray(ref), rtol=5e-2, atol=5e-2)

    # Exact f32 path, fused K=9*C_in im2col (v6e/v7x conv mode), forced multi-strip M-tiling.
    out_f32_fused = jax.block_until_ready(
        discriminator_block(x, w1, b1, w2, b2, compute_dtype=jnp.float32,
                            conv_mode="fused", row_tile=4))
    np.testing.assert_allclose(np.asarray(out_f32_fused), np.asarray(ref),
                               rtol=1e-4, atol=1e-4)

    # Exact f32 path, per-tap K=C_in accumulating matmuls (v5e conv mode), multi-strip M-tiling.
    out_f32_tap = jax.block_until_ready(
        discriminator_block(x, w1, b1, w2, b2, compute_dtype=jnp.float32,
                            conv_mode="per_tap", row_tile=4))
    np.testing.assert_allclose(np.asarray(out_f32_tap), np.asarray(ref),
                               rtol=1e-4, atol=1e-4)

    print("KERNEL_OK")
</pallas_src>

<mosaic_0001>
module attributes {stable_mosaic.version = 11 : i64} {
  func.func @_disc_block_kernel(%arg0: i32, %arg1: memref<2x16x16x4xbf16, #tpu.memory_space<vmem>>, %arg2: memref<36x4xbf16, #tpu.memory_space<vmem>>, %arg3: memref<1x4xf32, #tpu.memory_space<vmem>>, %arg4: memref<36x8xbf16, #tpu.memory_space<vmem>>, %arg5: memref<1x8xf32, #tpu.memory_space<vmem>>, %arg6: memref<2x8x8x8xf32, #tpu.memory_space<vmem>>, %arg7: memref<18x32x4xbf16, #tpu.memory_space<vmem>>, %arg8: memref<18x32x4xbf16, #tpu.memory_space<vmem>>, %arg9: memref<16x16x8xf32, #tpu.memory_space<vmem>>) attributes {dimension_semantics = [#tpu.dimension_semantics<parallel>], iteration_bounds = array<i64: 1>, scalar_prefetch = 0 : i64, scratch_operands = 3 : i64, tpu.core_type = #tpu.core_type<tc>, window_params = [{transform_indices = @transform_0, window_bounds = array<i64: 2, 16, 16, 4>}, {pipeline_mode = #tpu.pipeline_mode<synchronous>, transform_indices = @transform_1, window_bounds = array<i64: 36, 4>}, {pipeline_mode = #tpu.pipeline_mode<synchronous>, transform_indices = @transform_2, window_bounds = array<i64: 1, 4>}, {pipeline_mode = #tpu.pipeline_mode<synchronous>, transform_indices = @transform_3, window_bounds = array<i64: 36, 8>}, {pipeline_mode = #tpu.pipeline_mode<synchronous>, transform_indices = @transform_4, window_bounds = array<i64: 1, 8>}, {transform_indices = @transform_5, window_bounds = array<i64: 2, 8, 8, 8>}]} {
    %cst = arith.constant 0.000000e+00 : bf16
    %0 = vector.broadcast %cst : bf16 to vector<1x32x4xbf16>
    %cst_0 = arith.constant 0.000000e+00 : bf16
    %1 = vector.broadcast %cst_0 : bf16 to vector<18x8x4xbf16>
    %c0 = arith.constant 0 : index
    %c0_1 = arith.constant 0 : index
    %c0_2 = arith.constant 0 : index
    %2 = vector.load %arg7[%c0, %c0_1, %c0_2] : memref<18x32x4xbf16, #tpu.memory_space<vmem>>, vector<1x32x4xbf16>
    tpu.vector_store %arg7[%c0, %c0_1, %c0_2], %0 {strides = array<i32>} : memref<18x32x4xbf16, #tpu.memory_space<vmem>>, vector<1x32x4xbf16>,
    %c17 = arith.constant 17 : index
    %c0_3 = arith.constant 0 : index
    %c0_4 = arith.constant 0 : index
    %3 = vector.load %arg7[%c17, %c0_3, %c0_4] : memref<18x32x4xbf16, #tpu.memory_space<vmem>>, vector<1x32x4xbf16>
    tpu.vector_store %arg7[%c17, %c0_3, %c0_4], %0 {strides = array<i32>} : memref<18x32x4xbf16, #tpu.memory_space<vmem>>, vector<1x32x4xbf16>,
    %c0_5 = arith.constant 0 : index
    %c0_6 = arith.constant 0 : index
    %c0_7 = arith.constant 0 : index
    %4 = vector.load %arg7[%c0_5, %c0_6, %c0_7] : memref<18x32x4xbf16, #tpu.memory_space<vmem>>, vector<18x8x4xbf16>
    tpu.vector_store %arg7[%c0_5, %c0_6, %c0_7], %1 {strides = array<i32>} : memref<18x32x4xbf16, #tpu.memory_space<vmem>>, vector<18x8x4xbf16>,
    %c0_8 = arith.constant 0 : index
    %c24 = arith.constant 24 : index
    %c0_9 = arith.constant 0 : index
    %5 = vector.load %arg7[%c0_8, %c24, %c0_9] : memref<18x32x4xbf16, #tpu.memory_space<vmem>>, vector<18x8x4xbf16>
    tpu.vector_store %arg7[%c0_8, %c24, %c0_9], %1 {strides = array<i32>} : memref<18x32x4xbf16, #tpu.memory_space<vmem>>, vector<18x8x4xbf16>,
    %c0_10 = arith.constant 0 : index
    %c0_11 = arith.constant 0 : index
    %c0_12 = arith.constant 0 : index
    %6 = vector.load %arg8[%c0_10, %c0_11, %c0_12] : memref<18x32x4xbf16, #tpu.memory_space<vmem>>, vector<1x32x4xbf16>
    tpu.vector_store %arg8[%c0_10, %c0_11, %c0_12], %0 {strides = array<i32>} : memref<18x32x4xbf16, #tpu.memory_space<vmem>>, vector<1x32x4xbf16>,
    %c17_13 = arith.constant 17 : index
    %c0_14 = arith.constant 0 : index
    %c0_15 = arith.constant 0 : index
    %7 = vector.load %arg8[%c17_13, %c0_14, %c0_15] : memref<18x32x4xbf16, #tpu.memory_space<vmem>>, vector<1x32x4xbf16>
    tpu.vector_store %arg8[%c17_13, %c0_14, %c0_15], %0 {strides = array<i32>} : memref<18x32x4xbf16, #tpu.memory_space<vmem>>, vector<1x32x4xbf16>,
    %c0_16 = arith.constant 0 : index
    %c0_17 = arith.constant 0 : index
    %c0_18 = arith.constant 0 : index
    %8 = vector.load %arg8[%c0_16, %c0_17, %c0_18] : memref<18x32x4xbf16, #tpu.memory_space<vmem>>, vector<18x8x4xbf16>
    tpu.vector_store %arg8[%c0_16, %c0_17, %c0_18], %1 {strides = array<i32>} : memref<18x32x4xbf16, #tpu.memory_space<vmem>>, vector<18x8x4xbf16>,
    %c0_19 = arith.constant 0 : index
    %c24_20 = arith.constant 24 : index
    %c0_21 = arith.constant 0 : index
    %9 = vector.load %arg8[%c0_19, %c24_20, %c0_21] : memref<18x32x4xbf16, #tpu.memory_space<vmem>>, vector<18x8x4xbf16>
    tpu.vector_store %arg8[%c0_19, %c24_20, %c0_21], %1 {strides = array<i32>} : memref<18x32x4xbf16, #tpu.memory_space<vmem>>, vector<18x8x4xbf16>,
    %c0_22 = arith.constant 0 : index
    %c0_23 = arith.constant 0 : index
    %c0_24 = arith.constant 0 : index
    %c0_25 = arith.constant 0 : index
    %10 = vector.load %arg1[%c0_22, %c0_23, %c0_24, %c0_25] : memref<2x16x16x4xbf16, #tpu.memory_space<vmem>>, vector<1x16x16x4xbf16>
    %11 = vector.shape_cast %10 : vector<1x16x16x4xbf16> to vector<16x16x4xbf16>
    %c1 = arith.constant 1 : index
    %c8 = arith.constant 8 : index
    %c0_26 = arith.constant 0 : index
    %12 = vector.load %arg7[%c1, %c8, %c0_26] : memref<18x32x4xbf16, #tpu.memory_space<vmem>>, vector<16x16x4xbf16>
    tpu.vector_store %arg7[%c1, %c8, %c0_26], %11 {strides = array<i32>} : memref<18x32x4xbf16, #tpu.memory_space<vmem>>, vector<16x16x4xbf16>,
    %c0_27 = arith.constant 0 : index
    %c7 = arith.constant 7 : index
    %c0_28 = arith.constant 0 : index
    %13 = vector.load %arg7[%c0_27, %c7, %c0_28] : memref<18x32x4xbf16, #tpu.memory_space<vmem>>, vector<16x16x4xbf16>
    %14 = vector.shape_cast %13 : vector<16x16x4xbf16> to vector<256x4xbf16>
    %c0_29 = arith.constant 0 : index
    %c8_30 = arith.constant 8 : index
    %c0_31 = arith.constant 0 : index
    %15 = vector.load %arg7[%c0_29, %c8_30, %c0_31] : memref<18x32x4xbf16, #tpu.memory_space<vmem>>, vector<16x16x4xbf16>
    %16 = vector.shape_cast %15 : vector<16x16x4xbf16> to vector<256x4xbf16>
    %c0_32 = arith.constant 0 : index
    %c9 = arith.constant 9 : index
    %c0_33 = arith.constant 0 : index
    %17 = vector.load %arg7[%c0_32, %c9, %c0_33] : memref<18x32x4xbf16, #tpu.memory_space<vmem>>, vector<16x16x4xbf16>
    %18 = vector.shape_cast %17 : vector<16x16x4xbf16> to vector<256x4xbf16>
    %c1_34 = arith.constant 1 : index
    %c7_35 = arith.constant 7 : index
    %c0_36 = arith.constant 0 : index
    %19 = vector.load %arg7[%c1_34, %c7_35, %c0_36] : memref<18x32x4xbf16, #tpu.memory_space<vmem>>, vector<16x16x4xbf16>
    %20 = vector.shape_cast %19 : vector<16x16x4xbf16> to vector<256x4xbf16>
    %c1_37 = arith.constant 1 : index
    %c8_38 = arith.constant 8 : index
    %c0_39 = arith.constant 0 : index
    %21 = vector.load %arg7[%c1_37, %c8_38, %c0_39] : memref<18x32x4xbf16, #tpu.memory_space<vmem>>, vector<16x16x4xbf16>
    %22 = vector.shape_cast %21 : vector<16x16x4xbf16> to vector<256x4xbf16>
    %c1_40 = arith.constant 1 : index
    %c9_41 = arith.constant 9 : index
    %c0_42 = arith.constant 0 : index
    %23 = vector.load %arg7[%c1_40, %c9_41, %c0_42] : memref<18x32x4xbf16, #tpu.memory_space<vmem>>, vector<16x16x4xbf16>
    %24 = vector.shape_cast %23 : vector<16x16x4xbf16> to vector<256x4xbf16>
    %c2 = arith.constant 2 : index
    %c7_43 = arith.constant 7 : index
    %c0_44 = arith.constant 0 : index
    %25 = vector.load %arg7[%c2, %c7_43, %c0_44] : memref<18x32x4xbf16, #tpu.memory_space<vmem>>, vector<16x16x4xbf16>
    %26 = vector.shape_cast %25 : vector<16x16x4xbf16> to vector<256x4xbf16>
    %c2_45 = arith.constant 2 : index
    %c8_46 = arith.constant 8 : index
    %c0_47 = arith.constant 0 : index
    %27 = vector.load %arg7[%c2_45, %c8_46, %c0_47] : memref<18x32x4xbf16, #tpu.memory_space<vmem>>, vector<16x16x4xbf16>
    %28 = vector.shape_cast %27 : vector<16x16x4xbf16> to vector<256x4xbf16>
    %c2_48 = arith.constant 2 : index
    %c9_49 = arith.constant 9 : index
    %c0_50 = arith.constant 0 : index
    %29 = vector.load %arg7[%c2_48, %c9_49, %c0_50] : memref<18x32x4xbf16, #tpu.memory_space<vmem>>, vector<16x16x4xbf16>
    %30 = vector.shape_cast %29 : vector<16x16x4xbf16> to vector<256x4xbf16>
    %31 = tpu.concatenate %14, %16, %18, %20, %22, %24, %26, %28, %30 in 1 : vector<256x4xbf16>, vector<256x4xbf16>, vector<256x4xbf16>, vector<256x4xbf16>, vector<256x4xbf16>, vector<256x4xbf16>, vector<256x4xbf16>, vector<256x4xbf16>, vector<256x4xbf16> -> vector<256x36xbf16>
    %c0_51 = arith.constant 0 : index
    %c0_52 = arith.constant 0 : index
    %32 = vector.load %arg2[%c0_51, %c0_52] : memref<36x4xbf16, #tpu.memory_space<vmem>>, vector<36x4xbf16>
    %cst_53 = arith.constant dense<0.000000e+00> : vector<256x4xf32>
    %33 = tpu.matmul %31, %32, %cst_53 {dimension_numbers = #tpu.dot_dimension_numbers<[1], [0], [0], [1], [0, 0, 1, 1], [], []>} : vector<256x36xbf16>, vector<36x4xbf16>, vector<256x4xf32> -> vector<256x4xf32>
    %c0_54 = arith.constant 0 : index
    %c0_55 = arith.constant 0 : index
    %34 = vector.load %arg3[%c0_54, %c0_55] : memref<1x4xf32, #tpu.memory_space<vmem>>, vector<1x4xf32>
    %35 = vector.broadcast %34 : vector<1x4xf32> to vector<256x4xf32>
    %36 = arith.addf %33, %35 : vector<256x4xf32>
    %cst_56 = arith.constant 0.000000e+00 : f32
    %37 = vector.broadcast %cst_56 : f32 to vector<256x4xf32>
    %38 = arith.cmpf ogt, %36, %37 : vector<256x4xf32>
    %cst_57 = arith.constant 2.000000e-01 : f32
    %39 = vector.broadcast %cst_57 : f32 to vector<256x4xf32>
    %40 = arith.mulf %39, %36 : vector<256x4xf32>
    %41 = arith.select %38, %36, %40 : vector<256x4xi1>, vector<256x4xf32>
    %42 = vector.shape_cast %41 : vector<256x4xf32> to vector<16x16x4xf32>
    %43 = arith.truncf %42 : vector<16x16x4xf32> to vector<16x16x4xbf16>
    %c1_58 = arith.constant 1 : index
    %c8_59 = arith.constant 8 : index
    %c0_60 = arith.constant 0 : index
    %44 = vector.load %arg8[%c1_58, %c8_59, %c0_60] : memref<18x32x4xbf16, #tpu.memory_space<vmem>>, vector<16x16x4xbf16>
    tpu.vector_store %arg8[%c1_58, %c8_59, %c0_60], %43 {strides = array<i32>} : memref<18x32x4xbf16, #tpu.memory_space<vmem>>, vector<16x16x4xbf16>,
    %c0_61 = arith.constant 0 : index
    %c7_62 = arith.constant 7 : index
    %c0_63 = arith.constant 0 : index
    %45 = vector.load %arg8[%c0_61, %c7_62, %c0_63] : memref<18x32x4xbf16, #tpu.memory_space<vmem>>, vector<16x16x4xbf16>
    %46 = vector.shape_cast %45 : vector<16x16x4xbf16> to vector<256x4xbf16>
    %c0_64 = arith.constant 0 : index
    %c8_65 = arith.constant 8 : index
    %c0_66 = arith.constant 0 : index
    %47 = vector.load %arg8[%c0_64, %c8_65, %c0_66] : memref<18x32x4xbf16, #tpu.memory_space<vmem>>, vector<16x16x4xbf16>
    %48 = vector.shape_cast %47 : vector<16x16x4xbf16> to vector<256x4xbf16>
    %c0_67 = arith.constant 0 : index
    %c9_68 = arith.constant 9 : index
    %c0_69 = arith.constant 0 : index
    %49 = vector.load %arg8[%c0_67, %c9_68, %c0_69] : memref<18x32x4xbf16, #tpu.memory_space<vmem>>, vector<16x16x4xbf16>
    %50 = vector.shape_cast %49 : vector<16x16x4xbf16> to vector<256x4xbf16>
    %c1_70 = arith.constant 1 : index
    %c7_71 = arith.constant 7 : index
    %c0_72 = arith.constant 0 : index
    %51 = vector.load %arg8[%c1_70, %c7_71, %c0_72] : memref<18x32x4xbf16, #tpu.memory_space<vmem>>, vector<16x16x4xbf16>
    %52 = vector.shape_cast %51 : vector<16x16x4xbf16> to vector<256x4xbf16>
    %c1_73 = arith.constant 1 : index
    %c8_74 = arith.constant 8 : index
    %c0_75 = arith.constant 0 : index
    %53 = vector.load %arg8[%c1_73, %c8_74, %c0_75] : memref<18x32x4xbf16, #tpu.memory_space<vmem>>, vector<16x16x4xbf16>
    %54 = vector.shape_cast %53 : vector<16x16x4xbf16> to vector<256x4xbf16>
    %c1_76 = arith.constant 1 : index
    %c9_77 = arith.constant 9 : index
    %c0_78 = arith.constant 0 : index
    %55 = vector.load %arg8[%c1_76, %c9_77, %c0_78] : memref<18x32x4xbf16, #tpu.memory_space<vmem>>, vector<16x16x4xbf16>
    %56 = vector.shape_cast %55 : vector<16x16x4xbf16> to vector<256x4xbf16>
    %c2_79 = arith.constant 2 : index
    %c7_80 = arith.constant 7 : index
    %c0_81 = arith.constant 0 : index
    %57 = vector.load %arg8[%c2_79, %c7_80, %c0_81] : memref<18x32x4xbf16, #tpu.memory_space<vmem>>, vector<16x16x4xbf16>
    %58 = vector.shape_cast %57 : vector<16x16x4xbf16> to vector<256x4xbf16>
    %c2_82 = arith.constant 2 : index
    %c8_83 = arith.constant 8 : index
    %c0_84 = arith.constant 0 : index
    %59 = vector.load %arg8[%c2_82, %c8_83, %c0_84] : memref<18x32x4xbf16, #tpu.memory_space<vmem>>, vector<16x16x4xbf16>
    %60 = vector.shape_cast %59 : vector<16x16x4xbf16> to vector<256x4xbf16>
    %c2_85 = arith.constant 2 : index
    %c9_86 = arith.constant 9 : index
    %c0_87 = arith.constant 0 : index
    %61 = vector.load %arg8[%c2_85, %c9_86, %c0_87] : memref<18x32x4xbf16, #tpu.memory_space<vmem>>, vector<16x16x4xbf16>
    %62 = vector.shape_cast %61 : vector<16x16x4xbf16> to vector<256x4xbf16>
    %63 = tpu.concatenate %46, %48, %50, %52, %54, %56, %58, %60, %62 in 1 : vector<256x4xbf16>, vector<256x4xbf16>, vector<256x4xbf16>, vector<256x4xbf16>, vector<256x4xbf16>, vector<256x4xbf16>, vector<256x4xbf16>, vector<256x4xbf16>, vector<256x4xbf16> -> vector<256x36xbf16>
    %c0_88 = arith.constant 0 : index
    %c0_89 = arith.constant 0 : index
    %64 = vector.load %arg4[%c0_88, %c0_89] : memref<36x8xbf16, #tpu.memory_space<vmem>>, vector<36x8xbf16>
    %cst_90 = arith.constant dense<0.000000e+00> : vector<256x8xf32>
    %65 = tpu.matmul %63, %64, %cst_90 {dimension_numbers = #tpu.dot_dimension_numbers<[1], [0], [0], [1], [0, 0, 1, 1], [], []>} : vector<256x36xbf16>, vector<36x8xbf16>, vector<256x8xf32> -> vector<256x8xf32>
    %c0_91 = arith.constant 0 : index
    %c0_92 = arith.constant 0 : index
    %66 = vector.load %arg5[%c0_91, %c0_92] : memref<1x8xf32, #tpu.memory_space<vmem>>, vector<1x8xf32>
    %67 = vector.broadcast %66 : vector<1x8xf32> to vector<256x8xf32>
    %68 = arith.addf %65, %67 : vector<256x8xf32>
    %cst_93 = arith.constant 0.000000e+00 : f32
    %69 = vector.broadcast %cst_93 : f32 to vector<256x8xf32>
    %70 = arith.cmpf ogt, %68, %69 : vector<256x8xf32>
    %cst_94 = arith.constant 2.000000e-01 : f32
    %71 = vector.broadcast %cst_94 : f32 to vector<256x8xf32>
    %72 = arith.mulf %71, %68 : vector<256x8xf32>
    %73 = arith.select %70, %68, %72 : vector<256x8xi1>, vector<256x8xf32>
    %74 = vector.shape_cast %73 : vector<256x8xf32> to vector<16x16x8xf32>
    %c0_95 = arith.constant 0 : index
    %c0_96 = arith.constant 0 : index
    %c0_97 = arith.constant 0 : index
    %75 = vector.load %arg9[%c0_95, %c0_96, %c0_97] : memref<16x16x8xf32, #tpu.memory_space<vmem>>, vector<16x16x8xf32>
    tpu.vector_store %arg9[%c0_95, %c0_96, %c0_97], %74 {strides = array<i32>} : memref<16x16x8xf32, #tpu.memory_space<vmem>>, vector<16x16x8xf32>,
    %c0_98 = arith.constant 0 : index
    %c0_99 = arith.constant 0 : index
    %c0_100 = arith.constant 0 : index
    %76 = tpu.strided_load %arg9[%c0_98, %c0_99, %c0_100] {strides = array<i32: 1, 2, 1>} : memref<16x16x8xf32, #tpu.memory_space<vmem>>, vector<16x8x8xf32>
    %c0_101 = arith.constant 0 : index
    %c1_102 = arith.constant 1 : index
    %c0_103 = arith.constant 0 : index
    %77 = tpu.strided_load %arg9[%c0_101, %c1_102, %c0_103] {strides = array<i32: 1, 2, 1>} : memref<16x16x8xf32, #tpu.memory_space<vmem>>, vector<16x8x8xf32>
    %78 = arith.addf %76, %77 : vector<16x8x8xf32>
    %79 = vector.shape_cast %78 : vector<16x8x8xf32> to vector<8x2x8x8xf32>
    %80 = vector.extract_strided_slice %79 {offsets = [0, 0, 0, 0], sizes = [8, 1, 8, 8], strides = [1, 1, 1, 1]} : vector<8x2x8x8xf32> to vector<8x1x8x8xf32>
    %81 = vector.shape_cast %80 : vector<8x1x8x8xf32> to vector<8x8x8xf32>
    %82 = vector.extract_strided_slice %79 {offsets = [0, 1, 0, 0], sizes = [8, 1, 8, 8], strides = [1, 1, 1, 1]} : vector<8x2x8x8xf32> to vector<8x1x8x8xf32>
    %83 = vector.shape_cast %82 : vector<8x1x8x8xf32> to vector<8x8x8xf32>
    %84 = arith.addf %81, %83 : vector<8x8x8xf32>
    %cst_104 = arith.constant 2.500000e-01 : f32
    %85 = vector.broadcast %cst_104 : f32 to vector<8x8x8xf32>
    %86 = arith.mulf %84, %85 : vector<8x8x8xf32>
    %c0_105 = arith.constant 0 : index
    %c0_106 = arith.constant 0 : index
    %c0_107 = arith.constant 0 : index
    %c0_108 = arith.constant 0 : index
    %87 = vector.load %arg6[%c0_105, %c0_106, %c0_107, %c0_108] : memref<2x8x8x8xf32, #tpu.memory_space<vmem>>, vector<1x8x8x8xf32>
    %88 = vector.shape_cast %87 : vector<1x8x8x8xf32> to vector<8x8x8xf32>
    %89 = vector.shape_cast %86 : vector<8x8x8xf32> to vector<1x8x8x8xf32>
    tpu.vector_store %arg6[%c0_105, %c0_106, %c0_107, %c0_108], %89 {strides = array<i32>} : memref<2x8x8x8xf32, #tpu.memory_space<vmem>>, vector<1x8x8x8xf32>,
    %c1_109 = arith.constant 1 : index
    %c0_110 = arith.constant 0 : index
    %c0_111 = arith.constant 0 : index
    %c0_112 = arith.constant 0 : index
    %90 = vector.load %arg1[%c1_109, %c0_110, %c0_111, %c0_112] : memref<2x16x16x4xbf16, #tpu.memory_space<vmem>>, vector<1x16x16x4xbf16>
    %91 = vector.shape_cast %90 : vector<1x16x16x4xbf16> to vector<16x16x4xbf16>
    %c1_113 = arith.constant 1 : index
    %c8_114 = arith.constant 8 : index
    %c0_115 = arith.constant 0 : index
    %92 = vector.load %arg7[%c1_113, %c8_114, %c0_115] : memref<18x32x4xbf16, #tpu.memory_space<vmem>>, vector<16x16x4xbf16>
    tpu.vector_store %arg7[%c1_113, %c8_114, %c0_115], %91 {strides = array<i32>} : memref<18x32x4xbf16, #tpu.memory_space<vmem>>, vector<16x16x4xbf16>,
    %c0_116 = arith.constant 0 : index
    %c7_117 = arith.constant 7 : index
    %c0_118 = arith.constant 0 : index
    %93 = vector.load %arg7[%c0_116, %c7_117, %c0_118] : memref<18x32x4xbf16, #tpu.memory_space<vmem>>, vector<16x16x4xbf16>
    %94 = vector.shape_cast %93 : vector<16x16x4xbf16> to vector<256x4xbf16>
    %c0_119 = arith.constant 0 : index
    %c8_120 = arith.constant 8 : index
    %c0_121 = arith.constant 0 : index
    %95 = vector.load %arg7[%c0_119, %c8_120, %c0_121] : memref<18x32x4xbf16, #tpu.memory_space<vmem>>, vector<16x16x4xbf16>
    %96 = vector.shape_cast %95 : vector<16x16x4xbf16> to vector<256x4xbf16>
    %c0_122 = arith.constant 0 : index
    %c9_123 = arith.constant 9 : index
    %c0_124 = arith.constant 0 : index
    %97 = vector.load %arg7[%c0_122, %c9_123, %c0_124] : memref<18x32x4xbf16, #tpu.memory_space<vmem>>, vector<16x16x4xbf16>
    %98 = vector.shape_cast %97 : vector<16x16x4xbf16> to vector<256x4xbf16>
    %c1_125 = arith.constant 1 : index
    %c7_126 = arith.constant 7 : index
    %c0_127 = arith.constant 0 : index
    %99 = vector.load %arg7[%c1_125, %c7_126, %c0_127] : memref<18x32x4xbf16, #tpu.memory_space<vmem>>, vector<16x16x4xbf16>
    %100 = vector.shape_cast %99 : vector<16x16x4xbf16> to vector<256x4xbf16>
    %c1_128 = arith.constant 1 : index
    %c8_129 = arith.constant 8 : index
    %c0_130 = arith.constant 0 : index
    %101 = vector.load %arg7[%c1_128, %c8_129, %c0_130] : memref<18x32x4xbf16, #tpu.memory_space<vmem>>, vector<16x16x4xbf16>
    %102 = vector.shape_cast %101 : vector<16x16x4xbf16> to vector<256x4xbf16>
    %c1_131 = arith.constant 1 : index
    %c9_132 = arith.constant 9 : index
    %c0_133 = arith.constant 0 : index
    %103 = vector.load %arg7[%c1_131, %c9_132, %c0_133] : memref<18x32x4xbf16, #tpu.memory_space<vmem>>, vector<16x16x4xbf16>
    %104 = vector.shape_cast %103 : vector<16x16x4xbf16> to vector<256x4xbf16>
    %c2_134 = arith.constant 2 : index
    %c7_135 = arith.constant 7 : index
    %c0_136 = arith.constant 0 : index
    %105 = vector.load %arg7[%c2_134, %c7_135, %c0_136] : memref<18x32x4xbf16, #tpu.memory_space<vmem>>, vector<16x16x4xbf16>
    %106 = vector.shape_cast %105 : vector<16x16x4xbf16> to vector<256x4xbf16>
    %c2_137 = arith.constant 2 : index
    %c8_138 = arith.constant 8 : index
    %c0_139 = arith.constant 0 : index
    %107 = vector.load %arg7[%c2_137, %c8_138, %c0_139] : memref<18x32x4xbf16, #tpu.memory_space<vmem>>, vector<16x16x4xbf16>
    %108 = vector.shape_cast %107 : vector<16x16x4xbf16> to vector<256x4xbf16>
    %c2_140 = arith.constant 2 : index
    %c9_141 = arith.constant 9 : index
    %c0_142 = arith.constant 0 : index
    %109 = vector.load %arg7[%c2_140, %c9_141, %c0_142] : memref<18x32x4xbf16, #tpu.memory_space<vmem>>, vector<16x16x4xbf16>
    %110 = vector.shape_cast %109 : vector<16x16x4xbf16> to vector<256x4xbf16>
    %111 = tpu.concatenate %94, %96, %98, %100, %102, %104, %106, %108, %110 in 1 : vector<256x4xbf16>, vector<256x4xbf16>, vector<256x4xbf16>, vector<256x4xbf16>, vector<256x4xbf16>, vector<256x4xbf16>, vector<256x4xbf16>, vector<256x4xbf16>, vector<256x4xbf16> -> vector<256x36xbf16>
    %c0_143 = arith.constant 0 : index
    %c0_144 = arith.constant 0 : index
    %112 = vector.load %arg2[%c0_143, %c0_144] : memref<36x4xbf16, #tpu.memory_space<vmem>>, vector<36x4xbf16>
    %cst_145 = arith.constant dense<0.000000e+00> : vector<256x4xf32>
    %113 = tpu.matmul %111, %112, %cst_145 {dimension_numbers = #tpu.dot_dimension_numbers<[1], [0], [0], [1], [0, 0, 1, 1], [], []>} : vector<256x36xbf16>, vector<36x4xbf16>, vector<256x4xf32> -> vector<256x4xf32>
    %c0_146 = arith.constant 0 : index
    %c0_147 = arith.constant 0 : index
    %114 = vector.load %arg3[%c0_146, %c0_147] : memref<1x4xf32, #tpu.memory_space<vmem>>, vector<1x4xf32>
    %115 = vector.broadcast %114 : vector<1x4xf32> to vector<256x4xf32>
    %116 = arith.addf %113, %115 : vector<256x4xf32>
    %cst_148 = arith.constant 0.000000e+00 : f32
    %117 = vector.broadcast %cst_148 : f32 to vector<256x4xf32>
    %118 = arith.cmpf ogt, %116, %117 : vector<256x4xf32>
    %cst_149 = arith.constant 2.000000e-01 : f32
    %119 = vector.broadcast %cst_149 : f32 to vector<256x4xf32>
    %120 = arith.mulf %119, %116 : vector<256x4xf32>
    %121 = arith.select %118, %116, %120 : vector<256x4xi1>, vector<256x4xf32>
    %122 = vector.shape_cast %121 : vector<256x4xf32> to vector<16x16x4xf32>
    %123 = arith.truncf %122 : vector<16x16x4xf32> to vector<16x16x4xbf16>
    %c1_150 = arith.constant 1 : index
    %c8_151 = arith.constant 8 : index
    %c0_152 = arith.constant 0 : index
    %124 = vector.load %arg8[%c1_150, %c8_151, %c0_152] : memref<18x32x4xbf16, #tpu.memory_space<vmem>>, vector<16x16x4xbf16>
    tpu.vector_store %arg8[%c1_150, %c8_151, %c0_152], %123 {strides = array<i32>} : memref<18x32x4xbf16, #tpu.memory_space<vmem>>, vector<16x16x4xbf16>,
    %c0_153 = arith.constant 0 : index
    %c7_154 = arith.constant 7 : index
    %c0_155 = arith.constant 0 : index
    %125 = vector.load %arg8[%c0_153, %c7_154, %c0_155] : memref<18x32x4xbf16, #tpu.memory_space<vmem>>, vector<16x16x4xbf16>
    %126 = vector.shape_cast %125 : vector<16x16x4xbf16> to vector<256x4xbf16>
    %c0_156 = arith.constant 0 : index
    %c8_157 = arith.constant 8 : index
    %c0_158 = arith.constant 0 : index
    %127 = vector.load %arg8[%c0_156, %c8_157, %c0_158] : memref<18x32x4xbf16, #tpu.memory_space<vmem>>, vector<16x16x4xbf16>
    %128 = vector.shape_cast %127 : vector<16x16x4xbf16> to vector<256x4xbf16>
    %c0_159 = arith.constant 0 : index
    %c9_160 = arith.constant 9 : index
    %c0_161 = arith.constant 0 : index
    %129 = vector.load %arg8[%c0_159, %c9_160, %c0_161] : memref<18x32x4xbf16, #tpu.memory_space<vmem>>, vector<16x16x4xbf16>
    %130 = vector.shape_cast %129 : vector<16x16x4xbf16> to vector<256x4xbf16>
    %c1_162 = arith.constant 1 : index
    %c7_163 = arith.constant 7 : index
    %c0_164 = arith.constant 0 : index
    %131 = vector.load %arg8[%c1_162, %c7_163, %c0_164] : memref<18x32x4xbf16, #tpu.memory_space<vmem>>, vector<16x16x4xbf16>
    %132 = vector.shape_cast %131 : vector<16x16x4xbf16> to vector<256x4xbf16>
    %c1_165 = arith.constant 1 : index
    %c8_166 = arith.constant 8 : index
    %c0_167 = arith.constant 0 : index
    %133 = vector.load %arg8[%c1_165, %c8_166, %c0_167] : memref<18x32x4xbf16, #tpu.memory_space<vmem>>, vector<16x16x4xbf16>
    %134 = vector.shape_cast %133 : vector<16x16x4xbf16> to vector<256x4xbf16>
    %c1_168 = arith.constant 1 : index
    %c9_169 = arith.constant 9 : index
    %c0_170 = arith.constant 0 : index
    %135 = vector.load %arg8[%c1_168, %c9_169, %c0_170] : memref<18x32x4xbf16, #tpu.memory_space<vmem>>, vector<16x16x4xbf16>
    %136 = vector.shape_cast %135 : vector<16x16x4xbf16> to vector<256x4xbf16>
    %c2_171 = arith.constant 2 : index
    %c7_172 = arith.constant 7 : index
    %c0_173 = arith.constant 0 : index
    %137 = vector.load %arg8[%c2_171, %c7_172, %c0_173] : memref<18x32x4xbf16, #tpu.memory_space<vmem>>, vector<16x16x4xbf16>
    %138 = vector.shape_cast %137 : vector<16x16x4xbf16> to vector<256x4xbf16>
    %c2_174 = arith.constant 2 : index
    %c8_175 = arith.constant 8 : index
    %c0_176 = arith.constant 0 : index
    %139 = vector.load %arg8[%c2_174, %c8_175, %c0_176] : memref<18x32x4xbf16, #tpu.memory_space<vmem>>, vector<16x16x4xbf16>
    %140 = vector.shape_cast %139 : vector<16x16x4xbf16> to vector<256x4xbf16>
    %c2_177 = arith.constant 2 : index
    %c9_178 = arith.constant 9 : index
    %c0_179 = arith.constant 0 : index
    %141 = vector.load %arg8[%c2_177, %c9_178, %c0_179] : memref<18x32x4xbf16, #tpu.memory_space<vmem>>, vector<16x16x4xbf16>
    %142 = vector.shape_cast %141 : vector<16x16x4xbf16> to vector<256x4xbf16>
    %143 = tpu.concatenate %126, %128, %130, %132, %134, %136, %138, %140, %142 in 1 : vector<256x4xbf16>, vector<256x4xbf16>, vector<256x4xbf16>, vector<256x4xbf16>, vector<256x4xbf16>, vector<256x4xbf16>, vector<256x4xbf16>, vector<256x4xbf16>, vector<256x4xbf16> -> vector<256x36xbf16>
    %c0_180 = arith.constant 0 : index
    %c0_181 = arith.constant 0 : index
    %144 = vector.load %arg4[%c0_180, %c0_181] : memref<36x8xbf16, #tpu.memory_space<vmem>>, vector<36x8xbf16>
    %cst_182 = arith.constant dense<0.000000e+00> : vector<256x8xf32>
    %145 = tpu.matmul %143, %144, %cst_182 {dimension_numbers = #tpu.dot_dimension_numbers<[1], [0], [0], [1], [0, 0, 1, 1], [], []>} : vector<256x36xbf16>, vector<36x8xbf16>, vector<256x8xf32> -> vector<256x8xf32>
    %c0_183 = arith.constant 0 : index
    %c0_184 = arith.constant 0 : index
    %146 = vector.load %arg5[%c0_183, %c0_184] : memref<1x8xf32, #tpu.memory_space<vmem>>, vector<1x8xf32>
    %147 = vector.broadcast %146 : vector<1x8xf32> to vector<256x8xf32>
    %148 = arith.addf %145, %147 : vector<256x8xf32>
    %cst_185 = arith.constant 0.000000e+00 : f32
    %149 = vector.broadcast %cst_185 : f32 to vector<256x8xf32>
    %150 = arith.cmpf ogt, %148, %149 : vector<256x8xf32>
    %cst_186 = arith.constant 2.000000e-01 : f32
    %151 = vector.broadcast %cst_186 : f32 to vector<256x8xf32>
    %152 = arith.mulf %151, %148 : vector<256x8xf32>
    %153 = arith.select %150, %148, %152 : vector<256x8xi1>, vector<256x8xf32>
    %154 = vector.shape_cast %153 : vector<256x8xf32> to vector<16x16x8xf32>
    %c0_187 = arith.constant 0 : index
    %c0_188 = arith.constant 0 : index
    %c0_189 = arith.constant 0 : index
    %155 = vector.load %arg9[%c0_187, %c0_188, %c0_189] : memref<16x16x8xf32, #tpu.memory_space<vmem>>, vector<16x16x8xf32>
    tpu.vector_store %arg9[%c0_187, %c0_188, %c0_189], %154 {strides = array<i32>} : memref<16x16x8xf32, #tpu.memory_space<vmem>>, vector<16x16x8xf32>,
    %c0_190 = arith.constant 0 : index
    %c0_191 = arith.constant 0 : index
    %c0_192 = arith.constant 0 : index
    %156 = tpu.strided_load %arg9[%c0_190, %c0_191, %c0_192] {strides = array<i32: 1, 2, 1>} : memref<16x16x8xf32, #tpu.memory_space<vmem>>, vector<16x8x8xf32>
    %c0_193 = arith.constant 0 : index
    %c1_194 = arith.constant 1 : index
    %c0_195 = arith.constant 0 : index
    %157 = tpu.strided_load %arg9[%c0_193, %c1_194, %c0_195] {strides = array<i32: 1, 2, 1>} : memref<16x16x8xf32, #tpu.memory_space<vmem>>, vector<16x8x8xf32>
    %158 = arith.addf %156, %157 : vector<16x8x8xf32>
    %159 = vector.shape_cast %158 : vector<16x8x8xf32> to vector<8x2x8x8xf32>
    %160 = vector.extract_strided_slice %159 {offsets = [0, 0, 0, 0], sizes = [8, 1, 8, 8], strides = [1, 1, 1, 1]} : vector<8x2x8x8xf32> to vector<8x1x8x8xf32>
    %161 = vector.shape_cast %160 : vector<8x1x8x8xf32> to vector<8x8x8xf32>
    %162 = vector.extract_strided_slice %159 {offsets = [0, 1, 0, 0], sizes = [8, 1, 8, 8], strides = [1, 1, 1, 1]} : vector<8x2x8x8xf32> to vector<8x1x8x8xf32>
    %163 = vector.shape_cast %162 : vector<8x1x8x8xf32> to vector<8x8x8xf32>
    %164 = arith.addf %161, %163 : vector<8x8x8xf32>
    %cst_196 = arith.constant 2.500000e-01 : f32
    %165 = vector.broadcast %cst_196 : f32 to vector<8x8x8xf32>
    %166 = arith.mulf %164, %165 : vector<8x8x8xf32>
    %c1_197 = arith.constant 1 : index
    %c0_198 = arith.constant 0 : index
    %c0_199 = arith.constant 0 : index
    %c0_200 = arith.constant 0 : index
    %167 = vector.load %arg6[%c1_197, %c0_198, %c0_199, %c0_200] : memref<2x8x8x8xf32, #tpu.memory_space<vmem>>, vector<1x8x8x8xf32>
    %168 = vector.shape_cast %167 : vector<1x8x8x8xf32> to vector<8x8x8xf32>
    %169 = vector.shape_cast %166 : vector<8x8x8xf32> to vector<1x8x8x8xf32>
    tpu.vector_store %arg6[%c1_197, %c0_198, %c0_199, %c0_200], %169 {strides = array<i32>} : memref<2x8x8x8xf32, #tpu.memory_space<vmem>>, vector<1x8x8x8xf32>,
    return
  }
  func.func @transform_0(%arg0: i32) -> (i32, i32, i32, i32) {
    %c0_i32 = arith.constant 0 : i32
    %c0_i32_0 = arith.constant 0 : i32
    %c0_i32_1 = arith.constant 0 : i32
    %c0_i32_2 = arith.constant 0 : i32
    return %arg0, %c0_i32, %c0_i32_0, %c0_i32_1 : i32, i32, i32, i32
  }
  func.func @transform_1(%arg0: i32) -> (i32, i32) {
    %c0_i32 = arith.constant 0 : i32
    %c0_i32_0 = arith.constant 0 : i32
    %c0_i32_1 = arith.constant 0 : i32
    return %c0_i32, %c0_i32_0 : i32, i32
  }
  func.func @transform_2(%arg0: i32) -> (i32, i32) {
    %c0_i32 = arith.constant 0 : i32
    %c0_i32_0 = arith.constant 0 : i32
    %c0_i32_1 = arith.constant 0 : i32
    return %c0_i32, %c0_i32_0 : i32, i32
  }
  func.func @transform_3(%arg0: i32) -> (i32, i32) {
    %c0_i32 = arith.constant 0 : i32
    %c0_i32_0 = arith.constant 0 : i32
    %c0_i32_1 = arith.constant 0 : i32
    return %c0_i32, %c0_i32_0 : i32, i32
  }
  func.func @transform_4(%arg0: i32) -> (i32, i32) {
    %c0_i32 = arith.constant 0 : i32
    %c0_i32_0 = arith.constant 0 : i32
    %c0_i32_1 = arith.constant 0 : i32
    return %c0_i32, %c0_i32_0 : i32, i32
  }
  func.func @transform_5(%arg0: i32) -> (i32, i32, i32, i32) {
    %c0_i32 = arith.constant 0 : i32
    %c0_i32_0 = arith.constant 0 : i32
    %c0_i32_1 = arith.constant 0 : i32
    %c0_i32_2 = arith.constant 0 : i32
    return %arg0, %c0_i32, %c0_i32_0, %c0_i32_1 : i32, i32, i32, i32
  }
}

</mosaic_0001>

<llo_original>
// kernel: tpu_custom_call.1
$region0: #{tpu_custom_call.1}
  #allocation0 [shape = 'u32[]', space=smem, size = 0x4, offset = 0x4, fixed_abs, tag = 'smem constant byte address 0x4 - core index']
  #allocation1 [shape = 'u32[72,128]{1,0:T(1,128)}', space=vmem, size = 0x9000, scoped, tag = 'internal scratch']
  #allocation2 [shape = 'bf16[18,32,4]{2,1,0:T(8,128)(2,1)}', space=vmem, size = 0x24000, scoped, tag = 'scratch operand']
  #allocation3 [shape = 'bf16[18,32,4]{2,1,0:T(8,128)(2,1)}', space=vmem, size = 0x24000, scoped, tag = 'scratch operand']
  #allocation4 [shape = 'f32[16,16,8]{2,1,0:T(8,128)}', space=vmem, size = 0x20000, scoped, tag = 'scratch operand']
  %s0 = inlined_call_operand.vmem [shape: bf16[2,16,16,4], index: 0, kind: input, shape index: {}]
  %s1 = inlined_call_operand.vmem [shape: bf16[36,4], index: 1, kind: input, shape index: {}]
  %s2 = inlined_call_operand.vmem [shape: f32[1,4], index: 2, kind: input, shape index: {}]
  %s3 = inlined_call_operand.vmem [shape: bf16[36,8], index: 3, kind: input, shape index: {}]
  %s4 = inlined_call_operand.vmem [shape: f32[1,8], index: 4, kind: input, shape index: {}]
  %s5 = inlined_call_operand.hbm [shape: f32[2,8,8,8], index: 5, kind: output, shape index: {}]
  %s6 = sld [smem:[#allocation0]]
  $region30: #{tpu_custom_call.1} parent=0
    _
  %s8 = ssub.s32 1, %s6
  %s9 = scalar_select 0, %s8, %s6
  $region1: #{tpu_custom_call.1} parent=0
    #allocation5 [shape = 'u8[65536]{0}', space=vmem, size = 0x10000, scoped, tag = 'output window, operand 0, single buffered']
    #allocation6 [shape = 's32[1]{0}', space=sflag, size = 0x4, scoped, tag = 'scoped memory for tpu_custom_call.1']
    %10 = vsyncpa [#allocation6], 0
    // Predicated region
    $region2: #{tpu_custom_call.1} parent=1 // pred_check
      _
    $region3: #{tpu_custom_call.1} parent=1 // pred_check_branch
      %12 = sbr.rel (0) target = $region5
    $region4: #{tpu_custom_call.1} parent=1 // pred_region
      _
    $region5: #{tpu_custom_call.1} parent=1 // pred_fallthru
      _
    // Predicated region
    $region6: #{tpu_custom_call.1} parent=1 // pred_check
      _
    $region7: #{tpu_custom_call.1} parent=1 // pred_check_branch
      %14 = sbr.rel (0) target = $region9
    $region8: #{tpu_custom_call.1} parent=1 // pred_region
      _
    $region9: #{tpu_custom_call.1} parent=1 // pred_fallthru
      _
    // Predicated region
    $region10: #{tpu_custom_call.1} parent=1 // pred_check
      _
    $region11: #{tpu_custom_call.1} parent=1 // pred_check_branch
      %16 = sbr.rel (0) target = $region13
    $region12: #{tpu_custom_call.1} parent=1 // pred_region
      _
    $region13: #{tpu_custom_call.1} parent=1 // pred_fallthru
      _
    // Predicated region
    $region14: #{tpu_custom_call.1} parent=1 // pred_check
      _
    $region15: #{tpu_custom_call.1} parent=1 // pred_check_branch
      %18 = sbr.rel (0) target = $region17
    $region16: #{tpu_custom_call.1} parent=1 // pred_region
      _
    $region17: #{tpu_custom_call.1} parent=1 // pred_fallthru
      _
    // Predicated region
    $region18: #{tpu_custom_call.1} parent=1 // pred_check
      _
    $region19: #{tpu_custom_call.1} parent=1 // pred_check_branch
      %20 = sbr.rel (0) target = $region21
    $region20: #{tpu_custom_call.1} parent=1 // pred_region
      _
    $region21: #{tpu_custom_call.1} parent=1 // pred_fallthru
      _
    %vm22 = vcmask 27648
    %23 = vst.msk [vmem:[#allocation2] sm:$0xf] %vm22, 0
    %24 = vst.msk [vmem:[#allocation2 + $0x4] sm:$0xf] %vm22, 0
    %25 = vst.msk [vmem:[#allocation2 + $0x8] sm:$0xf] %vm22, 0
    %26 = vst.msk [vmem:[#allocation2 + $0xc] sm:$0xf] %vm22, 0
    %s27 = scalar_lea.vmem [#allocation2], 272
    %28 = vst.msk [vmem:[%s27] sm:$0xf] %vm22, 0
    %29 = vst.msk [vmem:[%s27 + $0x4] sm:$0xf] %vm22, 0
    %30 = vst.msk [vmem:[%s27 + $0x8] sm:$0xf] %vm22, 0
    %31 = vst.msk [vmem:[%s27 + $0xc] sm:$0xf] %vm22, 0
    %32 = vst.msk [vmem:[#allocation2] sm:$0xf] %vm22, 0
    %33 = vst.msk [vmem:[#allocation2 + $0x10] sm:$0xf] %vm22, 0
    %34 = vst.msk [vmem:[#allocation2 + $0x20] sm:$0xf] %vm22, 0
    %35 = vst.msk [vmem:[#allocation2 + $0x30] sm:$0xf] %vm22, 0
    %36 = vst.msk [vmem:[#allocation2 + $0x40] sm:$0xf] %vm22, 0
    %37 = vst.msk [vmem:[#allocation2 + $0x50] sm:$0xf] %vm22, 0
    %38 = vst.msk [vmem:[#allocation2 + $0x60] sm:$0xf] %vm22, 0
    %39 = vst.msk [vmem:[#allocation2 + $0x70] sm:$0xf] %vm22, 0
    %40 = vst.msk [vmem:[#allocation2 + $0x80] sm:$0xf] %vm22, 0
    %41 = vst.msk [vmem:[#allocation2 + $0x90] sm:$0xf] %vm22, 0
    %42 = vst.msk [vmem:[#allocation2 + $0xa0] sm:$0xf] %vm22, 0
    %43 = vst.msk [vmem:[#allocation2 + $0xb0] sm:$0xf] %vm22, 0
    %44 = vst.msk [vmem:[#allocation2 + $0xc0] sm:$0xf] %vm22, 0
    %45 = vst.msk [vmem:[#allocation2 + $0xd0] sm:$0xf] %vm22, 0
    %46 = vst.msk [vmem:[#allocation2 + $0xe0] sm:$0xf] %vm22, 0
    %47 = vst.msk [vmem:[#allocation2 + $0xf0] sm:$0xf] %vm22, 0
    %48 = vst.msk [vmem:[#allocation2 + $0x100] sm:$0xf] %vm22, 0
    %49 = vst.msk [vmem:[#allocation2 + $0x110] sm:$0xf] %vm22, 0
    %50 = vst.msk [vmem:[#allocation2 + $0xc] sm:$0xf] %vm22, 0
    %51 = vst.msk [vmem:[#allocation2 + $0x1c] sm:$0xf] %vm22, 0
    %52 = vst.msk [vmem:[#allocation2 + $0x2c] sm:$0xf] %vm22, 0
    %53 = vst.msk [vmem:[#allocation2 + $0x3c] sm:$0xf] %vm22, 0
    %54 = vst.msk [vmem:[#allocation2 + $0x4c] sm:$0xf] %vm22, 0
    %55 = vst.msk [vmem:[#allocation2 + $0x5c] sm:$0xf] %vm22, 0
    %56 = vst.msk [vmem:[#allocation2 + $0x6c] sm:$0xf] %vm22, 0
    %57 = vst.msk [vmem:[#allocation2 + $0x7c] sm:$0xf] %vm22, 0
    %58 = vst.msk [vmem:[#allocation2 + $0x8c] sm:$0xf] %vm22, 0
    %59 = vst.msk [vmem:[#allocation2 + $0x9c] sm:$0xf] %vm22, 0
    %60 = vst.msk [vmem:[#allocation2 + $0xac] sm:$0xf] %vm22, 0
    %61 = vst.msk [vmem:[#allocation2 + $0xbc] sm:$0xf] %vm22, 0
    %62 = vst.msk [vmem:[#allocation2 + $0xcc] sm:$0xf] %vm22, 0
    %63 = vst.msk [vmem:[#allocation2 + $0xdc] sm:$0xf] %vm22, 0
    %64 = vst.msk [vmem:[#allocation2 + $0xec] sm:$0xf] %vm22, 0
    %65 = vst.msk [vmem:[#allocation2 + $0xfc] sm:$0xf] %vm22, 0
    %66 = vst.msk [vmem:[#allocation2 + $0x10c] sm:$0xf] %vm22, 0
    %67 = vst.msk [vmem:[#allocation2 + $0x11c] sm:$0xf] %vm22, 0
    %68 = vst.msk [vmem:[#allocation3] sm:$0xf] %vm22, 0
    %69 = vst.msk [vmem:[#allocation3 + $0x4] sm:$0xf] %vm22, 0
    %70 = vst.msk [vmem:[#allocation3 + $0x8] sm:$0xf] %vm22, 0
    %71 = vst.msk [vmem:[#allocation3 + $0xc] sm:$0xf] %vm22, 0
    %s72 = scalar_lea.vmem [#allocation3], 272
    %73 = vst.msk [vmem:[%s72] sm:$0xf] %vm22, 0
    %74 = vst.msk [vmem:[%s72 + $0x4] sm:$0xf] %vm22, 0
    %75 = vst.msk [vmem:[%s72 + $0x8] sm:$0xf] %vm22, 0
    %76 = vst.msk [vmem:[%s72 + $0xc] sm:$0xf] %vm22, 0
    %77 = vst.msk [vmem:[#allocation3] sm:$0xf] %vm22, 0
    %78 = vst.msk [vmem:[#allocation3 + $0x10] sm:$0xf] %vm22, 0
    %79 = vst.msk [vmem:[#allocation3 + $0x20] sm:$0xf] %vm22, 0
    %80 = vst.msk [vmem:[#allocation3 + $0x30] sm:$0xf] %vm22, 0
    %81 = vst.msk [vmem:[#allocation3 + $0x40] sm:$0xf] %vm22, 0
    %82 = vst.msk [vmem:[#allocation3 + $0x50] sm:$0xf] %vm22, 0
    %83 = vst.msk [vmem:[#allocation3 + $0x60] sm:$0xf] %vm22, 0
    %84 = vst.msk [vmem:[#allocation3 + $0x70] sm:$0xf] %vm22, 0
    %85 = vst.msk [vmem:[#allocation3 + $0x80] sm:$0xf] %vm22, 0
    %86 = vst.msk [vmem:[#allocation3 + $0x90] sm:$0xf] %vm22, 0
    %87 = vst.msk [vmem:[#allocation3 + $0xa0] sm:$0xf] %vm22, 0
    %88 = vst.msk [vmem:[#allocation3 + $0xb0] sm:$0xf] %vm22, 0
    %89 = vst.msk [vmem:[#allocation3 + $0xc0] sm:$0xf] %vm22, 0
    %90 = vst.msk [vmem:[#allocation3 + $0xd0] sm:$0xf] %vm22, 0
    %91 = vst.msk [vmem:[#allocation3 + $0xe0] sm:$0xf] %vm22, 0
    %92 = vst.msk [vmem:[#allocation3 + $0xf0] sm:$0xf] %vm22, 0
    %93 = vst.msk [vmem:[#allocation3 + $0x100] sm:$0xf] %vm22, 0
    %94 = vst.msk [vmem:[#allocation3 + $0x110] sm:$0xf] %vm22, 0
    %95 = vst.msk [vmem:[#allocation3 + $0xc] sm:$0xf] %vm22, 0
    %96 = vst.msk [vmem:[#allocation3 + $0x1c] sm:$0xf] %vm22, 0
    %97 = vst.msk [vmem:[#allocation3 + $0x2c] sm:$0xf] %vm22, 0
    %98 = vst.msk [vmem:[#allocation3 + $0x3c] sm:$0xf] %vm22, 0
    %99 = vst.msk [vmem:[#allocation3 + $0x4c] sm:$0xf] %vm22, 0
    %100 = vst.msk [vmem:[#allocation3 + $0x5c] sm:$0xf] %vm22, 0
    %101 = vst.msk [vmem:[#allocation3 + $0x6c] sm:$0xf] %vm22, 0
    %102 = vst.msk [vmem:[#allocation3 + $0x7c] sm:$0xf] %vm22, 0
    %103 = vst.msk [vmem:[#allocation3 + $0x8c] sm:$0xf] %vm22, 0
    %104 = vst.msk [vmem:[#allocation3 + $0x9c] sm:$0xf] %vm22, 0
    %105 = vst.msk [vmem:[#allocation3 + $0xac] sm:$0xf] %vm22, 0
    %106 = vst.msk [vmem:[#allocation3 + $0xbc] sm:$0xf] %vm22, 0
    %107 = vst.msk [vmem:[#allocation3 + $0xcc] sm:$0xf] %vm22, 0
    %108 = vst.msk [vmem:[#allocation3 + $0xdc] sm:$0xf] %vm22, 0
    %109 = vst.msk [vmem:[#allocation3 + $0xec] sm:$0xf] %vm22, 0
    %110 = vst.msk [vmem:[#allocation3 + $0xfc] sm:$0xf] %vm22, 0
    %111 = vst.msk [vmem:[#allocation3 + $0x10c] sm:$0xf] %vm22, 0
    %112 = vst.msk [vmem:[#allocation3 + $0x11c] sm:$0xf] %vm22, 0
    %v113 = vld [vmem:[%s0] sm:$0xf]
    %v114 = vld [vmem:[%s0 + $0x4] sm:$0xf]
    %v115 = vld [vmem:[%s0 + $0x8] sm:$0xf]
    %v116 = vld [vmem:[%s0 + $0xc] sm:$0xf]
    %v117 = vld [vmem:[%s0 + $0x10] sm:$0xf]
    %v118 = vld [vmem:[%s0 + $0x14] sm:$0xf]
    %v119 = vld [vmem:[%s0 + $0x18] sm:$0xf]
    %v120 = vld [vmem:[%s0 + $0x1c] sm:$0xf]
    %v121 = vld [vmem:[%s0 + $0x20] sm:$0xf]
    %v122 = vld [vmem:[%s0 + $0x24] sm:$0xf]
    %v123 = vld [vmem:[%s0 + $0x28] sm:$0xf]
    %v124 = vld [vmem:[%s0 + $0x2c] sm:$0xf]
    %v125 = vld [vmem:[%s0 + $0x30] sm:$0xf]
    %v126 = vld [vmem:[%s0 + $0x34] sm:$0xf]
    %v127 = vld [vmem:[%s0 + $0x38] sm:$0xf]
    %v128 = vld [vmem:[%s0 + $0x3c] sm:$0xf]
    %v129 = vld [vmem:[%s0 + $0x40] sm:$0xf]
    %v130 = vld [vmem:[%s0 + $0x44] sm:$0xf]
    %v131 = vld [vmem:[%s0 + $0x48] sm:$0xf]
    %v132 = vld [vmem:[%s0 + $0x4c] sm:$0xf]
    %v133 = vld [vmem:[%s0 + $0x50] sm:$0xf]
    %v134 = vld [vmem:[%s0 + $0x54] sm:$0xf]
    %v135 = vld [vmem:[%s0 + $0x58] sm:$0xf]
    %v136 = vld [vmem:[%s0 + $0x5c] sm:$0xf]
    %v137 = vld [vmem:[%s0 + $0x60] sm:$0xf]
    %v138 = vld [vmem:[%s0 + $0x64] sm:$0xf]
    %v139 = vld [vmem:[%s0 + $0x68] sm:$0xf]
    %v140 = vld [vmem:[%s0 + $0x6c] sm:$0xf]
    %v141 = vld [vmem:[%s0 + $0x70] sm:$0xf]
    %v142 = vld [vmem:[%s0 + $0x74] sm:$0xf]
    %v143 = vld [vmem:[%s0 + $0x78] sm:$0xf]
    %v144 = vld [vmem:[%s0 + $0x7c] sm:$0xf]
    %s145 = scalar_lea.vmem [#allocation2], 16
    %146 = vst.msk [vmem:[%s145 + $0x4] sm:$0xf] %vm22, %v113
    %147 = vst.msk [vmem:[%s145 + $0x8] sm:$0xf] %vm22, %v114
    %148 = vst.msk [vmem:[%s145 + $0x14] sm:$0xf] %vm22, %v115
    %149 = vst.msk [vmem:[%s145 + $0x18] sm:$0xf] %vm22, %v116
    %150 = vst.msk [vmem:[%s145 + $0x24] sm:$0xf] %vm22, %v117
    %151 = vst.msk [vmem:[%s145 + $0x28] sm:$0xf] %vm22, %v118
    %152 = vst.msk [vmem:[%s145 + $0x34] sm:$0xf] %vm22, %v119
    %153 = vst.msk [vmem:[%s145 + $0x38] sm:$0xf] %vm22, %v120
    %154 = vst.msk [vmem:[%s145 + $0x44] sm:$0xf] %vm22, %v121
    %155 = vst.msk [vmem:[%s145 + $0x48] sm:$0xf] %vm22, %v122
    %156 = vst.msk [vmem:[%s145 + $0x54] sm:$0xf] %vm22, %v123
    %157 = vst.msk [vmem:[%s145 + $0x58] sm:$0xf] %vm22, %v124
    %158 = vst.msk [vmem:[%s145 + $0x64] sm:$0xf] %vm22, %v125
    %159 = vst.msk [vmem:[%s145 + $0x68] sm:$0xf] %vm22, %v126
    %160 = vst.msk [vmem:[%s145 + $0x74] sm:$0xf] %vm22, %v127
    %161 = vst.msk [vmem:[%s145 + $0x78] sm:$0xf] %vm22, %v128
    %162 = vst.msk [vmem:[%s145 + $0x84] sm:$0xf] %vm22, %v129
    %163 = vst.msk [vmem:[%s145 + $0x88] sm:$0xf] %vm22, %v130
    %164 = vst.msk [vmem:[%s145 + $0x94] sm:$0xf] %vm22, %v131
    %165 = vst.msk [vmem:[%s145 + $0x98] sm:$0xf] %vm22, %v132
    %166 = vst.msk [vmem:[%s145 + $0xa4] sm:$0xf] %vm22, %v133
    %167 = vst.msk [vmem:[%s145 + $0xa8] sm:$0xf] %vm22, %v134
    %168 = vst.msk [vmem:[%s145 + $0xb4] sm:$0xf] %vm22, %v135
    %169 = vst.msk [vmem:[%s145 + $0xb8] sm:$0xf] %vm22, %v136
    %170 = vst.msk [vmem:[%s145 + $0xc4] sm:$0xf] %vm22, %v137
    %171 = vst.msk [vmem:[%s145 + $0xc8] sm:$0xf] %vm22, %v138
    %172 = vst.msk [vmem:[%s145 + $0xd4] sm:$0xf] %vm22, %v139
    %173 = vst.msk [vmem:[%s145 + $0xd8] sm:$0xf] %vm22, %v140
    %174 = vst.msk [vmem:[%s145 + $0xe4] sm:$0xf] %vm22, %v141
    %175 = vst.msk [vmem:[%s145 + $0xe8] sm:$0xf] %vm22, %v142
    %176 = vst.msk [vmem:[%s145 + $0xf4] sm:$0xf] %vm22, %v143
    %177 = vst.msk [vmem:[%s145 + $0xf8] sm:$0xf] %vm22, %v144
    %v178 = vld [vmem:[#allocation2] sm:$0x8]
    %v179 = vld [vmem:[#allocation2 + $0x4] sm:$0xf]
    %v180 = vld [vmem:[#allocation2 + $0x8] sm:$0xf]
    %v181 = vld [vmem:[#allocation2 + $0x10] sm:$0x8]
    %v182 = vld [vmem:[#allocation2 + $0x14] sm:$0xf]
    %v183 = vld [vmem:[#allocation2 + $0x18] sm:$0xf]
    %v184 = vld [vmem:[#allocation2 + $0x20] sm:$0x8]
    %v185 = vld [vmem:[#allocation2 + $0x24] sm:$0xf]
    %v186 = vld [vmem:[#allocation2 + $0x28] sm:$0xf]
    %v187 = vld [vmem:[#allocation2 + $0x30] sm:$0x8]
    %v188 = vld [vmem:[#allocation2 + $0x34] sm:$0xf]
    %v189 = vld [vmem:[#allocation2 + $0x38] sm:$0xf]
    %v190 = vld [vmem:[#allocation2 + $0x40] sm:$0x8]
    %v191 = vld [vmem:[#allocation2 + $0x44] sm:$0xf]
    %v192 = vld [vmem:[#allocation2 + $0x48] sm:$0xf]
    %v193 = vld [vmem:[#allocation2 + $0x50] sm:$0x8]
    %v194 = vld [vmem:[#allocation2 + $0x54] sm:$0xf]
    %v195 = vld [vmem:[#allocation2 + $0x58] sm:$0xf]
    %v196 = vld [vmem:[#allocation2 + $0x60] sm:$0x8]
    %v197 = vld [vmem:[#allocation2 + $0x64] sm:$0xf]
    %v198 = vld [vmem:[#allocation2 + $0x68] sm:$0xf]
    %v199 = vld [vmem:[#allocation2 + $0x70] sm:$0x8]
    %v200 = vld [vmem:[#allocation2 + $0x74] sm:$0xf]
    %v201 = vld [vmem:[#allocation2 + $0x78] sm:$0xf]
    %v202 = vld [vmem:[#allocation2 + $0x80] sm:$0x8]
    %v203 = vld [vmem:[#allocation2 + $0x84] sm:$0xf]
    %v204 = vld [vmem:[#allocation2 + $0x88] sm:$0xf]
    %v205 = vld [vmem:[#allocation2 + $0x90] sm:$0x8]
    %v206 = vld [vmem:[#allocation2 + $0x94] sm:$0xf]
    %v207 = vld [vmem:[#allocation2 + $0x98] sm:$0xf]
    %v208 = vld [vmem:[#allocation2 + $0xa0] sm:$0x8]
    %v209 = vld [vmem:[#allocation2 + $0xa4] sm:$0xf]
    %v210 = vld [vmem:[#allocation2 + $0xa8] sm:$0xf]
    %v211 = vld [vmem:[#allocation2 + $0xb0] sm:$0x8]
    %v212 = vld [vmem:[#allocation2 + $0xb4] sm:$0xf]
    %v213 = vld [vmem:[#allocation2 + $0xb8] sm:$0xf]
    %v214 = vld [vmem:[#allocation2 + $0xc0] sm:$0x8]
    %v215 = vld [vmem:[#allocation2 + $0xc4] sm:$0xf]
    %v216 = vld [vmem:[#allocation2 + $0xc8] sm:$0xf]
    %v217 = vld [vmem:[#allocation2 + $0xd0] sm:$0x8]
    %v218 = vld [vmem:[#allocation2 + $0xd4] sm:$0xf]
    %v219 = vld [vmem:[#allocation2 + $0xd8] sm:$0xf]
    %v220 = vld [vmem:[#allocation2 + $0xe0] sm:$0x8]
    %v221 = vld [vmem:[#allocation2 + $0xe4] sm:$0xf]
    %v222 = vld [vmem:[#allocation2 + $0xe8] sm:$0xf]
    %v223 = vld [vmem:[#allocation2 + $0xf0] sm:$0x8]
    %v224 = vld [vmem:[#allocation2 + $0xf4] sm:$0xf]
    %v225 = vld [vmem:[#allocation2 + $0xf8] sm:$0xf]
    %vm226 = vsmask.f32 256
    %vm227 = vsmask.f32 4368
    %vm228 = vmor %vm226, %vm227
    %v230 = vshrl.u32 %v178, 16
    %v232 = vrot.slane %v230, 7
    %v233 = vrot.slane %v232, 4
    %v235 = vshrl.u32 %v179, 16
    %v237 = vrot.slane %v235, 7
    %v238 = vshll.u32 %v179, 16
    %v240 = vor.u32 %v237, %v238
    %v241 = vsel %vm228, %v233, %v240
    %v242 = vrot.slane %v237, 4
    %v244 = vshrl.u32 %v180, 16
    %v246 = vrot.slane %v244, 7
    %v247 = vshll.u32 %v180, 16
    %v249 = vor.u32 %v246, %v247
    %v250 = vsel %vm228, %v242, %v249
    %v252 = vshrl.u32 %v181, 16
    %v254 = vrot.slane %v252, 7
    %v255 = vrot.slane %v254, 4
    %v257 = vshrl.u32 %v182, 16
    %v259 = vrot.slane %v257, 7
    %v260 = vshll.u32 %v182, 16
    %v262 = vor.u32 %v259, %v260
    %v263 = vsel %vm228, %v255, %v262
    %v264 = vrot.slane %v259, 4
    %v266 = vshrl.u32 %v183, 16
    %v268 = vrot.slane %v266, 7
    %v269 = vshll.u32 %v183, 16
    %v271 = vor.u32 %v268, %v269
    %v272 = vsel %vm228, %v264, %v271
    %v274 = vshrl.u32 %v184, 16
    %v276 = vrot.slane %v274, 7
    %v277 = vrot.slane %v276, 4
    %v279 = vshrl.u32 %v185, 16
    %v281 = vrot.slane %v279, 7
    %v282 = vshll.u32 %v185, 16
    %v284 = vor.u32 %v281, %v282
    %v285 = vsel %vm228, %v277, %v284
    %v286 = vrot.slane %v281, 4
    %v288 = vshrl.u32 %v186, 16
    %v290 = vrot.slane %v288, 7
    %v291 = vshll.u32 %v186, 16
    %v293 = vor.u32 %v290, %v291
    %v294 = vsel %vm228, %v286, %v293
    %v296 = vshrl.u32 %v187, 16
    %v298 = vrot.slane %v296, 7
    %v299 = vrot.slane %v298, 4
    %v301 = vshrl.u32 %v188, 16
    %v303 = vrot.slane %v301, 7
    %v304 = vshll.u32 %v188, 16
    %v306 = vor.u32 %v303, %v304
    %v307 = vsel %vm228, %v299, %v306
    %v308 = vrot.slane %v303, 4
    %v310 = vshrl.u32 %v189, 16
    %v312 = vrot.slane %v310, 7
    %v313 = vshll.u32 %v189, 16
    %v315 = vor.u32 %v312, %v313
    %v316 = vsel %vm228, %v308, %v315
    %v318 = vshrl.u32 %v190, 16
    %v320 = vrot.slane %v318, 7
    %v321 = vrot.slane %v320, 4
    %v323 = vshrl.u32 %v191, 16
    %v325 = vrot.slane %v323, 7
    %v326 = vshll.u32 %v191, 16
    %v328 = vor.u32 %v325, %v326
    %v329 = vsel %vm228, %v321, %v328
    %v330 = vrot.slane %v325, 4
    %v332 = vshrl.u32 %v192, 16
    %v334 = vrot.slane %v332, 7
    %v335 = vshll.u32 %v192, 16
    %v337 = vor.u32 %v334, %v335
    %v338 = vsel %vm228, %v330, %v337
    %v340 = vshrl.u32 %v193, 16
    %v342 = vrot.slane %v340, 7
    %v343 = vrot.slane %v342, 4
    %v345 = vshrl.u32 %v194, 16
    %v347 = vrot.slane %v345, 7
    %v348 = vshll.u32 %v194, 16
    %v350 = vor.u32 %v347, %v348
    %v351 = vsel %vm228, %v343, %v350
    %v352 = vrot.slane %v347, 4
    %v354 = vshrl.u32 %v195, 16
    %v356 = vrot.slane %v354, 7
    %v357 = vshll.u32 %v195, 16
    %v359 = vor.u32 %v356, %v357
    %v360 = vsel %vm228, %v352, %v359
    %v362 = vshrl.u32 %v196, 16
    %v364 = vrot.slane %v362, 7
    %v365 = vrot.slane %v364, 4
    %v367 = vshrl.u32 %v197, 16
    %v369 = vrot.slane %v367, 7
    %v370 = vshll.u32 %v197, 16
    %v372 = vor.u32 %v369, %v370
    %v373 = vsel %vm228, %v365, %v372
    %v374 = vrot.slane %v369, 4
    %v376 = vshrl.u32 %v198, 16
    %v378 = vrot.slane %v376, 7
    %v379 = vshll.u32 %v198, 16
    %v381 = vor.u32 %v378, %v379
    %v382 = vsel %vm228, %v374, %v381
    %v384 = vshrl.u32 %v199, 16
    %v386 = vrot.slane %v384, 7
    %v387 = vrot.slane %v386, 4
    %v389 = vshrl.u32 %v200, 16
    %v391 = vrot.slane %v389, 7
    %v392 = vshll.u32 %v200, 16
    %v394 = vor.u32 %v391, %v392
    %v395 = vsel %vm228, %v387, %v394
    %v396 = vrot.slane %v391, 4
    %v398 = vshrl.u32 %v201, 16
    %v400 = vrot.slane %v398, 7
    %v401 = vshll.u32 %v201, 16
    %v403 = vor.u32 %v400, %v401
    %v404 = vsel %vm228, %v396, %v403
    %v406 = vshrl.u32 %v202, 16
    %v408 = vrot.slane %v406, 7
    %v409 = vrot.slane %v408, 4
    %v411 = vshrl.u32 %v203, 16
    %v413 = vrot.slane %v411, 7
    %v414 = vshll.u32 %v203, 16
    %v416 = vor.u32 %v413, %v414
    %v417 = vsel %vm228, %v409, %v416
    %v418 = vrot.slane %v413, 4
    %v420 = vshrl.u32 %v204, 16
    %v422 = vrot.slane %v420, 7
    %v423 = vshll.u32 %v204, 16
    %v425 = vor.u32 %v422, %v423
    %v426 = vsel %vm228, %v418, %v425
    %v428 = vshrl.u32 %v205, 16
    %v430 = vrot.slane %v428, 7
    %v431 = vrot.slane %v430, 4
    %v433 = vshrl.u32 %v206, 16
    %v435 = vrot.slane %v433, 7
    %v436 = vshll.u32 %v206, 16
    %v438 = vor.u32 %v435, %v436
    %v439 = vsel %vm228, %v431, %v438
    %v440 = vrot.slane %v435, 4
    %v442 = vshrl.u32 %v207, 16
    %v444 = vrot.slane %v442, 7
    %v445 = vshll.u32 %v207, 16
    %v447 = vor.u32 %v444, %v445
    %v448 = vsel %vm228, %v440, %v447
    %v450 = vshrl.u32 %v208, 16
    %v452 = vrot.slane %v450, 7
    %v453 = vrot.slane %v452, 4
    %v455 = vshrl.u32 %v209, 16
    %v457 = vrot.slane %v455, 7
    %v458 = vshll.u32 %v209, 16
    %v460 = vor.u32 %v457, %v458
    %v461 = vsel %vm228, %v453, %v460
    %v462 = vrot.slane %v457, 4
    %v464 = vshrl.u32 %v210, 16
    %v466 = vrot.slane %v464, 7
    %v467 = vshll.u32 %v210, 16
    %v469 = vor.u32 %v466, %v467
    %v470 = vsel %vm228, %v462, %v469
    %v472 = vshrl.u32 %v211, 16
    %v474 = vrot.slane %v472, 7
    %v475 = vrot.slane %v474, 4
    %v477 = vshrl.u32 %v212, 16
    %v479 = vrot.slane %v477, 7
    %v480 = vshll.u32 %v212, 16
    %v482 = vor.u32 %v479, %v480
    %v483 = vsel %vm228, %v475, %v482
    %v484 = vrot.slane %v479, 4
    %v486 = vshrl.u32 %v213, 16
    %v488 = vrot.slane %v486, 7
    %v489 = vshll.u32 %v213, 16
    %v491 = vor.u32 %v488, %v489
    %v492 = vsel %vm228, %v484, %v491
    %v494 = vshrl.u32 %v214, 16
    %v496 = vrot.slane %v494, 7
    %v497 = vrot.slane %v496, 4
    %v499 = vshrl.u32 %v215, 16
    %v501 = vrot.slane %v499, 7
    %v502 = vshll.u32 %v215, 16
    %v504 = vor.u32 %v501, %v502
    %v505 = vsel %vm228, %v497, %v504
    %v506 = vrot.slane %v501, 4
    %v508 = vshrl.u32 %v216, 16
    %v510 = vrot.slane %v508, 7
    %v511 = vshll.u32 %v216, 16
    %v513 = vor.u32 %v510, %v511
    %v514 = vsel %vm228, %v506, %v513
    %v516 = vshrl.u32 %v217, 16
    %v518 = vrot.slane %v516, 7
    %v519 = vrot.slane %v518, 4
    %v521 = vshrl.u32 %v218, 16
    %v523 = vrot.slane %v521, 7
    %v524 = vshll.u32 %v218, 16
    %v526 = vor.u32 %v523, %v524
    %v527 = vsel %vm228, %v519, %v526
    %v528 = vrot.slane %v523, 4
    %v530 = vshrl.u32 %v219, 16
    %v532 = vrot.slane %v530, 7
    %v533 = vshll.u32 %v219, 16
    %v535 = vor.u32 %v532, %v533
    %v536 = vsel %vm228, %v528, %v535
    %v538 = vshrl.u32 %v220, 16
    %v540 = vrot.slane %v538, 7
    %v541 = vrot.slane %v540, 4
    %v543 = vshrl.u32 %v221, 16
    %v545 = vrot.slane %v543, 7
    %v546 = vshll.u32 %v221, 16
    %v548 = vor.u32 %v545, %v546
    %v549 = vsel %vm228, %v541, %v548
    %v550 = vrot.slane %v545, 4
    %v552 = vshrl.u32 %v222, 16
    %v554 = vrot.slane %v552, 7
    %v555 = vshll.u32 %v222, 16
    %v557 = vor.u32 %v554, %v555
    %v558 = vsel %vm228, %v550, %v557
    %v560 = vshrl.u32 %v223, 16
    %v562 = vrot.slane %v560, 7
    %v563 = vrot.slane %v562, 4
    %v565 = vshrl.u32 %v224, 16
    %v567 = vrot.slane %v565, 7
    %v568 = vshll.u32 %v224, 16
    %v570 = vor.u32 %v567, %v568
    %v571 = vsel %vm228, %v563, %v570
    %v572 = vrot.slane %v567, 4
    %v574 = vshrl.u32 %v225, 16
    %v576 = vrot.slane %v574, 7
    %v577 = vshll.u32 %v225, 16
    %v579 = vor.u32 %v576, %v577
    %v580 = vsel %vm228, %v572, %v579
    %v581 = vld [vmem:[#allocation2 + $0xc] sm:$0x1]
    %v582 = vld [vmem:[#allocation2 + $0x1c] sm:$0x1]
    %v583 = vld [vmem:[#allocation2 + $0x2c] sm:$0x1]
    %v584 = vld [vmem:[#allocation2 + $0x3c] sm:$0x1]
    %v585 = vld [vmem:[#allocation2 + $0x4c] sm:$0x1]
    %v586 = vld [vmem:[#allocation2 + $0x5c] sm:$0x1]
    %v587 = vld [vmem:[#allocation2 + $0x6c] sm:$0x1]
    %v588 = vld [vmem:[#allocation2 + $0x7c] sm:$0x1]
    %v589 = vld [vmem:[#allocation2 + $0x8c] sm:$0x1]
    %v590 = vld [vmem:[#allocation2 + $0x9c] sm:$0x1]
    %v591 = vld [vmem:[#allocation2 + $0xac] sm:$0x1]
    %v592 = vld [vmem:[#allocation2 + $0xbc] sm:$0x1]
    %v593 = vld [vmem:[#allocation2 + $0xcc] sm:$0x1]
    %v594 = vld [vmem:[#allocation2 + $0xdc] sm:$0x1]
    %v595 = vld [vmem:[#allocation2 + $0xec] sm:$0x1]
    %v596 = vld [vmem:[#allocation2 + $0xfc] sm:$0x1]
    %vm597 = vsmask.f32 3328
    %vm598 = vsmask.f32 7440
    %vm599 = vmor %vm597, %vm598
    %v600 = vrot.slane %v235, 4
    %v601 = vrot.slane %v238, 5
    %v602 = vor.u32 %v600, %v601
    %v603 = vrot.slane %v602, 4
    %v604 = vrot.slane %v247, 5
    %v605 = vsel %vm599, %v603, %v604
    %v606 = vrot.slane %v244, 4
    %v607 = vor.u32 %v606, %v604
    %v608 = vrot.slane %v607, 4
    %v610 = vshll.u32 %v581, 16
    %v612 = vrot.slane %v610, 5
    %v613 = vsel %vm599, %v608, %v612
    %v614 = vrot.slane %v257, 4
    %v615 = vrot.slane %v260, 5
    %v616 = vor.u32 %v614, %v615
    %v617 = vrot.slane %v616, 4
    %v618 = vrot.slane %v269, 5
    %v619 = vsel %vm599, %v617, %v618
    %v620 = vrot.slane %v266, 4
    %v621 = vor.u32 %v620, %v618
    %v622 = vrot.slane %v621, 4
    %v624 = vshll.u32 %v582, 16
    %v626 = vrot.slane %v624, 5
    %v627 = vsel %vm599, %v622, %v626
    %v628 = vrot.slane %v279, 4
    %v629 = vrot.slane %v282, 5
    %v630 = vor.u32 %v628, %v629
    %v631 = vrot.slane %v630, 4
    %v632 = vrot.slane %v291, 5
    %v633 = vsel %vm599, %v631, %v632
    %v634 = vrot.slane %v288, 4
    %v635 = vor.u32 %v634, %v632
    %v636 = vrot.slane %v635, 4
    %v638 = vshll.u32 %v583, 16
    %v640 = vrot.slane %v638, 5
    %v641 = vsel %vm599, %v636, %v640
    %v642 = vrot.slane %v301, 4
    %v643 = vrot.slane %v304, 5
    %v644 = vor.u32 %v642, %v643
    %v645 = vrot.slane %v644, 4
    %v646 = vrot.slane %v313, 5
    %v647 = vsel %vm599, %v645, %v646
    %v648 = vrot.slane %v310, 4
    %v649 = vor.u32 %v648, %v646
    %v650 = vrot.slane %v649, 4
    %v652 = vshll.u32 %v584, 16
    %v654 = vrot.slane %v652, 5
    %v655 = vsel %vm599, %v650, %v654
    %v656 = vrot.slane %v323, 4
    %v657 = vrot.slane %v326, 5
    %v658 = vor.u32 %v656, %v657
    %v659 = vrot.slane %v658, 4
    %v660 = vrot.slane %v335, 5
    %v661 = vsel %vm599, %v659, %v660
    %v662 = vrot.slane %v332, 4
    %v663 = vor.u32 %v662, %v660
    %v664 = vrot.slane %v663, 4
    %v666 = vshll.u32 %v585, 16
    %v668 = vrot.slane %v666, 5
    %v669 = vsel %vm599, %v664, %v668
    %v670 = vrot.slane %v345, 4
    %v671 = vrot.slane %v348, 5
    %v672 = vor.u32 %v670, %v671
    %v673 = vrot.slane %v672, 4
    %v674 = vrot.slane %v357, 5
    %v675 = vsel %vm599, %v673, %v674
    %v676 = vrot.slane %v354, 4
    %v677 = vor.u32 %v676, %v674
    %v678 = vrot.slane %v677, 4
    %v680 = vshll.u32 %v586, 16
    %v682 = vrot.slane %v680, 5
    %v683 = vsel %vm599, %v678, %v682
    %v684 = vrot.slane %v367, 4
    %v685 = vrot.slane %v370, 5
    %v686 = vor.u32 %v684, %v685
    %v687 = vrot.slane %v686, 4
    %v688 = vrot.slane %v379, 5
    %v689 = vsel %vm599, %v687, %v688
    %v690 = vrot.slane %v376, 4
    %v691 = vor.u32 %v690, %v688
    %v692 = vrot.slane %v691, 4
    %v694 = vshll.u32 %v587, 16
    %v696 = vrot.slane %v694, 5
    %v697 = vsel %vm599, %v692, %v696
    %v698 = vrot.slane %v389, 4
    %v699 = vrot.slane %v392, 5
    %v700 = vor.u32 %v698, %v699
    %v701 = vrot.slane %v700, 4
    %v702 = vrot.slane %v401, 5
    %v703 = vsel %vm599, %v701, %v702
    %v704 = vrot.slane %v398, 4
    %v705 = vor.u32 %v704, %v702
    %v706 = vrot.slane %v705, 4
    %v708 = vshll.u32 %v588, 16
    %v710 = vrot.slane %v708, 5
    %v711 = vsel %vm599, %v706, %v710
    %v712 = vrot.slane %v411, 4
    %v713 = vrot.slane %v414, 5
    %v714 = vor.u32 %v712, %v713
    %v715 = vrot.slane %v714, 4
    %v716 = vrot.slane %v423, 5
    %v717 = vsel %vm599, %v715, %v716
    %v718 = vrot.slane %v420, 4
    %v719 = vor.u32 %v718, %v716
    %v720 = vrot.slane %v719, 4
    %v722 = vshll.u32 %v589, 16
    %v724 = vrot.slane %v722, 5
    %v725 = vsel %vm599, %v720, %v724
    %v726 = vrot.slane %v433, 4
    %v727 = vrot.slane %v436, 5
    %v728 = vor.u32 %v726, %v727
    %v729 = vrot.slane %v728, 4
    %v730 = vrot.slane %v445, 5
    %v731 = vsel %vm599, %v729, %v730
    %v732 = vrot.slane %v442, 4
    %v733 = vor.u32 %v732, %v730
    %v734 = vrot.slane %v733, 4
    %v736 = vshll.u32 %v590, 16
    %v738 = vrot.slane %v736, 5
    %v739 = vsel %vm599, %v734, %v738
    %v740 = vrot.slane %v455, 4
    %v741 = vrot.slane %v458, 5
    %v742 = vor.u32 %v740, %v741
    %v743 = vrot.slane %v742, 4
    %v744 = vrot.slane %v467, 5
    %v745 = vsel %vm599, %v743, %v744
    %v746 = vrot.slane %v464, 4
    %v747 = vor.u32 %v746, %v744
    %v748 = vrot.slane %v747, 4
    %v750 = vshll.u32 %v591, 16
    %v752 = vrot.slane %v750, 5
    %v753 = vsel %vm599, %v748, %v752
    %v754 = vrot.slane %v477, 4
    %v755 = vrot.slane %v480, 5
    %v756 = vor.u32 %v754, %v755
    %v757 = vrot.slane %v756, 4
    %v758 = vrot.slane %v489, 5
    %v759 = vsel %vm599, %v757, %v758
    %v760 = vrot.slane %v486, 4
    %v761 = vor.u32 %v760, %v758
    %v762 = vrot.slane %v761, 4
    %v764 = vshll.u32 %v592, 16
    %v766 = vrot.slane %v764, 5
    %v767 = vsel %vm599, %v762, %v766
    %v768 = vrot.slane %v499, 4
    %v769 = vrot.slane %v502, 5
    %v770 = vor.u32 %v768, %v769
    %v771 = vrot.slane %v770, 4
    %v772 = vrot.slane %v511, 5
    %v773 = vsel %vm599, %v771, %v772
    %v774 = vrot.slane %v508, 4
    %v775 = vor.u32 %v774, %v772
    %v776 = vrot.slane %v775, 4
    %v778 = vshll.u32 %v593, 16
    %v780 = vrot.slane %v778, 5
    %v781 = vsel %vm599, %v776, %v780
    %v782 = vrot.slane %v521, 4
    %v783 = vrot.slane %v524, 5
    %v784 = vor.u32 %v782, %v783
    %v785 = vrot.slane %v784, 4
    %v786 = vrot.slane %v533, 5
    %v787 = vsel %vm599, %v785, %v786
    %v788 = vrot.slane %v530, 4
    %v789 = vor.u32 %v788, %v786
    %v790 = vrot.slane %v789, 4
    %v792 = vshll.u32 %v594, 16
    %v794 = vrot.slane %v792, 5
    %v795 = vsel %vm599, %v790, %v794
    %v796 = vrot.slane %v543, 4
    %v797 = vrot.slane %v546, 5
    %v798 = vor.u32 %v796, %v797
    %v799 = vrot.slane %v798, 4
    %v800 = vrot.slane %v555, 5
    %v801 = vsel %vm599, %v799, %v800
    %v802 = vrot.slane %v552, 4
    %v803 = vor.u32 %v802, %v800
    %v804 = vrot.slane %v803, 4
    %v806 = vshll.u32 %v595, 16
    %v808 = vrot.slane %v806, 5
    %v809 = vsel %vm599, %v804, %v808
    %v810 = vrot.slane %v565, 4
    %v811 = vrot.slane %v568, 5
    %v812 = vor.u32 %v810, %v811
    %v813 = vrot.slane %v812, 4
    %v814 = vrot.slane %v577, 5
    %v815 = vsel %vm599, %v813, %v814
    %v816 = vrot.slane %v574, 4
    %v817 = vor.u32 %v816, %v814
    %v818 = vrot.slane %v817, 4
    %v820 = vshll.u32 %v596, 16
    %v822 = vrot.slane %v820, 5
    %v823 = vsel %vm599, %v818, %v822
    %v824 = vld [vmem:[%s145] sm:$0x8]
    %v825 = vld [vmem:[%s145 + $0x4] sm:$0xf]
    %v826 = vld [vmem:[%s145 + $0x8] sm:$0xf]
    %v827 = vld [vmem:[%s145 + $0x10] sm:$0x8]
    %v828 = vld [vmem:[%s145 + $0x14] sm:$0xf]
    %v829 = vld [vmem:[%s145 + $0x18] sm:$0xf]
    %v830 = vld [vmem:[%s145 + $0x20] sm:$0x8]
    %v831 = vld [vmem:[%s145 + $0x24] sm:$0xf]
    %v832 = vld [vmem:[%s145 + $0x28] sm:$0xf]
    %v833 = vld [vmem:[%s145 + $0x30] sm:$0x8]
    %v834 = vld [vmem:[%s145 + $0x34] sm:$0xf]
    %v835 = vld [vmem:[%s145 + $0x38] sm:$0xf]
    %v836 = vld [vmem:[%s145 + $0x40] sm:$0x8]
    %v837 = vld [vmem:[%s145 + $0x44] sm:$0xf]
    %v838 = vld [vmem:[%s145 + $0x48] sm:$0xf]
    %v839 = vld [vmem:[%s145 + $0x50] sm:$0x8]
    %v840 = vld [vmem:[%s145 + $0x54] sm:$0xf]
    %v841 = vld [vmem:[%s145 + $0x58] sm:$0xf]
    %v842 = vld [vmem:[%s145 + $0x60] sm:$0x8]
    %v843 = vld [vmem:[%s145 + $0x64] sm:$0xf]
    %v844 = vld [vmem:[%s145 + $0x68] sm:$0xf]
    %v845 = vld [vmem:[%s145 + $0x70] sm:$0x8]
    %v846 = vld [vmem:[%s145 + $0x74] sm:$0xf]
    %v847 = vld [vmem:[%s145 + $0x78] sm:$0xf]
    %v848 = vld [vmem:[%s145 + $0x80] sm:$0x8]
    %v849 = vld [vmem:[%s145 + $0x84] sm:$0xf]
    %v850 = vld [vmem:[%s145 + $0x88] sm:$0xf]
    %v851 = vld [vmem:[%s145 + $0x90] sm:$0x8]
    %v852 = vld [vmem:[%s145 + $0x94] sm:$0xf]
    %v853 = vld [vmem:[%s145 + $0x98] sm:$0xf]
    %v854 = vld [vmem:[%s145 + $0xa0] sm:$0x8]
    %v855 = vld [vmem:[%s145 + $0xa4] sm:$0xf]
    %v856 = vld [vmem:[%s145 + $0xa8] sm:$0xf]
    %v857 = vld [vmem:[%s145 + $0xb0] sm:$0x8]
    %v858 = vld [vmem:[%s145 + $0xb4] sm:$0xf]
    %v859 = vld [vmem:[%s145 + $0xb8] sm:$0xf]
    %v860 = vld [vmem:[%s145 + $0xc0] sm:$0x8]
    %v861 = vld [vmem:[%s145 + $0xc4] sm:$0xf]
    %v862 = vld [vmem:[%s145 + $0xc8] sm:$0xf]
    %v863 = vld [vmem:[%s145 + $0xd0] sm:$0x8]
    %v864 = vld [vmem:[%s145 + $0xd4] sm:$0xf]
    %v865 = vld [vmem:[%s145 + $0xd8] sm:$0xf]
    %v866 = vld [vmem:[%s145 + $0xe0] sm:$0x8]
    %v867 = vld [vmem:[%s145 + $0xe4] sm:$0xf]
    %v868 = vld [vmem:[%s145 + $0xe8] sm:$0xf]
    %v869 = vld [vmem:[%s145 + $0xf0] sm:$0x8]
    %v870 = vld [vmem:[%s145 + $0xf4] sm:$0xf]
    %v871 = vld [vmem:[%s145 + $0xf8] sm:$0xf]
    %v873 = vshrl.u32 %v824, 16
    %v875 = vrot.slane %v873, 7
    %v876 = vrot.slane %v875, 4
    %v878 = vshrl.u32 %v825, 16
    %v880 = vrot.slane %v878, 7
    %v881 = vshll.u32 %v825, 16
    %v883 = vor.u32 %v880, %v881
    %v884 = vsel %vm228, %v876, %v883
    %v885 = vrot.slane %v880, 4
    %v887 = vshrl.u32 %v826, 16
    %v889 = vrot.slane %v887, 7
    %v890 = vshll.u32 %v826, 16
    %v892 = vor.u32 %v889, %v890
    %v893 = vsel %vm228, %v885, %v892
    %v895 = vshrl.u32 %v827, 16
    %v897 = vrot.slane %v895, 7
    %v898 = vrot.slane %v897, 4
    %v900 = vshrl.u32 %v828, 16
    %v902 = vrot.slane %v900, 7
    %v903 = vshll.u32 %v828, 16
    %v905 = vor.u32 %v902, %v903
    %v906 = vsel %vm228, %v898, %v905
    %v907 = vrot.slane %v902, 4
    %v909 = vshrl.u32 %v829, 16
    %v911 = vrot.slane %v909, 7
    %v912 = vshll.u32 %v829, 16
    %v914 = vor.u32 %v911, %v912
    %v915 = vsel %vm228, %v907, %v914
    %v917 = vshrl.u32 %v830, 16
    %v919 = vrot.slane %v917, 7
    %v920 = vrot.slane %v919, 4
    %v922 = vshrl.u32 %v831, 16
    %v924 = vrot.slane %v922, 7
    %v925 = vshll.u32 %v831, 16
    %v927 = vor.u32 %v924, %v925
    %v928 = vsel %vm228, %v920, %v927
    %v929 = vrot.slane %v924, 4
    %v931 = vshrl.u32 %v832, 16
    %v933 = vrot.slane %v931, 7
    %v934 = vshll.u32 %v832, 16
    %v936 = vor.u32 %v933, %v934
    %v937 = vsel %vm228, %v929, %v936
    %v939 = vshrl.u32 %v833, 16
    %v941 = vrot.slane %v939, 7
    %v942 = vrot.slane %v941, 4
    %v944 = vshrl.u32 %v834, 16
    %v946 = vrot.slane %v944, 7
    %v947 = vshll.u32 %v834, 16
    %v949 = vor.u32 %v946, %v947
    %v950 = vsel %vm228, %v942, %v949
    %v951 = vrot.slane %v946, 4
    %v953 = vshrl.u32 %v835, 16
    %v955 = vrot.slane %v953, 7
    %v956 = vshll.u32 %v835, 16
    %v958 = vor.u32 %v955, %v956
    %v959 = vsel %vm228, %v951, %v958
    %v961 = vshrl.u32 %v836, 16
    %v963 = vrot.slane %v961, 7
    %v964 = vrot.slane %v963, 4
    %v966 = vshrl.u32 %v837, 16
    %v968 = vrot.slane %v966, 7
    %v969 = vshll.u32 %v837, 16
    %v971 = vor.u32 %v968, %v969
    %v972 = vsel %vm228, %v964, %v971
    %v973 = vrot.slane %v968, 4
    %v975 = vshrl.u32 %v838, 16
    %v977 = vrot.slane %v975, 7
    %v978 = vshll.u32 %v838, 16
    %v980 = vor.u32 %v977, %v978
    %v981 = vsel %vm228, %v973, %v980
    %v983 = vshrl.u32 %v839, 16
    %v985 = vrot.slane %v983, 7
    %v986 = vrot.slane %v985, 4
    %v988 = vshrl.u32 %v840, 16
    %v990 = vrot.slane %v988, 7
    %v991 = vshll.u32 %v840, 16
    %v993 = vor.u32 %v990, %v991
    %v994 = vsel %vm228, %v986, %v993
    %v995 = vrot.slane %v990, 4
    %v997 = vshrl.u32 %v841, 16
    %v999 = vrot.slane %v997, 7
    %v1000 = vshll.u32 %v841, 16
    %v1002 = vor.u32 %v999, %v1000
    %v1003 = vsel %vm228, %v995, %v1002
    %v1005 = vshrl.u32 %v842, 16
    %v1007 = vrot.slane %v1005, 7
    %v1008 = vrot.slane %v1007, 4
    %v1010 = vshrl.u32 %v843, 16
    %v1012 = vrot.slane %v1010, 7
    %v1013 = vshll.u32 %v843, 16
    %v1015 = vor.u32 %v1012, %v1013
    %v1016 = vsel %vm228, %v1008, %v1015
    %v1017 = vrot.slane %v1012, 4
    %v1019 = vshrl.u32 %v844, 16
    %v1021 = vrot.slane %v1019, 7
    %v1022 = vshll.u32 %v844, 16
    %v1024 = vor.u32 %v1021, %v1022
    %v1025 = vsel %vm228, %v1017, %v1024
    %v1027 = vshrl.u32 %v845, 16
    %v1029 = vrot.slane %v1027, 7
    %v1030 = vrot.slane %v1029, 4
    %v1032 = vshrl.u32 %v846, 16
    %v1034 = vrot.slane %v1032, 7
    %v1035 = vshll.u32 %v846, 16
    %v1037 = vor.u32 %v1034, %v1035
    %v1038 = vsel %vm228, %v1030, %v1037
    %v1039 = vrot.slane %v1034, 4
    %v1041 = vshrl.u32 %v847, 16
    %v1043 = vrot.slane %v1041, 7
    %v1044 = vshll.u32 %v847, 16
    %v1046 = vor.u32 %v1043, %v1044
    %v1047 = vsel %vm228, %v1039, %v1046
    %v1049 = vshrl.u32 %v848, 16
    %v1051 = vrot.slane %v1049, 7
    %v1052 = vrot.slane %v1051, 4
    %v1054 = vshrl.u32 %v849, 16
    %v1056 = vrot.slane %v1054, 7
    %v1057 = vshll.u32 %v849, 16
    %v1059 = vor.u32 %v1056, %v1057
    %v1060 = vsel %vm228, %v1052, %v1059
    %v1061 = vrot.slane %v1056, 4
    %v1063 = vshrl.u32 %v850, 16
    %v1065 = vrot.slane %v1063, 7
    %v1066 = vshll.u32 %v850, 16
    %v1068 = vor.u32 %v1065, %v1066
    %v1069 = vsel %vm228, %v1061, %v1068
    %v1071 = vshrl.u32 %v851, 16
    %v1073 = vrot.slane %v1071, 7
    %v1074 = vrot.slane %v1073, 4
    %v1076 = vshrl.u32 %v852, 16
    %v1078 = vrot.slane %v1076, 7
    %v1079 = vshll.u32 %v852, 16
    %v1081 = vor.u32 %v1078, %v1079
    %v1082 = vsel %vm228, %v1074, %v1081
    %v1083 = vrot.slane %v1078, 4
    %v1085 = vshrl.u32 %v853, 16
    %v1087 = vrot.slane %v1085, 7
    %v1088 = vshll.u32 %v853, 16
    %v1090 = vor.u32 %v1087, %v1088
    %v1091 = vsel %vm228, %v1083, %v1090
    %v1093 = vshrl.u32 %v854, 16
    %v1095 = vrot.slane %v1093, 7
    %v1096 = vrot.slane %v1095, 4
    %v1098 = vshrl.u32 %v855, 16
    %v1100 = vrot.slane %v1098, 7
    %v1101 = vshll.u32 %v855, 16
    %v1103 = vor.u32 %v1100, %v1101
    %v1104 = vsel %vm228, %v1096, %v1103
    %v1105 = vrot.slane %v1100, 4
    %v1107 = vshrl.u32 %v856, 16
    %v1109 = vrot.slane %v1107, 7
    %v1110 = vshll.u32 %v856, 16
    %v1112 = vor.u32 %v1109, %v1110
    %v1113 = vsel %vm228, %v1105, %v1112
    %v1115 = vshrl.u32 %v857, 16
    %v1117 = vrot.slane %v1115, 7
    %v1118 = vrot.slane %v1117, 4
    %v1120 = vshrl.u32 %v858, 16
    %v1122 = vrot.slane %v1120, 7
    %v1123 = vshll.u32 %v858, 16
    %v1125 = vor.u32 %v1122, %v1123
    %v1126 = vsel %vm228, %v1118, %v1125
    %v1127 = vrot.slane %v1122, 4
    %v1129 = vshrl.u32 %v859, 16
    %v1131 = vrot.slane %v1129, 7
    %v1132 = vshll.u32 %v859, 16
    %v1134 = vor.u32 %v1131, %v1132
    %v1135 = vsel %vm228, %v1127, %v1134
    %v1137 = vshrl.u32 %v860, 16
    %v1139 = vrot.slane %v1137, 7
    %v1140 = vrot.slane %v1139, 4
    %v1142 = vshrl.u32 %v861, 16
    %v1144 = vrot.slane %v1142, 7
    %v1145 = vshll.u32 %v861, 16
    %v1147 = vor.u32 %v1144, %v1145
    %v1148 = vsel %vm228, %v1140, %v1147
    %v1149 = vrot.slane %v1144, 4
    %v1151 = vshrl.u32 %v862, 16
    %v1153 = vrot.slane %v1151, 7
    %v1154 = vshll.u32 %v862, 16
    %v1156 = vor.u32 %v1153, %v1154
    %v1157 = vsel %vm228, %v1149, %v1156
    %v1159 = vshrl.u32 %v863, 16
    %v1161 = vrot.slane %v1159, 7
    %v1162 = vrot.slane %v1161, 4
    %v1164 = vshrl.u32 %v864, 16
    %v1166 = vrot.slane %v1164, 7
    %v1167 = vshll.u32 %v864, 16
    %v1169 = vor.u32 %v1166, %v1167
    %v1170 = vsel %vm228, %v1162, %v1169
    %v1171 = vrot.slane %v1166, 4
    %v1173 = vshrl.u32 %v865, 16
    %v1175 = vrot.slane %v1173, 7
    %v1176 = vshll.u32 %v865, 16
    %v1178 = vor.u32 %v1175, %v1176
    %v1179 = vsel %vm228, %v1171, %v1178
    %v1181 = vshrl.u32 %v866, 16
    %v1183 = vrot.slane %v1181, 7
    %v1184 = vrot.slane %v1183, 4
    %v1186 = vshrl.u32 %v867, 16
    %v1188 = vrot.slane %v1186, 7
    %v1189 = vshll.u32 %v867, 16
    %v1191 = vor.u32 %v1188, %v1189
    %v1192 = vsel %vm228, %v1184, %v1191
    %v1193 = vrot.slane %v1188, 4
    %v1195 = vshrl.u32 %v868, 16
    %v1197 = vrot.slane %v1195, 7
    %v1198 = vshll.u32 %v868, 16
    %v1200 = vor.u32 %v1197, %v1198
    %v1201 = vsel %vm228, %v1193, %v1200
    %v1203 = vshrl.u32 %v869, 16
    %v1205 = vrot.slane %v1203, 7
    %v1206 = vrot.slane %v1205, 4
    %v1208 = vshrl.u32 %v870, 16
    %v1210 = vrot.slane %v1208, 7
    %v1211 = vshll.u32 %v870, 16
    %v1213 = vor.u32 %v1210, %v1211
    %v1214 = vsel %vm228, %v1206, %v1213
    %v1215 = vrot.slane %v1210, 4
    %v1217 = vshrl.u32 %v871, 16
    %v1219 = vrot.slane %v1217, 7
    %v1220 = vshll.u32 %v871, 16
    %v1222 = vor.u32 %v1219, %v1220
    %v1223 = vsel %vm228, %v1215, %v1222
    %v1224 = vld [vmem:[%s145 + $0xc] sm:$0x1]
    %v1225 = vld [vmem:[%s145 + $0x1c] sm:$0x1]
    %v1226 = vld [vmem:[%s145 + $0x2c] sm:$0x1]
    %v1227 = vld [vmem:[%s145 + $0x3c] sm:$0x1]
    %v1228 = vld [vmem:[%s145 + $0x4c] sm:$0x1]
    %v1229 = vld [vmem:[%s145 + $0x5c] sm:$0x1]
    %v1230 = vld [vmem:[%s145 + $0x6c] sm:$0x1]
    %v1231 = vld [vmem:[%s145 + $0x7c] sm:$0x1]
    %v1232 = vld [vmem:[%s145 + $0x8c] sm:$0x1]
    %v1233 = vld [vmem:[%s145 + $0x9c] sm:$0x1]
    %v1234 = vld [vmem:[%s145 + $0xac] sm:$0x1]
    %v1235 = vld [vmem:[%s145 + $0xbc] sm:$0x1]
    %v1236 = vld [vmem:[%s145 + $0xcc] sm:$0x1]
    %v1237 = vld [vmem:[%s145 + $0xdc] sm:$0x1]
    %v1238 = vld [vmem:[%s145 + $0xec] sm:$0x1]
    %v1239 = vld [vmem:[%s145 + $0xfc] sm:$0x1]
    %v1240 = vrot.slane %v878, 4
    %v1241 = vrot.slane %v881, 5
    %v1242 = vor.u32 %v1240, %v1241
    %v1243 = vrot.slane %v1242, 4
    %v1244 = vrot.slane %v890, 5
    %v1245 = vsel %vm599, %v1243, %v1244
    %v1246 = vrot.slane %v887, 4
    %v1247 = vor.u32 %v1246, %v1244
    %v1248 = vrot.slane %v1247, 4
    %v1250 = vshll.u32 %v1224, 16
    %v1252 = vrot.slane %v1250, 5
    %v1253 = vsel %vm599, %v1248, %v1252
    %v1254 = vrot.slane %v900, 4
    %v1255 = vrot.slane %v903, 5
    %v1256 = vor.u32 %v1254, %v1255
    %v1257 = vrot.slane %v1256, 4
    %v1258 = vrot.slane %v912, 5
    %v1259 = vsel %vm599, %v1257, %v1258
    %v1260 = vrot.slane %v909, 4
    %v1261 = vor.u32 %v1260, %v1258
    %v1262 = vrot.slane %v1261, 4
    %v1264 = vshll.u32 %v1225, 16
    %v1266 = vrot.slane %v1264, 5
    %v1267 = vsel %vm599, %v1262, %v1266
    %v1268 = vrot.slane %v922, 4
    %v1269 = vrot.slane %v925, 5
    %v1270 = vor.u32 %v1268, %v1269
    %v1271 = vrot.slane %v1270, 4
    %v1272 = vrot.slane %v934, 5
    %v1273 = vsel %vm599, %v1271, %v1272
    %v1274 = vrot.slane %v931, 4
    %v1275 = vor.u32 %v1274, %v1272
    %v1276 = vrot.slane %v1275, 4
    %v1278 = vshll.u32 %v1226, 16
    %v1280 = vrot.slane %v1278, 5
    %v1281 = vsel %vm599, %v1276, %v1280
    %v1282 = vrot.slane %v944, 4
    %v1283 = vrot.slane %v947, 5
    %v1284 = vor.u32 %v1282, %v1283
    %v1285 = vrot.slane %v1284, 4
    %v1286 = vrot.slane %v956, 5
    %v1287 = vsel %vm599, %v1285, %v1286
    %v1288 = vrot.slane %v953, 4
    %v1289 = vor.u32 %v1288, %v1286
    %v1290 = vrot.slane %v1289, 4
    %v1292 = vshll.u32 %v1227, 16
    %v1294 = vrot.slane %v1292, 5
    %v1295 = vsel %vm599, %v1290, %v1294
    %v1296 = vrot.slane %v966, 4
    %v1297 = vrot.slane %v969, 5
    %v1298 = vor.u32 %v1296, %v1297
    %v1299 = vrot.slane %v1298, 4
    %v1300 = vrot.slane %v978, 5
    %v1301 = vsel %vm599, %v1299, %v1300
    %v1302 = vrot.slane %v975, 4
    %v1303 = vor.u32 %v1302, %v1300
    %v1304 = vrot.slane %v1303, 4
    %v1306 = vshll.u32 %v1228, 16
    %v1308 = vrot.slane %v1306, 5
    %v1309 = vsel %vm599, %v1304, %v1308
    %v1310 = vrot.slane %v988, 4
    %v1311 = vrot.slane %v991, 5
    %v1312 = vor.u32 %v1310, %v1311
    %v1313 = vrot.slane %v1312, 4
    %v1314 = vrot.slane %v1000, 5
    %v1315 = vsel %vm599, %v1313, %v1314
    %v1316 = vrot.slane %v997, 4
    %v1317 = vor.u32 %v1316, %v1314
    %v1318 = vrot.slane %v1317, 4
    %v1320 = vshll.u32 %v1229, 16
    %v1322 = vrot.slane %v1320, 5
    %v1323 = vsel %vm599, %v1318, %v1322
    %v1324 = vrot.slane %v1010, 4
    %v1325 = vrot.slane %v1013, 5
    %v1326 = vor.u32 %v1324, %v1325
    %v1327 = vrot.slane %v1326, 4
    %v1328 = vrot.slane %v1022, 5
    %v1329 = vsel %vm599, %v1327, %v1328
    %v1330 = vrot.slane %v1019, 4
    %v1331 = vor.u32 %v1330, %v1328
    %v1332 = vrot.slane %v1331, 4
    %v1334 = vshll.u32 %v1230, 16
    %v1336 = vrot.slane %v1334, 5
    %v1337 = vsel %vm599, %v1332, %v1336
    %v1338 = vrot.slane %v1032, 4
    %v1339 = vrot.slane %v1035, 5
    %v1340 = vor.u32 %v1338, %v1339
    %v1341 = vrot.slane %v1340, 4
    %v1342 = vrot.slane %v1044, 5
    %v1343 = vsel %vm599, %v1341, %v1342
    %v1344 = vrot.slane %v1041, 4
    %v1345 = vor.u32 %v1344, %v1342
    %v1346 = vrot.slane %v1345, 4
    %v1348 = vshll.u32 %v1231, 16
    %v1350 = vrot.slane %v1348, 5
    %v1351 = vsel %vm599, %v1346, %v1350
    %v1352 = vrot.slane %v1054, 4
    %v1353 = vrot.slane %v1057, 5
    %v1354 = vor.u32 %v1352, %v1353
    %v1355 = vrot.slane %v1354, 4
    %v1356 = vrot.slane %v1066, 5
    %v1357 = vsel %vm599, %v1355, %v1356
    %v1358 = vrot.slane %v1063, 4
    %v1359 = vor.u32 %v1358, %v1356
    %v1360 = vrot.slane %v1359, 4
    %v1362 = vshll.u32 %v1232, 16
    %v1364 = vrot.slane %v1362, 5
    %v1365 = vsel %vm599, %v1360, %v1364
    %v1366 = vrot.slane %v1076, 4
    %v1367 = vrot.slane %v1079, 5
    %v1368 = vor.u32 %v1366, %v1367
    %v1369 = vrot.slane %v1368, 4
    %v1370 = vrot.slane %v1088, 5
    %v1371 = vsel %vm599, %v1369, %v1370
    %v1372 = vrot.slane %v1085, 4
    %v1373 = vor.u32 %v1372, %v1370
    %v1374 = vrot.slane %v1373, 4
    %v1376 = vshll.u32 %v1233, 16
    %v1378 = vrot.slane %v1376, 5
    %v1379 = vsel %vm599, %v1374, %v1378
    %v1380 = vrot.slane %v1098, 4
    %v1381 = vrot.slane %v1101, 5
    %v1382 = vor.u32 %v1380, %v1381
    %v1383 = vrot.slane %v1382, 4
    %v1384 = vrot.slane %v1110, 5
    %v1385 = vsel %vm599, %v1383, %v1384
    %v1386 = vrot.slane %v1107, 4
    %v1387 = vor.u32 %v1386, %v1384
    %v1388 = vrot.slane %v1387, 4
    %v1390 = vshll.u32 %v1234, 16
    %v1392 = vrot.slane %v1390, 5
    %v1393 = vsel %vm599, %v1388, %v1392
    %v1394 = vrot.slane %v1120, 4
    %v1395 = vrot.slane %v1123, 5
    %v1396 = vor.u32 %v1394, %v1395
    %v1397 = vrot.slane %v1396, 4
    %v1398 = vrot.slane %v1132, 5
    %v1399 = vsel %vm599, %v1397, %v1398
    %v1400 = vrot.slane %v1129, 4
    %v1401 = vor.u32 %v1400, %v1398
    %v1402 = vrot.slane %v1401, 4
    %v1404 = vshll.u32 %v1235, 16
    %v1406 = vrot.slane %v1404, 5
    %v1407 = vsel %vm599, %v1402, %v1406
    %v1408 = vrot.slane %v1142, 4
    %v1409 = vrot.slane %v1145, 5
    %v1410 = vor.u32 %v1408, %v1409
    %v1411 = vrot.slane %v1410, 4
    %v1412 = vrot.slane %v1154, 5
    %v1413 = vsel %vm599, %v1411, %v1412
    %v1414 = vrot.slane %v1151, 4
    %v1415 = vor.u32 %v1414, %v1412
    %v1416 = vrot.slane %v1415, 4
    %v1418 = vshll.u32 %v1236, 16
    %v1420 = vrot.slane %v1418, 5
    %v1421 = vsel %vm599, %v1416, %v1420
    %v1422 = vrot.slane %v1164, 4
    %v1423 = vrot.slane %v1167, 5
    %v1424 = vor.u32 %v1422, %v1423
    %v1425 = vrot.slane %v1424, 4
    %v1426 = vrot.slane %v1176, 5
    %v1427 = vsel %vm599, %v1425, %v1426
    %v1428 = vrot.slane %v1173, 4
    %v1429 = vor.u32 %v1428, %v1426
    %v1430 = vrot.slane %v1429, 4
    %v1432 = vshll.u32 %v1237, 16
    %v1434 = vrot.slane %v1432, 5
    %v1435 = vsel %vm599, %v1430, %v1434
    %v1436 = vrot.slane %v1186, 4
    %v1437 = vrot.slane %v1189, 5
    %v1438 = vor.u32 %v1436, %v1437
    %v1439 = vrot.slane %v1438, 4
    %v1440 = vrot.slane %v1198, 5
    %v1441 = vsel %vm599, %v1439, %v1440
    %v1442 = vrot.slane %v1195, 4
    %v1443 = vor.u32 %v1442, %v1440
    %v1444 = vrot.slane %v1443, 4
    %v1446 = vshll.u32 %v1238, 16
    %v1448 = vrot.slane %v1446, 5
    %v1449 = vsel %vm599, %v1444, %v1448
    %v1450 = vrot.slane %v1208, 4
    %v1451 = vrot.slane %v1211, 5
    %v1452 = vor.u32 %v1450, %v1451
    %v1453 = vrot.slane %v1452, 4
    %v1454 = vrot.slane %v1220, 5
    %v1455 = vsel %vm599, %v1453, %v1454
    %v1456 = vrot.slane %v1217, 4
    %v1457 = vor.u32 %v1456, %v1454
    %v1458 = vrot.slane %v1457, 4
    %v1460 = vshll.u32 %v1239, 16
    %v1462 = vrot.slane %v1460, 5
    %v1463 = vsel %vm599, %v1458, %v1462
    %s1464 = scalar_lea.vmem [#allocation2], 32
    %v1465 = vld [vmem:[%s1464] sm:$0x8]
    %v1466 = vld [vmem:[%s1464 + $0x4] sm:$0xf]
    %v1467 = vld [vmem:[%s1464 + $0x8] sm:$0xf]
    %v1468 = vld [vmem:[%s1464 + $0x10] sm:$0x8]
    %v1469 = vld [vmem:[%s1464 + $0x14] sm:$0xf]
    %v1470 = vld [vmem:[%s1464 + $0x18] sm:$0xf]
    %v1471 = vld [vmem:[%s1464 + $0x20] sm:$0x8]
    %v1472 = vld [vmem:[%s1464 + $0x24] sm:$0xf]
    %v1473 = vld [vmem:[%s1464 + $0x28] sm:$0xf]
    %v1474 = vld [vmem:[%s1464 + $0x30] sm:$0x8]
    %v1475 = vld [vmem:[%s1464 + $0x34] sm:$0xf]
    %v1476 = vld [vmem:[%s1464 + $0x38] sm:$0xf]
    %v1477 = vld [vmem:[%s1464 + $0x40] sm:$0x8]
    %v1478 = vld [vmem:[%s1464 + $0x44] sm:$0xf]
    %v1479 = vld [vmem:[%s1464 + $0x48] sm:$0xf]
    %v1480 = vld [vmem:[%s1464 + $0x50] sm:$0x8]
    %v1481 = vld [vmem:[%s1464 + $0x54] sm:$0xf]
    %v1482 = vld [vmem:[%s1464 + $0x58] sm:$0xf]
    %v1483 = vld [vmem:[%s1464 + $0x60] sm:$0x8]
    %v1484 = vld [vmem:[%s1464 + $0x64] sm:$0xf]
    %v1485 = vld [vmem:[%s1464 + $0x68] sm:$0xf]
    %v1486 = vld [vmem:[%s1464 + $0x70] sm:$0x8]
    %v1487 = vld [vmem:[%s1464 + $0x74] sm:$0xf]
    %v1488 = vld [vmem:[%s1464 + $0x78] sm:$0xf]
    %v1489 = vld [vmem:[%s1464 + $0x80] sm:$0x8]
    %v1490 = vld [vmem:[%s1464 + $0x84] sm:$0xf]
    %v1491 = vld [vmem:[%s1464 + $0x88] sm:$0xf]
    %v1492 = vld [vmem:[%s1464 + $0x90] sm:$0x8]
    %v1493 = vld [vmem:[%s1464 + $0x94] sm:$0xf]
    %v1494 = vld [vmem:[%s1464 + $0x98] sm:$0xf]
    %v1495 = vld [vmem:[%s1464 + $0xa0] sm:$0x8]
    %v1496 = vld [vmem:[%s1464 + $0xa4] sm:$0xf]
    %v1497 = vld [vmem:[%s1464 + $0xa8] sm:$0xf]
    %v1498 = vld [vmem:[%s1464 + $0xb0] sm:$0x8]
    %v1499 = vld [vmem:[%s1464 + $0xb4] sm:$0xf]
    %v1500 = vld [vmem:[%s1464 + $0xb8] sm:$0xf]
    %v1501 = vld [vmem:[%s1464 + $0xc0] sm:$0x8]
    %v1502 = vld [vmem:[%s1464 + $0xc4] sm:$0xf]
    %v1503 = vld [vmem:[%s1464 + $0xc8] sm:$0xf]
    %v1504 = vld [vmem:[%s1464 + $0xd0] sm:$0x8]
    %v1505 = vld [vmem:[%s1464 + $0xd4] sm:$0xf]
    %v1506 = vld [vmem:[%s1464 + $0xd8] sm:$0xf]
    %v1507 = vld [vmem:[%s1464 + $0xe0] sm:$0x8]
    %v1508 = vld [vmem:[%s1464 + $0xe4] sm:$0xf]
    %v1509 = vld [vmem:[%s1464 + $0xe8] sm:$0xf]
    %v1510 = vld [vmem:[%s1464 + $0xf0] sm:$0x8]
    %v1511 = vld [vmem:[%s1464 + $0xf4] sm:$0xf]
    %v1512 = vld [vmem:[%s1464 + $0xf8] sm:$0xf]
    %v1514 = vshrl.u32 %v1465, 16
    %v1516 = vrot.slane %v1514, 7
    %v1517 = vrot.slane %v1516, 4
    %v1519 = vshrl.u32 %v1466, 16
    %v1521 = vrot.slane %v1519, 7
    %v1522 = vshll.u32 %v1466, 16
    %v1524 = vor.u32 %v1521, %v1522
    %v1525 = vsel %vm228, %v1517, %v1524
    %v1526 = vrot.slane %v1521, 4
    %v1528 = vshrl.u32 %v1467, 16
    %v1530 = vrot.slane %v1528, 7
    %v1531 = vshll.u32 %v1467, 16
    %v1533 = vor.u32 %v1530, %v1531
    %v1534 = vsel %vm228, %v1526, %v1533
    %v1536 = vshrl.u32 %v1468, 16
    %v1538 = vrot.slane %v1536, 7
    %v1539 = vrot.slane %v1538, 4
    %v1541 = vshrl.u32 %v1469, 16
    %v1543 = vrot.slane %v1541, 7
    %v1544 = vshll.u32 %v1469, 16
    %v1546 = vor.u32 %v1543, %v1544
    %v1547 = vsel %vm228, %v1539, %v1546
    %v1548 = vrot.slane %v1543, 4
    %v1550 = vshrl.u32 %v1470, 16
    %v1552 = vrot.slane %v1550, 7
    %v1553 = vshll.u32 %v1470, 16
    %v1555 = vor.u32 %v1552, %v1553
    %v1556 = vsel %vm228, %v1548, %v1555
    %v1558 = vshrl.u32 %v1471, 16
    %v1560 = vrot.slane %v1558, 7
    %v1561 = vrot.slane %v1560, 4
    %v1563 = vshrl.u32 %v1472, 16
    %v1565 = vrot.slane %v1563, 7
    %v1566 = vshll.u32 %v1472, 16
    %v1568 = vor.u32 %v1565, %v1566
    %v1569 = vsel %vm228, %v1561, %v1568
    %v1570 = vrot.slane %v1565, 4
    %v1572 = vshrl.u32 %v1473, 16
    %v1574 = vrot.slane %v1572, 7
    %v1575 = vshll.u32 %v1473, 16
    %v1577 = vor.u32 %v1574, %v1575
    %v1578 = vsel %vm228, %v1570, %v1577
    %v1580 = vshrl.u32 %v1474, 16
    %v1582 = vrot.slane %v1580, 7
    %v1583 = vrot.slane %v1582, 4
    %v1585 = vshrl.u32 %v1475, 16
    %v1587 = vrot.slane %v1585, 7
    %v1588 = vshll.u32 %v1475, 16
    %v1590 = vor.u32 %v1587, %v1588
    %v1591 = vsel %vm228, %v1583, %v1590
    %v1592 = vrot.slane %v1587, 4
    %v1594 = vshrl.u32 %v1476, 16
    %v1596 = vrot.slane %v1594, 7
    %v1597 = vshll.u32 %v1476, 16
    %v1599 = vor.u32 %v1596, %v1597
    %v1600 = vsel %vm228, %v1592, %v1599
    %v1602 = vshrl.u32 %v1477, 16
    %v1604 = vrot.slane %v1602, 7
    %v1605 = vrot.slane %v1604, 4
    %v1607 = vshrl.u32 %v1478, 16
    %v1609 = vrot.slane %v1607, 7
    %v1610 = vshll.u32 %v1478, 16
    %v1612 = vor.u32 %v1609, %v1610
    %v1613 = vsel %vm228, %v1605, %v1612
    %v1614 = vrot.slane %v1609, 4
    %v1616 = vshrl.u32 %v1479, 16
    %v1618 = vrot.slane %v1616, 7
    %v1619 = vshll.u32 %v1479, 16
    %v1621 = vor.u32 %v1618, %v1619
    %v1622 = vsel %vm228, %v1614, %v1621
    %v1624 = vshrl.u32 %v1480, 16
    %v1626 = vrot.slane %v1624, 7
    %v1627 = vrot.slane %v1626, 4
    %v1629 = vshrl.u32 %v1481, 16
    %v1631 = vrot.slane %v1629, 7
    %v1632 = vshll.u32 %v1481, 16
    %v1634 = vor.u32 %v1631, %v1632
    %v1635 = vsel %vm228, %v1627, %v1634
    %v1636 = vrot.slane %v1631, 4
    %v1638 = vshrl.u32 %v1482, 16
    %v1640 = vrot.slane %v1638, 7
    %v1641 = vshll.u32 %v1482, 16
    %v1643 = vor.u32 %v1640, %v1641
    %v1644 = vsel %vm228, %v1636, %v1643
    %v1646 = vshrl.u32 %v1483, 16
    %v1648 = vrot.slane %v1646, 7
    %v1649 = vrot.slane %v1648, 4
    %v1651 = vshrl.u32 %v1484, 16
    %v1653 = vrot.slane %v1651, 7
    %v1654 = vshll.u32 %v1484, 16
    %v1656 = vor.u32 %v1653, %v1654
    %v1657 = vsel %vm228, %v1649, %v1656
    %v1658 = vrot.slane %v1653, 4
    %v1660 = vshrl.u32 %v1485, 16
    %v1662 = vrot.slane %v1660, 7
    %v1663 = vshll.u32 %v1485, 16
    %v1665 = vor.u32 %v1662, %v1663
    %v1666 = vsel %vm228, %v1658, %v1665
    %v1668 = vshrl.u32 %v1486, 16
    %v1670 = vrot.slane %v1668, 7
    %v1671 = vrot.slane %v1670, 4
    %v1673 = vshrl.u32 %v1487, 16
    %v1675 = vrot.slane %v1673, 7
    %v1676 = vshll.u32 %v1487, 16
    %v1678 = vor.u32 %v1675, %v1676
    %v1679 = vsel %vm228, %v1671, %v1678
    %v1680 = vrot.slane %v1675, 4
    %v1682 = vshrl.u32 %v1488, 16
    %v1684 = vrot.slane %v1682, 7
    %v1685 = vshll.u32 %v1488, 16
    %v1687 = vor.u32 %v1684, %v1685
    %v1688 = vsel %vm228, %v1680, %v1687
    %v1690 = vshrl.u32 %v1489, 16
    %v1692 = vrot.slane %v1690, 7
    %v1693 = vrot.slane %v1692, 4
    %v1695 = vshrl.u32 %v1490, 16
    %v1697 = vrot.slane %v1695, 7
    %v1698 = vshll.u32 %v1490, 16
    %v1700 = vor.u32 %v1697, %v1698
    %v1701 = vsel %vm228, %v1693, %v1700
    %v1702 = vrot.slane %v1697, 4
    %v1704 = vshrl.u32 %v1491, 16
    %v1706 = vrot.slane %v1704, 7
    %v1707 = vshll.u32 %v1491, 16
    %v1709 = vor.u32 %v1706, %v1707
    %v1710 = vsel %vm228, %v1702, %v1709
    %v1712 = vshrl.u32 %v1492, 16
    %v1714 = vrot.slane %v1712, 7
    %v1715 = vrot.slane %v1714, 4
    %v1717 = vshrl.u32 %v1493, 16
    %v1719 = vrot.slane %v1717, 7
    %v1720 = vshll.u32 %v1493, 16
    %v1722 = vor.u32 %v1719, %v1720
    %v1723 = vsel %vm228, %v1715, %v1722
    %v1724 = vrot.slane %v1719, 4
    %v1726 = vshrl.u32 %v1494, 16
    %v1728 = vrot.slane %v1726, 7
    %v1729 = vshll.u32 %v1494, 16
    %v1731 = vor.u32 %v1728, %v1729
    %v1732 = vsel %vm228, %v1724, %v1731
    %v1734 = vshrl.u32 %v1495, 16
    %v1736 = vrot.slane %v1734, 7
    %v1737 = vrot.slane %v1736, 4
    %v1739 = vshrl.u32 %v1496, 16
    %v1741 = vrot.slane %v1739, 7
    %v1742 = vshll.u32 %v1496, 16
    %v1744 = vor.u32 %v1741, %v1742
    %v1745 = vsel %vm228, %v1737, %v1744
    %v1746 = vrot.slane %v1741, 4
    %v1748 = vshrl.u32 %v1497, 16
    %v1750 = vrot.slane %v1748, 7
    %v1751 = vshll.u32 %v1497, 16
    %v1753 = vor.u32 %v1750, %v1751
    %v1754 = vsel %vm228, %v1746, %v1753
    %v1756 = vshrl.u32 %v1498, 16
    %v1758 = vrot.slane %v1756, 7
    %v1759 = vrot.slane %v1758, 4
    %v1761 = vshrl.u32 %v1499, 16
    %v1763 = vrot.slane %v1761, 7
    %v1764 = vshll.u32 %v1499, 16
    %v1766 = vor.u32 %v1763, %v1764
    %v1767 = vsel %vm228, %v1759, %v1766
    %v1768 = vrot.slane %v1763, 4
    %v1770 = vshrl.u32 %v1500, 16
    %v1772 = vrot.slane %v1770, 7
    %v1773 = vshll.u32 %v1500, 16
    %v1775 = vor.u32 %v1772, %v1773
    %v1776 = vsel %vm228, %v1768, %v1775
    %v1778 = vshrl.u32 %v1501, 16
    %v1780 = vrot.slane %v1778, 7
    %v1781 = vrot.slane %v1780, 4
    %v1783 = vshrl.u32 %v1502, 16
    %v1785 = vrot.slane %v1783, 7
    %v1786 = vshll.u32 %v1502, 16
    %v1788 = vor.u32 %v1785, %v1786
    %v1789 = vsel %vm228, %v1781, %v1788
    %v1790 = vrot.slane %v1785, 4
    %v1792 = vshrl.u32 %v1503, 16
    %v1794 = vrot.slane %v1792, 7
    %v1795 = vshll.u32 %v1503, 16
    %v1797 = vor.u32 %v1794, %v1795
    %v1798 = vsel %vm228, %v1790, %v1797
    %v1800 = vshrl.u32 %v1504, 16
    %v1802 = vrot.slane %v1800, 7
    %v1803 = vrot.slane %v1802, 4
    %v1805 = vshrl.u32 %v1505, 16
    %v1807 = vrot.slane %v1805, 7
    %v1808 = vshll.u32 %v1505, 16
    %v1810 = vor.u32 %v1807, %v1808
    %v1811 = vsel %vm228, %v1803, %v1810
    %v1812 = vrot.slane %v1807, 4
    %v1814 = vshrl.u32 %v1506, 16
    %v1816 = vrot.slane %v1814, 7
    %v1817 = vshll.u32 %v1506, 16
    %v1819 = vor.u32 %v1816, %v1817
    %v1820 = vsel %vm228, %v1812, %v1819
    %v1822 = vshrl.u32 %v1507, 16
    %v1824 = vrot.slane %v1822, 7
    %v1825 = vrot.slane %v1824, 4
    %v1827 = vshrl.u32 %v1508, 16
    %v1829 = vrot.slane %v1827, 7
    %v1830 = vshll.u32 %v1508, 16
    %v1832 = vor.u32 %v1829, %v1830
    %v1833 = vsel %vm228, %v1825, %v1832
    %v1834 = vrot.slane %v1829, 4
    %v1836 = vshrl.u32 %v1509, 16
    %v1838 = vrot.slane %v1836, 7
    %v1839 = vshll.u32 %v1509, 16
    %v1841 = vor.u32 %v1838, %v1839
    %v1842 = vsel %vm228, %v1834, %v1841
    %v1844 = vshrl.u32 %v1510, 16
    %v1846 = vrot.slane %v1844, 7
    %v1847 = vrot.slane %v1846, 4
    %v1849 = vshrl.u32 %v1511, 16
    %v1851 = vrot.slane %v1849, 7
    %v1852 = vshll.u32 %v1511, 16
    %v1854 = vor.u32 %v1851, %v1852
    %v1855 = vsel %vm228, %v1847, %v1854
    %v1856 = vrot.slane %v1851, 4
    %v1858 = vshrl.u32 %v1512, 16
    %v1860 = vrot.slane %v1858, 7
    %v1861 = vshll.u32 %v1512, 16
    %v1863 = vor.u32 %v1860, %v1861
    %v1864 = vsel %vm228, %v1856, %v1863
    %v1865 = vld [vmem:[%s1464 + $0xc] sm:$0x1]
    %v1866 = vld [vmem:[%s1464 + $0x1c] sm:$0x1]
    %v1867 = vld [vmem:[%s1464 + $0x2c] sm:$0x1]
    %v1868 = vld [vmem:[%s1464 + $0x3c] sm:$0x1]
    %v1869 = vld [vmem:[%s1464 + $0x4c] sm:$0x1]
    %v1870 = vld [vmem:[%s1464 + $0x5c] sm:$0x1]
    %v1871 = vld [vmem:[%s1464 + $0x6c] sm:$0x1]
    %v1872 = vld [vmem:[%s1464 + $0x7c] sm:$0x1]
    %v1873 = vld [vmem:[%s1464 + $0x8c] sm:$0x1]
    %v1874 = vld [vmem:[%s1464 + $0x9c] sm:$0x1]
    %v1875 = vld [vmem:[%s1464 + $0xac] sm:$0x1]
    %v1876 = vld [vmem:[%s1464 + $0xbc] sm:$0x1]
    %v1877 = vld [vmem:[%s1464 + $0xcc] sm:$0x1]
    %v1878 = vld [vmem:[%s1464 + $0xdc] sm:$0x1]
    %v1879 = vld [vmem:[%s1464 + $0xec] sm:$0x1]
    %v1880 = vld [vmem:[%s1464 + $0xfc] sm:$0x1]
    %v1881 = vrot.slane %v1519, 4
    %v1882 = vrot.slane %v1522, 5
    %v1883 = vor.u32 %v1881, %v1882
    %v1884 = vrot.slane %v1883, 4
    %v1885 = vrot.slane %v1531, 5
    %v1886 = vsel %vm599, %v1884, %v1885
    %v1887 = vrot.slane %v1528, 4
    %v1888 = vor.u32 %v1887, %v1885
    %v1889 = vrot.slane %v1888, 4
    %v1891 = vshll.u32 %v1865, 16
    %v1893 = vrot.slane %v1891, 5
    %v1894 = vsel %vm599, %v1889, %v1893
    %v1895 = vrot.slane %v1541, 4
    %v1896 = vrot.slane %v1544, 5
    %v1897 = vor.u32 %v1895, %v1896
    %v1898 = vrot.slane %v1897, 4
    %v1899 = vrot.slane %v1553, 5
    %v1900 = vsel %vm599, %v1898, %v1899
    %v1901 = vrot.slane %v1550, 4
    %v1902 = vor.u32 %v1901, %v1899
    %v1903 = vrot.slane %v1902, 4
    %v1905 = vshll.u32 %v1866, 16
    %v1907 = vrot.slane %v1905, 5
    %v1908 = vsel %vm599, %v1903, %v1907
    %v1909 = vrot.slane %v1563, 4
    %v1910 = vrot.slane %v1566, 5
    %v1911 = vor.u32 %v1909, %v1910
    %v1912 = vrot.slane %v1911, 4
    %v1913 = vrot.slane %v1575, 5
    %v1914 = vsel %vm599, %v1912, %v1913
    %v1915 = vrot.slane %v1572, 4
    %v1916 = vor.u32 %v1915, %v1913
    %v1917 = vrot.slane %v1916, 4
    %v1919 = vshll.u32 %v1867, 16
    %v1921 = vrot.slane %v1919, 5
    %v1922 = vsel %vm599, %v1917, %v1921
    %v1923 = vrot.slane %v1585, 4
    %v1924 = vrot.slane %v1588, 5
    %v1925 = vor.u32 %v1923, %v1924
    %v1926 = vrot.slane %v1925, 4
    %v1927 = vrot.slane %v1597, 5
    %v1928 = vsel %vm599, %v1926, %v1927
    %v1929 = vrot.slane %v1594, 4
    %v1930 = vor.u32 %v1929, %v1927
    %v1931 = vrot.slane %v1930, 4
    %v1933 = vshll.u32 %v1868, 16
    %v1935 = vrot.slane %v1933, 5
    %v1936 = vsel %vm599, %v1931, %v1935
    %v1937 = vrot.slane %v1607, 4
    %v1938 = vrot.slane %v1610, 5
    %v1939 = vor.u32 %v1937, %v1938
    %v1940 = vrot.slane %v1939, 4
    %v1941 = vrot.slane %v1619, 5
    %v1942 = vsel %vm599, %v1940, %v1941
    %v1943 = vrot.slane %v1616, 4
    %v1944 = vor.u32 %v1943, %v1941
    %v1945 = vrot.slane %v1944, 4
    %v1947 = vshll.u32 %v1869, 16
    %v1949 = vrot.slane %v1947, 5
    %v1950 = vsel %vm599, %v1945, %v1949
    %v1951 = vrot.slane %v1629, 4
    %v1952 = vrot.slane %v1632, 5
    %v1953 = vor.u32 %v1951, %v1952
    %v1954 = vrot.slane %v1953, 4
    %v1955 = vrot.slane %v1641, 5
    %v1956 = vsel %vm599, %v1954, %v1955
    %v1957 = vrot.slane %v1638, 4
    %v1958 = vor.u32 %v1957, %v1955
    %v1959 = vrot.slane %v1958, 4
    %v1961 = vshll.u32 %v1870, 16
    %v1963 = vrot.slane %v1961, 5
    %v1964 = vsel %vm599, %v1959, %v1963
    %v1965 = vrot.slane %v1651, 4
    %v1966 = vrot.slane %v1654, 5
    %v1967 = vor.u32 %v1965, %v1966
    %v1968 = vrot.slane %v1967, 4
    %v1969 = vrot.slane %v1663, 5
    %v1970 = vsel %vm599, %v1968, %v1969
    %v1971 = vrot.slane %v1660, 4
    %v1972 = vor.u32 %v1971, %v1969
    %v1973 = vrot.slane %v1972, 4
    %v1975 = vshll.u32 %v1871, 16
    %v1977 = vrot.slane %v1975, 5
    %v1978 = vsel %vm599, %v1973, %v1977
    %v1979 = vrot.slane %v1673, 4
    %v1980 = vrot.slane %v1676, 5
    %v1981 = vor.u32 %v1979, %v1980
    %v1982 = vrot.slane %v1981, 4
    %v1983 = vrot.slane %v1685, 5
    %v1984 = vsel %vm599, %v1982, %v1983
    %v1985 = vrot.slane %v1682, 4
    %v1986 = vor.u32 %v1985, %v1983
    %v1987 = vrot.slane %v1986, 4
    %v1989 = vshll.u32 %v1872, 16
    %v1991 = vrot.slane %v1989, 5
    %v1992 = vsel %vm599, %v1987, %v1991
    %v1993 = vrot.slane %v1695, 4
    %v1994 = vrot.slane %v1698, 5
    %v1995 = vor.u32 %v1993, %v1994
    %v1996 = vrot.slane %v1995, 4
    %v1997 = vrot.slane %v1707, 5
    %v1998 = vsel %vm599, %v1996, %v1997
    %v1999 = vrot.slane %v1704, 4
    %v2000 = vor.u32 %v1999, %v1997
    %v2001 = vrot.slane %v2000, 4
    %v2003 = vshll.u32 %v1873, 16
    %v2005 = vrot.slane %v2003, 5
    %v2006 = vsel %vm599, %v2001, %v2005
    %v2007 = vrot.slane %v1717, 4
    %v2008 = vrot.slane %v1720, 5
    %v2009 = vor.u32 %v2007, %v2008
    %v2010 = vrot.slane %v2009, 4
    %v2011 = vrot.slane %v1729, 5
    %v2012 = vsel %vm599, %v2010, %v2011
    %v2013 = vrot.slane %v1726, 4
    %v2014 = vor.u32 %v2013, %v2011
    %v2015 = vrot.slane %v2014, 4
    %v2017 = vshll.u32 %v1874, 16
    %v2019 = vrot.slane %v2017, 5
    %v2020 = vsel %vm599, %v2015, %v2019
    %v2021 = vrot.slane %v1739, 4
    %v2022 = vrot.slane %v1742, 5
    %v2023 = vor.u32 %v2021, %v2022
    %v2024 = vrot.slane %v2023, 4
    %v2025 = vrot.slane %v1751, 5
    %v2026 = vsel %vm599, %v2024, %v2025
    %v2027 = vrot.slane %v1748, 4
    %v2028 = vor.u32 %v2027, %v2025
    %v2029 = vrot.slane %v2028, 4
    %v2031 = vshll.u32 %v1875, 16
    %v2033 = vrot.slane %v2031, 5
    %v2034 = vsel %vm599, %v2029, %v2033
    %v2035 = vrot.slane %v1761, 4
    %v2036 = vrot.slane %v1764, 5
    %v2037 = vor.u32 %v2035, %v2036
    %v2038 = vrot.slane %v2037, 4
    %v2039 = vrot.slane %v1773, 5
    %v2040 = vsel %vm599, %v2038, %v2039
    %v2041 = vrot.slane %v1770, 4
    %v2042 = vor.u32 %v2041, %v2039
    %v2043 = vrot.slane %v2042, 4
    %v2045 = vshll.u32 %v1876, 16
    %v2047 = vrot.slane %v2045, 5
    %v2048 = vsel %vm599, %v2043, %v2047
    %v2049 = vrot.slane %v1783, 4
    %v2050 = vrot.slane %v1786, 5
    %v2051 = vor.u32 %v2049, %v2050
    %v2052 = vrot.slane %v2051, 4
    %v2053 = vrot.slane %v1795, 5
    %v2054 = vsel %vm599, %v2052, %v2053
    %v2055 = vrot.slane %v1792, 4
    %v2056 = vor.u32 %v2055, %v2053
    %v2057 = vrot.slane %v2056, 4
    %v2059 = vshll.u32 %v1877, 16
    %v2061 = vrot.slane %v2059, 5
    %v2062 = vsel %vm599, %v2057, %v2061
    %v2063 = vrot.slane %v1805, 4
    %v2064 = vrot.slane %v1808, 5
    %v2065 = vor.u32 %v2063, %v2064
    %v2066 = vrot.slane %v2065, 4
    %v2067 = vrot.slane %v1817, 5
    %v2068 = vsel %vm599, %v2066, %v2067
    %v2069 = vrot.slane %v1814, 4
    %v2070 = vor.u32 %v2069, %v2067
    %v2071 = vrot.slane %v2070, 4
    %v2073 = vshll.u32 %v1878, 16
    %v2075 = vrot.slane %v2073, 5
    %v2076 = vsel %vm599, %v2071, %v2075
    %v2077 = vrot.slane %v1827, 4
    %v2078 = vrot.slane %v1830, 5
    %v2079 = vor.u32 %v2077, %v2078
    %v2080 = vrot.slane %v2079, 4
    %v2081 = vrot.slane %v1839, 5
    %v2082 = vsel %vm599, %v2080, %v2081
    %v2083 = vrot.slane %v1836, 4
    %v2084 = vor.u32 %v2083, %v2081
    %v2085 = vrot.slane %v2084, 4
    %v2087 = vshll.u32 %v1879, 16
    %v2089 = vrot.slane %v2087, 5
    %v2090 = vsel %vm599, %v2085, %v2089
    %v2091 = vrot.slane %v1849, 4
    %v2092 = vrot.slane %v1852, 5
    %v2093 = vor.u32 %v2091, %v2092
    %v2094 = vrot.slane %v2093, 4
    %v2095 = vrot.slane %v1861, 5
    %v2096 = vsel %vm599, %v2094, %v2095
    %v2097 = vrot.slane %v1858, 4
    %v2098 = vor.u32 %v2097, %v2095
    %v2099 = vrot.slane %v2098, 4
    %v2101 = vshll.u32 %v1880, 16
    %v2103 = vrot.slane %v2101, 5
    %v2104 = vsel %vm599, %v2099, %v2103
    %v2105 = vunpack.c.l.b16 %v241
    %v2106 = vunpack.c.l.b16 %v250
    %v2107 = vunpack.c.l.b16 %v263
    %v2108 = vunpack.c.l.b16 %v272
    %v2109 = vunpack.c.l.b16 %v285
    %v2110 = vunpack.c.l.b16 %v294
    %v2111 = vunpack.c.l.b16 %v307
    %v2112 = vunpack.c.l.b16 %v316
    %v2113 = vunpack.c.l.b16 %v329
    %v2114 = vunpack.c.l.b16 %v338
    %v2115 = vunpack.c.l.b16 %v351
    %v2116 = vunpack.c.l.b16 %v360
    %v2117 = vunpack.c.l.b16 %v373
    %v2118 = vunpack.c.l.b16 %v382
    %v2119 = vunpack.c.l.b16 %v395
    %v2120 = vunpack.c.l.b16 %v404
    %v2121 = vunpack.c.l.b16 %v417
    %v2122 = vunpack.c.l.b16 %v426
    %v2123 = vunpack.c.l.b16 %v439
    %v2124 = vunpack.c.l.b16 %v448
    %v2125 = vunpack.c.l.b16 %v461
    %v2126 = vunpack.c.l.b16 %v470
    %v2127 = vunpack.c.l.b16 %v483
    %v2128 = vunpack.c.l.b16 %v492
    %v2129 = vunpack.c.l.b16 %v505
    %v2130 = vunpack.c.l.b16 %v514
    %v2131 = vunpack.c.l.b16 %v527
    %v2132 = vunpack.c.l.b16 %v536
    %v2133 = vunpack.c.l.b16 %v549
    %v2134 = vunpack.c.l.b16 %v558
    %v2135 = vunpack.c.l.b16 %v571
    %v2136 = vunpack.c.l.b16 %v580
    %v2137 = vpack.c.b16 %v2106, %v2105
    %v2138 = vpack.c.b16 %v2108, %v2107
    %v2139 = vpack.c.b16 %v2110, %v2109
    %v2140 = vpack.c.b16 %v2112, %v2111
    %v2141 = vpack.c.b16 %v2114, %v2113
    %v2142 = vpack.c.b16 %v2116, %v2115
    %v2143 = vpack.c.b16 %v2118, %v2117
    %v2144 = vpack.c.b16 %v2120, %v2119
    %v2145 = vpack.c.b16 %v2122, %v2121
    %v2146 = vpack.c.b16 %v2124, %v2123
    %v2147 = vpack.c.b16 %v2126, %v2125
    %v2148 = vpack.c.b16 %v2128, %v2127
    %v2149 = vpack.c.b16 %v2130, %v2129
    %v2150 = vpack.c.b16 %v2132, %v2131
    %v2151 = vpack.c.b16 %v2134, %v2133
    %v2152 = vpack.c.b16 %v2136, %v2135
    %v2185 = vunpack.c.l.b16 %v179
    %v2186 = vunpack.c.l.b16 %v180
    %v2187 = vunpack.c.l.b16 %v182
    %v2188 = vunpack.c.l.b16 %v183
    %v2189 = vunpack.c.l.b16 %v185
    %v2190 = vunpack.c.l.b16 %v186
    %v2191 = vunpack.c.l.b16 %v188
    %v2192 = vunpack.c.l.b16 %v189
    %v2193 = vunpack.c.l.b16 %v191
    %v2194 = vunpack.c.l.b16 %v192
    %v2195 = vunpack.c.l.b16 %v194
    %v2196 = vunpack.c.l.b16 %v195
    %v2197 = vunpack.c.l.b16 %v197
    %v2198 = vunpack.c.l.b16 %v198
    %v2199 = vunpack.c.l.b16 %v200
    %v2200 = vunpack.c.l.b16 %v201
    %v2201 = vunpack.c.l.b16 %v203
    %v2202 = vunpack.c.l.b16 %v204
    %v2203 = vunpack.c.l.b16 %v206
    %v2204 = vunpack.c.l.b16 %v207
    %v2205 = vunpack.c.l.b16 %v209
    %v2206 = vunpack.c.l.b16 %v210
    %v2207 = vunpack.c.l.b16 %v212
    %v2208 = vunpack.c.l.b16 %v213
    %v2209 = vunpack.c.l.b16 %v215
    %v2210 = vunpack.c.l.b16 %v216
    %v2211 = vunpack.c.l.b16 %v218
    %v2212 = vunpack.c.l.b16 %v219
    %v2213 = vunpack.c.l.b16 %v221
    %v2214 = vunpack.c.l.b16 %v222
    %v2215 = vunpack.c.l.b16 %v224
    %v2216 = vunpack.c.l.b16 %v225
    %v2217 = vpack.c.b16 %v2186, %v2185
    %v2218 = vpack.c.b16 %v2188, %v2187
    %v2219 = vpack.c.b16 %v2190, %v2189
    %v2220 = vpack.c.b16 %v2192, %v2191
    %v2221 = vpack.c.b16 %v2194, %v2193
    %v2222 = vpack.c.b16 %v2196, %v2195
    %v2223 = vpack.c.b16 %v2198, %v2197
    %v2224 = vpack.c.b16 %v2200, %v2199
    %v2225 = vpack.c.b16 %v2202, %v2201
    %v2226 = vpack.c.b16 %v2204, %v2203
    %v2227 = vpack.c.b16 %v2206, %v2205
    %v2228 = vpack.c.b16 %v2208, %v2207
    %v2229 = vpack.c.b16 %v2210, %v2209
    %v2230 = vpack.c.b16 %v2212, %v2211
    %v2231 = vpack.c.b16 %v2214, %v2213
    %v2232 = vpack.c.b16 %v2216, %v2215
    %2233 = vrot.lane.b32.xlu0 %v2217, 4
    %v2234 = vpop.permute.xlu0 %2233
    %2235 = vrot.lane.b32.xlu0 %v2218, 4
    %v2236 = vpop.permute.xlu0 %2235
    %2237 = vrot.lane.b32.xlu0 %v2219, 4
    %v2238 = vpop.permute.xlu0 %2237
    %2239 = vrot.lane.b32.xlu0 %v2220, 4
    %v2240 = vpop.permute.xlu0 %2239
    %2241 = vrot.lane.b32.xlu0 %v2221, 4
    %v2242 = vpop.permute.xlu0 %2241
    %2243 = vrot.lane.b32.xlu0 %v2222, 4
    %v2244 = vpop.permute.xlu0 %2243
    %2245 = vrot.lane.b32.xlu0 %v2223, 4
    %v2246 = vpop.permute.xlu0 %2245
    %2247 = vrot.lane.b32.xlu0 %v2224, 4
    %v2248 = vpop.permute.xlu0 %2247
    %2249 = vrot.lane.b32.xlu0 %v2225, 4
    %v2250 = vpop.permute.xlu0 %2249
    %2251 = vrot.lane.b32.xlu0 %v2226, 4
    %v2252 = vpop.permute.xlu0 %2251
    %2253 = vrot.lane.b32.xlu0 %v2227, 4
    %v2254 = vpop.permute.xlu0 %2253
    %2255 = vrot.lane.b32.xlu0 %v2228, 4
    %v2256 = vpop.permute.xlu0 %2255
    %2257 = vrot.lane.b32.xlu0 %v2229, 4
    %v2258 = vpop.permute.xlu0 %2257
    %2259 = vrot.lane.b32.xlu0 %v2230, 4
    %v2260 = vpop.permute.xlu0 %2259
    %2261 = vrot.lane.b32.xlu0 %v2231, 4
    %v2262 = vpop.permute.xlu0 %2261
    %2263 = vrot.lane.b32.xlu0 %v2232, 4
    %v2264 = vpop.permute.xlu0 %2263
    %v2265 = vunpack.c.l.b16 %v605
    %v2266 = vunpack.c.l.b16 %v613
    %v2267 = vunpack.c.l.b16 %v619
    %v2268 = vunpack.c.l.b16 %v627
    %v2269 = vunpack.c.l.b16 %v633
    %v2270 = vunpack.c.l.b16 %v641
    %v2271 = vunpack.c.l.b16 %v647
    %v2272 = vunpack.c.l.b16 %v655
    %v2273 = vunpack.c.l.b16 %v661
    %v2274 = vunpack.c.l.b16 %v669
    %v2275 = vunpack.c.l.b16 %v675
    %v2276 = vunpack.c.l.b16 %v683
    %v2277 = vunpack.c.l.b16 %v689
    %v2278 = vunpack.c.l.b16 %v697
    %v2279 = vunpack.c.l.b16 %v703
    %v2280 = vunpack.c.l.b16 %v711
    %v2281 = vunpack.c.l.b16 %v717
    %v2282 = vunpack.c.l.b16 %v725
    %v2283 = vunpack.c.l.b16 %v731
    %v2284 = vunpack.c.l.b16 %v739
    %v2285 = vunpack.c.l.b16 %v745
    %v2286 = vunpack.c.l.b16 %v753
    %v2287 = vunpack.c.l.b16 %v759
    %v2288 = vunpack.c.l.b16 %v767
    %v2289 = vunpack.c.l.b16 %v773
    %v2290 = vunpack.c.l.b16 %v781
    %v2291 = vunpack.c.l.b16 %v787
    %v2292 = vunpack.c.l.b16 %v795
    %v2293 = vunpack.c.l.b16 %v801
    %v2294 = vunpack.c.l.b16 %v809
    %v2295 = vunpack.c.l.b16 %v815
    %v2296 = vunpack.c.l.b16 %v823
    %v2297 = vpack.c.b16 %v2266, %v2265
    %v2298 = vpack.c.b16 %v2268, %v2267
    %v2299 = vpack.c.b16 %v2270, %v2269
    %v2300 = vpack.c.b16 %v2272, %v2271
    %v2301 = vpack.c.b16 %v2274, %v2273
    %v2302 = vpack.c.b16 %v2276, %v2275
    %v2303 = vpack.c.b16 %v2278, %v2277
    %v2304 = vpack.c.b16 %v2280, %v2279
    %v2305 = vpack.c.b16 %v2282, %v2281
    %v2306 = vpack.c.b16 %v2284, %v2283
    %v2307 = vpack.c.b16 %v2286, %v2285
    %v2308 = vpack.c.b16 %v2288, %v2287
    %v2309 = vpack.c.b16 %v2290, %v2289
    %v2310 = vpack.c.b16 %v2292, %v2291
    %v2311 = vpack.c.b16 %v2294, %v2293
    %v2312 = vpack.c.b16 %v2296, %v2295
    %2313 = vrot.lane.b32.xlu0 %v2297, 8
    %v2314 = vpop.permute.xlu0 %2313
    %2315 = vrot.lane.b32.xlu0 %v2298, 8
    %v2316 = vpop.permute.xlu0 %2315
    %2317 = vrot.lane.b32.xlu0 %v2299, 8
    %v2318 = vpop.permute.xlu0 %2317
    %2319 = vrot.lane.b32.xlu0 %v2300, 8
    %v2320 = vpop.permute.xlu0 %2319
    %2321 = vrot.lane.b32.xlu0 %v2301, 8
    %v2322 = vpop.permute.xlu0 %2321
    %2323 = vrot.lane.b32.xlu0 %v2302, 8
    %v2324 = vpop.permute.xlu0 %2323
    %2325 = vrot.lane.b32.xlu0 %v2303, 8
    %v2326 = vpop.permute.xlu0 %2325
    %2327 = vrot.lane.b32.xlu0 %v2304, 8
    %v2328 = vpop.permute.xlu0 %2327
    %2329 = vrot.lane.b32.xlu0 %v2305, 8
    %v2330 = vpop.permute.xlu0 %2329
    %2331 = vrot.lane.b32.xlu0 %v2306, 8
    %v2332 = vpop.permute.xlu0 %2331
    %2333 = vrot.lane.b32.xlu0 %v2307, 8
    %v2334 = vpop.permute.xlu0 %2333
    %2335 = vrot.lane.b32.xlu0 %v2308, 8
    %v2336 = vpop.permute.xlu0 %2335
    %2337 = vrot.lane.b32.xlu0 %v2309, 8
    %v2338 = vpop.permute.xlu0 %2337
    %2339 = vrot.lane.b32.xlu0 %v2310, 8
    %v2340 = vpop.permute.xlu0 %2339
    %2341 = vrot.lane.b32.xlu0 %v2311, 8
    %v2342 = vpop.permute.xlu0 %2341
    %2343 = vrot.lane.b32.xlu0 %v2312, 8
    %v2344 = vpop.permute.xlu0 %2343
    %v2345 = vunpack.c.l.b16 %v884
    %v2346 = vunpack.c.l.b16 %v893
    %v2347 = vunpack.c.l.b16 %v906
    %v2348 = vunpack.c.l.b16 %v915
    %v2349 = vunpack.c.l.b16 %v928
    %v2350 = vunpack.c.l.b16 %v937
    %v2351 = vunpack.c.l.b16 %v950
    %v2352 = vunpack.c.l.b16 %v959
    %v2353 = vunpack.c.l.b16 %v972
    %v2354 = vunpack.c.l.b16 %v981
    %v2355 = vunpack.c.l.b16 %v994
    %v2356 = vunpack.c.l.b16 %v1003
    %v2357 = vunpack.c.l.b16 %v1016
    %v2358 = vunpack.c.l.b16 %v1025
    %v2359 = vunpack.c.l.b16 %v1038
    %v2360 = vunpack.c.l.b16 %v1047
    %v2361 = vunpack.c.l.b16 %v1060
    %v2362 = vunpack.c.l.b16 %v1069
    %v2363 = vunpack.c.l.b16 %v1082
    %v2364 = vunpack.c.l.b16 %v1091
    %v2365 = vunpack.c.l.b16 %v1104
    %v2366 = vunpack.c.l.b16 %v1113
    %v2367 = vunpack.c.l.b16 %v1126
    %v2368 = vunpack.c.l.b16 %v1135
    %v2369 = vunpack.c.l.b16 %v1148
    %v2370 = vunpack.c.l.b16 %v1157
    %v2371 = vunpack.c.l.b16 %v1170
    %v2372 = vunpack.c.l.b16 %v1179
    %v2373 = vunpack.c.l.b16 %v1192
    %v2374 = vunpack.c.l.b16 %v1201
    %v2375 = vunpack.c.l.b16 %v1214
    %v2376 = vunpack.c.l.b16 %v1223
    %v2377 = vpack.c.b16 %v2346, %v2345
    %v2378 = vpack.c.b16 %v2348, %v2347
    %v2379 = vpack.c.b16 %v2350, %v2349
    %v2380 = vpack.c.b16 %v2352, %v2351
    %v2381 = vpack.c.b16 %v2354, %v2353
    %v2382 = vpack.c.b16 %v2356, %v2355
    %v2383 = vpack.c.b16 %v2358, %v2357
    %v2384 = vpack.c.b16 %v2360, %v2359
    %v2385 = vpack.c.b16 %v2362, %v2361
    %v2386 = vpack.c.b16 %v2364, %v2363
    %v2387 = vpack.c.b16 %v2366, %v2365
    %v2388 = vpack.c.b16 %v2368, %v2367
    %v2389 = vpack.c.b16 %v2370, %v2369
    %v2390 = vpack.c.b16 %v2372, %v2371
    %v2391 = vpack.c.b16 %v2374, %v2373
    %v2392 = vpack.c.b16 %v2376, %v2375
    %2393 = vrot.lane.b32.xlu0 %v2377, 12
    %v2394 = vpop.permute.xlu0 %2393
    %2395 = vrot.lane.b32.xlu0 %v2378, 12
    %v2396 = vpop.permute.xlu0 %2395
    %2397 = vrot.lane.b32.xlu0 %v2379, 12
    %v2398 = vpop.permute.xlu0 %2397
    %2399 = vrot.lane.b32.xlu0 %v2380, 12
    %v2400 = vpop.permute.xlu0 %2399
    %2401 = vrot.lane.b32.xlu0 %v2381, 12
    %v2402 = vpop.permute.xlu0 %2401
    %2403 = vrot.lane.b32.xlu0 %v2382, 12
    %v2404 = vpop.permute.xlu0 %2403
    %2405 = vrot.lane.b32.xlu0 %v2383, 12
    %v2406 = vpop.permute.xlu0 %2405
    %2407 = vrot.lane.b32.xlu0 %v2384, 12
    %v2408 = vpop.permute.xlu0 %2407
    %2409 = vrot.lane.b32.xlu0 %v2385, 12
    %v2410 = vpop.permute.xlu0 %2409
    %2411 = vrot.lane.b32.xlu0 %v2386, 12
    %v2412 = vpop.permute.xlu0 %2411
    %2413 = vrot.lane.b32.xlu0 %v2387, 12
    %v2414 = vpop.permute.xlu0 %2413
    %2415 = vrot.lane.b32.xlu0 %v2388, 12
    %v2416 = vpop.permute.xlu0 %2415
    %2417 = vrot.lane.b32.xlu0 %v2389, 12
    %v2418 = vpop.permute.xlu0 %2417
    %2419 = vrot.lane.b32.xlu0 %v2390, 12
    %v2420 = vpop.permute.xlu0 %2419
    %2421 = vrot.lane.b32.xlu0 %v2391, 12
    %v2422 = vpop.permute.xlu0 %2421
    %2423 = vrot.lane.b32.xlu0 %v2392, 12
    %v2424 = vpop.permute.xlu0 %2423
    %v2457 = vunpack.c.l.b16 %v825
    %v2458 = vunpack.c.l.b16 %v826
    %v2459 = vunpack.c.l.b16 %v828
    %v2460 = vunpack.c.l.b16 %v829
    %v2461 = vunpack.c.l.b16 %v831
    %v2462 = vunpack.c.l.b16 %v832
    %v2463 = vunpack.c.l.b16 %v834
    %v2464 = vunpack.c.l.b16 %v835
    %v2465 = vunpack.c.l.b16 %v837
    %v2466 = vunpack.c.l.b16 %v838
    %v2467 = vunpack.c.l.b16 %v840
    %v2468 = vunpack.c.l.b16 %v841
    %v2469 = vunpack.c.l.b16 %v843
    %v2470 = vunpack.c.l.b16 %v844
    %v2471 = vunpack.c.l.b16 %v846
    %v2472 = vunpack.c.l.b16 %v847
    %v2473 = vunpack.c.l.b16 %v849
    %v2474 = vunpack.c.l.b16 %v850
    %v2475 = vunpack.c.l.b16 %v852
    %v2476 = vunpack.c.l.b16 %v853
    %v2477 = vunpack.c.l.b16 %v855
    %v2478 = vunpack.c.l.b16 %v856
    %v2479 = vunpack.c.l.b16 %v858
    %v2480 = vunpack.c.l.b16 %v859
    %v2481 = vunpack.c.l.b16 %v861
    %v2482 = vunpack.c.l.b16 %v862
    %v2483 = vunpack.c.l.b16 %v864
    %v2484 = vunpack.c.l.b16 %v865
    %v2485 = vunpack.c.l.b16 %v867
    %v2486 = vunpack.c.l.b16 %v868
    %v2487 = vunpack.c.l.b16 %v870
    %v2488 = vunpack.c.l.b16 %v871
    %v2489 = vpack.c.b16 %v2458, %v2457
    %v2490 = vpack.c.b16 %v2460, %v2459
    %v2491 = vpack.c.b16 %v2462, %v2461
    %v2492 = vpack.c.b16 %v2464, %v2463
    %v2493 = vpack.c.b16 %v2466, %v2465
    %v2494 = vpack.c.b16 %v2468, %v2467
    %v2495 = vpack.c.b16 %v2470, %v2469
    %v2496 = vpack.c.b16 %v2472, %v2471
    %v2497 = vpack.c.b16 %v2474, %v2473
    %v2498 = vpack.c.b16 %v2476, %v2475
    %v2499 = vpack.c.b16 %v2478, %v2477
    %v2500 = vpack.c.b16 %v2480, %v2479
    %v2501 = vpack.c.b16 %v2482, %v2481
    %v2502 = vpack.c.b16 %v2484, %v2483
    %v2503 = vpack.c.b16 %v2486, %v2485
    %v2504 = vpack.c.b16 %v2488, %v2487
    %2505 = vrot.lane.b32.xlu0 %v2489, 16
    %v2506 = vpop.permute.xlu0 %2505
    %2507 = vrot.lane.b32.xlu0 %v2490, 16
    %v2508 = vpop.permute.xlu0 %2507
    %2509 = vrot.lane.b32.xlu0 %v2491, 16
    %v2510 = vpop.permute.xlu0 %2509
    %2511 = vrot.lane.b32.xlu0 %v2492, 16
    %v2512 = vpop.permute.xlu0 %2511
    %2513 = vrot.lane.b32.xlu0 %v2493, 16
    %v2514 = vpop.permute.xlu0 %2513
    %2515 = vrot.lane.b32.xlu0 %v2494, 16
    %v2516 = vpop.permute.xlu0 %2515
    %2517 = vrot.lane.b32.xlu0 %v2495, 16
    %v2518 = vpop.permute.xlu0 %2517
    %2519 = vrot.lane.b32.xlu0 %v2496, 16
    %v2520 = vpop.permute.xlu0 %2519
    %2521 = vrot.lane.b32.xlu0 %v2497, 16
    %v2522 = vpop.permute.xlu0 %2521
    %2523 = vrot.lane.b32.xlu0 %v2498, 16
    %v2524 = vpop.permute.xlu0 %2523
    %2525 = vrot.lane.b32.xlu0 %v2499, 16
    %v2526 = vpop.permute.xlu0 %2525
    %2527 = vrot.lane.b32.xlu0 %v2500, 16
    %v2528 = vpop.permute.xlu0 %2527
    %2529 = vrot.lane.b32.xlu0 %v2501, 16
    %v2530 = vpop.permute.xlu0 %2529
    %2531 = vrot.lane.b32.xlu0 %v2502, 16
    %v2532 = vpop.permute.xlu0 %2531
    %2533 = vrot.lane.b32.xlu0 %v2503, 16
    %v2534 = vpop.permute.xlu0 %2533
    %2535 = vrot.lane.b32.xlu0 %v2504, 16
    %v2536 = vpop.permute.xlu0 %2535
    %v2537 = vunpack.c.l.b16 %v1245
    %v2538 = vunpack.c.l.b16 %v1253
    %v2539 = vunpack.c.l.b16 %v1259
    %v2540 = vunpack.c.l.b16 %v1267
    %v2541 = vunpack.c.l.b16 %v1273
    %v2542 = vunpack.c.l.b16 %v1281
    %v2543 = vunpack.c.l.b16 %v1287
    %v2544 = vunpack.c.l.b16 %v1295
    %v2545 = vunpack.c.l.b16 %v1301
    %v2546 = vunpack.c.l.b16 %v1309
    %v2547 = vunpack.c.l.b16 %v1315
    %v2548 = vunpack.c.l.b16 %v1323
    %v2549 = vunpack.c.l.b16 %v1329
    %v2550 = vunpack.c.l.b16 %v1337
    %v2551 = vunpack.c.l.b16 %v1343
    %v2552 = vunpack.c.l.b16 %v1351
    %v2553 = vunpack.c.l.b16 %v1357
    %v2554 = vunpack.c.l.b16 %v1365
    %v2555 = vunpack.c.l.b16 %v1371
    %v2556 = vunpack.c.l.b16 %v1379
    %v2557 = vunpack.c.l.b16 %v1385
    %v2558 = vunpack.c.l.b16 %v1393
    %v2559 = vunpack.c.l.b16 %v1399
    %v2560 = vunpack.c.l.b16 %v1407
    %v2561 = vunpack.c.l.b16 %v1413
    %v2562 = vunpack.c.l.b16 %v1421
    %v2563 = vunpack.c.l.b16 %v1427
    %v2564 = vunpack.c.l.b16 %v1435
    %v2565 = vunpack.c.l.b16 %v1441
    %v2566 = vunpack.c.l.b16 %v1449
    %v2567 = vunpack.c.l.b16 %v1455
    %v2568 = vunpack.c.l.b16 %v1463
    %v2569 = vpack.c.b16 %v2538, %v2537
    %v2570 = vpack.c.b16 %v2540, %v2539
    %v2571 = vpack.c.b16 %v2542, %v2541
    %v2572 = vpack.c.b16 %v2544, %v2543
    %v2573 = vpack.c.b16 %v2546, %v2545
    %v2574 = vpack.c.b16 %v2548, %v2547
    %v2575 = vpack.c.b16 %v2550, %v2549
    %v2576 = vpack.c.b16 %v2552, %v2551
    %v2577 = vpack.c.b16 %v2554, %v2553
    %v2578 = vpack.c.b16 %v2556, %v2555
    %v2579 = vpack.c.b16 %v2558, %v2557
    %v2580 = vpack.c.b16 %v2560, %v2559
    %v2581 = vpack.c.b16 %v2562, %v2561
    %v2582 = vpack.c.b16 %v2564, %v2563
    %v2583 = vpack.c.b16 %v2566, %v2565
    %v2584 = vpack.c.b16 %v2568, %v2567
    %2585 = vrot.lane.b32.xlu0 %v2569, 20
    %v2586 = vpop.permute.xlu0 %2585
    %2587 = vrot.lane.b32.xlu0 %v2570, 20
    %v2588 = vpop.permute.xlu0 %2587
    %2589 = vrot.lane.b32.xlu0 %v2571, 20
    %v2590 = vpop.permute.xlu0 %2589
    %2591 = vrot.lane.b32.xlu0 %v2572, 20
    %v2592 = vpop.permute.xlu0 %2591
    %2593 = vrot.lane.b32.xlu0 %v2573, 20
    %v2594 = vpop.permute.xlu0 %2593
    %2595 = vrot.lane.b32.xlu0 %v2574, 20
    %v2596 = vpop.permute.xlu0 %2595
    %2597 = vrot.lane.b32.xlu0 %v2575, 20
    %v2598 = vpop.permute.xlu0 %2597
    %2599 = vrot.lane.b32.xlu0 %v2576, 20
    %v2600 = vpop.permute.xlu0 %2599
    %2601 = vrot.lane.b32.xlu0 %v2577, 20
    %v2602 = vpop.permute.xlu0 %2601
    %2603 = vrot.lane.b32.xlu0 %v2578, 20
    %v2604 = vpop.permute.xlu0 %2603
    %2605 = vrot.lane.b32.xlu0 %v2579, 20
    %v2606 = vpop.permute.xlu0 %2605
    %2607 = vrot.lane.b32.xlu0 %v2580, 20
    %v2608 = vpop.permute.xlu0 %2607
    %2609 = vrot.lane.b32.xlu0 %v2581, 20
    %v2610 = vpop.permute.xlu0 %2609
    %2611 = vrot.lane.b32.xlu0 %v2582, 20
    %v2612 = vpop.permute.xlu0 %2611
    %2613 = vrot.lane.b32.xlu0 %v2583, 20
    %v2614 = vpop.permute.xlu0 %2613
    %2615 = vrot.lane.b32.xlu0 %v2584, 20
    %v2616 = vpop.permute.xlu0 %2615
    %v2617 = vunpack.c.l.b16 %v1525
    %v2618 = vunpack.c.l.b16 %v1534
    %v2619 = vunpack.c.l.b16 %v1547
    %v2620 = vunpack.c.l.b16 %v1556
    %v2621 = vunpack.c.l.b16 %v1569
    %v2622 = vunpack.c.l.b16 %v1578
    %v2623 = vunpack.c.l.b16 %v1591
    %v2624 = vunpack.c.l.b16 %v1600
    %v2625 = vunpack.c.l.b16 %v1613
    %v2626 = vunpack.c.l.b16 %v1622
    %v2627 = vunpack.c.l.b16 %v1635
    %v2628 = vunpack.c.l.b16 %v1644
    %v2629 = vunpack.c.l.b16 %v1657
    %v2630 = vunpack.c.l.b16 %v1666
    %v2631 = vunpack.c.l.b16 %v1679
    %v2632 = vunpack.c.l.b16 %v1688
    %v2633 = vunpack.c.l.b16 %v1701
    %v2634 = vunpack.c.l.b16 %v1710
    %v2635 = vunpack.c.l.b16 %v1723
    %v2636 = vunpack.c.l.b16 %v1732
    %v2637 = vunpack.c.l.b16 %v1745
    %v2638 = vunpack.c.l.b16 %v1754
    %v2639 = vunpack.c.l.b16 %v1767
    %v2640 = vunpack.c.l.b16 %v1776
    %v2641 = vunpack.c.l.b16 %v1789
    %v2642 = vunpack.c.l.b16 %v1798
    %v2643 = vunpack.c.l.b16 %v1811
    %v2644 = vunpack.c.l.b16 %v1820
    %v2645 = vunpack.c.l.b16 %v1833
    %v2646 = vunpack.c.l.b16 %v1842
    %v2647 = vunpack.c.l.b16 %v1855
    %v2648 = vunpack.c.l.b16 %v1864
    %v2649 = vpack.c.b16 %v2618, %v2617
    %v2650 = vpack.c.b16 %v2620, %v2619
    %v2651 = vpack.c.b16 %v2622, %v2621
    %v2652 = vpack.c.b16 %v2624, %v2623
    %v2653 = vpack.c.b16 %v2626, %v2625
    %v2654 = vpack.c.b16 %v2628, %v2627
    %v2655 = vpack.c.b16 %v2630, %v2629
    %v2656 = vpack.c.b16 %v2632, %v2631
    %v2657 = vpack.c.b16 %v2634, %v2633
    %v2658 = vpack.c.b16 %v2636, %v2635
    %v2659 = vpack.c.b16 %v2638, %v2637
    %v2660 = vpack.c.b16 %v2640, %v2639
    %v2661 = vpack.c.b16 %v2642, %v2641
    %v2662 = vpack.c.b16 %v2644, %v2643
    %v2663 = vpack.c.b16 %v2646, %v2645
    %v2664 = vpack.c.b16 %v2648, %v2647
    %2665 = vrot.lane.b32.xlu0 %v2649, 24
    %v2666 = vpop.permute.xlu0 %2665
    %2667 = vrot.lane.b32.xlu0 %v2650, 24
    %v2668 = vpop.permute.xlu0 %2667
    %2669 = vrot.lane.b32.xlu0 %v2651, 24
    %v2670 = vpop.permute.xlu0 %2669
    %2671 = vrot.lane.b32.xlu0 %v2652, 24
    %v2672 = vpop.permute.xlu0 %2671
    %2673 = vrot.lane.b32.xlu0 %v2653, 24
    %v2674 = vpop.permute.xlu0 %2673
    %2675 = vrot.lane.b32.xlu0 %v2654, 24
    %v2676 = vpop.permute.xlu0 %2675
    %2677 = vrot.lane.b32.xlu0 %v2655, 24
    %v2678 = vpop.permute.xlu0 %2677
    %2679 = vrot.lane.b32.xlu0 %v2656, 24
    %v2680 = vpop.permute.xlu0 %2679
    %2681 = vrot.lane.b32.xlu0 %v2657, 24
    %v2682 = vpop.permute.xlu0 %2681
    %2683 = vrot.lane.b32.xlu0 %v2658, 24
    %v2684 = vpop.permute.xlu0 %2683
    %2685 = vrot.lane.b32.xlu0 %v2659, 24
    %v2686 = vpop.permute.xlu0 %2685
    %2687 = vrot.lane.b32.xlu0 %v2660, 24
    %v2688 = vpop.permute.xlu0 %2687
    %2689 = vrot.lane.b32.xlu0 %v2661, 24
    %v2690 = vpop.permute.xlu0 %2689
    %2691 = vrot.lane.b32.xlu0 %v2662, 24
    %v2692 = vpop.permute.xlu0 %2691
    %2693 = vrot.lane.b32.xlu0 %v2663, 24
    %v2694 = vpop.permute.xlu0 %2693
    %2695 = vrot.lane.b32.xlu0 %v2664, 24
    %v2696 = vpop.permute.xlu0 %2695
    %v2729 = vunpack.c.l.b16 %v1466
    %v2730 = vunpack.c.l.b16 %v1467
    %v2731 = vunpack.c.l.b16 %v1469
    %v2732 = vunpack.c.l.b16 %v1470
    %v2733 = vunpack.c.l.b16 %v1472
    %v2734 = vunpack.c.l.b16 %v1473
    %v2735 = vunpack.c.l.b16 %v1475
    %v2736 = vunpack.c.l.b16 %v1476
    %v2737 = vunpack.c.l.b16 %v1478
    %v2738 = vunpack.c.l.b16 %v1479
    %v2739 = vunpack.c.l.b16 %v1481
    %v2740 = vunpack.c.l.b16 %v1482
    %v2741 = vunpack.c.l.b16 %v1484
    %v2742 = vunpack.c.l.b16 %v1485
    %v2743 = vunpack.c.l.b16 %v1487
    %v2744 = vunpack.c.l.b16 %v1488
    %v2745 = vunpack.c.l.b16 %v1490
    %v2746 = vunpack.c.l.b16 %v1491
    %v2747 = vunpack.c.l.b16 %v1493
    %v2748 = vunpack.c.l.b16 %v1494
    %v2749 = vunpack.c.l.b16 %v1496
    %v2750 = vunpack.c.l.b16 %v1497
    %v2751 = vunpack.c.l.b16 %v1499
    %v2752 = vunpack.c.l.b16 %v1500
    %v2753 = vunpack.c.l.b16 %v1502
    %v2754 = vunpack.c.l.b16 %v1503
    %v2755 = vunpack.c.l.b16 %v1505
    %v2756 = vunpack.c.l.b16 %v1506
    %v2757 = vunpack.c.l.b16 %v1508
    %v2758 = vunpack.c.l.b16 %v1509
    %v2759 = vunpack.c.l.b16 %v1511
    %v2760 = vunpack.c.l.b16 %v1512
    %v2761 = vpack.c.b16 %v2730, %v2729
    %v2762 = vpack.c.b16 %v2732, %v2731
    %v2763 = vpack.c.b16 %v2734, %v2733
    %v2764 = vpack.c.b16 %v2736, %v2735
    %v2765 = vpack.c.b16 %v2738, %v2737
    %v2766 = vpack.c.b16 %v2740, %v2739
    %v2767 = vpack.c.b16 %v2742, %v2741
    %v2768 = vpack.c.b16 %v2744, %v2743
    %v2769 = vpack.c.b16 %v2746, %v2745
    %v2770 = vpack.c.b16 %v2748, %v2747
    %v2771 = vpack.c.b16 %v2750, %v2749
    %v2772 = vpack.c.b16 %v2752, %v2751
    %v2773 = vpack.c.b16 %v2754, %v2753
    %v2774 = vpack.c.b16 %v2756, %v2755
    %v2775 = vpack.c.b16 %v2758, %v2757
    %v2776 = vpack.c.b16 %v2760, %v2759
    %2777 = vrot.lane.b32.xlu0 %v2761, 28
    %v2778 = vpop.permute.xlu0 %2777
    %2779 = vrot.lane.b32.xlu0 %v2762, 28
    %v2780 = vpop.permute.xlu0 %2779
    %2781 = vrot.lane.b32.xlu0 %v2763, 28
    %v2782 = vpop.permute.xlu0 %2781
    %2783 = vrot.lane.b32.xlu0 %v2764, 28
    %v2784 = vpop.permute.xlu0 %2783
    %2785 = vrot.lane.b32.xlu0 %v2765, 28
    %v2786 = vpop.permute.xlu0 %2785
    %2787 = vrot.lane.b32.xlu0 %v2766, 28
    %v2788 = vpop.permute.xlu0 %2787
    %2789 = vrot.lane.b32.xlu0 %v2767, 28
    %v2790 = vpop.permute.xlu0 %2789
    %2791 = vrot.lane.b32.xlu0 %v2768, 28
    %v2792 = vpop.permute.xlu0 %2791
    %2793 = vrot.lane.b32.xlu0 %v2769, 28
    %v2794 = vpop.permute.xlu0 %2793
    %2795 = vrot.lane.b32.xlu0 %v2770, 28
    %v2796 = vpop.permute.xlu0 %2795
    %2797 = vrot.lane.b32.xlu0 %v2771, 28
    %v2798 = vpop.permute.xlu0 %2797
    %2799 = vrot.lane.b32.xlu0 %v2772, 28
    %v2800 = vpop.permute.xlu0 %2799
    %2801 = vrot.lane.b32.xlu0 %v2773, 28
    %v2802 = vpop.permute.xlu0 %2801
    %2803 = vrot.lane.b32.xlu0 %v2774, 28
    %v2804 = vpop.permute.xlu0 %2803
    %2805 = vrot.lane.b32.xlu0 %v2775, 28
    %v2806 = vpop.permute.xlu0 %2805
    %2807 = vrot.lane.b32.xlu0 %v2776, 28
    %v2808 = vpop.permute.xlu0 %2807
    %v2809 = vunpack.c.l.b16 %v1886
    %v2810 = vunpack.c.l.b16 %v1894
    %v2811 = vunpack.c.l.b16 %v1900
    %v2812 = vunpack.c.l.b16 %v1908
    %v2813 = vunpack.c.l.b16 %v1914
    %v2814 = vunpack.c.l.b16 %v1922
    %v2815 = vunpack.c.l.b16 %v1928
    %v2816 = vunpack.c.l.b16 %v1936
    %v2817 = vunpack.c.l.b16 %v1942
    %v2818 = vunpack.c.l.b16 %v1950
    %v2819 = vunpack.c.l.b16 %v1956
    %v2820 = vunpack.c.l.b16 %v1964
    %v2821 = vunpack.c.l.b16 %v1970
    %v2822 = vunpack.c.l.b16 %v1978
    %v2823 = vunpack.c.l.b16 %v1984
    %v2824 = vunpack.c.l.b16 %v1992
    %v2825 = vunpack.c.l.b16 %v1998
    %v2826 = vunpack.c.l.b16 %v2006
    %v2827 = vunpack.c.l.b16 %v2012
    %v2828 = vunpack.c.l.b16 %v2020
    %v2829 = vunpack.c.l.b16 %v2026
    %v2830 = vunpack.c.l.b16 %v2034
    %v2831 = vunpack.c.l.b16 %v2040
    %v2832 = vunpack.c.l.b16 %v2048
    %v2833 = vunpack.c.l.b16 %v2054
    %v2834 = vunpack.c.l.b16 %v2062
    %v2835 = vunpack.c.l.b16 %v2068
    %v2836 = vunpack.c.l.b16 %v2076
    %v2837 = vunpack.c.l.b16 %v2082
    %v2838 = vunpack.c.l.b16 %v2090
    %v2839 = vunpack.c.l.b16 %v2096
    %v2840 = vunpack.c.l.b16 %v2104
    %v2841 = vpack.c.b16 %v2810, %v2809
    %v2842 = vpack.c.b16 %v2812, %v2811
    %v2843 = vpack.c.b16 %v2814, %v2813
    %v2844 = vpack.c.b16 %v2816, %v2815
    %v2845 = vpack.c.b16 %v2818, %v2817
    %v2846 = vpack.c.b16 %v2820, %v2819
    %v2847 = vpack.c.b16 %v2822, %v2821
    %v2848 = vpack.c.b16 %v2824, %v2823
    %v2849 = vpack.c.b16 %v2826, %v2825
    %v2850 = vpack.c.b16 %v2828, %v2827
    %v2851 = vpack.c.b16 %v2830, %v2829
    %v2852 = vpack.c.b16 %v2832, %v2831
    %v2853 = vpack.c.b16 %v2834, %v2833
    %v2854 = vpack.c.b16 %v2836, %v2835
    %v2855 = vpack.c.b16 %v2838, %v2837
    %v2856 = vpack.c.b16 %v2840, %v2839
    %2857 = vrot.lane.b32.xlu0 %v2841, 32
    %v2858 = vpop.permute.xlu0 %2857
    %2859 = vrot.lane.b32.xlu0 %v2842, 32
    %v2860 = vpop.permute.xlu0 %2859
    %2861 = vrot.lane.b32.xlu0 %v2843, 32
    %v2862 = vpop.permute.xlu0 %2861
    %2863 = vrot.lane.b32.xlu0 %v2844, 32
    %v2864 = vpop.permute.xlu0 %2863
    %2865 = vrot.lane.b32.xlu0 %v2845, 32
    %v2866 = vpop.permute.xlu0 %2865
    %2867 = vrot.lane.b32.xlu0 %v2846, 32
    %v2868 = vpop.permute.xlu0 %2867
    %2869 = vrot.lane.b32.xlu0 %v2847, 32
    %v2870 = vpop.permute.xlu0 %2869
    %2871 = vrot.lane.b32.xlu0 %v2848, 32
    %v2872 = vpop.permute.xlu0 %2871
    %2873 = vrot.lane.b32.xlu0 %v2849, 32
    %v2874 = vpop.permute.xlu0 %2873
    %2875 = vrot.lane.b32.xlu0 %v2850, 32
    %v2876 = vpop.permute.xlu0 %2875
    %2877 = vrot.lane.b32.xlu0 %v2851, 32
    %v2878 = vpop.permute.xlu0 %2877
    %2879 = vrot.lane.b32.xlu0 %v2852, 32
    %v2880 = vpop.permute.xlu0 %2879
    %2881 = vrot.lane.b32.xlu0 %v2853, 32
    %v2882 = vpop.permute.xlu0 %2881
    %2883 = vrot.lane.b32.xlu0 %v2854, 32
    %v2884 = vpop.permute.xlu0 %2883
    %2885 = vrot.lane.b32.xlu0 %v2855, 32
    %v2886 = vpop.permute.xlu0 %2885
    %2887 = vrot.lane.b32.xlu0 %v2856, 32
    %v2888 = vpop.permute.xlu0 %2887
    %vm2889 = vcmask 31744
    %v2892 = vsel %vm2889, %v2137, %v2234
    %v2895 = vsel %vm2889, %v2138, %v2236
    %v2898 = vsel %vm2889, %v2139, %v2238
    %v2901 = vsel %vm2889, %v2140, %v2240
    %v2904 = vsel %vm2889, %v2141, %v2242
    %v2907 = vsel %vm2889, %v2142, %v2244
    %v2910 = vsel %vm2889, %v2143, %v2246
    %v2913 = vsel %vm2889, %v2144, %v2248
    %v2916 = vsel %vm2889, %v2145, %v2250
    %v2919 = vsel %vm2889, %v2146, %v2252
    %v2922 = vsel %vm2889, %v2147, %v2254
    %v2925 = vsel %vm2889, %v2148, %v2256
    %v2928 = vsel %vm2889, %v2149, %v2258
    %v2931 = vsel %vm2889, %v2150, %v2260
    %v2934 = vsel %vm2889, %v2151, %v2262
    %v2937 = vsel %vm2889, %v2152, %v2264
    %vm2938 = vcmask 64512
    %v2940 = vsel %vm2938, %v2892, %v2314
    %v2942 = vsel %vm2938, %v2895, %v2316
    %v2944 = vsel %vm2938, %v2898, %v2318
    %v2946 = vsel %vm2938, %v2901, %v2320
    %v2948 = vsel %vm2938, %v2904, %v2322
    %v2950 = vsel %vm2938, %v2907, %v2324
    %v2952 = vsel %vm2938, %v2910, %v2326
    %v2954 = vsel %vm2938, %v2913, %v2328
    %v2956 = vsel %vm2938, %v2916, %v2330
    %v2958 = vsel %vm2938, %v2919, %v2332
    %v2960 = vsel %vm2938, %v2922, %v2334
    %v2962 = vsel %vm2938, %v2925, %v2336
    %v2964 = vsel %vm2938, %v2928, %v2338
    %v2966 = vsel %vm2938, %v2931, %v2340
    %v2968 = vsel %vm2938, %v2934, %v2342
    %v2970 = vsel %vm2938, %v2937, %v2344
    %vm2971 = vcmask 97280
    %v2973 = vsel %vm2971, %v2940, %v2394
    %v2975 = vsel %vm2971, %v2942, %v2396
    %v2977 = vsel %vm2971, %v2944, %v2398
    %v2979 = vsel %vm2971, %v2946, %v2400
    %v2981 = vsel %vm2971, %v2948, %v2402
    %v2983 = vsel %vm2971, %v2950, %v2404
    %v2985 = vsel %vm2971, %v2952, %v2406
    %v2987 = vsel %vm2971, %v2954, %v2408
    %v2989 = vsel %vm2971, %v2956, %v2410
    %v2991 = vsel %vm2971, %v2958, %v2412
    %v2993 = vsel %vm2971, %v2960, %v2414
    %v2995 = vsel %vm2971, %v2962, %v2416
    %v2997 = vsel %vm2971, %v2964, %v2418
    %v2999 = vsel %vm2971, %v2966, %v2420
    %v3001 = vsel %vm2971, %v2968, %v2422
    %v3003 = vsel %vm2971, %v2970, %v2424
    %vm3004 = vcmask 130048
    %v3006 = vsel %vm3004, %v2973, %v2506
    %v3008 = vsel %vm3004, %v2975, %v2508
    %v3010 = vsel %vm3004, %v2977, %v2510
    %v3012 = vsel %vm3004, %v2979, %v2512
    %v3014 = vsel %vm3004, %v2981, %v2514
    %v3016 = vsel %vm3004, %v2983, %v2516
    %v3018 = vsel %vm3004, %v2985, %v2518
    %v3020 = vsel %vm3004, %v2987, %v2520
    %v3022 = vsel %vm3004, %v2989, %v2522
    %v3024 = vsel %vm3004, %v2991, %v2524
    %v3026 = vsel %vm3004, %v2993, %v2526
    %v3028 = vsel %vm3004, %v2995, %v2528
    %v3030 = vsel %vm3004, %v2997, %v2530
    %v3032 = vsel %vm3004, %v2999, %v2532
    %v3034 = vsel %vm3004, %v3001, %v2534
    %v3036 = vsel %vm3004, %v3003, %v2536
    %vm3037 = vcmask 162816
    %v3039 = vsel %vm3037, %v3006, %v2586
    %v3041 = vsel %vm3037, %v3008, %v2588
    %v3043 = vsel %vm3037, %v3010, %v2590
    %v3045 = vsel %vm3037, %v3012, %v2592
    %v3047 = vsel %vm3037, %v3014, %v2594
    %v3049 = vsel %vm3037, %v3016, %v2596
    %v3051 = vsel %vm3037, %v3018, %v2598
    %v3053 = vsel %vm3037, %v3020, %v2600
    %v3055 = vsel %vm3037, %v3022, %v2602
    %v3057 = vsel %vm3037, %v3024, %v2604
    %v3059 = vsel %vm3037, %v3026, %v2606
    %v3061 = vsel %vm3037, %v3028, %v2608
    %v3063 = vsel %vm3037, %v3030, %v2610
    %v3065 = vsel %vm3037, %v3032, %v2612
    %v3067 = vsel %vm3037, %v3034, %v2614
    %v3069 = vsel %vm3037, %v3036, %v2616
    %vm3070 = vcmask 195584
    %v3072 = vsel %vm3070, %v3039, %v2666
    %v3074 = vsel %vm3070, %v3041, %v2668
    %v3076 = vsel %vm3070, %v3043, %v2670
    %v3078 = vsel %vm3070, %v3045, %v2672
    %v3080 = vsel %vm3070, %v3047, %v2674
    %v3082 = vsel %vm3070, %v3049, %v2676
    %v3084 = vsel %vm3070, %v3051, %v2678
    %v3086 = vsel %vm3070, %v3053, %v2680
    %v3088 = vsel %vm3070, %v3055, %v2682
    %v3090 = vsel %vm3070, %v3057, %v2684
    %v3092 = vsel %vm3070, %v3059, %v2686
    %v3094 = vsel %vm3070, %v3061, %v2688
    %v3096 = vsel %vm3070, %v3063, %v2690
    %v3098 = vsel %vm3070, %v3065, %v2692
    %v3100 = vsel %vm3070, %v3067, %v2694
    %v3102 = vsel %vm3070, %v3069, %v2696
    %vm3103 = vcmask 228352
    %v3105 = vsel %vm3103, %v3072, %v2778
    %v3107 = vsel %vm3103, %v3074, %v2780
    %v3109 = vsel %vm3103, %v3076, %v2782
    %v3111 = vsel %vm3103, %v3078, %v2784
    %v3113 = vsel %vm3103, %v3080, %v2786
    %v3115 = vsel %vm3103, %v3082, %v2788
    %v3117 = vsel %vm3103, %v3084, %v2790
    %v3119 = vsel %vm3103, %v3086, %v2792
    %v3121 = vsel %vm3103, %v3088, %v2794
    %v3123 = vsel %vm3103, %v3090, %v2796
    %v3125 = vsel %vm3103, %v3092, %v2798
    %v3127 = vsel %vm3103, %v3094, %v2800
    %v3129 = vsel %vm3103, %v3096, %v2802
    %v3131 = vsel %vm3103, %v3098, %v2804
    %v3133 = vsel %vm3103, %v3100, %v2806
    %v3135 = vsel %vm3103, %v3102, %v2808
    %vm3136 = vcmask 261120
    %v3138 = vsel %vm3136, %v3105, %v2858
    %v3140 = vsel %vm3136, %v3107, %v2860
    %v3142 = vsel %vm3136, %v3109, %v2862
    %v3144 = vsel %vm3136, %v3111, %v2864
    %v3146 = vsel %vm3136, %v3113, %v2866
    %v3148 = vsel %vm3136, %v3115, %v2868
    %v3150 = vsel %vm3136, %v3117, %v2870
    %v3152 = vsel %vm3136, %v3119, %v2872
    %v3154 = vsel %vm3136, %v3121, %v2874
    %v3156 = vsel %vm3136, %v3123, %v2876
    %v3158 = vsel %vm3136, %v3125, %v2878
    %v3160 = vsel %vm3136, %v3127, %v2880
    %v3162 = vsel %vm3136, %v3129, %v2882
    %v3164 = vsel %vm3136, %v3131, %v2884
    %v3166 = vsel %vm3136, %v3133, %v2886
    %v3168 = vsel %vm3136, %v3135, %v2888
    %v3169 = vld [vmem:[%s1] sm:$0xf]
    %v3170 = vld [vmem:[%s1 + $0x4] sm:$0xf]
    %v3171 = vld [vmem:[%s1 + $0x8] sm:$0xf]
    %v3172 = vld [vmem:[%s1 + $0xc] sm:$0xf]
    %v3173 = vld [vmem:[%s1 + $0x10] sm:$0x3]
    %v3174 = vld [vmem:[%s2] sm:$0x1]
    %v3176 = vperm.slane %v3174, 0
    %v3183 = vunpack.c.l.b16 %v3169
    %v3184 = vunpack.c.l.b16 %v3170
    %v3185 = vunpack.c.l.b16 %v3171
    %v3186 = vunpack.c.l.b16 %v3172
    %v3187 = vunpack.c.l.b16 %v3173
    %v3188 = vpack.c.b16 %v3184, %v3183
    %v3189 = vpack.c.b16 %v3186, %v3185
    %v3190 = vpack.c.b16 %v3187, %v3187
    %vm3193 = vcmask 293888
    %v3194 = vsel %vm3193, %v3138, 0
    %v3196 = vsel %vm3193, %v3140, 0
    %v3198 = vsel %vm3193, %v3142, 0
    %v3200 = vsel %vm3193, %v3144, 0
    %v3202 = vsel %vm3193, %v3146, 0
    %v3204 = vsel %vm3193, %v3148, 0
    %v3206 = vsel %vm3193, %v3150, 0
    %v3208 = vsel %vm3193, %v3152, 0
    %v3210 = vsel %vm3193, %v3154, 0
    %v3212 = vsel %vm3193, %v3156, 0
    %v3214 = vsel %vm3193, %v3158, 0
    %v3216 = vsel %vm3193, %v3160, 0
    %v3218 = vsel %vm3193, %v3162, 0
    %v3220 = vsel %vm3193, %v3164, 0
    %v3222 = vsel %vm3193, %v3166, 0
    %v3224 = vsel %vm3193, %v3168, 0
    %vm3226 = vcmask 1041408
    %v3228 = vsel %vm3226, %v3190, 0
    %3230 = vmatpush.bf16.msra.mxu0 0
    %3231 = vmatpush.bf16.msra.mxu0 0
    %3232 = vmatpush.bf16.msra.mxu0 0
    %3233 = vmatpush.bf16.msra.mxu0 0
    %3234 = vmatpush.bf16.msra.mxu0 0
    %3235 = vmatpush.bf16.msra.mxu0 %v3228
    %3236 = vmatpush.bf16.msra.mxu0 %v3189
    %3237 = vmatpush.bf16.msra.mxu0 %v3188
    %3238 = vmatmul.bf16.gmra.mxu0 %v3194
    %v3239 = vpop.f32.mrf.mxu0
    %v3240 = vadd.f32 %v3176, %v3239
    %v3241 = vpop.f32.mrf.mxu0
    %v3242 = vadd.f32 %v3176, %v3241
    %3243 = vmatmul.bf16.gmra.mxu0 %v3196
    %v3244 = vpop.f32.mrf.mxu0
    %v3245 = vadd.f32 %v3176, %v3244
    %v3246 = vpop.f32.mrf.mxu0
    %v3247 = vadd.f32 %v3176, %v3246
    %3248 = vmatmul.bf16.gmra.mxu0 %v3198
    %v3249 = vpop.f32.mrf.mxu0
    %v3250 = vadd.f32 %v3176, %v3249
    %v3251 = vpop.f32.mrf.mxu0
    %v3252 = vadd.f32 %v3176, %v3251
    %3253 = vmatmul.bf16.gmra.mxu0 %v3200
    %v3254 = vpop.f32.mrf.mxu0
    %v3255 = vadd.f32 %v3176, %v3254
    %v3256 = vpop.f32.mrf.mxu0
    %v3257 = vadd.f32 %v3176, %v3256
    %3258 = vmatmul.bf16.gmra.mxu0 %v3202
    %v3259 = vpop.f32.mrf.mxu0
    %v3260 = vadd.f32 %v3176, %v3259
    %v3261 = vpop.f32.mrf.mxu0
    %v3262 = vadd.f32 %v3176, %v3261
    %3263 = vmatmul.bf16.gmra.mxu0 %v3204
    %v3264 = vpop.f32.mrf.mxu0
    %v3265 = vadd.f32 %v3176, %v3264
    %v3266 = vpop.f32.mrf.mxu0
    %v3267 = vadd.f32 %v3176, %v3266
    %3268 = vmatmul.bf16.gmra.mxu0 %v3206
    %v3269 = vpop.f32.mrf.mxu0
    %v3270 = vadd.f32 %v3176, %v3269
    %v3271 = vpop.f32.mrf.mxu0
    %v3272 = vadd.f32 %v3176, %v3271
    %3273 = vmatmul.bf16.gmra.mxu0 %v3208
    %v3274 = vpop.f32.mrf.mxu0
    %v3275 = vadd.f32 %v3176, %v3274
    %v3276 = vpop.f32.mrf.mxu0
    %v3277 = vadd.f32 %v3176, %v3276
    %3278 = vmatmul.bf16.gmra.mxu0 %v3210
    %v3279 = vpop.f32.mrf.mxu0
    %v3280 = vadd.f32 %v3176, %v3279
    %v3281 = vpop.f32.mrf.mxu0
    %v3282 = vadd.f32 %v3176, %v3281
    %3283 = vmatmul.bf16.gmra.mxu0 %v3212
    %v3284 = vpop.f32.mrf.mxu0
    %v3285 = vadd.f32 %v3176, %v3284
    %v3286 = vpop.f32.mrf.mxu0
    %v3287 = vadd.f32 %v3176, %v3286
    %3288 = vmatmul.bf16.gmra.mxu0 %v3214
    %v3289 = vpop.f32.mrf.mxu0
    %v3290 = vadd.f32 %v3176, %v3289
    %v3291 = vpop.f32.mrf.mxu0
    %v3292 = vadd.f32 %v3176, %v3291
    %3293 = vmatmul.bf16.gmra.mxu0 %v3216
    %v3294 = vpop.f32.mrf.mxu0
    %v3295 = vadd.f32 %v3176, %v3294
    %v3296 = vpop.f32.mrf.mxu0
    %v3297 = vadd.f32 %v3176, %v3296
    %3298 = vmatmul.bf16.gmra.mxu0 %v3218
    %v3299 = vpop.f32.mrf.mxu0
    %v3300 = vadd.f32 %v3176, %v3299
    %v3301 = vpop.f32.mrf.mxu0
    %v3302 = vadd.f32 %v3176, %v3301
    %3303 = vmatmul.bf16.gmra.mxu0 %v3220
    %v3304 = vpop.f32.mrf.mxu0
    %v3305 = vadd.f32 %v3176, %v3304
    %v3306 = vpop.f32.mrf.mxu0
    %v3307 = vadd.f32 %v3176, %v3306
    %3308 = vmatmul.bf16.gmra.mxu0 %v3222
    %v3309 = vpop.f32.mrf.mxu0
    %v3310 = vadd.f32 %v3176, %v3309
    %v3311 = vpop.f32.mrf.mxu0
    %v3312 = vadd.f32 %v3176, %v3311
    %3313 = vmatmul.bf16.gmra.mxu0 %v3224
    %v3314 = vpop.f32.mrf.mxu0
    %v3315 = vadd.f32 %v3176, %v3314
    %v3316 = vpop.f32.mrf.mxu0
    %v3317 = vadd.f32 %v3176, %v3316
    %3318 = vdwg.mxu0
    %vm3319 = vcmp.gt.f32.partialorder %v3240, 0.0
    %vm3320 = vcmp.gt.f32.partialorder %v3242, 0.0
    %vm3321 = vcmp.gt.f32.partialorder %v3245, 0.0
    %vm3322 = vcmp.gt.f32.partialorder %v3247, 0.0
    %vm3323 = vcmp.gt.f32.partialorder %v3250, 0.0
    %vm3324 = vcmp.gt.f32.partialorder %v3252, 0.0
    %vm3325 = vcmp.gt.f32.partialorder %v3255, 0.0
    %vm3326 = vcmp.gt.f32.partialorder %v3257, 0.0
    %vm3327 = vcmp.gt.f32.partialorder %v3260, 0.0
    %vm3328 = vcmp.gt.f32.partialorder %v3262, 0.0
    %vm3329 = vcmp.gt.f32.partialorder %v3265, 0.0
    %vm3330 = vcmp.gt.f32.partialorder %v3267, 0.0
    %vm3331 = vcmp.gt.f32.partialorder %v3270, 0.0
    %vm3332 = vcmp.gt.f32.partialorder %v3272, 0.0
    %vm3333 = vcmp.gt.f32.partialorder %v3275, 0.0
    %vm3334 = vcmp.gt.f32.partialorder %v3277, 0.0
    %vm3335 = vcmp.gt.f32.partialorder %v3280, 0.0
    %vm3336 = vcmp.gt.f32.partialorder %v3282, 0.0
    %vm3337 = vcmp.gt.f32.partialorder %v3285, 0.0
    %vm3338 = vcmp.gt.f32.partialorder %v3287, 0.0
    %vm3339 = vcmp.gt.f32.partialorder %v3290, 0.0
    %vm3340 = vcmp.gt.f32.partialorder %v3292, 0.0
    %vm3341 = vcmp.gt.f32.partialorder %v3295, 0.0
    %vm3342 = vcmp.gt.f32.partialorder %v3297, 0.0
    %vm3343 = vcmp.gt.f32.partialorder %v3300, 0.0
    %vm3344 = vcmp.gt.f32.partialorder %v3302, 0.0
    %vm3345 = vcmp.gt.f32.partialorder %v3305, 0.0
    %vm3346 = vcmp.gt.f32.partialorder %v3307, 0.0
    %vm3347 = vcmp.gt.f32.partialorder %v3310, 0.0
    %vm3348 = vcmp.gt.f32.partialorder %v3312, 0.0
    %vm3349 = vcmp.gt.f32.partialorder %v3315, 0.0
    %vm3350 = vcmp.gt.f32.partialorder %v3317, 0.0
    %v3351 = vmul.f32 %v3240, 0.2
    %v3352 = vmul.f32 %v3242, 0.2
    %v3353 = vmul.f32 %v3245, 0.2
    %v3354 = vmul.f32 %v3247, 0.2
    %v3355 = vmul.f32 %v3250, 0.2
    %v3356 = vmul.f32 %v3252, 0.2
    %v3357 = vmul.f32 %v3255, 0.2
    %v3358 = vmul.f32 %v3257, 0.2
    %v3359 = vmul.f32 %v3260, 0.2
    %v3360 = vmul.f32 %v3262, 0.2
    %v3361 = vmul.f32 %v3265, 0.2
    %v3362 = vmul.f32 %v3267, 0.2
    %v3363 = vmul.f32 %v3270, 0.2
    %v3364 = vmul.f32 %v3272, 0.2
    %v3365 = vmul.f32 %v3275, 0.2
    %v3366 = vmul.f32 %v3277, 0.2
    %v3367 = vmul.f32 %v3280, 0.2
    %v3368 = vmul.f32 %v3282, 0.2
    %v3369 = vmul.f32 %v3285, 0.2
    %v3370 = vmul.f32 %v3287, 0.2
    %v3371 = vmul.f32 %v3290, 0.2
    %v3372 = vmul.f32 %v3292, 0.2
    %v3373 = vmul.f32 %v3295, 0.2
    %v3374 = vmul.f32 %v3297, 0.2
    %v3375 = vmul.f32 %v3300, 0.2
    %v3376 = vmul.f32 %v3302, 0.2
    %v3377 = vmul.f32 %v3305, 0.2
    %v3378 = vmul.f32 %v3307, 0.2
    %v3379 = vmul.f32 %v3310, 0.2
    %v3380 = vmul.f32 %v3312, 0.2
    %v3381 = vmul.f32 %v3315, 0.2
    %v3382 = vmul.f32 %v3317, 0.2
    %v3383 = vsel %vm3319, %v3240, %v3351
    %v3384 = vsel %vm3320, %v3242, %v3352
    %v3385 = vsel %vm3321, %v3245, %v3353
    %v3386 = vsel %vm3322, %v3247, %v3354
    %v3387 = vsel %vm3323, %v3250, %v3355
    %v3388 = vsel %vm3324, %v3252, %v3356
    %v3389 = vsel %vm3325, %v3255, %v3357
    %v3390 = vsel %vm3326, %v3257, %v3358
    %v3391 = vsel %vm3327, %v3260, %v3359
    %v3392 = vsel %vm3328, %v3262, %v3360
    %v3393 = vsel %vm3329, %v3265, %v3361
    %v3394 = vsel %vm3330, %v3267, %v3362
    %v3395 = vsel %vm3331, %v3270, %v3363
    %v3396 = vsel %vm3332, %v3272, %v3364
    %v3397 = vsel %vm3333, %v3275, %v3365
    %v3398 = vsel %vm3334, %v3277, %v3366
    %v3399 = vsel %vm3335, %v3280, %v3367
    %v3400 = vsel %vm3336, %v3282, %v3368
    %v3401 = vsel %vm3337, %v3285, %v3369
    %v3402 = vsel %vm3338, %v3287, %v3370
    %v3403 = vsel %vm3339, %v3290, %v3371
    %v3404 = vsel %vm3340, %v3292, %v3372
    %v3405 = vsel %vm3341, %v3295, %v3373
    %v3406 = vsel %vm3342, %v3297, %v3374
    %v3407 = vsel %vm3343, %v3300, %v3375
    %v3408 = vsel %vm3344, %v3302, %v3376
    %v3409 = vsel %vm3345, %v3305, %v3377
    %v3410 = vsel %vm3346, %v3307, %v3378
    %v3411 = vsel %vm3347, %v3310, %v3379
    %v3412 = vsel %vm3348, %v3312, %v3380
    %v3413 = vsel %vm3349, %v3315, %v3381
    %v3414 = vsel %vm3350, %v3317, %v3382
    %v3415 = vpack.c.bf16 %v3383, %v3383
    %v3416 = vpack.c.bf16 %v3384, %v3384
    %v3417 = vpack.c.bf16 %v3385, %v3385
    %v3418 = vpack.c.bf16 %v3386, %v3386
    %v3419 = vpack.c.bf16 %v3387, %v3387
    %v3420 = vpack.c.bf16 %v3388, %v3388
    %v3421 = vpack.c.bf16 %v3389, %v3389
    %v3422 = vpack.c.bf16 %v3390, %v3390
    %v3423 = vpack.c.bf16 %v3391, %v3391
    %v3424 = vpack.c.bf16 %v3392, %v3392
    %v3425 = vpack.c.bf16 %v3393, %v3393
    %v3426 = vpack.c.bf16 %v3394, %v3394
    %v3427 = vpack.c.bf16 %v3395, %v3395
    %v3428 = vpack.c.bf16 %v3396, %v3396
    %v3429 = vpack.c.bf16 %v3397, %v3397
    %v3430 = vpack.c.bf16 %v3398, %v3398
    %v3431 = vpack.c.bf16 %v3399, %v3399
    %v3432 = vpack.c.bf16 %v3400, %v3400
    %v3433 = vpack.c.bf16 %v3401, %v3401
    %v3434 = vpack.c.bf16 %v3402, %v3402
    %v3435 = vpack.c.bf16 %v3403, %v3403
    %v3436 = vpack.c.bf16 %v3404, %v3404
    %v3437 = vpack.c.bf16 %v3405, %v3405
    %v3438 = vpack.c.bf16 %v3406, %v3406
    %v3439 = vpack.c.bf16 %v3407, %v3407
    %v3440 = vpack.c.bf16 %v3408, %v3408
    %v3441 = vpack.c.bf16 %v3409, %v3409
    %v3442 = vpack.c.bf16 %v3410, %v3410
    %v3443 = vpack.c.bf16 %v3411, %v3411
    %v3444 = vpack.c.bf16 %v3412, %v3412
    %v3445 = vpack.c.bf16 %v3413, %v3413
    %v3446 = vpack.c.bf16 %v3414, %v3414
    %s3447 = scalar_lea.vmem [#allocation3], 16
    %3448 = vst.msk [vmem:[%s3447 + $0x4] sm:$0xf] %vm22, %v3415
    %3449 = vst.msk [vmem:[%s3447 + $0x8] sm:$0xf] %vm22, %v3416
    %3450 = vst.msk [vmem:[%s3447 + $0x14] sm:$0xf] %vm22, %v3417
    %3451 = vst.msk [vmem:[%s3447 + $0x18] sm:$0xf] %vm22, %v3418
    %3452 = vst.msk [vmem:[%s3447 + $0x24] sm:$0xf] %vm22, %v3419
    %3453 = vst.msk [vmem:[%s3447 + $0x28] sm:$0xf] %vm22, %v3420
    %3454 = vst.msk [vmem:[%s3447 + $0x34] sm:$0xf] %vm22, %v3421
    %3455 = vst.msk [vmem:[%s3447 + $0x38] sm:$0xf] %vm22, %v3422
    %3456 = vst.msk [vmem:[%s3447 + $0x44] sm:$0xf] %vm22, %v3423
    %3457 = vst.msk [vmem:[%s3447 + $0x48] sm:$0xf] %vm22, %v3424
    %3458 = vst.msk [vmem:[%s3447 + $0x54] sm:$0xf] %vm22, %v3425
    %3459 = vst.msk [vmem:[%s3447 + $0x58] sm:$0xf] %vm22, %v3426
    %3460 = vst.msk [vmem:[%s3447 + $0x64] sm:$0xf] %vm22, %v3427
    %3461 = vst.msk [vmem:[%s3447 + $0x68] sm:$0xf] %vm22, %v3428
    %3462 = vst.msk [vmem:[%s3447 + $0x74] sm:$0xf] %vm22, %v3429
    %3463 = vst.msk [vmem:[%s3447 + $0x78] sm:$0xf] %vm22, %v3430
    %3464 = vst.msk [vmem:[%s3447 + $0x84] sm:$0xf] %vm22, %v3431
    %3465 = vst.msk [vmem:[%s3447 + $0x88] sm:$0xf] %vm22, %v3432
    %3466 = vst.msk [vmem:[%s3447 + $0x94] sm:$0xf] %vm22, %v3433
    %3467 = vst.msk [vmem:[%s3447 + $0x98] sm:$0xf] %vm22, %v3434
    %3468 = vst.msk [vmem:[%s3447 + $0xa4] sm:$0xf] %vm22, %v3435
    %3469 = vst.msk [vmem:[%s3447 + $0xa8] sm:$0xf] %vm22, %v3436
    %3470 = vst.msk [vmem:[%s3447 + $0xb4] sm:$0xf] %vm22, %v3437
    %3471 = vst.msk [vmem:[%s3447 + $0xb8] sm:$0xf] %vm22, %v3438
    %3472 = vst.msk [vmem:[%s3447 + $0xc4] sm:$0xf] %vm22, %v3439
    %3473 = vst.msk [vmem:[%s3447 + $0xc8] sm:$0xf] %vm22, %v3440
    %3474 = vst.msk [vmem:[%s3447 + $0xd4] sm:$0xf] %vm22, %v3441
    %3475 = vst.msk [vmem:[%s3447 + $0xd8] sm:$0xf] %vm22, %v3442
    %3476 = vst.msk [vmem:[%s3447 + $0xe4] sm:$0xf] %vm22, %v3443
    %3477 = vst.msk [vmem:[%s3447 + $0xe8] sm:$0xf] %vm22, %v3444
    %3478 = vst.msk [vmem:[%s3447 + $0xf4] sm:$0xf] %vm22, %v3445
    %3479 = vst.msk [vmem:[%s3447 + $0xf8] sm:$0xf] %vm22, %v3446
    %v3480 = vld [vmem:[#allocation3] sm:$0x8]
    %v3481 = vld [vmem:[#allocation3 + $0x4] sm:$0xf]
    %v3482 = vld [vmem:[#allocation3 + $0x8] sm:$0xf]
    %v3483 = vld [vmem:[#allocation3 + $0x10] sm:$0x8]
    %v3484 = vld [vmem:[#allocation3 + $0x14] sm:$0xf]
    %v3485 = vld [vmem:[#allocation3 + $0x18] sm:$0xf]
    %v3486 = vld [vmem:[#allocation3 + $0x20] sm:$0x8]
    %v3487 = vld [vmem:[#allocation3 + $0x24] sm:$0xf]
    %v3488 = vld [vmem:[#allocation3 + $0x28] sm:$0xf]
    %v3489 = vld [vmem:[#allocation3 + $0x30] sm:$0x8]
    %v3490 = vld [vmem:[#allocation3 + $0x34] sm:$0xf]
    %v3491 = vld [vmem:[#allocation3 + $0x38] sm:$0xf]
    %v3492 = vld [vmem:[#allocation3 + $0x40] sm:$0x8]
    %v3493 = vld [vmem:[#allocation3 + $0x44] sm:$0xf]
    %v3494 = vld [vmem:[#allocation3 + $0x48] sm:$0xf]
    %v3495 = vld [vmem:[#allocation3 + $0x50] sm:$0x8]
    %v3496 = vld [vmem:[#allocation3 + $0x54] sm:$0xf]
    %v3497 = vld [vmem:[#allocation3 + $0x58] sm:$0xf]
    %v3498 = vld [vmem:[#allocation3 + $0x60] sm:$0x8]
    %v3499 = vld [vmem:[#allocation3 + $0x64] sm:$0xf]
    %v3500 = vld [vmem:[#allocation3 + $0x68] sm:$0xf]
    %v3501 = vld [vmem:[#allocation3 + $0x70] sm:$0x8]
    %v3502 = vld [vmem:[#allocation3 + $0x74] sm:$0xf]
    %v3503 = vld [vmem:[#allocation3 + $0x78] sm:$0xf]
    %v3504 = vld [vmem:[#allocation3 + $0x80] sm:$0x8]
    %v3505 = vld [vmem:[#allocation3 + $0x84] sm:$0xf]
    %v3506 = vld [vmem:[#allocation3 + $0x88] sm:$0xf]
    %v3507 = vld [vmem:[#allocation3 + $0x90] sm:$0x8]
    %v3508 = vld [vmem:[#allocation3 + $0x94] sm:$0xf]
    %v3509 = vld [vmem:[#allocation3 + $0x98] sm:$0xf]
    %v3510 = vld [vmem:[#allocation3 + $0xa0] sm:$0x8]
    %v3511 = vld [vmem:[#allocation3 + $0xa4] sm:$0xf]
    %v3512 = vld [vmem:[#allocation3 + $0xa8] sm:$0xf]
    %v3513 = vld [vmem:[#allocation3 + $0xb0] sm:$0x8]
    %v3514 = vld [vmem:[#allocation3 + $0xb4] sm:$0xf]
    %v3515 = vld [vmem:[#allocation3 + $0xb8] sm:$0xf]
    %v3516 = vld [vmem:[#allocation3 + $0xc0] sm:$0x8]
    %v3517 = vld [vmem:[#allocation3 + $0xc4] sm:$0xf]
    %v3518 = vld [vmem:[#allocation3 + $0xc8] sm:$0xf]
    %v3519 = vld [vmem:[#allocation3 + $0xd0] sm:$0x8]
    %v3520 = vld [vmem:[#allocation3 + $0xd4] sm:$0xf]
    %v3521 = vld [vmem:[#allocation3 + $0xd8] sm:$0xf]
    %v3522 = vld [vmem:[#allocation3 + $0xe0] sm:$0x8]
    %v3523 = vld [vmem:[#allocation3 + $0xe4] sm:$0xf]
    %v3524 = vld [vmem:[#allocation3 + $0xe8] sm:$0xf]
    %v3525 = vld [vmem:[#allocation3 + $0xf0] sm:$0x8]
    %v3526 = vld [vmem:[#allocation3 + $0xf4] sm:$0xf]
    %v3527 = vld [vmem:[#allocation3 + $0xf8] sm:$0xf]
    %v3529 = vshrl.u32 %v3480, 16
    %v3531 = vrot.slane %v3529, 7
    %v3532 = vrot.slane %v3531, 4
    %v3534 = vshrl.u32 %v3481, 16
    %v3536 = vrot.slane %v3534, 7
    %v3537 = vshll.u32 %v3481, 16
    %v3539 = vor.u32 %v3536, %v3537
    %v3540 = vsel %vm228, %v3532, %v3539
    %v3541 = vrot.slane %v3536, 4
    %v3543 = vshrl.u32 %v3482, 16
    %v3545 = vrot.slane %v3543, 7
    %v3546 = vshll.u32 %v3482, 16
    %v3548 = vor.u32 %v3545, %v3546
    %v3549 = vsel %vm228, %v3541, %v3548
    %v3551 = vshrl.u32 %v3483, 16
    %v3553 = vrot.slane %v3551, 7
    %v3554 = vrot.slane %v3553, 4
    %v3556 = vshrl.u32 %v3484, 16
    %v3558 = vrot.slane %v3556, 7
    %v3559 = vshll.u32 %v3484, 16
    %v3561 = vor.u32 %v3558, %v3559
    %v3562 = vsel %vm228, %v3554, %v3561
    %v3563 = vrot.slane %v3558, 4
    %v3565 = vshrl.u32 %v3485, 16
    %v3567 = vrot.slane %v3565, 7
    %v3568 = vshll.u32 %v3485, 16
    %v3570 = vor.u32 %v3567, %v3568
    %v3571 = vsel %vm228, %v3563, %v3570
    %v3573 = vshrl.u32 %v3486, 16
    %v3575 = vrot.slane %v3573, 7
    %v3576 = vrot.slane %v3575, 4
    %v3578 = vshrl.u32 %v3487, 16
    %v3580 = vrot.slane %v3578, 7
    %v3581 = vshll.u32 %v3487, 16
    %v3583 = vor.u32 %v3580, %v3581
    %v3584 = vsel %vm228, %v3576, %v3583
    %v3585 = vrot.slane %v3580, 4
    %v3587 = vshrl.u32 %v3488, 16
    %v3589 = vrot.slane %v3587, 7
    %v3590 = vshll.u32 %v3488, 16
    %v3592 = vor.u32 %v3589, %v3590
    %v3593 = vsel %vm228, %v3585, %v3592
    %v3595 = vshrl.u32 %v3489, 16
    %v3597 = vrot.slane %v3595, 7
    %v3598 = vrot.slane %v3597, 4
    %v3600 = vshrl.u32 %v3490, 16
    %v3602 = vrot.slane %v3600, 7
    %v3603 = vshll.u32 %v3490, 16
    %v3605 = vor.u32 %v3602, %v3603
    %v3606 = vsel %vm228, %v3598, %v3605
    %v3607 = vrot.slane %v3602, 4
    %v3609 = vshrl.u32 %v3491, 16
    %v3611 = vrot.slane %v3609, 7
    %v3612 = vshll.u32 %v3491, 16
    %v3614 = vor.u32 %v3611, %v3612
    %v3615 = vsel %vm228, %v3607, %v3614
    %v3617 = vshrl.u32 %v3492, 16
    %v3619 = vrot.slane %v3617, 7
    %v3620 = vrot.slane %v3619, 4
    %v3622 = vshrl.u32 %v3493, 16
    %v3624 = vrot.slane %v3622, 7
    %v3625 = vshll.u32 %v3493, 16
    %v3627 = vor.u32 %v3624, %v3625
    %v3628 = vsel %vm228, %v3620, %v3627
    %v3629 = vrot.slane %v3624, 4
    %v3631 = vshrl.u32 %v3494, 16
    %v3633 = vrot.slane %v3631, 7
    %v3634 = vshll.u32 %v3494, 16
    %v3636 = vor.u32 %v3633, %v3634
    %v3637 = vsel %vm228, %v3629, %v3636
    %v3639 = vshrl.u32 %v3495, 16
    %v3641 = vrot.slane %v3639, 7
    %v3642 = vrot.slane %v3641, 4
    %v3644 = vshrl.u32 %v3496, 16
    %v3646 = vrot.slane %v3644, 7
    %v3647 = vshll.u32 %v3496, 16
    %v3649 = vor.u32 %v3646, %v3647
    %v3650 = vsel %vm228, %v3642, %v3649
    %v3651 = vrot.slane %v3646, 4
    %v3653 = vshrl.u32 %v3497, 16
    %v3655 = vrot.slane %v3653, 7
    %v3656 = vshll.u32 %v3497, 16
    %v3658 = vor.u32 %v3655, %v3656
    %v3659 = vsel %vm228, %v3651, %v3658
    %v3661 = vshrl.u32 %v3498, 16
    %v3663 = vrot.slane %v3661, 7
    %v3664 = vrot.slane %v3663, 4
    %v3666 = vshrl.u32 %v3499, 16
    %v3668 = vrot.slane %v3666, 7
    %v3669 = vshll.u32 %v3499, 16
    %v3671 = vor.u32 %v3668, %v3669
    %v3672 = vsel %vm228, %v3664, %v3671
    %v3673 = vrot.slane %v3668, 4
    %v3675 = vshrl.u32 %v3500, 16
    %v3677 = vrot.slane %v3675, 7
    %v3678 = vshll.u32 %v3500, 16
    %v3680 = vor.u32 %v3677, %v3678
    %v3681 = vsel %vm228, %v3673, %v3680
    %v3683 = vshrl.u32 %v3501, 16
    %v3685 = vrot.slane %v3683, 7
    %v3686 = vrot.slane %v3685, 4
    %v3688 = vshrl.u32 %v3502, 16
    %v3690 = vrot.slane %v3688, 7
    %v3691 = vshll.u32 %v3502, 16
    %v3693 = vor.u32 %v3690, %v3691
    %v3694 = vsel %vm228, %v3686, %v3693
    %v3695 = vrot.slane %v3690, 4
    %v3697 = vshrl.u32 %v3503, 16
    %v3699 = vrot.slane %v3697, 7
    %v3700 = vshll.u32 %v3503, 16
    %v3702 = vor.u32 %v3699, %v3700
    %v3703 = vsel %vm228, %v3695, %v3702
    %v3705 = vshrl.u32 %v3504, 16
    %v3707 = vrot.slane %v3705, 7
    %v3708 = vrot.slane %v3707, 4
    %v3710 = vshrl.u32 %v3505, 16
    %v3712 = vrot.slane %v3710, 7
    %v3713 = vshll.u32 %v3505, 16
    %v3715 = vor.u32 %v3712, %v3713
    %v3716 = vsel %vm228, %v3708, %v3715
    %v3717 = vrot.slane %v3712, 4
    %v3719 = vshrl.u32 %v3506, 16
    %v3721 = vrot.slane %v3719, 7
    %v3722 = vshll.u32 %v3506, 16
    %v3724 = vor.u32 %v3721, %v3722
    %v3725 = vsel %vm228, %v3717, %v3724
    %v3727 = vshrl.u32 %v3507, 16
    %v3729 = vrot.slane %v3727, 7
    %v3730 = vrot.slane %v3729, 4
    %v3732 = vshrl.u32 %v3508, 16
    %v3734 = vrot.slane %v3732, 7
    %v3735 = vshll.u32 %v3508, 16
    %v3737 = vor.u32 %v3734, %v3735
    %v3738 = vsel %vm228, %v3730, %v3737
    %v3739 = vrot.slane %v3734, 4
    %v3741 = vshrl.u32 %v3509, 16
    %v3743 = vrot.slane %v3741, 7
    %v3744 = vshll.u32 %v3509, 16
    %v3746 = vor.u32 %v3743, %v3744
    %v3747 = vsel %vm228, %v3739, %v3746
    %v3749 = vshrl.u32 %v3510, 16
    %v3751 = vrot.slane %v3749, 7
    %v3752 = vrot.slane %v3751, 4
    %v3754 = vshrl.u32 %v3511, 16
    %v3756 = vrot.slane %v3754, 7
    %v3757 = vshll.u32 %v3511, 16
    %v3759 = vor.u32 %v3756, %v3757
    %v3760 = vsel %vm228, %v3752, %v3759
    %v3761 = vrot.slane %v3756, 4
    %v3763 = vshrl.u32 %v3512, 16
    %v3765 = vrot.slane %v3763, 7
    %v3766 = vshll.u32 %v3512, 16
    %v3768 = vor.u32 %v3765, %v3766
    %v3769 = vsel %vm228, %v3761, %v3768
    %v3771 = vshrl.u32 %v3513, 16
    %v3773 = vrot.slane %v3771, 7
    %v3774 = vrot.slane %v3773, 4
    %v3776 = vshrl.u32 %v3514, 16
    %v3778 = vrot.slane %v3776, 7
    %v3779 = vshll.u32 %v3514, 16
    %v3781 = vor.u32 %v3778, %v3779
    %v3782 = vsel %vm228, %v3774, %v3781
    %v3783 = vrot.slane %v3778, 4
    %v3785 = vshrl.u32 %v3515, 16
    %v3787 = vrot.slane %v3785, 7
    %v3788 = vshll.u32 %v3515, 16
    %v3790 = vor.u32 %v3787, %v3788
    %v3791 = vsel %vm228, %v3783, %v3790
    %v3793 = vshrl.u32 %v3516, 16
    %v3795 = vrot.slane %v3793, 7
    %v3796 = vrot.slane %v3795, 4
    %v3798 = vshrl.u32 %v3517, 16
    %v3800 = vrot.slane %v3798, 7
    %v3801 = vshll.u32 %v3517, 16
    %v3803 = vor.u32 %v3800, %v3801
    %v3804 = vsel %vm228, %v3796, %v3803
    %v3805 = vrot.slane %v3800, 4
    %v3807 = vshrl.u32 %v3518, 16
    %v3809 = vrot.slane %v3807, 7
    %v3810 = vshll.u32 %v3518, 16
    %v3812 = vor.u32 %v3809, %v3810
    %v3813 = vsel %vm228, %v3805, %v3812
    %v3815 = vshrl.u32 %v3519, 16
    %v3817 = vrot.slane %v3815, 7
    %v3818 = vrot.slane %v3817, 4
    %v3820 = vshrl.u32 %v3520, 16
    %v3822 = vrot.slane %v3820, 7
    %v3823 = vshll.u32 %v3520, 16
    %v3825 = vor.u32 %v3822, %v3823
    %v3826 = vsel %vm228, %v3818, %v3825
    %v3827 = vrot.slane %v3822, 4
    %v3829 = vshrl.u32 %v3521, 16
    %v3831 = vrot.slane %v3829, 7
    %v3832 = vshll.u32 %v3521, 16
    %v3834 = vor.u32 %v3831, %v3832
    %v3835 = vsel %vm228, %v3827, %v3834
    %v3837 = vshrl.u32 %v3522, 16
    %v3839 = vrot.slane %v3837, 7
    %v3840 = vrot.slane %v3839, 4
    %v3842 = vshrl.u32 %v3523, 16
    %v3844 = vrot.slane %v3842, 7
    %v3845 = vshll.u32 %v3523, 16
    %v3847 = vor.u32 %v3844, %v3845
    %v3848 = vsel %vm228, %v3840, %v3847
    %v3849 = vrot.slane %v3844, 4
    %v3851 = vshrl.u32 %v3524, 16
    %v3853 = vrot.slane %v3851, 7
    %v3854 = vshll.u32 %v3524, 16
    %v3856 = vor.u32 %v3853, %v3854
    %v3857 = vsel %vm228, %v3849, %v3856
    %v3859 = vshrl.u32 %v3525, 16
    %v3861 = vrot.slane %v3859, 7
    %v3862 = vrot.slane %v3861, 4
    %v3864 = vshrl.u32 %v3526, 16
    %v3866 = vrot.slane %v3864, 7
    %v3867 = vshll.u32 %v3526, 16
    %v3869 = vor.u32 %v3866, %v3867
    %v3870 = vsel %vm228, %v3862, %v3869
    %v3871 = vrot.slane %v3866, 4
    %v3873 = vshrl.u32 %v3527, 16
    %v3875 = vrot.slane %v3873, 7
    %v3876 = vshll.u32 %v3527, 16
    %v3878 = vor.u32 %v3875, %v3876
    %v3879 = vsel %vm228, %v3871, %v3878
    %v3880 = vld [vmem:[#allocation3 + $0xc] sm:$0x1]
    %v3881 = vld [vmem:[#allocation3 + $0x1c] sm:$0x1]
    %v3882 = vld [vmem:[#allocation3 + $0x2c] sm:$0x1]
    %v3883 = vld [vmem:[#allocation3 + $0x3c] sm:$0x1]
    %v3884 = vld [vmem:[#allocation3 + $0x4c] sm:$0x1]
    %v3885 = vld [vmem:[#allocation3 + $0x5c] sm:$0x1]
    %v3886 = vld [vmem:[#allocation3 + $0x6c] sm:$0x1]
    %v3887 = vld [vmem:[#allocation3 + $0x7c] sm:$0x1]
    %v3888 = vld [vmem:[#allocation3 + $0x8c] sm:$0x1]
    %v3889 = vld [vmem:[#allocation3 + $0x9c] sm:$0x1]
    %v3890 = vld [vmem:[#allocation3 + $0xac] sm:$0x1]
    %v3891 = vld [vmem:[#allocation3 + $0xbc] sm:$0x1]
    %v3892 = vld [vmem:[#allocation3 + $0xcc] sm:$0x1]
    %v3893 = vld [vmem:[#allocation3 + $0xdc] sm:$0x1]
    %v3894 = vld [vmem:[#allocation3 + $0xec] sm:$0x1]
    %v3895 = vld [vmem:[#allocation3 + $0xfc] sm:$0x1]
    %v3896 = vrot.slane %v3534, 4
    %v3897 = vrot.slane %v3537, 5
    %v3898 = vor.u32 %v3896, %v3897
    %v3899 = vrot.slane %v3898, 4
    %v3900 = vrot.slane %v3546, 5
    %v3901 = vsel %vm599, %v3899, %v3900
    %v3902 = vrot.slane %v3543, 4
    %v3903 = vor.u32 %v3902, %v3900
    %v3904 = vrot.slane %v3903, 4
    %v3906 = vshll.u32 %v3880, 16
    %v3908 = vrot.slane %v3906, 5
    %v3909 = vsel %vm599, %v3904, %v3908
    %v3910 = vrot.slane %v3556, 4
    %v3911 = vrot.slane %v3559, 5
    %v3912 = vor.u32 %v3910, %v3911
    %v3913 = vrot.slane %v3912, 4
    %v3914 = vrot.slane %v3568, 5
    %v3915 = vsel %vm599, %v3913, %v3914
    %v3916 = vrot.slane %v3565, 4
    %v3917 = vor.u32 %v3916, %v3914
    %v3918 = vrot.slane %v3917, 4
    %v3920 = vshll.u32 %v3881, 16
    %v3922 = vrot.slane %v3920, 5
    %v3923 = vsel %vm599, %v3918, %v3922
    %v3924 = vrot.slane %v3578, 4
    %v3925 = vrot.slane %v3581, 5
    %v3926 = vor.u32 %v3924, %v3925
    %v3927 = vrot.slane %v3926, 4
    %v3928 = vrot.slane %v3590, 5
    %v3929 = vsel %vm599, %v3927, %v3928
    %v3930 = vrot.slane %v3587, 4
    %v3931 = vor.u32 %v3930, %v3928
    %v3932 = vrot.slane %v3931, 4
    %v3934 = vshll.u32 %v3882, 16
    %v3936 = vrot.slane %v3934, 5
    %v3937 = vsel %vm599, %v3932, %v3936
    %v3938 = vrot.slane %v3600, 4
    %v3939 = vrot.slane %v3603, 5
    %v3940 = vor.u32 %v3938, %v3939
    %v3941 = vrot.slane %v3940, 4
    %v3942 = vrot.slane %v3612, 5
    %v3943 = vsel %vm599, %v3941, %v3942
    %v3944 = vrot.slane %v3609, 4
    %v3945 = vor.u32 %v3944, %v3942
    %v3946 = vrot.slane %v3945, 4
    %v3948 = vshll.u32 %v3883, 16
    %v3950 = vrot.slane %v3948, 5
    %v3951 = vsel %vm599, %v3946, %v3950
    %v3952 = vrot.slane %v3622, 4
    %v3953 = vrot.slane %v3625, 5
    %v3954 = vor.u32 %v3952, %v3953
    %v3955 = vrot.slane %v3954, 4
    %v3956 = vrot.slane %v3634, 5
    %v3957 = vsel %vm599, %v3955, %v3956
    %v3958 = vrot.slane %v3631, 4
    %v3959 = vor.u32 %v3958, %v3956
    %v3960 = vrot.slane %v3959, 4
    %v3962 = vshll.u32 %v3884, 16
    %v3964 = vrot.slane %v3962, 5
    %v3965 = vsel %vm599, %v3960, %v3964
    %v3966 = vrot.slane %v3644, 4
    %v3967 = vrot.slane %v3647, 5
    %v3968 = vor.u32 %v3966, %v3967
    %v3969 = vrot.slane %v3968, 4
    %v3970 = vrot.slane %v3656, 5
    %v3971 = vsel %vm599, %v3969, %v3970
    %v3972 = vrot.slane %v3653, 4
    %v3973 = vor.u32 %v3972, %v3970
    %v3974 = vrot.slane %v3973, 4
    %v3976 = vshll.u32 %v3885, 16
    %v3978 = vrot.slane %v3976, 5
    %v3979 = vsel %vm599, %v3974, %v3978
    %v3980 = vrot.slane %v3666, 4
    %v3981 = vrot.slane %v3669, 5
    %v3982 = vor.u32 %v3980, %v3981
    %v3983 = vrot.slane %v3982, 4
    %v3984 = vrot.slane %v3678, 5
    %v3985 = vsel %vm599, %v3983, %v3984
    %v3986 = vrot.slane %v3675, 4
    %v3987 = vor.u32 %v3986, %v3984
    %v3988 = vrot.slane %v3987, 4
    %v3990 = vshll.u32 %v3886, 16
    %v3992 = vrot.slane %v3990, 5
    %v3993 = vsel %vm599, %v3988, %v3992
    %v3994 = vrot.slane %v3688, 4
    %v3995 = vrot.slane %v3691, 5
    %v3996 = vor.u32 %v3994, %v3995
    %v3997 = vrot.slane %v3996, 4
    %v3998 = vrot.slane %v3700, 5
    %v3999 = vsel %vm599, %v3997, %v3998
    %v4000 = vrot.slane %v3697, 4
    %v4001 = vor.u32 %v4000, %v3998
    %v4002 = vrot.slane %v4001, 4
    %v4004 = vshll.u32 %v3887, 16
    %v4006 = vrot.slane %v4004, 5
    %v4007 = vsel %vm599, %v4002, %v4006
    %v4008 = vrot.slane %v3710, 4
    %v4009 = vrot.slane %v3713, 5
    %v4010 = vor.u32 %v4008, %v4009
    %v4011 = vrot.slane %v4010, 4
    %v4012 = vrot.slane %v3722, 5
    %v4013 = vsel %vm599, %v4011, %v4012
    %v4014 = vrot.slane %v3719, 4
    %v4015 = vor.u32 %v4014, %v4012
    %v4016 = vrot.slane %v4015, 4
    %v4018 = vshll.u32 %v3888, 16
    %v4020 = vrot.slane %v4018, 5
    %v4021 = vsel %vm599, %v4016, %v4020
    %v4022 = vrot.slane %v3732, 4
    %v4023 = vrot.slane %v3735, 5
    %v4024 = vor.u32 %v4022, %v4023
    %v4025 = vrot.slane %v4024, 4
    %v4026 = vrot.slane %v3744, 5
    %v4027 = vsel %vm599, %v4025, %v4026
    %v4028 = vrot.slane %v3741, 4
    %v4029 = vor.u32 %v4028, %v4026
    %v4030 = vrot.slane %v4029, 4
    %v4032 = vshll.u32 %v3889, 16
    %v4034 = vrot.slane %v4032, 5
    %v4035 = vsel %vm599, %v4030, %v4034
    %v4036 = vrot.slane %v3754, 4
    %v4037 = vrot.slane %v3757, 5
    %v4038 = vor.u32 %v4036, %v4037
    %v4039 = vrot.slane %v4038, 4
    %v4040 = vrot.slane %v3766, 5
    %v4041 = vsel %vm599, %v4039, %v4040
    %v4042 = vrot.slane %v3763, 4
    %v4043 = vor.u32 %v4042, %v4040
    %v4044 = vrot.slane %v4043, 4
    %v4046 = vshll.u32 %v3890, 16
    %v4048 = vrot.slane %v4046, 5
    %v4049 = vsel %vm599, %v4044, %v4048
    %v4050 = vrot.slane %v3776, 4
    %v4051 = vrot.slane %v3779, 5
    %v4052 = vor.u32 %v4050, %v4051
    %v4053 = vrot.slane %v4052, 4
    %v4054 = vrot.slane %v3788, 5
    %v4055 = vsel %vm599, %v4053, %v4054
    %v4056 = vrot.slane %v3785, 4
    %v4057 = vor.u32 %v4056, %v4054
    %v4058 = vrot.slane %v4057, 4
    %v4060 = vshll.u32 %v3891, 16
    %v4062 = vrot.slane %v4060, 5
    %v4063 = vsel %vm599, %v4058, %v4062
    %v4064 = vrot.slane %v3798, 4
    %v4065 = vrot.slane %v3801, 5
    %v4066 = vor.u32 %v4064, %v4065
    %v4067 = vrot.slane %v4066, 4
    %v4068 = vrot.slane %v3810, 5
    %v4069 = vsel %vm599, %v4067, %v4068
    %v4070 = vrot.slane %v3807, 4
    %v4071 = vor.u32 %v4070, %v4068
    %v4072 = vrot.slane %v4071, 4
    %v4074 = vshll.u32 %v3892, 16
    %v4076 = vrot.slane %v4074, 5
    %v4077 = vsel %vm599, %v4072, %v4076
    %v4078 = vrot.slane %v3820, 4
    %v4079 = vrot.slane %v3823, 5
    %v4080 = vor.u32 %v4078, %v4079
    %v4081 = vrot.slane %v4080, 4
    %v4082 = vrot.slane %v3832, 5
    %v4083 = vsel %vm599, %v4081, %v4082
    %v4084 = vrot.slane %v3829, 4
    %v4085 = vor.u32 %v4084, %v4082
    %v4086 = vrot.slane %v4085, 4
    %v4088 = vshll.u32 %v3893, 16
    %v4090 = vrot.slane %v4088, 5
    %v4091 = vsel %vm599, %v4086, %v4090
    %v4092 = vrot.slane %v3842, 4
    %v4093 = vrot.slane %v3845, 5
    %v4094 = vor.u32 %v4092, %v4093
    %v4095 = vrot.slane %v4094, 4
    %v4096 = vrot.slane %v3854, 5
    %v4097 = vsel %vm599, %v4095, %v4096
    %v4098 = vrot.slane %v3851, 4
    %v4099 = vor.u32 %v4098, %v4096
    %v4100 = vrot.slane %v4099, 4
    %v4102 = vshll.u32 %v3894, 16
    %v4104 = vrot.slane %v4102, 5
    %v4105 = vsel %vm599, %v4100, %v4104
    %v4106 = vrot.slane %v3864, 4
    %v4107 = vrot.slane %v3867, 5
    %v4108 = vor.u32 %v4106, %v4107
    %v4109 = vrot.slane %v4108, 4
    %v4110 = vrot.slane %v3876, 5
    %v4111 = vsel %vm599, %v4109, %v4110
    %v4112 = vrot.slane %v3873, 4
    %v4113 = vor.u32 %v4112, %v4110
    %v4114 = vrot.slane %v4113, 4
    %v4116 = vshll.u32 %v3895, 16
    %v4118 = vrot.slane %v4116, 5
    %v4119 = vsel %vm599, %v4114, %v4118
    %v4120 = vld [vmem:[%s3447] sm:$0x8]
    %v4121 = vld [vmem:[%s3447 + $0x4] sm:$0xf]
    %v4122 = vld [vmem:[%s3447 + $0x8] sm:$0xf]
    %v4123 = vld [vmem:[%s3447 + $0x10] sm:$0x8]
    %v4124 = vld [vmem:[%s3447 + $0x14] sm:$0xf]
    %v4125 = vld [vmem:[%s3447 + $0x18] sm:$0xf]
    %v4126 = vld [vmem:[%s3447 + $0x20] sm:$0x8]
    %v4127 = vld [vmem:[%s3447 + $0x24] sm:$0xf]
    %v4128 = vld [vmem:[%s3447 + $0x28] sm:$0xf]
    %v4129 = vld [vmem:[%s3447 + $0x30] sm:$0x8]
    %v4130 = vld [vmem:[%s3447 + $0x34] sm:$0xf]
    %v4131 = vld [vmem:[%s3447 + $0x38] sm:$0xf]
    %v4132 = vld [vmem:[%s3447 + $0x40] sm:$0x8]
    %v4133 = vld [vmem:[%s3447 + $0x44] sm:$0xf]
    %v4134 = vld [vmem:[%s3447 + $0x48] sm:$0xf]
    %v4135 = vld [vmem:[%s3447 + $0x50] sm:$0x8]
    %v4136 = vld [vmem:[%s3447 + $0x54] sm:$0xf]
    %v4137 = vld [vmem:[%s3447 + $0x58] sm:$0xf]
    %v4138 = vld [vmem:[%s3447 + $0x60] sm:$0x8]
    %v4139 = vld [vmem:[%s3447 + $0x64] sm:$0xf]
    %v4140 = vld [vmem:[%s3447 + $0x68] sm:$0xf]
    %v4141 = vld [vmem:[%s3447 + $0x70] sm:$0x8]
    %v4142 = vld [vmem:[%s3447 + $0x74] sm:$0xf]
    %v4143 = vld [vmem:[%s3447 + $0x78] sm:$0xf]
    %v4144 = vld [vmem:[%s3447 + $0x80] sm:$0x8]
    %v4145 = vld [vmem:[%s3447 + $0x84] sm:$0xf]
    %v4146 = vld [vmem:[%s3447 + $0x88] sm:$0xf]
    %v4147 = vld [vmem:[%s3447 + $0x90] sm:$0x8]
    %v4148 = vld [vmem:[%s3447 + $0x94] sm:$0xf]
    %v4149 = vld [vmem:[%s3447 + $0x98] sm:$0xf]
    %v4150 = vld [vmem:[%s3447 + $0xa0] sm:$0x8]
    %v4151 = vld [vmem:[%s3447 + $0xa4] sm:$0xf]
    %v4152 = vld [vmem:[%s3447 + $0xa8] sm:$0xf]
    %v4153 = vld [vmem:[%s3447 + $0xb0] sm:$0x8]
    %v4154 = vld [vmem:[%s3447 + $0xb4] sm:$0xf]
    %v4155 = vld [vmem:[%s3447 + $0xb8] sm:$0xf]
    %v4156 = vld [vmem:[%s3447 + $0xc0] sm:$0x8]
    %v4157 = vld [vmem:[%s3447 + $0xc4] sm:$0xf]
    %v4158 = vld [vmem:[%s3447 + $0xc8] sm:$0xf]
    %v4159 = vld [vmem:[%s3447 + $0xd0] sm:$0x8]
    %v4160 = vld [vmem:[%s3447 + $0xd4] sm:$0xf]
    %v4161 = vld [vmem:[%s3447 + $0xd8] sm:$0xf]
    %v4162 = vld [vmem:[%s3447 + $0xe0] sm:$0x8]
    %v4163 = vld [vmem:[%s3447 + $0xe4] sm:$0xf]
    %v4164 = vld [vmem:[%s3447 + $0xe8] sm:$0xf]
    %v4165 = vld [vmem:[%s3447 + $0xf0] sm:$0x8]
    %v4166 = vld [vmem:[%s3447 + $0xf4] sm:$0xf]
    %v4167 = vld [vmem:[%s3447 + $0xf8] sm:$0xf]
    %v4169 = vshrl.u32 %v4120, 16
    %v4171 = vrot.slane %v4169, 7
    %v4172 = vrot.slane %v4171, 4
    %v4174 = vshrl.u32 %v4121, 16
    %v4176 = vrot.slane %v4174, 7
    %v4177 = vshll.u32 %v4121, 16
    %v4179 = vor.u32 %v4176, %v4177
    %v4180 = vsel %vm228, %v4172, %v4179
    %v4181 = vrot.slane %v4176, 4
    %v4183 = vshrl.u32 %v4122, 16
    %v4185 = vrot.slane %v4183, 7
    %v4186 = vshll.u32 %v4122, 16
    %v4188 = vor.u32 %v4185, %v4186
    %v4189 = vsel %vm228, %v4181, %v4188
    %v4191 = vshrl.u32 %v4123, 16
    %v4193 = vrot.slane %v4191, 7
    %v4194 = vrot.slane %v4193, 4
    %v4196 = vshrl.u32 %v4124, 16
    %v4198 = vrot.slane %v4196, 7
    %v4199 = vshll.u32 %v4124, 16
    %v4201 = vor.u32 %v4198, %v4199
    %v4202 = vsel %vm228, %v4194, %v4201
    %v4203 = vrot.slane %v4198, 4
    %v4205 = vshrl.u32 %v4125, 16
    %v4207 = vrot.slane %v4205, 7
    %v4208 = vshll.u32 %v4125, 16
    %v4210 = vor.u32 %v4207, %v4208
    %v4211 = vsel %vm228, %v4203, %v4210
    %v4213 = vshrl.u32 %v4126, 16
    %v4215 = vrot.slane %v4213, 7
    %v4216 = vrot.slane %v4215, 4
    %v4218 = vshrl.u32 %v4127, 16
    %v4220 = vrot.slane %v4218, 7
    %v4221 = vshll.u32 %v4127, 16
    %v4223 = vor.u32 %v4220, %v4221
    %v4224 = vsel %vm228, %v4216, %v4223
    %v4225 = vrot.slane %v4220, 4
    %v4227 = vshrl.u32 %v4128, 16
    %v4229 = vrot.slane %v4227, 7
    %v4230 = vshll.u32 %v4128, 16
    %v4232 = vor.u32 %v4229, %v4230
    %v4233 = vsel %vm228, %v4225, %v4232
    %v4235 = vshrl.u32 %v4129, 16
    %v4237 = vrot.slane %v4235, 7
    %v4238 = vrot.slane %v4237, 4
    %v4240 = vshrl.u32 %v4130, 16
    %v4242 = vrot.slane %v4240, 7
    %v4243 = vshll.u32 %v4130, 16
    %v4245 = vor.u32 %v4242, %v4243
    %v4246 = vsel %vm228, %v4238, %v4245
    %v4247 = vrot.slane %v4242, 4
    %v4249 = vshrl.u32 %v4131, 16
    %v4251 = vrot.slane %v4249, 7
    %v4252 = vshll.u32 %v4131, 16
    %v4254 = vor.u32 %v4251, %v4252
    %v4255 = vsel %vm228, %v4247, %v4254
    %v4257 = vshrl.u32 %v4132, 16
    %v4259 = vrot.slane %v4257, 7
    %v4260 = vrot.slane %v4259, 4
    %v4262 = vshrl.u32 %v4133, 16
    %v4264 = vrot.slane %v4262, 7
    %v4265 = vshll.u32 %v4133, 16
    %v4267 = vor.u32 %v4264, %v4265
    %v4268 = vsel %vm228, %v4260, %v4267
    %v4269 = vrot.slane %v4264, 4
    %v4271 = vshrl.u32 %v4134, 16
    %v4273 = vrot.slane %v4271, 7
    %v4274 = vshll.u32 %v4134, 16
    %v4276 = vor.u32 %v4273, %v4274
    %v4277 = vsel %vm228, %v4269, %v4276
    %v4279 = vshrl.u32 %v4135, 16
    %v4281 = vrot.slane %v4279, 7
    %v4282 = vrot.slane %v4281, 4
    %v4284 = vshrl.u32 %v4136, 16
    %v4286 = vrot.slane %v4284, 7
    %v4287 = vshll.u32 %v4136, 16
    %v4289 = vor.u32 %v4286, %v4287
    %v4290 = vsel %vm228, %v4282, %v4289
    %v4291 = vrot.slane %v4286, 4
    %v4293 = vshrl.u32 %v4137, 16
    %v4295 = vrot.slane %v4293, 7
    %v4296 = vshll.u32 %v4137, 16
    %v4298 = vor.u32 %v4295, %v4296
    %v4299 = vsel %vm228, %v4291, %v4298
    %v4301 = vshrl.u32 %v4138, 16
    %v4303 = vrot.slane %v4301, 7
    %v4304 = vrot.slane %v4303, 4
    %v4306 = vshrl.u32 %v4139, 16
    %v4308 = vrot.slane %v4306, 7
    %v4309 = vshll.u32 %v4139, 16
    %v4311 = vor.u32 %v4308, %v4309
    %v4312 = vsel %vm228, %v4304, %v4311
    %v4313 = vrot.slane %v4308, 4
    %v4315 = vshrl.u32 %v4140, 16
    %v4317 = vrot.slane %v4315, 7
    %v4318 = vshll.u32 %v4140, 16
    %v4320 = vor.u32 %v4317, %v4318
    %v4321 = vsel %vm228, %v4313, %v4320
    %v4323 = vshrl.u32 %v4141, 16
    %v4325 = vrot.slane %v4323, 7
    %v4326 = vrot.slane %v4325, 4
    %v4328 = vshrl.u32 %v4142, 16
    %v4330 = vrot.slane %v4328, 7
    %v4331 = vshll.u32 %v4142, 16
    %v4333 = vor.u32 %v4330, %v4331
    %v4334 = vsel %vm228, %v4326, %v4333
    %v4335 = vrot.slane %v4330, 4
    %v4337 = vshrl.u32 %v4143, 16
    %v4339 = vrot.slane %v4337, 7
    %v4340 = vshll.u32 %v4143, 16
    %v4342 = vor.u32 %v4339, %v4340
    %v4343 = vsel %vm228, %v4335, %v4342
    %v4345 = vshrl.u32 %v4144, 16
    %v4347 = vrot.slane %v4345, 7
    %v4348 = vrot.slane %v4347, 4
    %v4350 = vshrl.u32 %v4145, 16
    %v4352 = vrot.slane %v4350, 7
    %v4353 = vshll.u32 %v4145, 16
    %v4355 = vor.u32 %v4352, %v4353
    %v4356 = vsel %vm228, %v4348, %v4355
    %v4357 = vrot.slane %v4352, 4
    %v4359 = vshrl.u32 %v4146, 16
    %v4361 = vrot.slane %v4359, 7
    %v4362 = vshll.u32 %v4146, 16
    %v4364 = vor.u32 %v4361, %v4362
    %v4365 = vsel %vm228, %v4357, %v4364
    %v4367 = vshrl.u32 %v4147, 16
    %v4369 = vrot.slane %v4367, 7
    %v4370 = vrot.slane %v4369, 4
    %v4372 = vshrl.u32 %v4148, 16
    %v4374 = vrot.slane %v4372, 7
    %v4375 = vshll.u32 %v4148, 16
    %v4377 = vor.u32 %v4374, %v4375
    %v4378 = vsel %vm228, %v4370, %v4377
    %v4379 = vrot.slane %v4374, 4
    %v4381 = vshrl.u32 %v4149, 16
    %v4383 = vrot.slane %v4381, 7
    %v4384 = vshll.u32 %v4149, 16
    %v4386 = vor.u32 %v4383, %v4384
    %v4387 = vsel %vm228, %v4379, %v4386
    %v4389 = vshrl.u32 %v4150, 16
    %v4391 = vrot.slane %v4389, 7
    %v4392 = vrot.slane %v4391, 4
    %v4394 = vshrl.u32 %v4151, 16
    %v4396 = vrot.slane %v4394, 7
    %v4397 = vshll.u32 %v4151, 16
    %v4399 = vor.u32 %v4396, %v4397
    %v4400 = vsel %vm228, %v4392, %v4399
    %v4401 = vrot.slane %v4396, 4
    %v4403 = vshrl.u32 %v4152, 16
    %v4405 = vrot.slane %v4403, 7
    %v4406 = vshll.u32 %v4152, 16
    %v4408 = vor.u32 %v4405, %v4406
    %v4409 = vsel %vm228, %v4401, %v4408
    %v4411 = vshrl.u32 %v4153, 16
    %v4413 = vrot.slane %v4411, 7
    %v4414 = vrot.slane %v4413, 4
    %v4416 = vshrl.u32 %v4154, 16
    %v4418 = vrot.slane %v4416, 7
    %v4419 = vshll.u32 %v4154, 16
    %v4421 = vor.u32 %v4418, %v4419
    %v4422 = vsel %vm228, %v4414, %v4421
    %v4423 = vrot.slane %v4418, 4
    %v4425 = vshrl.u32 %v4155, 16
    %v4427 = vrot.slane %v4425, 7
    %v4428 = vshll.u32 %v4155, 16
    %v4430 = vor.u32 %v4427, %v4428
    %v4431 = vsel %vm228, %v4423, %v4430
    %v4433 = vshrl.u32 %v4156, 16
    %v4435 = vrot.slane %v4433, 7
    %v4436 = vrot.slane %v4435, 4
    %v4438 = vshrl.u32 %v4157, 16
    %v4440 = vrot.slane %v4438, 7
    %v4441 = vshll.u32 %v4157, 16
    %v4443 = vor.u32 %v4440, %v4441
    %v4444 = vsel %vm228, %v4436, %v4443
    %v4445 = vrot.slane %v4440, 4
    %v4447 = vshrl.u32 %v4158, 16
    %v4449 = vrot.slane %v4447, 7
    %v4450 = vshll.u32 %v4158, 16
    %v4452 = vor.u32 %v4449, %v4450
    %v4453 = vsel %vm228, %v4445, %v4452
    %v4455 = vshrl.u32 %v4159, 16
    %v4457 = vrot.slane %v4455, 7
    %v4458 = vrot.slane %v4457, 4
    %v4460 = vshrl.u32 %v4160, 16
    %v4462 = vrot.slane %v4460, 7
    %v4463 = vshll.u32 %v4160, 16
    %v4465 = vor.u32 %v4462, %v4463
    %v4466 = vsel %vm228, %v4458, %v4465
    %v4467 = vrot.slane %v4462, 4
    %v4469 = vshrl.u32 %v4161, 16
    %v4471 = vrot.slane %v4469, 7
    %v4472 = vshll.u32 %v4161, 16
    %v4474 = vor.u32 %v4471, %v4472
    %v4475 = vsel %vm228, %v4467, %v4474
    %v4477 = vshrl.u32 %v4162, 16
    %v4479 = vrot.slane %v4477, 7
    %v4480 = vrot.slane %v4479, 4
    %v4482 = vshrl.u32 %v4163, 16
    %v4484 = vrot.slane %v4482, 7
    %v4485 = vshll.u32 %v4163, 16
    %v4487 = vor.u32 %v4484, %v4485
    %v4488 = vsel %vm228, %v4480, %v4487
    %v4489 = vrot.slane %v4484, 4
    %v4491 = vshrl.u32 %v4164, 16
    %v4493 = vrot.slane %v4491, 7
    %v4494 = vshll.u32 %v4164, 16
    %v4496 = vor.u32 %v4493, %v4494
    %v4497 = vsel %vm228, %v4489, %v4496
    %v4499 = vshrl.u32 %v4165, 16
    %v4501 = vrot.slane %v4499, 7
    %v4502 = vrot.slane %v4501, 4
    %v4504 = vshrl.u32 %v4166, 16
    %v4506 = vrot.slane %v4504, 7
    %v4507 = vshll.u32 %v4166, 16
    %v4509 = vor.u32 %v4506, %v4507
    %v4510 = vsel %vm228, %v4502, %v4509
    %v4511 = vrot.slane %v4506, 4
    %v4513 = vshrl.u32 %v4167, 16
    %v4515 = vrot.slane %v4513, 7
    %v4516 = vshll.u32 %v4167, 16
    %v4518 = vor.u32 %v4515, %v4516
    %v4519 = vsel %vm228, %v4511, %v4518
    %v4520 = vld [vmem:[%s3447 + $0xc] sm:$0x1]
    %v4521 = vld [vmem:[%s3447 + $0x1c] sm:$0x1]
    %v4522 = vld [vmem:[%s3447 + $0x2c] sm:$0x1]
    %v4523 = vld [vmem:[%s3447 + $0x3c] sm:$0x1]
    %v4524 = vld [vmem:[%s3447 + $0x4c] sm:$0x1]
    %v4525 = vld [vmem:[%s3447 + $0x5c] sm:$0x1]
    %v4526 = vld [vmem:[%s3447 + $0x6c] sm:$0x1]
    %v4527 = vld [vmem:[%s3447 + $0x7c] sm:$0x1]
    %v4528 = vld [vmem:[%s3447 + $0x8c] sm:$0x1]
    %v4529 = vld [vmem:[%s3447 + $0x9c] sm:$0x1]
    %v4530 = vld [vmem:[%s3447 + $0xac] sm:$0x1]
    %v4531 = vld [vmem:[%s3447 + $0xbc] sm:$0x1]
    %v4532 = vld [vmem:[%s3447 + $0xcc] sm:$0x1]
    %v4533 = vld [vmem:[%s3447 + $0xdc] sm:$0x1]
    %v4534 = vld [vmem:[%s3447 + $0xec] sm:$0x1]
    %v4535 = vld [vmem:[%s3447 + $0xfc] sm:$0x1]
    %v4536 = vrot.slane %v4174, 4
    %v4537 = vrot.slane %v4177, 5
    %v4538 = vor.u32 %v4536, %v4537
    %v4539 = vrot.slane %v4538, 4
    %v4540 = vrot.slane %v4186, 5
    %v4541 = vsel %vm599, %v4539, %v4540
    %v4542 = vrot.slane %v4183, 4
    %v4543 = vor.u32 %v4542, %v4540
    %v4544 = vrot.slane %v4543, 4
    %v4546 = vshll.u32 %v4520, 16
    %v4548 = vrot.slane %v4546, 5
    %v4549 = vsel %vm599, %v4544, %v4548
    %v4550 = vrot.slane %v4196, 4
    %v4551 = vrot.slane %v4199, 5
    %v4552 = vor.u32 %v4550, %v4551
    %v4553 = vrot.slane %v4552, 4
    %v4554 = vrot.slane %v4208, 5
    %v4555 = vsel %vm599, %v4553, %v4554
    %v4556 = vrot.slane %v4205, 4
    %v4557 = vor.u32 %v4556, %v4554
    %v4558 = vrot.slane %v4557, 4
    %v4560 = vshll.u32 %v4521, 16
    %v4562 = vrot.slane %v4560, 5
    %v4563 = vsel %vm599, %v4558, %v4562
    %v4564 = vrot.slane %v4218, 4
    %v4565 = vrot.slane %v4221, 5
    %v4566 = vor.u32 %v4564, %v4565
    %v4567 = vrot.slane %v4566, 4
    %v4568 = vrot.slane %v4230, 5
    %v4569 = vsel %vm599, %v4567, %v4568
    %v4570 = vrot.slane %v4227, 4
    %v4571 = vor.u32 %v4570, %v4568
    %v4572 = vrot.slane %v4571, 4
    %v4574 = vshll.u32 %v4522, 16
    %v4576 = vrot.slane %v4574, 5
    %v4577 = vsel %vm599, %v4572, %v4576
    %v4578 = vrot.slane %v4240, 4
    %v4579 = vrot.slane %v4243, 5
    %v4580 = vor.u32 %v4578, %v4579
    %v4581 = vrot.slane %v4580, 4
    %v4582 = vrot.slane %v4252, 5
    %v4583 = vsel %vm599, %v4581, %v4582
    %v4584 = vrot.slane %v4249, 4
    %v4585 = vor.u32 %v4584, %v4582
    %v4586 = vrot.slane %v4585, 4
    %v4588 = vshll.u32 %v4523, 16
    %v4590 = vrot.slane %v4588, 5
    %v4591 = vsel %vm599, %v4586, %v4590
    %v4592 = vrot.slane %v4262, 4
    %v4593 = vrot.slane %v4265, 5
    %v4594 = vor.u32 %v4592, %v4593
    %v4595 = vrot.slane %v4594, 4
    %v4596 = vrot.slane %v4274, 5
    %v4597 = vsel %vm599, %v4595, %v4596
    %v4598 = vrot.slane %v4271, 4
    %v4599 = vor.u32 %v4598, %v4596
    %v4600 = vrot.slane %v4599, 4
    %v4602 = vshll.u32 %v4524, 16
    %v4604 = vrot.slane %v4602, 5
    %v4605 = vsel %vm599, %v4600, %v4604
    %v4606 = vrot.slane %v4284, 4
    %v4607 = vrot.slane %v4287, 5
    %v4608 = vor.u32 %v4606, %v4607
    %v4609 = vrot.slane %v4608, 4
    %v4610 = vrot.slane %v4296, 5
    %v4611 = vsel %vm599, %v4609, %v4610
    %v4612 = vrot.slane %v4293, 4
    %v4613 = vor.u32 %v4612, %v4610
    %v4614 = vrot.slane %v4613, 4
    %v4616 = vshll.u32 %v4525, 16
    %v4618 = vrot.slane %v4616, 5
    %v4619 = vsel %vm599, %v4614, %v4618
    %v4620 = vrot.slane %v4306, 4
    %v4621 = vrot.slane %v4309, 5
    %v4622 = vor.u32 %v4620, %v4621
    %v4623 = vrot.slane %v4622, 4
    %v4624 = vrot.slane %v4318, 5
    %v4625 = vsel %vm599, %v4623, %v4624
    %v4626 = vrot.slane %v4315, 4
    %v4627 = vor.u32 %v4626, %v4624
    %v4628 = vrot.slane %v4627, 4
    %v4630 = vshll.u32 %v4526, 16
    %v4632 = vrot.slane %v4630, 5
    %v4633 = vsel %vm599, %v4628, %v4632
    %v4634 = vrot.slane %v4328, 4
    %v4635 = vrot.slane %v4331, 5
    %v4636 = vor.u32 %v4634, %v4635
    %v4637 = vrot.slane %v4636, 4
    %v4638 = vrot.slane %v4340, 5
    %v4639 = vsel %vm599, %v4637, %v4638
    %v4640 = vrot.slane %v4337, 4
    %v4641 = vor.u32 %v4640, %v4638
    %v4642 = vrot.slane %v4641, 4
    %v4644 = vshll.u32 %v4527, 16
    %v4646 = vrot.slane %v4644, 5
    %v4647 = vsel %vm599, %v4642, %v4646
    %v4648 = vrot.slane %v4350, 4
    %v4649 = vrot.slane %v4353, 5
    %v4650 = vor.u32 %v4648, %v4649
    %v4651 = vrot.slane %v4650, 4
    %v4652 = vrot.slane %v4362, 5
    %v4653 = vsel %vm599, %v4651, %v4652
    %v4654 = vrot.slane %v4359, 4
    %v4655 = vor.u32 %v4654, %v4652
    %v4656 = vrot.slane %v4655, 4
    %v4658 = vshll.u32 %v4528, 16
    %v4660 = vrot.slane %v4658, 5
    %v4661 = vsel %vm599, %v4656, %v4660
    %v4662 = vrot.slane %v4372, 4
    %v4663 = vrot.slane %v4375, 5
    %v4664 = vor.u32 %v4662, %v4663
    %v4665 = vrot.slane %v4664, 4
    %v4666 = vrot.slane %v4384, 5
    %v4667 = vsel %vm599, %v4665, %v4666
    %v4668 = vrot.slane %v4381, 4
    %v4669 = vor.u32 %v4668, %v4666
    %v4670 = vrot.slane %v4669, 4
    %v4672 = vshll.u32 %v4529, 16
    %v4674 = vrot.slane %v4672, 5
    %v4675 = vsel %vm599, %v4670, %v4674
    %v4676 = vrot.slane %v4394, 4
    %v4677 = vrot.slane %v4397, 5
    %v4678 = vor.u32 %v4676, %v4677
    %v4679 = vrot.slane %v4678, 4
    %v4680 = vrot.slane %v4406, 5
    %v4681 = vsel %vm599, %v4679, %v4680
    %v4682 = vrot.slane %v4403, 4
    %v4683 = vor.u32 %v4682, %v4680
    %v4684 = vrot.slane %v4683, 4
    %v4686 = vshll.u32 %v4530, 16
    %v4688 = vrot.slane %v4686, 5
    %v4689 = vsel %vm599, %v4684, %v4688
    %v4690 = vrot.slane %v4416, 4
    %v4691 = vrot.slane %v4419, 5
    %v4692 = vor.u32 %v4690, %v4691
    %v4693 = vrot.slane %v4692, 4
    %v4694 = vrot.slane %v4428, 5
    %v4695 = vsel %vm599, %v4693, %v4694
    %v4696 = vrot.slane %v4425, 4
    %v4697 = vor.u32 %v4696, %v4694
    %v4698 = vrot.slane %v4697, 4
    %v4700 = vshll.u32 %v4531, 16
    %v4702 = vrot.slane %v4700, 5
    %v4703 = vsel %vm599, %v4698, %v4702
    %v4704 = vrot.slane %v4438, 4
    %v4705 = vrot.slane %v4441, 5
    %v4706 = vor.u32 %v4704, %v4705
    %v4707 = vrot.slane %v4706, 4
    %v4708 = vrot.slane %v4450, 5
    %v4709 = vsel %vm599, %v4707, %v4708
    %v4710 = vrot.slane %v4447, 4
    %v4711 = vor.u32 %v4710, %v4708
    %v4712 = vrot.slane %v4711, 4
    %v4714 = vshll.u32 %v4532, 16
    %v4716 = vrot.slane %v4714, 5
    %v4717 = vsel %vm599, %v4712, %v4716
    %v4718 = vrot.slane %v4460, 4
    %v4719 = vrot.slane %v4463, 5
    %v4720 = vor.u32 %v4718, %v4719
    %v4721 = vrot.slane %v4720, 4
    %v4722 = vrot.slane %v4472, 5
    %v4723 = vsel %vm599, %v4721, %v4722
    %v4724 = vrot.slane %v4469, 4
    %v4725 = vor.u32 %v4724, %v4722
    %v4726 = vrot.slane %v4725, 4
    %v4728 = vshll.u32 %v4533, 16
    %v4730 = vrot.slane %v4728, 5
    %v4731 = vsel %vm599, %v4726, %v4730
    %v4732 = vrot.slane %v4482, 4
    %v4733 = vrot.slane %v4485, 5
    %v4734 = vor.u32 %v4732, %v4733
    %v4735 = vrot.slane %v4734, 4
    %v4736 = vrot.slane %v4494, 5
    %v4737 = vsel %vm599, %v4735, %v4736
    %v4738 = vrot.slane %v4491, 4
    %v4739 = vor.u32 %v4738, %v4736
    %v4740 = vrot.slane %v4739, 4
    %v4742 = vshll.u32 %v4534, 16
    %v4744 = vrot.slane %v4742, 5
    %v4745 = vsel %vm599, %v4740, %v4744
    %v4746 = vrot.slane %v4504, 4
    %v4747 = vrot.slane %v4507, 5
    %v4748 = vor.u32 %v4746, %v4747
    %v4749 = vrot.slane %v4748, 4
    %v4750 = vrot.slane %v4516, 5
    %v4751 = vsel %vm599, %v4749, %v4750
    %v4752 = vrot.slane %v4513, 4
    %v4753 = vor.u32 %v4752, %v4750
    %v4754 = vrot.slane %v4753, 4
    %v4756 = vshll.u32 %v4535, 16
    %v4758 = vrot.slane %v4756, 5
    %v4759 = vsel %vm599, %v4754, %v4758
    %s4760 = scalar_lea.vmem [#allocation3], 32
    %v4761 = vld [vmem:[%s4760] sm:$0x8]
    %v4762 = vld [vmem:[%s4760 + $0x4] sm:$0xf]
    %v4763 = vld [vmem:[%s4760 + $0x8] sm:$0xf]
    %v4764 = vld [vmem:[%s4760 + $0x10] sm:$0x8]
    %v4765 = vld [vmem:[%s4760 + $0x14] sm:$0xf]
    %v4766 = vld [vmem:[%s4760 + $0x18] sm:$0xf]
    %v4767 = vld [vmem:[%s4760 + $0x20] sm:$0x8]
    %v4768 = vld [vmem:[%s4760 + $0x24] sm:$0xf]
    %v4769 = vld [vmem:[%s4760 + $0x28] sm:$0xf]
    %v4770 = vld [vmem:[%s4760 + $0x30] sm:$0x8]
    %v4771 = vld [vmem:[%s4760 + $0x34] sm:$0xf]
    %v4772 = vld [vmem:[%s4760 + $0x38] sm:$0xf]
    %v4773 = vld [vmem:[%s4760 + $0x40] sm:$0x8]
    %v4774 = vld [vmem:[%s4760 + $0x44] sm:$0xf]
    %v4775 = vld [vmem:[%s4760 + $0x48] sm:$0xf]
    %v4776 = vld [vmem:[%s4760 + $0x50] sm:$0x8]
    %v4777 = vld [vmem:[%s4760 + $0x54] sm:$0xf]
    %v4778 = vld [vmem:[%s4760 + $0x58] sm:$0xf]
    %v4779 = vld [vmem:[%s4760 + $0x60] sm:$0x8]
    %v4780 = vld [vmem:[%s4760 + $0x64] sm:$0xf]
    %v4781 = vld [vmem:[%s4760 + $0x68] sm:$0xf]
    %v4782 = vld [vmem:[%s4760 + $0x70] sm:$0x8]
    %v4783 = vld [vmem:[%s4760 + $0x74] sm:$0xf]
    %v4784 = vld [vmem:[%s4760 + $0x78] sm:$0xf]
    %v4785 = vld [vmem:[%s4760 + $0x80] sm:$0x8]
    %v4786 = vld [vmem:[%s4760 + $0x84] sm:$0xf]
    %v4787 = vld [vmem:[%s4760 + $0x88] sm:$0xf]
    %v4788 = vld [vmem:[%s4760 + $0x90] sm:$0x8]
    %v4789 = vld [vmem:[%s4760 + $0x94] sm:$0xf]
    %v4790 = vld [vmem:[%s4760 + $0x98] sm:$0xf]
    %v4791 = vld [vmem:[%s4760 + $0xa0] sm:$0x8]
    %v4792 = vld [vmem:[%s4760 + $0xa4] sm:$0xf]
    %v4793 = vld [vmem:[%s4760 + $0xa8] sm:$0xf]
    %v4794 = vld [vmem:[%s4760 + $0xb0] sm:$0x8]
    %v4795 = vld [vmem:[%s4760 + $0xb4] sm:$0xf]
    %v4796 = vld [vmem:[%s4760 + $0xb8] sm:$0xf]
    %v4797 = vld [vmem:[%s4760 + $0xc0] sm:$0x8]
    %v4798 = vld [vmem:[%s4760 + $0xc4] sm:$0xf]
    %v4799 = vld [vmem:[%s4760 + $0xc8] sm:$0xf]
    %v4800 = vld [vmem:[%s4760 + $0xd0] sm:$0x8]
    %v4801 = vld [vmem:[%s4760 + $0xd4] sm:$0xf]
    %v4802 = vld [vmem:[%s4760 + $0xd8] sm:$0xf]
    %v4803 = vld [vmem:[%s4760 + $0xe0] sm:$0x8]
    %v4804 = vld [vmem:[%s4760 + $0xe4] sm:$0xf]
    %v4805 = vld [vmem:[%s4760 + $0xe8] sm:$0xf]
    %v4806 = vld [vmem:[%s4760 + $0xf0] sm:$0x8]
    %v4807 = vld [vmem:[%s4760 + $0xf4] sm:$0xf]
    %v4808 = vld [vmem:[%s4760 + $0xf8] sm:$0xf]
    %v4810 = vshrl.u32 %v4761, 16
    %v4812 = vrot.slane %v4810, 7
    %v4813 = vrot.slane %v4812, 4
    %v4815 = vshrl.u32 %v4762, 16
    %v4817 = vrot.slane %v4815, 7
    %v4818 = vshll.u32 %v4762, 16
    %v4820 = vor.u32 %v4817, %v4818
    %v4821 = vsel %vm228, %v4813, %v4820
    %v4822 = vrot.slane %v4817, 4
    %v4824 = vshrl.u32 %v4763, 16
    %v4826 = vrot.slane %v4824, 7
    %v4827 = vshll.u32 %v4763, 16
    %v4829 = vor.u32 %v4826, %v4827
    %v4830 = vsel %vm228, %v4822, %v4829
    %v4832 = vshrl.u32 %v4764, 16
    %v4834 = vrot.slane %v4832, 7
    %v4835 = vrot.slane %v4834, 4
    %v4837 = vshrl.u32 %v4765, 16
    %v4839 = vrot.slane %v4837, 7
    %v4840 = vshll.u32 %v4765, 16
    %v4842 = vor.u32 %v4839, %v4840
    %v4843 = vsel %vm228, %v4835, %v4842
    %v4844 = vrot.slane %v4839, 4
    %v4846 = vshrl.u32 %v4766, 16
    %v4848 = vrot.slane %v4846, 7
    %v4849 = vshll.u32 %v4766, 16
    %v4851 = vor.u32 %v4848, %v4849
    %v4852 = vsel %vm228, %v4844, %v4851
    %v4854 = vshrl.u32 %v4767, 16
    %v4856 = vrot.slane %v4854, 7
    %v4857 = vrot.slane %v4856, 4
    %v4859 = vshrl.u32 %v4768, 16
    %v4861 = vrot.slane %v4859, 7
    %v4862 = vshll.u32 %v4768, 16
    %v4864 = vor.u32 %v4861, %v4862
    %v4865 = vsel %vm228, %v4857, %v4864
    %v4866 = vrot.slane %v4861, 4
    %v4868 = vshrl.u32 %v4769, 16
    %v4870 = vrot.slane %v4868, 7
    %v4871 = vshll.u32 %v4769, 16
    %v4873 = vor.u32 %v4870, %v4871
    %v4874 = vsel %vm228, %v4866, %v4873
    %v4876 = vshrl.u32 %v4770, 16
    %v4878 = vrot.slane %v4876, 7
    %v4879 = vrot.slane %v4878, 4
    %v4881 = vshrl.u32 %v4771, 16
    %v4883 = vrot.slane %v4881, 7
    %v4884 = vshll.u32 %v4771, 16
    %v4886 = vor.u32 %v4883, %v4884
    %v4887 = vsel %vm228, %v4879, %v4886
    %v4888 = vrot.slane %v4883, 4
    %v4890 = vshrl.u32 %v4772, 16
    %v4892 = vrot.slane %v4890, 7
    %v4893 = vshll.u32 %v4772, 16
    %v4895 = vor.u32 %v4892, %v4893
    %v4896 = vsel %vm228, %v4888, %v4895
    %v4898 = vshrl.u32 %v4773, 16
    %v4900 = vrot.slane %v4898, 7
    %v4901 = vrot.slane %v4900, 4
    %v4903 = vshrl.u32 %v4774, 16
    %v4905 = vrot.slane %v4903, 7
    %v4906 = vshll.u32 %v4774, 16
    %v4908 = vor.u32 %v4905, %v4906
    %v4909 = vsel %vm228, %v4901, %v4908
    %v4910 = vrot.slane %v4905, 4
    %v4912 = vshrl.u32 %v4775, 16
    %v4914 = vrot.slane %v4912, 7
    %v4915 = vshll.u32 %v4775, 16
    %v4917 = vor.u32 %v4914, %v4915
    %v4918 = vsel %vm228, %v4910, %v4917
    %v4920 = vshrl.u32 %v4776, 16
    %v4922 = vrot.slane %v4920, 7
    %v4923 = vrot.slane %v4922, 4
    %v4925 = vshrl.u32 %v4777, 16
    %v4927 = vrot.slane %v4925, 7
    %v4928 = vshll.u32 %v4777, 16
    %v4930 = vor.u32 %v4927, %v4928
    %v4931 = vsel %vm228, %v4923, %v4930
    %v4932 = vrot.slane %v4927, 4
    %v4934 = vshrl.u32 %v4778, 16
    %v4936 = vrot.slane %v4934, 7
    %v4937 = vshll.u32 %v4778, 16
    %v4939 = vor.u32 %v4936, %v4937
    %v4940 = vsel %vm228, %v4932, %v4939
    %v4942 = vshrl.u32 %v4779, 16
    %v4944 = vrot.slane %v4942, 7
    %v4945 = vrot.slane %v4944, 4
    %v4947 = vshrl.u32 %v4780, 16
    %v4949 = vrot.slane %v4947, 7
    %v4950 = vshll.u32 %v4780, 16
    %v4952 = vor.u32 %v4949, %v4950
    %v4953 = vsel %vm228, %v4945, %v4952
    %v4954 = vrot.slane %v4949, 4
    %v4956 = vshrl.u32 %v4781, 16
    %v4958 = vrot.slane %v4956, 7
    %v4959 = vshll.u32 %v4781, 16
    %v4961 = vor.u32 %v4958, %v4959
    %v4962 = vsel %vm228, %v4954, %v4961
    %v4964 = vshrl.u32 %v4782, 16
    %v4966 = vrot.slane %v4964, 7
    %v4967 = vrot.slane %v4966, 4
    %v4969 = vshrl.u32 %v4783, 16
    %v4971 = vrot.slane %v4969, 7
    %v4972 = vshll.u32 %v4783, 16
    %v4974 = vor.u32 %v4971, %v4972
    %v4975 = vsel %vm228, %v4967, %v4974
    %v4976 = vrot.slane %v4971, 4
    %v4978 = vshrl.u32 %v4784, 16
    %v4980 = vrot.slane %v4978, 7
    %v4981 = vshll.u32 %v4784, 16
    %v4983 = vor.u32 %v4980, %v4981
    %v4984 = vsel %vm228, %v4976, %v4983
    %v4986 = vshrl.u32 %v4785, 16
    %v4988 = vrot.slane %v4986, 7
    %v4989 = vrot.slane %v4988, 4
    %v4991 = vshrl.u32 %v4786, 16
    %v4993 = vrot.slane %v4991, 7
    %v4994 = vshll.u32 %v4786, 16
    %v4996 = vor.u32 %v4993, %v4994
    %v4997 = vsel %vm228, %v4989, %v4996
    %v4998 = vrot.slane %v4993, 4
    %v5000 = vshrl.u32 %v4787, 16
    %v5002 = vrot.slane %v5000, 7
    %v5003 = vshll.u32 %v4787, 16
    %v5005 = vor.u32 %v5002, %v5003
    %v5006 = vsel %vm228, %v4998, %v5005
    %v5008 = vshrl.u32 %v4788, 16
    %v5010 = vrot.slane %v5008, 7
    %v5011 = vrot.slane %v5010, 4
    %v5013 = vshrl.u32 %v4789, 16
    %v5015 = vrot.slane %v5013, 7
    %v5016 = vshll.u32 %v4789, 16
    %v5018 = vor.u32 %v5015, %v5016
    %v5019 = vsel %vm228, %v5011, %v5018
    %v5020 = vrot.slane %v5015, 4
    %v5022 = vshrl.u32 %v4790, 16
    %v5024 = vrot.slane %v5022, 7
    %v5025 = vshll.u32 %v4790, 16
    %v5027 = vor.u32 %v5024, %v5025
    %v5028 = vsel %vm228, %v5020, %v5027
    %v5030 = vshrl.u32 %v4791, 16
    %v5032 = vrot.slane %v5030, 7
    %v5033 = vrot.slane %v5032, 4
    %v5035 = vshrl.u32 %v4792, 16
    %v5037 = vrot.slane %v5035, 7
    %v5038 = vshll.u32 %v4792, 16
    %v5040 = vor.u32 %v5037, %v5038
    %v5041 = vsel %vm228, %v5033, %v5040
    %v5042 = vrot.slane %v5037, 4
    %v5044 = vshrl.u32 %v4793, 16
    %v5046 = vrot.slane %v5044, 7
    %v5047 = vshll.u32 %v4793, 16
    %v5049 = vor.u32 %v5046, %v5047
    %v5050 = vsel %vm228, %v5042, %v5049
    %v5052 = vshrl.u32 %v4794, 16
    %v5054 = vrot.slane %v5052, 7
    %v5055 = vrot.slane %v5054, 4
    %v5057 = vshrl.u32 %v4795, 16
    %v5059 = vrot.slane %v5057, 7
    %v5060 = vshll.u32 %v4795, 16
    %v5062 = vor.u32 %v5059, %v5060
    %v5063 = vsel %vm228, %v5055, %v5062
    %v5064 = vrot.slane %v5059, 4
    %v5066 = vshrl.u32 %v4796, 16
    %v5068 = vrot.slane %v5066, 7
    %v5069 = vshll.u32 %v4796, 16
    %v5071 = vor.u32 %v5068, %v5069
    %v5072 = vsel %vm228, %v5064, %v5071
    %v5074 = vshrl.u32 %v4797, 16
    %v5076 = vrot.slane %v5074, 7
    %v5077 = vrot.slane %v5076, 4
    %v5079 = vshrl.u32 %v4798, 16
    %v5081 = vrot.slane %v5079, 7
    %v5082 = vshll.u32 %v4798, 16
    %v5084 = vor.u32 %v5081, %v5082
    %v5085 = vsel %vm228, %v5077, %v5084
    %v5086 = vrot.slane %v5081, 4
    %v5088 = vshrl.u32 %v4799, 16
    %v5090 = vrot.slane %v5088, 7
    %v5091 = vshll.u32 %v4799, 16
    %v5093 = vor.u32 %v5090, %v5091
    %v5094 = vsel %vm228, %v5086, %v5093
    %v5096 = vshrl.u32 %v4800, 16
    %v5098 = vrot.slane %v5096, 7
    %v5099 = vrot.slane %v5098, 4
    %v5101 = vshrl.u32 %v4801, 16
    %v5103 = vrot.slane %v5101, 7
    %v5104 = vshll.u32 %v4801, 16
    %v5106 = vor.u32 %v5103, %v5104
    %v5107 = vsel %vm228, %v5099, %v5106
    %v5108 = vrot.slane %v5103, 4
    %v5110 = vshrl.u32 %v4802, 16
    %v5112 = vrot.slane %v5110, 7
    %v5113 = vshll.u32 %v4802, 16
    %v5115 = vor.u32 %v5112, %v5113
    %v5116 = vsel %vm228, %v5108, %v5115
    %v5118 = vshrl.u32 %v4803, 16
    %v5120 = vrot.slane %v5118, 7
    %v5121 = vrot.slane %v5120, 4
    %v5123 = vshrl.u32 %v4804, 16
    %v5125 = vrot.slane %v5123, 7
    %v5126 = vshll.u32 %v4804, 16
    %v5128 = vor.u32 %v5125, %v5126
    %v5129 = vsel %vm228, %v5121, %v5128
    %v5130 = vrot.slane %v5125, 4
    %v5132 = vshrl.u32 %v4805, 16
    %v5134 = vrot.slane %v5132, 7
    %v5135 = vshll.u32 %v4805, 16
    %v5137 = vor.u32 %v5134, %v5135
    %v5138 = vsel %vm228, %v5130, %v5137
    %v5140 = vshrl.u32 %v4806, 16
    %v5142 = vrot.slane %v5140, 7
    %v5143 = vrot.slane %v5142, 4
    %v5145 = vshrl.u32 %v4807, 16
    %v5147 = vrot.slane %v5145, 7
    %v5148 = vshll.u32 %v4807, 16
    %v5150 = vor.u32 %v5147, %v5148
    %v5151 = vsel %vm228, %v5143, %v5150
    %v5152 = vrot.slane %v5147, 4
    %v5154 = vshrl.u32 %v4808, 16
    %v5156 = vrot.slane %v5154, 7
    %v5157 = vshll.u32 %v4808, 16
    %v5159 = vor.u32 %v5156, %v5157
    %v5160 = vsel %vm228, %v5152, %v5159
    %v5161 = vld [vmem:[%s4760 + $0xc] sm:$0x1]
    %v5162 = vld [vmem:[%s4760 + $0x1c] sm:$0x1]
    %v5163 = vld [vmem:[%s4760 + $0x2c] sm:$0x1]
    %v5164 = vld [vmem:[%s4760 + $0x3c] sm:$0x1]
    %v5165 = vld [vmem:[%s4760 + $0x4c] sm:$0x1]
    %v5166 = vld [vmem:[%s4760 + $0x5c] sm:$0x1]
    %v5167 = vld [vmem:[%s4760 + $0x6c] sm:$0x1]
    %v5168 = vld [vmem:[%s4760 + $0x7c] sm:$0x1]
    %v5169 = vld [vmem:[%s4760 + $0x8c] sm:$0x1]
    %v5170 = vld [vmem:[%s4760 + $0x9c] sm:$0x1]
    %v5171 = vld [vmem:[%s4760 + $0xac] sm:$0x1]
    %v5172 = vld [vmem:[%s4760 + $0xbc] sm:$0x1]
    %v5173 = vld [vmem:[%s4760 + $0xcc] sm:$0x1]
    %v5174 = vld [vmem:[%s4760 + $0xdc] sm:$0x1]
    %v5175 = vld [vmem:[%s4760 + $0xec] sm:$0x1]
    %v5176 = vld [vmem:[%s4760 + $0xfc] sm:$0x1]
    %v5177 = vrot.slane %v4815, 4
    %v5178 = vrot.slane %v4818, 5
    %v5179 = vor.u32 %v5177, %v5178
    %v5180 = vrot.slane %v5179, 4
    %v5181 = vrot.slane %v4827, 5
    %v5182 = vsel %vm599, %v5180, %v5181
    %v5183 = vrot.slane %v4824, 4
    %v5184 = vor.u32 %v5183, %v5181
    %v5185 = vrot.slane %v5184, 4
    %v5187 = vshll.u32 %v5161, 16
    %v5189 = vrot.slane %v5187, 5
    %v5190 = vsel %vm599, %v5185, %v5189
    %v5191 = vrot.slane %v4837, 4
    %v5192 = vrot.slane %v4840, 5
    %v5193 = vor.u32 %v5191, %v5192
    %v5194 = vrot.slane %v5193, 4
    %v5195 = vrot.slane %v4849, 5
    %v5196 = vsel %vm599, %v5194, %v5195
    %v5197 = vrot.slane %v4846, 4
    %v5198 = vor.u32 %v5197, %v5195
    %v5199 = vrot.slane %v5198, 4
    %v5201 = vshll.u32 %v5162, 16
    %v5203 = vrot.slane %v5201, 5
    %v5204 = vsel %vm599, %v5199, %v5203
    %v5205 = vrot.slane %v4859, 4
    %v5206 = vrot.slane %v4862, 5
    %v5207 = vor.u32 %v5205, %v5206
    %v5208 = vrot.slane %v5207, 4
    %v5209 = vrot.slane %v4871, 5
    %v5210 = vsel %vm599, %v5208, %v5209
    %v5211 = vrot.slane %v4868, 4
    %v5212 = vor.u32 %v5211, %v5209
    %v5213 = vrot.slane %v5212, 4
    %v5215 = vshll.u32 %v5163, 16
    %v5217 = vrot.slane %v5215, 5
    %v5218 = vsel %vm599, %v5213, %v5217
    %v5219 = vrot.slane %v4881, 4
    %v5220 = vrot.slane %v4884, 5
    %v5221 = vor.u32 %v5219, %v5220
    %v5222 = vrot.slane %v5221, 4
    %v5223 = vrot.slane %v4893, 5
    %v5224 = vsel %vm599, %v5222, %v5223
    %v5225 = vrot.slane %v4890, 4
    %v5226 = vor.u32 %v5225, %v5223
    %v5227 = vrot.slane %v5226, 4
    %v5229 = vshll.u32 %v5164, 16
    %v5231 = vrot.slane %v5229, 5
    %v5232 = vsel %vm599, %v5227, %v5231
    %v5233 = vrot.slane %v4903, 4
    %v5234 = vrot.slane %v4906, 5
    %v5235 = vor.u32 %v5233, %v5234
    %v5236 = vrot.slane %v5235, 4
    %v5237 = vrot.slane %v4915, 5
    %v5238 = vsel %vm599, %v5236, %v5237
    %v5239 = vrot.slane %v4912, 4
    %v5240 = vor.u32 %v5239, %v5237
    %v5241 = vrot.slane %v5240, 4
    %v5243 = vshll.u32 %v5165, 16
    %v5245 = vrot.slane %v5243, 5
    %v5246 = vsel %vm599, %v5241, %v5245
    %v5247 = vrot.slane %v4925, 4
    %v5248 = vrot.slane %v4928, 5
    %v5249 = vor.u32 %v5247, %v5248
    %v5250 = vrot.slane %v5249, 4
    %v5251 = vrot.slane %v4937, 5
    %v5252 = vsel %vm599, %v5250, %v5251
    %v5253 = vrot.slane %v4934, 4
    %v5254 = vor.u32 %v5253, %v5251
    %v5255 = vrot.slane %v5254, 4
    %v5257 = vshll.u32 %v5166, 16
    %v5259 = vrot.slane %v5257, 5
    %v5260 = vsel %vm599, %v5255, %v5259
    %v5261 = vrot.slane %v4947, 4
    %v5262 = vrot.slane %v4950, 5
    %v5263 = vor.u32 %v5261, %v5262
    %v5264 = vrot.slane %v5263, 4
    %v5265 = vrot.slane %v4959, 5
    %v5266 = vsel %vm599, %v5264, %v5265
    %v5267 = vrot.slane %v4956, 4
    %v5268 = vor.u32 %v5267, %v5265
    %v5269 = vrot.slane %v5268, 4
    %v5271 = vshll.u32 %v5167, 16
    %v5273 = vrot.slane %v5271, 5
    %v5274 = vsel %vm599, %v5269, %v5273
    %v5275 = vrot.slane %v4969, 4
    %v5276 = vrot.slane %v4972, 5
    %v5277 = vor.u32 %v5275, %v5276
    %v5278 = vrot.slane %v5277, 4
    %v5279 = vrot.slane %v4981, 5
    %v5280 = vsel %vm599, %v5278, %v5279
    %v5281 = vrot.slane %v4978, 4
    %v5282 = vor.u32 %v5281, %v5279
    %v5283 = vrot.slane %v5282, 4
    %v5285 = vshll.u32 %v5168, 16
    %v5287 = vrot.slane %v5285, 5
    %v5288 = vsel %vm599, %v5283, %v5287
    %v5289 = vrot.slane %v4991, 4
    %v5290 = vrot.slane %v4994, 5
    %v5291 = vor.u32 %v5289, %v5290
    %v5292 = vrot.slane %v5291, 4
    %v5293 = vrot.slane %v5003, 5
    %v5294 = vsel %vm599, %v5292, %v5293
    %v5295 = vrot.slane %v5000, 4
    %v5296 = vor.u32 %v5295, %v5293
    %v5297 = vrot.slane %v5296, 4
    %v5299 = vshll.u32 %v5169, 16
    %v5301 = vrot.slane %v5299, 5
    %v5302 = vsel %vm599, %v5297, %v5301
    %v5303 = vrot.slane %v5013, 4
    %v5304 = vrot.slane %v5016, 5
    %v5305 = vor.u32 %v5303, %v5304
    %v5306 = vrot.slane %v5305, 4
    %v5307 = vrot.slane %v5025, 5
    %v5308 = vsel %vm599, %v5306, %v5307
    %v5309 = vrot.slane %v5022, 4
    %v5310 = vor.u32 %v5309, %v5307
    %v5311 = vrot.slane %v5310, 4
    %v5313 = vshll.u32 %v5170, 16
    %v5315 = vrot.slane %v5313, 5
    %v5316 = vsel %vm599, %v5311, %v5315
    %v5317 = vrot.slane %v5035, 4
    %v5318 = vrot.slane %v5038, 5
    %v5319 = vor.u32 %v5317, %v5318
    %v5320 = vrot.slane %v5319, 4
    %v5321 = vrot.slane %v5047, 5
    %v5322 = vsel %vm599, %v5320, %v5321
    %v5323 = vrot.slane %v5044, 4
    %v5324 = vor.u32 %v5323, %v5321
    %v5325 = vrot.slane %v5324, 4
    %v5327 = vshll.u32 %v5171, 16
    %v5329 = vrot.slane %v5327, 5
    %v5330 = vsel %vm599, %v5325, %v5329
    %v5331 = vrot.slane %v5057, 4
    %v5332 = vrot.slane %v5060, 5
    %v5333 = vor.u32 %v5331, %v5332
    %v5334 = vrot.slane %v5333, 4
    %v5335 = vrot.slane %v5069, 5
    %v5336 = vsel %vm599, %v5334, %v5335
    %v5337 = vrot.slane %v5066, 4
    %v5338 = vor.u32 %v5337, %v5335
    %v5339 = vrot.slane %v5338, 4
    %v5341 = vshll.u32 %v5172, 16
    %v5343 = vrot.slane %v5341, 5
    %v5344 = vsel %vm599, %v5339, %v5343
    %v5345 = vrot.slane %v5079, 4
    %v5346 = vrot.slane %v5082, 5
    %v5347 = vor.u32 %v5345, %v5346
    %v5348 = vrot.slane %v5347, 4
    %v5349 = vrot.slane %v5091, 5
    %v5350 = vsel %vm599, %v5348, %v5349
    %v5351 = vrot.slane %v5088, 4
    %v5352 = vor.u32 %v5351, %v5349
    %v5353 = vrot.slane %v5352, 4
    %v5355 = vshll.u32 %v5173, 16
    %v5357 = vrot.slane %v5355, 5
    %v5358 = vsel %vm599, %v5353, %v5357
    %v5359 = vrot.slane %v5101, 4
    %v5360 = vrot.slane %v5104, 5
    %v5361 = vor.u32 %v5359, %v5360
    %v5362 = vrot.slane %v5361, 4
    %v5363 = vrot.slane %v5113, 5
    %v5364 = vsel %vm599, %v5362, %v5363
    %v5365 = vrot.slane %v5110, 4
    %v5366 = vor.u32 %v5365, %v5363
    %v5367 = vrot.slane %v5366, 4
    %v5369 = vshll.u32 %v5174, 16
    %v5371 = vrot.slane %v5369, 5
    %v5372 = vsel %vm599, %v5367, %v5371
    %v5373 = vrot.slane %v5123, 4
    %v5374 = vrot.slane %v5126, 5
    %v5375 = vor.u32 %v5373, %v5374
    %v5376 = vrot.slane %v5375, 4
    %v5377 = vrot.slane %v5135, 5
    %v5378 = vsel %vm599, %v5376, %v5377
    %v5379 = vrot.slane %v5132, 4
    %v5380 = vor.u32 %v5379, %v5377
    %v5381 = vrot.slane %v5380, 4
    %v5383 = vshll.u32 %v5175, 16
    %v5385 = vrot.slane %v5383, 5
    %v5386 = vsel %vm599, %v5381, %v5385
    %v5387 = vrot.slane %v5145, 4
    %v5388 = vrot.slane %v5148, 5
    %v5389 = vor.u32 %v5387, %v5388
    %v5390 = vrot.slane %v5389, 4
    %v5391 = vrot.slane %v5157, 5
    %v5392 = vsel %vm599, %v5390, %v5391
    %v5393 = vrot.slane %v5154, 4
    %v5394 = vor.u32 %v5393, %v5391
    %v5395 = vrot.slane %v5394, 4
    %v5397 = vshll.u32 %v5176, 16
    %v5399 = vrot.slane %v5397, 5
    %v5400 = vsel %vm599, %v5395, %v5399
    %v5401 = vunpack.c.l.b16 %v3540
    %v5402 = vunpack.c.l.b16 %v3549
    %v5403 = vunpack.c.l.b16 %v3562
    %v5404 = vunpack.c.l.b16 %v3571
    %v5405 = vunpack.c.l.b16 %v3584
    %v5406 = vunpack.c.l.b16 %v3593
    %v5407 = vunpack.c.l.b16 %v3606
    %v5408 = vunpack.c.l.b16 %v3615
    %v5409 = vunpack.c.l.b16 %v3628
    %v5410 = vunpack.c.l.b16 %v3637
    %v5411 = vunpack.c.l.b16 %v3650
    %v5412 = vunpack.c.l.b16 %v3659
    %v5413 = vunpack.c.l.b16 %v3672
    %v5414 = vunpack.c.l.b16 %v3681
    %v5415 = vunpack.c.l.b16 %v3694
    %v5416 = vunpack.c.l.b16 %v3703
    %v5417 = vunpack.c.l.b16 %v3716
    %v5418 = vunpack.c.l.b16 %v3725
    %v5419 = vunpack.c.l.b16 %v3738
    %v5420 = vunpack.c.l.b16 %v3747
    %v5421 = vunpack.c.l.b16 %v3760
    %v5422 = vunpack.c.l.b16 %v3769
    %v5423 = vunpack.c.l.b16 %v3782
    %v5424 = vunpack.c.l.b16 %v3791
    %v5425 = vunpack.c.l.b16 %v3804
    %v5426 = vunpack.c.l.b16 %v3813
    %v5427 = vunpack.c.l.b16 %v3826
    %v5428 = vunpack.c.l.b16 %v3835
    %v5429 = vunpack.c.l.b16 %v3848
    %v5430 = vunpack.c.l.b16 %v3857
    %v5431 = vunpack.c.l.b16 %v3870
    %v5432 = vunpack.c.l.b16 %v3879
    %v5433 = vpack.c.b16 %v5402, %v5401
    %v5434 = vpack.c.b16 %v5404, %v5403
    %v5435 = vpack.c.b16 %v5406, %v5405
    %v5436 = vpack.c.b16 %v5408, %v5407
    %v5437 = vpack.c.b16 %v5410, %v5409
    %v5438 = vpack.c.b16 %v5412, %v5411
    %v5439 = vpack.c.b16 %v5414, %v5413
    %v5440 = vpack.c.b16 %v5416, %v5415
    %v5441 = vpack.c.b16 %v5418, %v5417
    %v5442 = vpack.c.b16 %v5420, %v5419
    %v5443 = vpack.c.b16 %v5422, %v5421
    %v5444 = vpack.c.b16 %v5424, %v5423
    %v5445 = vpack.c.b16 %v5426, %v5425
    %v5446 = vpack.c.b16 %v5428, %v5427
    %v5447 = vpack.c.b16 %v5430, %v5429
    %v5448 = vpack.c.b16 %v5432, %v5431
    %v5481 = vunpack.c.l.b16 %v3481
    %v5482 = vunpack.c.l.b16 %v3482
    %v5483 = vunpack.c.l.b16 %v3484
    %v5484 = vunpack.c.l.b16 %v3485
    %v5485 = vunpack.c.l.b16 %v3487
    %v5486 = vunpack.c.l.b16 %v3488
    %v5487 = vunpack.c.l.b16 %v3490
    %v5488 = vunpack.c.l.b16 %v3491
    %v5489 = vunpack.c.l.b16 %v3493
    %v5490 = vunpack.c.l.b16 %v3494
    %v5491 = vunpack.c.l.b16 %v3496
    %v5492 = vunpack.c.l.b16 %v3497
    %v5493 = vunpack.c.l.b16 %v3499
    %v5494 = vunpack.c.l.b16 %v3500
    %v5495 = vunpack.c.l.b16 %v3502
    %v5496 = vunpack.c.l.b16 %v3503
    %v5497 = vunpack.c.l.b16 %v3505
    %v5498 = vunpack.c.l.b16 %v3506
    %v5499 = vunpack.c.l.b16 %v3508
    %v5500 = vunpack.c.l.b16 %v3509
    %v5501 = vunpack.c.l.b16 %v3511
    %v5502 = vunpack.c.l.b16 %v3512
    %v5503 = vunpack.c.l.b16 %v3514
    %v5504 = vunpack.c.l.b16 %v3515
    %v5505 = vunpack.c.l.b16 %v3517
    %v5506 = vunpack.c.l.b16 %v3518
    %v5507 = vunpack.c.l.b16 %v3520
    %v5508 = vunpack.c.l.b16 %v3521
    %v5509 = vunpack.c.l.b16 %v3523
    %v5510 = vunpack.c.l.b16 %v3524
    %v5511 = vunpack.c.l.b16 %v3526
    %v5512 = vunpack.c.l.b16 %v3527
    %v5513 = vpack.c.b16 %v5482, %v5481
    %v5514 = vpack.c.b16 %v5484, %v5483
    %v5515 = vpack.c.b16 %v5486, %v5485
    %v5516 = vpack.c.b16 %v5488, %v5487
    %v5517 = vpack.c.b16 %v5490, %v5489
    %v5518 = vpack.c.b16 %v5492, %v5491
    %v5519 = vpack.c.b16 %v5494, %v5493
    %v5520 = vpack.c.b16 %v5496, %v5495
    %v5521 = vpack.c.b16 %v5498, %v5497
    %v5522 = vpack.c.b16 %v5500, %v5499
    %v5523 = vpack.c.b16 %v5502, %v5501
    %v5524 = vpack.c.b16 %v5504, %v5503
    %v5525 = vpack.c.b16 %v5506, %v5505
    %v5526 = vpack.c.b16 %v5508, %v5507
    %v5527 = vpack.c.b16 %v5510, %v5509
    %v5528 = vpack.c.b16 %v5512, %v5511
    %5529 = vrot.lane.b32.xlu0 %v5513, 4
    %v5530 = vpop.permute.xlu0 %5529
    %5531 = vrot.lane.b32.xlu0 %v5514, 4
    %v5532 = vpop.permute.xlu0 %5531
    %5533 = vrot.lane.b32.xlu0 %v5515, 4
    %v5534 = vpop.permute.xlu0 %5533
    %5535 = vrot.lane.b32.xlu0 %v5516, 4
    %v5536 = vpop.permute.xlu0 %5535
    %5537 = vrot.lane.b32.xlu0 %v5517, 4
    %v5538 = vpop.permute.xlu0 %5537
    %5539 = vrot.lane.b32.xlu0 %v5518, 4
    %v5540 = vpop.permute.xlu0 %5539
    %5541 = vrot.lane.b32.xlu0 %v5519, 4
    %v5542 = vpop.permute.xlu0 %5541
    %5543 = vrot.lane.b32.xlu0 %v5520, 4
    %v5544 = vpop.permute.xlu0 %5543
    %5545 = vrot.lane.b32.xlu0 %v5521, 4
    %v5546 = vpop.permute.xlu0 %5545
    %5547 = vrot.lane.b32.xlu0 %v5522, 4
    %v5548 = vpop.permute.xlu0 %5547
    %5549 = vrot.lane.b32.xlu0 %v5523, 4
    %v5550 = vpop.permute.xlu0 %5549
    %5551 = vrot.lane.b32.xlu0 %v5524, 4
    %v5552 = vpop.permute.xlu0 %5551
    %5553 = vrot.lane.b32.xlu0 %v5525, 4
    %v5554 = vpop.permute.xlu0 %5553
    %5555 = vrot.lane.b32.xlu0 %v5526, 4
    %v5556 = vpop.permute.xlu0 %5555
    %5557 = vrot.lane.b32.xlu0 %v5527, 4
    %v5558 = vpop.permute.xlu0 %5557
    %5559 = vrot.lane.b32.xlu0 %v5528, 4
    %v5560 = vpop.permute.xlu0 %5559
    %v5561 = vunpack.c.l.b16 %v3901
    %v5562 = vunpack.c.l.b16 %v3909
    %v5563 = vunpack.c.l.b16 %v3915
    %v5564 = vunpack.c.l.b16 %v3923
    %v5565 = vunpack.c.l.b16 %v3929
    %v5566 = vunpack.c.l.b16 %v3937
    %v5567 = vunpack.c.l.b16 %v3943
    %v5568 = vunpack.c.l.b16 %v3951
    %v5569 = vunpack.c.l.b16 %v3957
    %v5570 = vunpack.c.l.b16 %v3965
    %v5571 = vunpack.c.l.b16 %v3971
    %v5572 = vunpack.c.l.b16 %v3979
    %v5573 = vunpack.c.l.b16 %v3985
    %v5574 = vunpack.c.l.b16 %v3993
    %v5575 = vunpack.c.l.b16 %v3999
    %v5576 = vunpack.c.l.b16 %v4007
    %v5577 = vunpack.c.l.b16 %v4013
    %v5578 = vunpack.c.l.b16 %v4021
    %v5579 = vunpack.c.l.b16 %v4027
    %v5580 = vunpack.c.l.b16 %v4035
    %v5581 = vunpack.c.l.b16 %v4041
    %v5582 = vunpack.c.l.b16 %v4049
    %v5583 = vunpack.c.l.b16 %v4055
    %v5584 = vunpack.c.l.b16 %v4063
    %v5585 = vunpack.c.l.b16 %v4069
    %v5586 = vunpack.c.l.b16 %v4077
    %v5587 = vunpack.c.l.b16 %v4083
    %v5588 = vunpack.c.l.b16 %v4091
    %v5589 = vunpack.c.l.b16 %v4097
    %v5590 = vunpack.c.l.b16 %v4105
    %v5591 = vunpack.c.l.b16 %v4111
    %v5592 = vunpack.c.l.b16 %v4119
    %v5593 = vpack.c.b16 %v5562, %v5561
    %v5594 = vpack.c.b16 %v5564, %v5563
    %v5595 = vpack.c.b16 %v5566, %v5565
    %v5596 = vpack.c.b16 %v5568, %v5567
    %v5597 = vpack.c.b16 %v5570, %v5569
    %v5598 = vpack.c.b16 %v5572, %v5571
    %v5599 = vpack.c.b16 %v5574, %v5573
    %v5600 = vpack.c.b16 %v5576, %v5575
    %v5601 = vpack.c.b16 %v5578, %v5577
    %v5602 = vpack.c.b16 %v5580, %v5579
    %v5603 = vpack.c.b16 %v5582, %v5581
    %v5604 = vpack.c.b16 %v5584, %v5583
    %v5605 = vpack.c.b16 %v5586, %v5585
    %v5606 = vpack.c.b16 %v5588, %v5587
    %v5607 = vpack.c.b16 %v5590, %v5589
    %v5608 = vpack.c.b16 %v5592, %v5591
    %5609 = vrot.lane.b32.xlu0 %v5593, 8
    %v5610 = vpop.permute.xlu0 %5609
    %5611 = vrot.lane.b32.xlu0 %v5594, 8
    %v5612 = vpop.permute.xlu0 %5611
    %5613 = vrot.lane.b32.xlu0 %v5595, 8
    %v5614 = vpop.permute.xlu0 %5613
    %5615 = vrot.lane.b32.xlu0 %v5596, 8
    %v5616 = vpop.permute.xlu0 %5615
    %5617 = vrot.lane.b32.xlu0 %v5597, 8
    %v5618 = vpop.permute.xlu0 %5617
    %5619 = vrot.lane.b32.xlu0 %v5598, 8
    %v5620 = vpop.permute.xlu0 %5619
    %5621 = vrot.lane.b32.xlu0 %v5599, 8
    %v5622 = vpop.permute.xlu0 %5621
    %5623 = vrot.lane.b32.xlu0 %v5600, 8
    %v5624 = vpop.permute.xlu0 %5623
    %5625 = vrot.lane.b32.xlu0 %v5601, 8
    %v5626 = vpop.permute.xlu0 %5625
    %5627 = vrot.lane.b32.xlu0 %v5602, 8
    %v5628 = vpop.permute.xlu0 %5627
    %5629 = vrot.lane.b32.xlu0 %v5603, 8
    %v5630 = vpop.permute.xlu0 %5629
    %5631 = vrot.lane.b32.xlu0 %v5604, 8
    %v5632 = vpop.permute.xlu0 %5631
    %5633 = vrot.lane.b32.xlu0 %v5605, 8
    %v5634 = vpop.permute.xlu0 %5633
    %5635 = vrot.lane.b32.xlu0 %v5606, 8
    %v5636 = vpop.permute.xlu0 %5635
    %5637 = vrot.lane.b32.xlu0 %v5607, 8
    %v5638 = vpop.permute.xlu0 %5637
    %5639 = vrot.lane.b32.xlu0 %v5608, 8
    %v5640 = vpop.permute.xlu0 %5639
    %v5641 = vunpack.c.l.b16 %v4180
    %v5642 = vunpack.c.l.b16 %v4189
    %v5643 = vunpack.c.l.b16 %v4202
    %v5644 = vunpack.c.l.b16 %v4211
    %v5645 = vunpack.c.l.b16 %v4224
    %v5646 = vunpack.c.l.b16 %v4233
    %v5647 = vunpack.c.l.b16 %v4246
    %v5648 = vunpack.c.l.b16 %v4255
    %v5649 = vunpack.c.l.b16 %v4268
    %v5650 = vunpack.c.l.b16 %v4277
    %v5651 = vunpack.c.l.b16 %v4290
    %v5652 = vunpack.c.l.b16 %v4299
    %v5653 = vunpack.c.l.b16 %v4312
    %v5654 = vunpack.c.l.b16 %v4321
    %v5655 = vunpack.c.l.b16 %v4334
    %v5656 = vunpack.c.l.b16 %v4343
    %v5657 = vunpack.c.l.b16 %v4356
    %v5658 = vunpack.c.l.b16 %v4365
    %v5659 = vunpack.c.l.b16 %v4378
    %v5660 = vunpack.c.l.b16 %v4387
    %v5661 = vunpack.c.l.b16 %v4400
    %v5662 = vunpack.c.l.b16 %v4409
    %v5663 = vunpack.c.l.b16 %v4422
    %v5664 = vunpack.c.l.b16 %v4431
    %v5665 = vunpack.c.l.b16 %v4444
    %v5666 = vunpack.c.l.b16 %v4453
    %v5667 = vunpack.c.l.b16 %v4466
    %v5668 = vunpack.c.l.b16 %v4475
    %v5669 = vunpack.c.l.b16 %v4488
    %v5670 = vunpack.c.l.b16 %v4497
    %v5671 = vunpack.c.l.b16 %v4510
    %v5672 = vunpack.c.l.b16 %v4519
    %v5673 = vpack.c.b16 %v5642, %v5641
    %v5674 = vpack.c.b16 %v5644, %v5643
    %v5675 = vpack.c.b16 %v5646, %v5645
    %v5676 = vpack.c.b16 %v5648, %v5647
    %v5677 = vpack.c.b16 %v5650, %v5649
    %v5678 = vpack.c.b16 %v5652, %v5651
    %v5679 = vpack.c.b16 %v5654, %v5653
    %v5680 = vpack.c.b16 %v5656, %v5655
    %v5681 = vpack.c.b16 %v5658, %v5657
    %v5682 = vpack.c.b16 %v5660, %v5659
    %v5683 = vpack.c.b16 %v5662, %v5661
    %v5684 = vpack.c.b16 %v5664, %v5663
    %v5685 = vpack.c.b16 %v5666, %v5665
    %v5686 = vpack.c.b16 %v5668, %v5667
    %v5687 = vpack.c.b16 %v5670, %v5669
    %v5688 = vpack.c.b16 %v5672, %v5671
    %5689 = vrot.lane.b32.xlu0 %v5673, 12
    %v5690 = vpop.permute.xlu0 %5689
    %5691 = vrot.lane.b32.xlu0 %v5674, 12
    %v5692 = vpop.permute.xlu0 %5691
    %5693 = vrot.lane.b32.xlu0 %v5675, 12
    %v5694 = vpop.permute.xlu0 %5693
    %5695 = vrot.lane.b32.xlu0 %v5676, 12
    %v5696 = vpop.permute.xlu0 %5695
    %5697 = vrot.lane.b32.xlu0 %v5677, 12
    %v5698 = vpop.permute.xlu0 %5697
    %5699 = vrot.lane.b32.xlu0 %v5678, 12
    %v5700 = vpop.permute.xlu0 %5699
    %5701 = vrot.lane.b32.xlu0 %v5679, 12
    %v5702 = vpop.permute.xlu0 %5701
    %5703 = vrot.lane.b32.xlu0 %v5680, 12
    %v5704 = vpop.permute.xlu0 %5703
    %5705 = vrot.lane.b32.xlu0 %v5681, 12
    %v5706 = vpop.permute.xlu0 %5705
    %5707 = vrot.lane.b32.xlu0 %v5682, 12
    %v5708 = vpop.permute.xlu0 %5707
    %5709 = vrot.lane.b32.xlu0 %v5683, 12
    %v5710 = vpop.permute.xlu0 %5709
    %5711 = vrot.lane.b32.xlu0 %v5684, 12
    %v5712 = vpop.permute.xlu0 %5711
    %5713 = vrot.lane.b32.xlu0 %v5685, 12
    %v5714 = vpop.permute.xlu0 %5713
    %5715 = vrot.lane.b32.xlu0 %v5686, 12
    %v5716 = vpop.permute.xlu0 %5715
    %5717 = vrot.lane.b32.xlu0 %v5687, 12
    %v5718 = vpop.permute.xlu0 %5717
    %5719 = vrot.lane.b32.xlu0 %v5688, 12
    %v5720 = vpop.permute.xlu0 %5719
    %v5753 = vunpack.c.l.b16 %v4121
    %v5754 = vunpack.c.l.b16 %v4122
    %v5755 = vunpack.c.l.b16 %v4124
    %v5756 = vunpack.c.l.b16 %v4125
    %v5757 = vunpack.c.l.b16 %v4127
    %v5758 = vunpack.c.l.b16 %v4128
    %v5759 = vunpack.c.l.b16 %v4130
    %v5760 = vunpack.c.l.b16 %v4131
    %v5761 = vunpack.c.l.b16 %v4133
    %v5762 = vunpack.c.l.b16 %v4134
    %v5763 = vunpack.c.l.b16 %v4136
    %v5764 = vunpack.c.l.b16 %v4137
    %v5765 = vunpack.c.l.b16 %v4139
    %v5766 = vunpack.c.l.b16 %v4140
    %v5767 = vunpack.c.l.b16 %v4142
    %v5768 = vunpack.c.l.b16 %v4143
    %v5769 = vunpack.c.l.b16 %v4145
    %v5770 = vunpack.c.l.b16 %v4146
    %v5771 = vunpack.c.l.b16 %v4148
    %v5772 = vunpack.c.l.b16 %v4149
    %v5773 = vunpack.c.l.b16 %v4151
    %v5774 = vunpack.c.l.b16 %v4152
    %v5775 = vunpack.c.l.b16 %v4154
    %v5776 = vunpack.c.l.b16 %v4155
    %v5777 = vunpack.c.l.b16 %v4157
    %v5778 = vunpack.c.l.b16 %v4158
    %v5779 = vunpack.c.l.b16 %v4160
    %v5780 = vunpack.c.l.b16 %v4161
    %v5781 = vunpack.c.l.b16 %v4163
    %v5782 = vunpack.c.l.b16 %v4164
    %v5783 = vunpack.c.l.b16 %v4166
    %v5784 = vunpack.c.l.b16 %v4167
    %v5785 = vpack.c.b16 %v5754, %v5753
    %v5786 = vpack.c.b16 %v5756, %v5755
    %v5787 = vpack.c.b16 %v5758, %v5757
    %v5788 = vpack.c.b16 %v5760, %v5759
    %v5789 = vpack.c.b16 %v5762, %v5761
    %v5790 = vpack.c.b16 %v5764, %v5763
    %v5791 = vpack.c.b16 %v5766, %v5765
    %v5792 = vpack.c.b16 %v5768, %v5767
    %v5793 = vpack.c.b16 %v5770, %v5769
    %v5794 = vpack.c.b16 %v5772, %v5771
    %v5795 = vpack.c.b16 %v5774, %v5773
    %v5796 = vpack.c.b16 %v5776, %v5775
    %v5797 = vpack.c.b16 %v5778, %v5777
    %v5798 = vpack.c.b16 %v5780, %v5779
    %v5799 = vpack.c.b16 %v5782, %v5781
    %v5800 = vpack.c.b16 %v5784, %v5783
    %5801 = vrot.lane.b32.xlu0 %v5785, 16
    %v5802 = vpop.permute.xlu0 %5801
    %5803 = vrot.lane.b32.xlu0 %v5786, 16
    %v5804 = vpop.permute.xlu0 %5803
    %5805 = vrot.lane.b32.xlu0 %v5787, 16
    %v5806 = vpop.permute.xlu0 %5805
    %5807 = vrot.lane.b32.xlu0 %v5788, 16
    %v5808 = vpop.permute.xlu0 %5807
    %5809 = vrot.lane.b32.xlu0 %v5789, 16
    %v5810 = vpop.permute.xlu0 %5809
    %5811 = vrot.lane.b32.xlu0 %v5790, 16
    %v5812 = vpop.permute.xlu0 %5811
    %5813 = vrot.lane.b32.xlu0 %v5791, 16
    %v5814 = vpop.permute.xlu0 %5813
    %5815 = vrot.lane.b32.xlu0 %v5792, 16
    %v5816 = vpop.permute.xlu0 %5815
    %5817 = vrot.lane.b32.xlu0 %v5793, 16
    %v5818 = vpop.permute.xlu0 %5817
    %5819 = vrot.lane.b32.xlu0 %v5794, 16
    %v5820 = vpop.permute.xlu0 %5819
    %5821 = vrot.lane.b32.xlu0 %v5795, 16
    %v5822 = vpop.permute.xlu0 %5821
    %5823 = vrot.lane.b32.xlu0 %v5796, 16
    %v5824 = vpop.permute.xlu0 %5823
    %5825 = vrot.lane.b32.xlu0 %v5797, 16
    %v5826 = vpop.permute.xlu0 %5825
    %5827 = vrot.lane.b32.xlu0 %v5798, 16
    %v5828 = vpop.permute.xlu0 %5827
    %5829 = vrot.lane.b32.xlu0 %v5799, 16
    %v5830 = vpop.permute.xlu0 %5829
    %5831 = vrot.lane.b32.xlu0 %v5800, 16
    %v5832 = vpop.permute.xlu0 %5831
    %v5833 = vunpack.c.l.b16 %v4541
    %v5834 = vunpack.c.l.b16 %v4549
    %v5835 = vunpack.c.l.b16 %v4555
    %v5836 = vunpack.c.l.b16 %v4563
    %v5837 = vunpack.c.l.b16 %v4569
    %v5838 = vunpack.c.l.b16 %v4577
    %v5839 = vunpack.c.l.b16 %v4583
    %v5840 = vunpack.c.l.b16 %v4591
    %v5841 = vunpack.c.l.b16 %v4597
    %v5842 = vunpack.c.l.b16 %v4605
    %v5843 = vunpack.c.l.b16 %v4611
    %v5844 = vunpack.c.l.b16 %v4619
    %v5845 = vunpack.c.l.b16 %v4625
    %v5846 = vunpack.c.l.b16 %v4633
    %v5847 = vunpack.c.l.b16 %v4639
    %v5848 = vunpack.c.l.b16 %v4647
    %v5849 = vunpack.c.l.b16 %v4653
    %v5850 = vunpack.c.l.b16 %v4661
    %v5851 = vunpack.c.l.b16 %v4667
    %v5852 = vunpack.c.l.b16 %v4675
    %v5853 = vunpack.c.l.b16 %v4681
    %v5854 = vunpack.c.l.b16 %v4689
    %v5855 = vunpack.c.l.b16 %v4695
    %v5856 = vunpack.c.l.b16 %v4703
    %v5857 = vunpack.c.l.b16 %v4709
    %v5858 = vunpack.c.l.b16 %v4717
    %v5859 = vunpack.c.l.b16 %v4723
    %v5860 = vunpack.c.l.b16 %v4731
    %v5861 = vunpack.c.l.b16 %v4737
    %v5862 = vunpack.c.l.b16 %v4745
    %v5863 = vunpack.c.l.b16 %v4751
    %v5864 = vunpack.c.l.b16 %v4759
    %v5865 = vpack.c.b16 %v5834, %v5833
    %v5866 = vpack.c.b16 %v5836, %v5835
    %v5867 = vpack.c.b16 %v5838, %v5837
    %v5868 = vpack.c.b16 %v5840, %v5839
    %v5869 = vpack.c.b16 %v5842, %v5841
    %v5870 = vpack.c.b16 %v5844, %v5843
    %v5871 = vpack.c.b16 %v5846, %v5845
    %v5872 = vpack.c.b16 %v5848, %v5847
    %v5873 = vpack.c.b16 %v5850, %v5849
    %v5874 = vpack.c.b16 %v5852, %v5851
    %v5875 = vpack.c.b16 %v5854, %v5853
    %v5876 = vpack.c.b16 %v5856, %v5855
    %v5877 = vpack.c.b16 %v5858, %v5857
    %v5878 = vpack.c.b16 %v5860, %v5859
    %v5879 = vpack.c.b16 %v5862, %v5861
    %v5880 = vpack.c.b16 %v5864, %v5863
    %5881 = vrot.lane.b32.xlu0 %v5865, 20
    %v5882 = vpop.permute.xlu0 %5881
    %5883 = vrot.lane.b32.xlu0 %v5866, 20
    %v5884 = vpop.permute.xlu0 %5883
    %5885 = vrot.lane.b32.xlu0 %v5867, 20
    %v5886 = vpop.permute.xlu0 %5885
    %5887 = vrot.lane.b32.xlu0 %v5868, 20
    %v5888 = vpop.permute.xlu0 %5887
    %5889 = vrot.lane.b32.xlu0 %v5869, 20
    %v5890 = vpop.permute.xlu0 %5889
    %5891 = vrot.lane.b32.xlu0 %v5870, 20
    %v5892 = vpop.permute.xlu0 %5891
    %5893 = vrot.lane.b32.xlu0 %v5871, 20
    %v5894 = vpop.permute.xlu0 %5893
    %5895 = vrot.lane.b32.xlu0 %v5872, 20
    %v5896 = vpop.permute.xlu0 %5895
    %5897 = vrot.lane.b32.xlu0 %v5873, 20
    %v5898 = vpop.permute.xlu0 %5897
    %5899 = vrot.lane.b32.xlu0 %v5874, 20
    %v5900 = vpop.permute.xlu0 %5899
    %5901 = vrot.lane.b32.xlu0 %v5875, 20
    %v5902 = vpop.permute.xlu0 %5901
    %5903 = vrot.lane.b32.xlu0 %v5876, 20
    %v5904 = vpop.permute.xlu0 %5903
    %5905 = vrot.lane.b32.xlu0 %v5877, 20
    %v5906 = vpop.permute.xlu0 %5905
    %5907 = vrot.lane.b32.xlu0 %v5878, 20
    %v5908 = vpop.permute.xlu0 %5907
    %5909 = vrot.lane.b32.xlu0 %v5879, 20
    %v5910 = vpop.permute.xlu0 %5909
    %5911 = vrot.lane.b32.xlu0 %v5880, 20
    %v5912 = vpop.permute.xlu0 %5911
    %v5913 = vunpack.c.l.b16 %v4821
    %v5914 = vunpack.c.l.b16 %v4830
    %v5915 = vunpack.c.l.b16 %v4843
    %v5916 = vunpack.c.l.b16 %v4852
    %v5917 = vunpack.c.l.b16 %v4865
    %v5918 = vunpack.c.l.b16 %v4874
    %v5919 = vunpack.c.l.b16 %v4887
    %v5920 = vunpack.c.l.b16 %v4896
    %v5921 = vunpack.c.l.b16 %v4909
    %v5922 = vunpack.c.l.b16 %v4918
    %v5923 = vunpack.c.l.b16 %v4931
    %v5924 = vunpack.c.l.b16 %v4940
    %v5925 = vunpack.c.l.b16 %v4953
    %v5926 = vunpack.c.l.b16 %v4962
    %v5927 = vunpack.c.l.b16 %v4975
    %v5928 = vunpack.c.l.b16 %v4984
    %v5929 = vunpack.c.l.b16 %v4997
    %v5930 = vunpack.c.l.b16 %v5006
    %v5931 = vunpack.c.l.b16 %v5019
    %v5932 = vunpack.c.l.b16 %v5028
    %v5933 = vunpack.c.l.b16 %v5041
    %v5934 = vunpack.c.l.b16 %v5050
    %v5935 = vunpack.c.l.b16 %v5063
    %v5936 = vunpack.c.l.b16 %v5072
    %v5937 = vunpack.c.l.b16 %v5085
    %v5938 = vunpack.c.l.b16 %v5094
    %v5939 = vunpack.c.l.b16 %v5107
    %v5940 = vunpack.c.l.b16 %v5116
    %v5941 = vunpack.c.l.b16 %v5129
    %v5942 = vunpack.c.l.b16 %v5138
    %v5943 = vunpack.c.l.b16 %v5151
    %v5944 = vunpack.c.l.b16 %v5160
    %v5945 = vpack.c.b16 %v5914, %v5913
    %v5946 = vpack.c.b16 %v5916, %v5915
    %v5947 = vpack.c.b16 %v5918, %v5917
    %v5948 = vpack.c.b16 %v5920, %v5919
    %v5949 = vpack.c.b16 %v5922, %v5921
    %v5950 = vpack.c.b16 %v5924, %v5923
    %v5951 = vpack.c.b16 %v5926, %v5925
    %v5952 = vpack.c.b16 %v5928, %v5927
    %v5953 = vpack.c.b16 %v5930, %v5929
    %v5954 = vpack.c.b16 %v5932, %v5931
    %v5955 = vpack.c.b16 %v5934, %v5933
    %v5956 = vpack.c.b16 %v5936, %v5935
    %v5957 = vpack.c.b16 %v5938, %v5937
    %v5958 = vpack.c.b16 %v5940, %v5939
    %v5959 = vpack.c.b16 %v5942, %v5941
    %v5960 = vpack.c.b16 %v5944, %v5943
    %5961 = vrot.lane.b32.xlu0 %v5945, 24
    %v5962 = vpop.permute.xlu0 %5961
    %5963 = vrot.lane.b32.xlu0 %v5946, 24
    %v5964 = vpop.permute.xlu0 %5963
    %5965 = vrot.lane.b32.xlu0 %v5947, 24
    %v5966 = vpop.permute.xlu0 %5965
    %5967 = vrot.lane.b32.xlu0 %v5948, 24
    %v5968 = vpop.permute.xlu0 %5967
    %5969 = vrot.lane.b32.xlu0 %v5949, 24
    %v5970 = vpop.permute.xlu0 %5969
    %5971 = vrot.lane.b32.xlu0 %v5950, 24
    %v5972 = vpop.permute.xlu0 %5971
    %5973 = vrot.lane.b32.xlu0 %v5951, 24
    %v5974 = vpop.permute.xlu0 %5973
    %5975 = vrot.lane.b32.xlu0 %v5952, 24
    %v5976 = vpop.permute.xlu0 %5975
    %5977 = vrot.lane.b32.xlu0 %v5953, 24
    %v5978 = vpop.permute.xlu0 %5977
    %5979 = vrot.lane.b32.xlu0 %v5954, 24
    %v5980 = vpop.permute.xlu0 %5979
    %5981 = vrot.lane.b32.xlu0 %v5955, 24
    %v5982 = vpop.permute.xlu0 %5981
    %5983 = vrot.lane.b32.xlu0 %v5956, 24
    %v5984 = vpop.permute.xlu0 %5983
    %5985 = vrot.lane.b32.xlu0 %v5957, 24
    %v5986 = vpop.permute.xlu0 %5985
    %5987 = vrot.lane.b32.xlu0 %v5958, 24
    %v5988 = vpop.permute.xlu0 %5987
    %5989 = vrot.lane.b32.xlu0 %v5959, 24
    %v5990 = vpop.permute.xlu0 %5989
    %5991 = vrot.lane.b32.xlu0 %v5960, 24
    %v5992 = vpop.permute.xlu0 %5991
    %v6025 = vunpack.c.l.b16 %v4762
    %v6026 = vunpack.c.l.b16 %v4763
    %v6027 = vunpack.c.l.b16 %v4765
    %v6028 = vunpack.c.l.b16 %v4766
    %v6029 = vunpack.c.l.b16 %v4768
    %v6030 = vunpack.c.l.b16 %v4769
    %v6031 = vunpack.c.l.b16 %v4771
    %v6032 = vunpack.c.l.b16 %v4772
    %v6033 = vunpack.c.l.b16 %v4774
    %v6034 = vunpack.c.l.b16 %v4775
    %v6035 = vunpack.c.l.b16 %v4777
    %v6036 = vunpack.c.l.b16 %v4778
    %v6037 = vunpack.c.l.b16 %v4780
    %v6038 = vunpack.c.l.b16 %v4781
    %v6039 = vunpack.c.l.b16 %v4783
    %v6040 = vunpack.c.l.b16 %v4784
    %v6041 = vunpack.c.l.b16 %v4786
    %v6042 = vunpack.c.l.b16 %v4787
    %v6043 = vunpack.c.l.b16 %v4789
    %v6044 = vunpack.c.l.b16 %v4790
    %v6045 = vunpack.c.l.b16 %v4792
    %v6046 = vunpack.c.l.b16 %v4793
    %v6047 = vunpack.c.l.b16 %v4795
    %v6048 = vunpack.c.l.b16 %v4796
    %v6049 = vunpack.c.l.b16 %v4798
    %v6050 = vunpack.c.l.b16 %v4799
    %v6051 = vunpack.c.l.b16 %v4801
    %v6052 = vunpack.c.l.b16 %v4802
    %v6053 = vunpack.c.l.b16 %v4804
    %v6054 = vunpack.c.l.b16 %v4805
    %v6055 = vunpack.c.l.b16 %v4807
    %v6056 = vunpack.c.l.b16 %v4808
    %v6057 = vpack.c.b16 %v6026, %v6025
    %v6058 = vpack.c.b16 %v6028, %v6027
    %v6059 = vpack.c.b16 %v6030, %v6029
    %v6060 = vpack.c.b16 %v6032, %v6031
    %v6061 = vpack.c.b16 %v6034, %v6033
    %v6062 = vpack.c.b16 %v6036, %v6035
    %v6063 = vpack.c.b16 %v6038, %v6037
    %v6064 = vpack.c.b16 %v6040, %v6039
    %v6065 = vpack.c.b16 %v6042, %v6041
    %v6066 = vpack.c.b16 %v6044, %v6043
    %v6067 = vpack.c.b16 %v6046, %v6045
    %v6068 = vpack.c.b16 %v6048, %v6047
    %v6069 = vpack.c.b16 %v6050, %v6049
    %v6070 = vpack.c.b16 %v6052, %v6051
    %v6071 = vpack.c.b16 %v6054, %v6053
    %v6072 = vpack.c.b16 %v6056, %v6055
    %6073 = vrot.lane.b32.xlu0 %v6057, 28
    %v6074 = vpop.permute.xlu0 %6073
    %6075 = vrot.lane.b32.xlu0 %v6058, 28
    %v6076 = vpop.permute.xlu0 %6075
    %6077 = vrot.lane.b32.xlu0 %v6059, 28
    %v6078 = vpop.permute.xlu0 %6077
    %6079 = vrot.lane.b32.xlu0 %v6060, 28
    %v6080 = vpop.permute.xlu0 %6079
    %6081 = vrot.lane.b32.xlu0 %v6061, 28
    %v6082 = vpop.permute.xlu0 %6081
    %6083 = vrot.lane.b32.xlu0 %v6062, 28
    %v6084 = vpop.permute.xlu0 %6083
    %6085 = vrot.lane.b32.xlu0 %v6063, 28
    %v6086 = vpop.permute.xlu0 %6085
    %6087 = vrot.lane.b32.xlu0 %v6064, 28
    %v6088 = vpop.permute.xlu0 %6087
    %6089 = vrot.lane.b32.xlu0 %v6065, 28
    %v6090 = vpop.permute.xlu0 %6089
    %6091 = vrot.lane.b32.xlu0 %v6066, 28
    %v6092 = vpop.permute.xlu0 %6091
    %6093 = vrot.lane.b32.xlu0 %v6067, 28
    %v6094 = vpop.permute.xlu0 %6093
    %6095 = vrot.lane.b32.xlu0 %v6068, 28
    %v6096 = vpop.permute.xlu0 %6095
    %6097 = vrot.lane.b32.xlu0 %v6069, 28
    %v6098 = vpop.permute.xlu0 %6097
    %6099 = vrot.lane.b32.xlu0 %v6070, 28
    %v6100 = vpop.permute.xlu0 %6099
    %6101 = vrot.lane.b32.xlu0 %v6071, 28
    %v6102 = vpop.permute.xlu0 %6101
    %6103 = vrot.lane.b32.xlu0 %v6072, 28
    %v6104 = vpop.permute.xlu0 %6103
    %v6105 = vunpack.c.l.b16 %v5182
    %v6106 = vunpack.c.l.b16 %v5190
    %v6107 = vunpack.c.l.b16 %v5196
    %v6108 = vunpack.c.l.b16 %v5204
    %v6109 = vunpack.c.l.b16 %v5210
    %v6110 = vunpack.c.l.b16 %v5218
    %v6111 = vunpack.c.l.b16 %v5224
    %v6112 = vunpack.c.l.b16 %v5232
    %v6113 = vunpack.c.l.b16 %v5238
    %v6114 = vunpack.c.l.b16 %v5246
    %v6115 = vunpack.c.l.b16 %v5252
    %v6116 = vunpack.c.l.b16 %v5260
    %v6117 = vunpack.c.l.b16 %v5266
    %v6118 = vunpack.c.l.b16 %v5274
    %v6119 = vunpack.c.l.b16 %v5280
    %v6120 = vunpack.c.l.b16 %v5288
    %v6121 = vunpack.c.l.b16 %v5294
    %v6122 = vunpack.c.l.b16 %v5302
    %v6123 = vunpack.c.l.b16 %v5308
    %v6124 = vunpack.c.l.b16 %v5316
    %v6125 = vunpack.c.l.b16 %v5322
    %v6126 = vunpack.c.l.b16 %v5330
    %v6127 = vunpack.c.l.b16 %v5336
    %v6128 = vunpack.c.l.b16 %v5344
    %v6129 = vunpack.c.l.b16 %v5350
    %v6130 = vunpack.c.l.b16 %v5358
    %v6131 = vunpack.c.l.b16 %v5364
    %v6132 = vunpack.c.l.b16 %v5372
    %v6133 = vunpack.c.l.b16 %v5378
    %v6134 = vunpack.c.l.b16 %v5386
    %v6135 = vunpack.c.l.b16 %v5392
    %v6136 = vunpack.c.l.b16 %v5400
    %v6137 = vpack.c.b16 %v6106, %v6105
    %v6138 = vpack.c.b16 %v6108, %v6107
    %v6139 = vpack.c.b16 %v6110, %v6109
    %v6140 = vpack.c.b16 %v6112, %v6111
    %v6141 = vpack.c.b16 %v6114, %v6113
    %v6142 = vpack.c.b16 %v6116, %v6115
    %v6143 = vpack.c.b16 %v6118, %v6117
    %v6144 = vpack.c.b16 %v6120, %v6119
    %v6145 = vpack.c.b16 %v6122, %v6121
    %v6146 = vpack.c.b16 %v6124, %v6123
    %v6147 = vpack.c.b16 %v6126, %v6125
    %v6148 = vpack.c.b16 %v6128, %v6127
    %v6149 = vpack.c.b16 %v6130, %v6129
    %v6150 = vpack.c.b16 %v6132, %v6131
    %v6151 = vpack.c.b16 %v6134, %v6133
    %v6152 = vpack.c.b16 %v6136, %v6135
    %6153 = vrot.lane.b32.xlu0 %v6137, 32
    %v6154 = vpop.permute.xlu0 %6153
    %6155 = vrot.lane.b32.xlu0 %v6138, 32
    %v6156 = vpop.permute.xlu0 %6155
    %6157 = vrot.lane.b32.xlu0 %v6139, 32
    %v6158 = vpop.permute.xlu0 %6157
    %6159 = vrot.lane.b32.xlu0 %v6140, 32
    %v6160 = vpop.permute.xlu0 %6159
    %6161 = vrot.lane.b32.xlu0 %v6141, 32
    %v6162 = vpop.permute.xlu0 %6161
    %6163 = vrot.lane.b32.xlu0 %v6142, 32
    %v6164 = vpop.permute.xlu0 %6163
    %6165 = vrot.lane.b32.xlu0 %v6143, 32
    %v6166 = vpop.permute.xlu0 %6165
    %6167 = vrot.lane.b32.xlu0 %v6144, 32
    %v6168 = vpop.permute.xlu0 %6167
    %6169 = vrot.lane.b32.xlu0 %v6145, 32
    %v6170 = vpop.permute.xlu0 %6169
    %6171 = vrot.lane.b32.xlu0 %v6146, 32
    %v6172 = vpop.permute.xlu0 %6171
    %6173 = vrot.lane.b32.xlu0 %v6147, 32
    %v6174 = vpop.permute.xlu0 %6173
    %6175 = vrot.lane.b32.xlu0 %v6148, 32
    %v6176 = vpop.permute.xlu0 %6175
    %6177 = vrot.lane.b32.xlu0 %v6149, 32
    %v6178 = vpop.permute.xlu0 %6177
    %6179 = vrot.lane.b32.xlu0 %v6150, 32
    %v6180 = vpop.permute.xlu0 %6179
    %6181 = vrot.lane.b32.xlu0 %v6151, 32
    %v6182 = vpop.permute.xlu0 %6181
    %6183 = vrot.lane.b32.xlu0 %v6152, 32
    %v6184 = vpop.permute.xlu0 %6183
    %v6187 = vsel %vm2889, %v5433, %v5530
    %v6190 = vsel %vm2889, %v5434, %v5532
    %v6193 = vsel %vm2889, %v5435, %v5534
    %v6196 = vsel %vm2889, %v5436, %v5536
    %v6199 = vsel %vm2889, %v5437, %v5538
    %v6202 = vsel %vm2889, %v5438, %v5540
    %v6205 = vsel %vm2889, %v5439, %v5542
    %v6208 = vsel %vm2889, %v5440, %v5544
    %v6211 = vsel %vm2889, %v5441, %v5546
    %v6214 = vsel %vm2889, %v5442, %v5548
    %v6217 = vsel %vm2889, %v5443, %v5550
    %v6220 = vsel %vm2889, %v5444, %v5552
    %v6223 = vsel %vm2889, %v5445, %v5554
    %v6226 = vsel %vm2889, %v5446, %v5556
    %v6229 = vsel %vm2889, %v5447, %v5558
    %v6232 = vsel %vm2889, %v5448, %v5560
    %v6234 = vsel %vm2938, %v6187, %v5610
    %v6236 = vsel %vm2938, %v6190, %v5612
    %v6238 = vsel %vm2938, %v6193, %v5614
    %v6240 = vsel %vm2938, %v6196, %v5616
    %v6242 = vsel %vm2938, %v6199, %v5618
    %v6244 = vsel %vm2938, %v6202, %v5620
    %v6246 = vsel %vm2938, %v6205, %v5622
    %v6248 = vsel %vm2938, %v6208, %v5624
    %v6250 = vsel %vm2938, %v6211, %v5626
    %v6252 = vsel %vm2938, %v6214, %v5628
    %v6254 = vsel %vm2938, %v6217, %v5630
    %v6256 = vsel %vm2938, %v6220, %v5632
    %v6258 = vsel %vm2938, %v6223, %v5634
    %v6260 = vsel %vm2938, %v6226, %v5636
    %v6262 = vsel %vm2938, %v6229, %v5638
    %v6264 = vsel %vm2938, %v6232, %v5640
    %v6266 = vsel %vm2971, %v6234, %v5690
    %v6268 = vsel %vm2971, %v6236, %v5692
    %v6270 = vsel %vm2971, %v6238, %v5694
    %v6272 = vsel %vm2971, %v6240, %v5696
    %v6274 = vsel %vm2971, %v6242, %v5698
    %v6276 = vsel %vm2971, %v6244, %v5700
    %v6278 = vsel %vm2971, %v6246, %v5702
    %v6280 = vsel %vm2971, %v6248, %v5704
    %v6282 = vsel %vm2971, %v6250, %v5706
    %v6284 = vsel %vm2971, %v6252, %v5708
    %v6286 = vsel %vm2971, %v6254, %v5710
    %v6288 = vsel %vm2971, %v6256, %v5712
    %v6290 = vsel %vm2971, %v6258, %v5714
    %v6292 = vsel %vm2971, %v6260, %v5716
    %v6294 = vsel %vm2971, %v6262, %v5718
    %v6296 = vsel %vm2971, %v6264, %v5720
    %v6298 = vsel %vm3004, %v6266, %v5802
    %v6300 = vsel %vm3004, %v6268, %v5804
    %v6302 = vsel %vm3004, %v6270, %v5806
    %v6304 = vsel %vm3004, %v6272, %v5808
    %v6306 = vsel %vm3004, %v6274, %v5810
    %v6308 = vsel %vm3004, %v6276, %v5812
    %v6310 = vsel %vm3004, %v6278, %v5814
    %v6312 = vsel %vm3004, %v6280, %v5816
    %v6314 = vsel %vm3004, %v6282, %v5818
    %v6316 = vsel %vm3004, %v6284, %v5820
    %v6318 = vsel %vm3004, %v6286, %v5822
    %v6320 = vsel %vm3004, %v6288, %v5824
    %v6322 = vsel %vm3004, %v6290, %v5826
    %v6324 = vsel %vm3004, %v6292, %v5828
    %v6326 = vsel %vm3004, %v6294, %v5830
    %v6328 = vsel %vm3004, %v6296, %v5832
    %v6330 = vsel %vm3037, %v6298, %v5882
    %v6332 = vsel %vm3037, %v6300, %v5884
    %v6334 = vsel %vm3037, %v6302, %v5886
    %v6336 = vsel %vm3037, %v6304, %v5888
    %v6338 = vsel %vm3037, %v6306, %v5890
    %v6340 = vsel %vm3037, %v6308, %v5892
    %v6342 = vsel %vm3037, %v6310, %v5894
    %v6344 = vsel %vm3037, %v6312, %v5896
    %v6346 = vsel %vm3037, %v6314, %v5898
    %v6348 = vsel %vm3037, %v6316, %v5900
    %v6350 = vsel %vm3037, %v6318, %v5902
    %v6352 = vsel %vm3037, %v6320, %v5904
    %v6354 = vsel %vm3037, %v6322, %v5906
    %v6356 = vsel %vm3037, %v6324, %v5908
    %v6358 = vsel %vm3037, %v6326, %v5910
    %v6360 = vsel %vm3037, %v6328, %v5912
    %v6362 = vsel %vm3070, %v6330, %v5962
    %v6364 = vsel %vm3070, %v6332, %v5964
    %v6366 = vsel %vm3070, %v6334, %v5966
    %v6368 = vsel %vm3070, %v6336, %v5968
    %v6370 = vsel %vm3070, %v6338, %v5970
    %v6372 = vsel %vm3070, %v6340, %v5972
    %v6374 = vsel %vm3070, %v6342, %v5974
    %v6376 = vsel %vm3070, %v6344, %v5976
    %v6378 = vsel %vm3070, %v6346, %v5978
    %v6380 = vsel %vm3070, %v6348, %v5980
    %v6382 = vsel %vm3070, %v6350, %v5982
    %v6384 = vsel %vm3070, %v6352, %v5984
    %v6386 = vsel %vm3070, %v6354, %v5986
    %v6388 = vsel %vm3070, %v6356, %v5988
    %v6390 = vsel %vm3070, %v6358, %v5990
    %v6392 = vsel %vm3070, %v6360, %v5992
    %v6394 = vsel %vm3103, %v6362, %v6074
    %v6396 = vsel %vm3103, %v6364, %v6076
    %v6398 = vsel %vm3103, %v6366, %v6078
    %v6400 = vsel %vm3103, %v6368, %v6080
    %v6402 = vsel %vm3103, %v6370, %v6082
    %v6404 = vsel %vm3103, %v6372, %v6084
    %v6406 = vsel %vm3103, %v6374, %v6086
    %v6408 = vsel %vm3103, %v6376, %v6088
    %v6410 = vsel %vm3103, %v6378, %v6090
    %v6412 = vsel %vm3103, %v6380, %v6092
    %v6414 = vsel %vm3103, %v6382, %v6094
    %v6416 = vsel %vm3103, %v6384, %v6096
    %v6418 = vsel %vm3103, %v6386, %v6098
    %v6420 = vsel %vm3103, %v6388, %v6100
    %v6422 = vsel %vm3103, %v6390, %v6102
    %v6424 = vsel %vm3103, %v6392, %v6104
    %v6426 = vsel %vm3136, %v6394, %v6154
    %v6428 = vsel %vm3136, %v6396, %v6156
    %v6430 = vsel %vm3136, %v6398, %v6158
    %v6432 = vsel %vm3136, %v6400, %v6160
    %v6434 = vsel %vm3136, %v6402, %v6162
    %v6436 = vsel %vm3136, %v6404, %v6164
    %v6438 = vsel %vm3136, %v6406, %v6166
    %v6440 = vsel %vm3136, %v6408, %v6168
    %v6442 = vsel %vm3136, %v6410, %v6170
    %v6444 = vsel %vm3136, %v6412, %v6172
    %v6446 = vsel %vm3136, %v6414, %v6174
    %v6448 = vsel %vm3136, %v6416, %v6176
    %v6450 = vsel %vm3136, %v6418, %v6178
    %v6452 = vsel %vm3136, %v6420, %v6180
    %v6454 = vsel %vm3136, %v6422, %v6182
    %v6456 = vsel %vm3136, %v6424, %v6184
    %v6457 = vld [vmem:[%s3] sm:$0xf]
    %v6458 = vld [vmem:[%s3 + $0x4] sm:$0xf]
    %v6459 = vld [vmem:[%s3 + $0x8] sm:$0xf]
    %v6460 = vld [vmem:[%s3 + $0xc] sm:$0xf]
    %v6461 = vld [vmem:[%s3 + $0x10] sm:$0x3]
    %v6462 = vld [vmem:[%s4] sm:$0x1]
    %v6464 = vperm.slane %v6462, 0
    %v6471 = vunpack.c.l.b16 %v6457
    %v6472 = vunpack.c.l.b16 %v6458
    %v6473 = vunpack.c.l.b16 %v6459
    %v6474 = vunpack.c.l.b16 %v6460
    %v6475 = vunpack.c.l.b16 %v6461
    %v6476 = vpack.c.b16 %v6472, %v6471
    %v6477 = vpack.c.b16 %v6474, %v6473
    %v6478 = vpack.c.b16 %v6475, %v6475
    %v6481 = vsel %vm3193, %v6426, 0
    %v6483 = vsel %vm3193, %v6428, 0
    %v6485 = vsel %vm3193, %v6430, 0
    %v6487 = vsel %vm3193, %v6432, 0
    %v6489 = vsel %vm3193, %v6434, 0
    %v6491 = vsel %vm3193, %v6436, 0
    %v6493 = vsel %vm3193, %v6438, 0
    %v6495 = vsel %vm3193, %v6440, 0
    %v6497 = vsel %vm3193, %v6442, 0
    %v6499 = vsel %vm3193, %v6444, 0
    %v6501 = vsel %vm3193, %v6446, 0
    %v6503 = vsel %vm3193, %v6448, 0
    %v6505 = vsel %vm3193, %v6450, 0
    %v6507 = vsel %vm3193, %v6452, 0
    %v6509 = vsel %vm3193, %v6454, 0
    %v6511 = vsel %vm3193, %v6456, 0
    %v6514 = vsel %vm3226, %v6478, 0
    %6516 = vmatpush.bf16.msra.mxu0 0
    %6517 = vmatpush.bf16.msra.mxu0 0
    %6518 = vmatpush.bf16.msra.mxu0 0
    %6519 = vmatpush.bf16.msra.mxu0 0
    %6520 = vmatpush.bf16.msra.mxu0 0
    %6521 = vmatpush.bf16.msra.mxu0 %v6514
    %6522 = vmatpush.bf16.msra.mxu0 %v6477
    %6523 = vmatpush.bf16.msra.mxu0 %v6476
    %6524 = vmatmul.bf16.gmra.mxu0 %v6481
    %v6525 = vpop.f32.mrf.mxu0
    %v6526 = vadd.f32 %v6464, %v6525
    %v6527 = vpop.f32.mrf.mxu0
    %v6528 = vadd.f32 %v6464, %v6527
    %6529 = vmatmul.bf16.gmra.mxu0 %v6483
    %v6530 = vpop.f32.mrf.mxu0
    %v6531 = vadd.f32 %v6464, %v6530
    %v6532 = vpop.f32.mrf.mxu0
    %v6533 = vadd.f32 %v6464, %v6532
    %6534 = vmatmul.bf16.gmra.mxu0 %v6485
    %v6535 = vpop.f32.mrf.mxu0
    %v6536 = vadd.f32 %v6464, %v6535
    %v6537 = vpop.f32.mrf.mxu0
    %v6538 = vadd.f32 %v6464, %v6537
    %6539 = vmatmul.bf16.gmra.mxu0 %v6487
    %v6540 = vpop.f32.mrf.mxu0
    %v6541 = vadd.f32 %v6464, %v6540
    %v6542 = vpop.f32.mrf.mxu0
    %v6543 = vadd.f32 %v6464, %v6542
    %6544 = vmatmul.bf16.gmra.mxu0 %v6489
    %v6545 = vpop.f32.mrf.mxu0
    %v6546 = vadd.f32 %v6464, %v6545
    %v6547 = vpop.f32.mrf.mxu0
    %v6548 = vadd.f32 %v6464, %v6547
    %6549 = vmatmul.bf16.gmra.mxu0 %v6491
    %v6550 = vpop.f32.mrf.mxu0
    %v6551 = vadd.f32 %v6464, %v6550
    %v6552 = vpop.f32.mrf.mxu0
    %v6553 = vadd.f32 %v6464, %v6552
    %6554 = vmatmul.bf16.gmra.mxu0 %v6493
    %v6555 = vpop.f32.mrf.mxu0
    %v6556 = vadd.f32 %v6464, %v6555
    %v6557 = vpop.f32.mrf.mxu0
    %v6558 = vadd.f32 %v6464, %v6557
    %6559 = vmatmul.bf16.gmra.mxu0 %v6495
    %v6560 = vpop.f32.mrf.mxu0
    %v6561 = vadd.f32 %v6464, %v6560
    %v6562 = vpop.f32.mrf.mxu0
    %v6563 = vadd.f32 %v6464, %v6562
    %6564 = vmatmul.bf16.gmra.mxu0 %v6497
    %v6565 = vpop.f32.mrf.mxu0
    %v6566 = vadd.f32 %v6464, %v6565
    %v6567 = vpop.f32.mrf.mxu0
    %v6568 = vadd.f32 %v6464, %v6567
    %6569 = vmatmul.bf16.gmra.mxu0 %v6499
    %v6570 = vpop.f32.mrf.mxu0
    %v6571 = vadd.f32 %v6464, %v6570
    %v6572 = vpop.f32.mrf.mxu0
    %v6573 = vadd.f32 %v6464, %v6572
    %6574 = vmatmul.bf16.gmra.mxu0 %v6501
    %v6575 = vpop.f32.mrf.mxu0
    %v6576 = vadd.f32 %v6464, %v6575
    %v6577 = vpop.f32.mrf.mxu0
    %v6578 = vadd.f32 %v6464, %v6577
    %6579 = vmatmul.bf16.gmra.mxu0 %v6503
    %v6580 = vpop.f32.mrf.mxu0
    %v6581 = vadd.f32 %v6464, %v6580
    %v6582 = vpop.f32.mrf.mxu0
    %v6583 = vadd.f32 %v6464, %v6582
    %6584 = vmatmul.bf16.gmra.mxu0 %v6505
    %v6585 = vpop.f32.mrf.mxu0
    %v6586 = vadd.f32 %v6464, %v6585
    %v6587 = vpop.f32.mrf.mxu0
    %v6588 = vadd.f32 %v6464, %v6587
    %6589 = vmatmul.bf16.gmra.mxu0 %v6507
    %v6590 = vpop.f32.mrf.mxu0
    %v6591 = vadd.f32 %v6464, %v6590
    %v6592 = vpop.f32.mrf.mxu0
    %v6593 = vadd.f32 %v6464, %v6592
    %6594 = vmatmul.bf16.gmra.mxu0 %v6509
    %v6595 = vpop.f32.mrf.mxu0
    %v6596 = vadd.f32 %v6464, %v6595
    %v6597 = vpop.f32.mrf.mxu0
    %v6598 = vadd.f32 %v6464, %v6597
    %6599 = vmatmul.bf16.gmra.mxu0 %v6511
    %v6600 = vpop.f32.mrf.mxu0
    %v6601 = vadd.f32 %v6464, %v6600
    %v6602 = vpop.f32.mrf.mxu0
    %v6603 = vadd.f32 %v6464, %v6602
    %6604 = vdwg.mxu0
    %vm6605 = vcmp.gt.f32.partialorder %v6526, 0.0
    %vm6606 = vcmp.gt.f32.partialorder %v6528, 0.0
    %vm6607 = vcmp.gt.f32.partialorder %v6531, 0.0
    %vm6608 = vcmp.gt.f32.partialorder %v6533, 0.0
    %vm6609 = vcmp.gt.f32.partialorder %v6536, 0.0
    %vm6610 = vcmp.gt.f32.partialorder %v6538, 0.0
    %vm6611 = vcmp.gt.f32.partialorder %v6541, 0.0
    %vm6612 = vcmp.gt.f32.partialorder %v6543, 0.0
    %vm6613 = vcmp.gt.f32.partialorder %v6546, 0.0
    %vm6614 = vcmp.gt.f32.partialorder %v6548, 0.0
    %vm6615 = vcmp.gt.f32.partialorder %v6551, 0.0
    %vm6616 = vcmp.gt.f32.partialorder %v6553, 0.0
    %vm6617 = vcmp.gt.f32.partialorder %v6556, 0.0
    %vm6618 = vcmp.gt.f32.partialorder %v6558, 0.0
    %vm6619 = vcmp.gt.f32.partialorder %v6561, 0.0
    %vm6620 = vcmp.gt.f32.partialorder %v6563, 0.0
    %vm6621 = vcmp.gt.f32.partialorder %v6566, 0.0
    %vm6622 = vcmp.gt.f32.partialorder %v6568, 0.0
    %vm6623 = vcmp.gt.f32.partialorder %v6571, 0.0
    %vm6624 = vcmp.gt.f32.partialorder %v6573, 0.0
    %vm6625 = vcmp.gt.f32.partialorder %v6576, 0.0
    %vm6626 = vcmp.gt.f32.partialorder %v6578, 0.0
    %vm6627 = vcmp.gt.f32.partialorder %v6581, 0.0
    %vm6628 = vcmp.gt.f32.partialorder %v6583, 0.0
    %vm6629 = vcmp.gt.f32.partialorder %v6586, 0.0
    %vm6630 = vcmp.gt.f32.partialorder %v6588, 0.0
    %vm6631 = vcmp.gt.f32.partialorder %v6591, 0.0
    %vm6632 = vcmp.gt.f32.partialorder %v6593, 0.0
    %vm6633 = vcmp.gt.f32.partialorder %v6596, 0.0
    %vm6634 = vcmp.gt.f32.partialorder %v6598, 0.0
    %vm6635 = vcmp.gt.f32.partialorder %v6601, 0.0
    %vm6636 = vcmp.gt.f32.partialorder %v6603, 0.0
    %v6637 = vmul.f32 %v6526, 0.2
    %v6638 = vmul.f32 %v6528, 0.2
    %v6639 = vmul.f32 %v6531, 0.2
    %v6640 = vmul.f32 %v6533, 0.2
    %v6641 = vmul.f32 %v6536, 0.2
    %v6642 = vmul.f32 %v6538, 0.2
    %v6643 = vmul.f32 %v6541, 0.2
    %v6644 = vmul.f32 %v6543, 0.2
    %v6645 = vmul.f32 %v6546, 0.2
    %v6646 = vmul.f32 %v6548, 0.2
    %v6647 = vmul.f32 %v6551, 0.2
    %v6648 = vmul.f32 %v6553, 0.2
    %v6649 = vmul.f32 %v6556, 0.2
    %v6650 = vmul.f32 %v6558, 0.2
    %v6651 = vmul.f32 %v6561, 0.2
    %v6652 = vmul.f32 %v6563, 0.2
    %v6653 = vmul.f32 %v6566, 0.2
    %v6654 = vmul.f32 %v6568, 0.2
    %v6655 = vmul.f32 %v6571, 0.2
    %v6656 = vmul.f32 %v6573, 0.2
    %v6657 = vmul.f32 %v6576, 0.2
    %v6658 = vmul.f32 %v6578, 0.2
    %v6659 = vmul.f32 %v6581, 0.2
    %v6660 = vmul.f32 %v6583, 0.2
    %v6661 = vmul.f32 %v6586, 0.2
    %v6662 = vmul.f32 %v6588, 0.2
    %v6663 = vmul.f32 %v6591, 0.2
    %v6664 = vmul.f32 %v6593, 0.2
    %v6665 = vmul.f32 %v6596, 0.2
    %v6666 = vmul.f32 %v6598, 0.2
    %v6667 = vmul.f32 %v6601, 0.2
    %v6668 = vmul.f32 %v6603, 0.2
    %v6669 = vsel %vm6605, %v6526, %v6637
    %v6670 = vsel %vm6606, %v6528, %v6638
    %v6671 = vsel %vm6607, %v6531, %v6639
    %v6672 = vsel %vm6608, %v6533, %v6640
    %v6673 = vsel %vm6609, %v6536, %v6641
    %v6674 = vsel %vm6610, %v6538, %v6642
    %v6675 = vsel %vm6611, %v6541, %v6643
    %v6676 = vsel %vm6612, %v6543, %v6644
    %v6677 = vsel %vm6613, %v6546, %v6645
    %v6678 = vsel %vm6614, %v6548, %v6646
    %v6679 = vsel %vm6615, %v6551, %v6647
    %v6680 = vsel %vm6616, %v6553, %v6648
    %v6681 = vsel %vm6617, %v6556, %v6649
    %v6682 = vsel %vm6618, %v6558, %v6650
    %v6683 = vsel %vm6619, %v6561, %v6651
    %v6684 = vsel %vm6620, %v6563, %v6652
    %v6685 = vsel %vm6621, %v6566, %v6653
    %v6686 = vsel %vm6622, %v6568, %v6654
    %v6687 = vsel %vm6623, %v6571, %v6655
    %v6688 = vsel %vm6624, %v6573, %v6656
    %v6689 = vsel %vm6625, %v6576, %v6657
    %v6690 = vsel %vm6626, %v6578, %v6658
    %v6691 = vsel %vm6627, %v6581, %v6659
    %v6692 = vsel %vm6628, %v6583, %v6660
    %v6693 = vsel %vm6629, %v6586, %v6661
    %v6694 = vsel %vm6630, %v6588, %v6662
    %v6695 = vsel %vm6631, %v6591, %v6663
    %v6696 = vsel %vm6632, %v6593, %v6664
    %v6697 = vsel %vm6633, %v6596, %v6665
    %v6698 = vsel %vm6634, %v6598, %v6666
    %v6699 = vsel %vm6635, %v6601, %v6667
    %v6700 = vsel %vm6636, %v6603, %v6668
    %6701 = vst.msk [vmem:[#allocation4] sm:$0xff] %vm2938, %v6669
    %6702 = vst.msk [vmem:[#allocation4 + $0x8] sm:$0xff] %vm2938, %v6670
    %6703 = vst.msk [vmem:[#allocation4 + $0x10] sm:$0xff] %vm2938, %v6671
    %6704 = vst.msk [vmem:[#allocation4 + $0x18] sm:$0xff] %vm2938, %v6672
    %6705 = vst.msk [vmem:[#allocation4 + $0x20] sm:$0xff] %vm2938, %v6673
    %6706 = vst.msk [vmem:[#allocation4 + $0x28] sm:$0xff] %vm2938, %v6674
    %6707 = vst.msk [vmem:[#allocation4 + $0x30] sm:$0xff] %vm2938, %v6675
    %6708 = vst.msk [vmem:[#allocation4 + $0x38] sm:$0xff] %vm2938, %v6676
    %6709 = vst.msk [vmem:[#allocation4 + $0x40] sm:$0xff] %vm2938, %v6677
    %6710 = vst.msk [vmem:[#allocation4 + $0x48] sm:$0xff] %vm2938, %v6678
    %6711 = vst.msk [vmem:[#allocation4 + $0x50] sm:$0xff] %vm2938, %v6679
    %6712 = vst.msk [vmem:[#allocation4 + $0x58] sm:$0xff] %vm2938, %v6680
    %6713 = vst.msk [vmem:[#allocation4 + $0x60] sm:$0xff] %vm2938, %v6681
    %6714 = vst.msk [vmem:[#allocation4 + $0x68] sm:$0xff] %vm2938, %v6682
    %6715 = vst.msk [vmem:[#allocation4 + $0x70] sm:$0xff] %vm2938, %v6683
    %6716 = vst.msk [vmem:[#allocation4 + $0x78] sm:$0xff] %vm2938, %v6684
    %6717 = vst.msk [vmem:[#allocation4 + $0x80] sm:$0xff] %vm2938, %v6685
    %6718 = vst.msk [vmem:[#allocation4 + $0x88] sm:$0xff] %vm2938, %v6686
    %6719 = vst.msk [vmem:[#allocation4 + $0x90] sm:$0xff] %vm2938, %v6687
    %6720 = vst.msk [vmem:[#allocation4 + $0x98] sm:$0xff] %vm2938, %v6688
    %6721 = vst.msk [vmem:[#allocation4 + $0xa0] sm:$0xff] %vm2938, %v6689
    %6722 = vst.msk [vmem:[#allocation4 + $0xa8] sm:$0xff] %vm2938, %v6690
    %6723 = vst.msk [vmem:[#allocation4 + $0xb0] sm:$0xff] %vm2938, %v6691
    %6724 = vst.msk [vmem:[#allocation4 + $0xb8] sm:$0xff] %vm2938, %v6692
    %6725 = vst.msk [vmem:[#allocation4 + $0xc0] sm:$0xff] %vm2938, %v6693
    %6726 = vst.msk [vmem:[#allocation4 + $0xc8] sm:$0xff] %vm2938, %v6694
    %6727 = vst.msk [vmem:[#allocation4 + $0xd0] sm:$0xff] %vm2938, %v6695
    %6728 = vst.msk [vmem:[#allocation4 + $0xd8] sm:$0xff] %vm2938, %v6696
    %6729 = vst.msk [vmem:[#allocation4 + $0xe0] sm:$0xff] %vm2938, %v6697
    %6730 = vst.msk [vmem:[#allocation4 + $0xe8] sm:$0xff] %vm2938, %v6698
    %6731 = vst.msk [vmem:[#allocation4 + $0xf0] sm:$0xff] %vm2938, %v6699
    %6732 = vst.msk [vmem:[#allocation4 + $0xf8] sm:$0xff] %vm2938, %v6700
    %v6733 = vld [vmem:[#allocation4] ss:$2 sm:$0xff]
    %s6734 = scalar_lea.vmem [#allocation4], 16
    %v6735 = vld [vmem:[%s6734] ss:$2 sm:$0xff]
    %s6736 = scalar_lea.vmem [#allocation4], 32
    %v6737 = vld [vmem:[%s6736] ss:$2 sm:$0xff]
    %s6738 = scalar_lea.vmem [#allocation4], 48
    %v6739 = vld [vmem:[%s6738] ss:$2 sm:$0xff]
    %s6740 = scalar_lea.vmem [#allocation4], 64
    %v6741 = vld [vmem:[%s6740] ss:$2 sm:$0xff]
    %s6742 = scalar_lea.vmem [#allocation4], 80
    %v6743 = vld [vmem:[%s6742] ss:$2 sm:$0xff]
    %s6744 = scalar_lea.vmem [#allocation4], 96
    %v6745 = vld [vmem:[%s6744] ss:$2 sm:$0xff]
    %s6746 = scalar_lea.vmem [#allocation4], 112
    %v6747 = vld [vmem:[%s6746] ss:$2 sm:$0xff]
    %s6748 = scalar_lea.vmem [#allocation4], 128
    %v6749 = vld [vmem:[%s6748] ss:$2 sm:$0xff]
    %s6750 = scalar_lea.vmem [#allocation4], 144
    %v6751 = vld [vmem:[%s6750] ss:$2 sm:$0xff]
    %s6752 = scalar_lea.vmem [#allocation4], 160
    %v6753 = vld [vmem:[%s6752] ss:$2 sm:$0xff]
    %s6754 = scalar_lea.vmem [#allocation4], 176
    %v6755 = vld [vmem:[%s6754] ss:$2 sm:$0xff]
    %s6756 = scalar_lea.vmem [#allocation4], 192
    %v6757 = vld [vmem:[%s6756] ss:$2 sm:$0xff]
    %s6758 = scalar_lea.vmem [#allocation4], 208
    %v6759 = vld [vmem:[%s6758] ss:$2 sm:$0xff]
    %s6760 = scalar_lea.vmem [#allocation4], 224
    %v6761 = vld [vmem:[%s6760] ss:$2 sm:$0xff]
    %s6762 = scalar_lea.vmem [#allocation4], 240
    %v6763 = vld [vmem:[%s6762] ss:$2 sm:$0xff]
    %s6764 = scalar_lea.vmem [#allocation4], 1
    %v6765 = vld [vmem:[%s6764] ss:$2 sm:$0xff]
    %s6766 = scalar_lea.vmem [#allocation4], 17
    %v6767 = vld [vmem:[%s6766] ss:$2 sm:$0xff]
    %s6768 = scalar_lea.vmem [#allocation4], 33
    %v6769 = vld [vmem:[%s6768] ss:$2 sm:$0xff]
    %s6770 = scalar_lea.vmem [#allocation4], 49
    %v6771 = vld [vmem:[%s6770] ss:$2 sm:$0xff]
    %s6772 = scalar_lea.vmem [#allocation4], 65
    %v6773 = vld [vmem:[%s6772] ss:$2 sm:$0xff]
    %s6774 = scalar_lea.vmem [#allocation4], 81
    %v6775 = vld [vmem:[%s6774] ss:$2 sm:$0xff]
    %s6776 = scalar_lea.vmem [#allocation4], 97
    %v6777 = vld [vmem:[%s6776] ss:$2 sm:$0xff]
    %s6778 = scalar_lea.vmem [#allocation4], 113
    %v6779 = vld [vmem:[%s6778] ss:$2 sm:$0xff]
    %s6780 = scalar_lea.vmem [#allocation4], 129
    %v6781 = vld [vmem:[%s6780] ss:$2 sm:$0xff]
    %s6782 = scalar_lea.vmem [#allocation4], 145
    %v6783 = vld [vmem:[%s6782] ss:$2 sm:$0xff]
    %s6784 = scalar_lea.vmem [#allocation4], 161
    %v6785 = vld [vmem:[%s6784] ss:$2 sm:$0xff]
    %s6786 = scalar_lea.vmem [#allocation4], 177
    %v6787 = vld [vmem:[%s6786] ss:$2 sm:$0xff]
    %s6788 = scalar_lea.vmem [#allocation4], 193
    %v6789 = vld [vmem:[%s6788] ss:$2 sm:$0xff]
    %s6790 = scalar_lea.vmem [#allocation4], 209
    %v6791 = vld [vmem:[%s6790] ss:$2 sm:$0xff]
    %s6792 = scalar_lea.vmem [#allocation4], 225
    %v6793 = vld [vmem:[%s6792] ss:$2 sm:$0xff]
    %s6794 = scalar_lea.vmem [#allocation4], 241
    %v6795 = vld [vmem:[%s6794] ss:$2 sm:$0xff]
    %v6796 = vadd.f32 %v6733, %v6765
    %v6797 = vadd.f32 %v6735, %v6767
    %v6798 = vadd.f32 %v6737, %v6769
    %v6799 = vadd.f32 %v6739, %v6771
    %v6800 = vadd.f32 %v6741, %v6773
    %v6801 = vadd.f32 %v6743, %v6775
    %v6802 = vadd.f32 %v6745, %v6777
    %v6803 = vadd.f32 %v6747, %v6779
    %v6804 = vadd.f32 %v6749, %v6781
    %v6805 = vadd.f32 %v6751, %v6783
    %v6806 = vadd.f32 %v6753, %v6785
    %v6807 = vadd.f32 %v6755, %v6787
    %v6808 = vadd.f32 %v6757, %v6789
    %v6809 = vadd.f32 %v6759, %v6791
    %v6810 = vadd.f32 %v6761, %v6793
    %v6811 = vadd.f32 %v6763, %v6795
    %v6812 = vadd.f32 %v6796, %v6797
    %v6813 = vadd.f32 %v6798, %v6799
    %v6814 = vadd.f32 %v6800, %v6801
    %v6815 = vadd.f32 %v6802, %v6803
    %v6816 = vadd.f32 %v6804, %v6805
    %v6817 = vadd.f32 %v6806, %v6807
    %v6818 = vadd.f32 %v6808, %v6809
    %v6819 = vadd.f32 %v6810, %v6811
    %v6820 = vmul.f32 %v6812, 0.25
    %v6821 = vmul.f32 %v6813, 0.25
    %v6822 = vmul.f32 %v6814, 0.25
    %v6823 = vmul.f32 %v6815, 0.25
    %v6824 = vmul.f32 %v6816, 0.25
    %v6825 = vmul.f32 %v6817, 0.25
    %v6826 = vmul.f32 %v6818, 0.25
    %v6827 = vmul.f32 %v6819, 0.25
    %6828 = vst.msk [vmem:[#allocation5] sm:$0xff] %vm2938, %v6820
    %6829 = vst.msk [vmem:[#allocation5 + $0x8] sm:$0xff] %vm2938, %v6821
    %6830 = vst.msk [vmem:[#allocation5 + $0x10] sm:$0xff] %vm2938, %v6822
    %6831 = vst.msk [vmem:[#allocation5 + $0x18] sm:$0xff] %vm2938, %v6823
    %6832 = vst.msk [vmem:[#allocation5 + $0x20] sm:$0xff] %vm2938, %v6824
    %6833 = vst.msk [vmem:[#allocation5 + $0x28] sm:$0xff] %vm2938, %v6825
    %6834 = vst.msk [vmem:[#allocation5 + $0x30] sm:$0xff] %vm2938, %v6826
    %6835 = vst.msk [vmem:[#allocation5 + $0x38] sm:$0xff] %vm2938, %v6827
    %s6836 = scalar_lea.vmem %s0, 128
    %v6837 = vld [vmem:[%s6836] sm:$0xf]
    %v6838 = vld [vmem:[%s6836 + $0x4] sm:$0xf]
    %v6839 = vld [vmem:[%s6836 + $0x8] sm:$0xf]
    %v6840 = vld [vmem:[%s6836 + $0xc] sm:$0xf]
    %v6841 = vld [vmem:[%s6836 + $0x10] sm:$0xf]
    %v6842 = vld [vmem:[%s6836 + $0x14] sm:$0xf]
    %v6843 = vld [vmem:[%s6836 + $0x18] sm:$0xf]
    %v6844 = vld [vmem:[%s6836 + $0x1c] sm:$0xf]
    %v6845 = vld [vmem:[%s6836 + $0x20] sm:$0xf]
    %v6846 = vld [vmem:[%s6836 + $0x24] sm:$0xf]
    %v6847 = vld [vmem:[%s6836 + $0x28] sm:$0xf]
    %v6848 = vld [vmem:[%s6836 + $0x2c] sm:$0xf]
    %v6849 = vld [vmem:[%s6836 + $0x30] sm:$0xf]
    %v6850 = vld [vmem:[%s6836 + $0x34] sm:$0xf]
    %v6851 = vld [vmem:[%s6836 + $0x38] sm:$0xf]
    %v6852 = vld [vmem:[%s6836 + $0x3c] sm:$0xf]
    %v6853 = vld [vmem:[%s6836 + $0x40] sm:$0xf]
    %v6854 = vld [vmem:[%s6836 + $0x44] sm:$0xf]
    %v6855 = vld [vmem:[%s6836 + $0x48] sm:$0xf]
    %v6856 = vld [vmem:[%s6836 + $0x4c] sm:$0xf]
    %v6857 = vld [vmem:[%s6836 + $0x50] sm:$0xf]
    %v6858 = vld [vmem:[%s6836 + $0x54] sm:$0xf]
    %v6859 = vld [vmem:[%s6836 + $0x58] sm:$0xf]
    %v6860 = vld [vmem:[%s6836 + $0x5c] sm:$0xf]
    %v6861 = vld [vmem:[%s6836 + $0x60] sm:$0xf]
    %v6862 = vld [vmem:[%s6836 + $0x64] sm:$0xf]
    %v6863 = vld [vmem:[%s6836 + $0x68] sm:$0xf]
    %v6864 = vld [vmem:[%s6836 + $0x6c] sm:$0xf]
    %v6865 = vld [vmem:[%s6836 + $0x70] sm:$0xf]
    %v6866 = vld [vmem:[%s6836 + $0x74] sm:$0xf]
    %v6867 = vld [vmem:[%s6836 + $0x78] sm:$0xf]
    %v6868 = vld [vmem:[%s6836 + $0x7c] sm:$0xf]
    %6869 = vst.msk [vmem:[%s145 + $0x4] sm:$0xf] %vm22, %v6837
    %6870 = vst.msk [vmem:[%s145 + $0x8] sm:$0xf] %vm22, %v6838
    %6871 = vst.msk [vmem:[%s145 + $0x14] sm:$0xf] %vm22, %v6839
    %6872 = vst.msk [vmem:[%s145 + $0x18] sm:$0xf] %vm22, %v6840
    %6873 = vst.msk [vmem:[%s145 + $0x24] sm:$0xf] %vm22, %v6841
    %6874 = vst.msk [vmem:[%s145 + $0x28] sm:$0xf] %vm22, %v6842
    %6875 = vst.msk [vmem:[%s145 + $0x34] sm:$0xf] %vm22, %v6843
    %6876 = vst.msk [vmem:[%s145 + $0x38] sm:$0xf] %vm22, %v6844
    %6877 = vst.msk [vmem:[%s145 + $0x44] sm:$0xf] %vm22, %v6845
    %6878 = vst.msk [vmem:[%s145 + $0x48] sm:$0xf] %vm22, %v6846
    %6879 = vst.msk [vmem:[%s145 + $0x54] sm:$0xf] %vm22, %v6847
    %6880 = vst.msk [vmem:[%s145 + $0x58] sm:$0xf] %vm22, %v6848
    %6881 = vst.msk [vmem:[%s145 + $0x64] sm:$0xf] %vm22, %v6849
    %6882 = vst.msk [vmem:[%s145 + $0x68] sm:$0xf] %vm22, %v6850
    %6883 = vst.msk [vmem:[%s145 + $0x74] sm:$0xf] %vm22, %v6851
    %6884 = vst.msk [vmem:[%s145 + $0x78] sm:$0xf] %vm22, %v6852
    %6885 = vst.msk [vmem:[%s145 + $0x84] sm:$0xf] %vm22, %v6853
    %6886 = vst.msk [vmem:[%s145 + $0x88] sm:$0xf] %vm22, %v6854
    %6887 = vst.msk [vmem:[%s145 + $0x94] sm:$0xf] %vm22, %v6855
    %6888 = vst.msk [vmem:[%s145 + $0x98] sm:$0xf] %vm22, %v6856
    %6889 = vst.msk [vmem:[%s145 + $0xa4] sm:$0xf] %vm22, %v6857
    %6890 = vst.msk [vmem:[%s145 + $0xa8] sm:$0xf] %vm22, %v6858
    %6891 = vst.msk [vmem:[%s145 + $0xb4] sm:$0xf] %vm22, %v6859
    %6892 = vst.msk [vmem:[%s145 + $0xb8] sm:$0xf] %vm22, %v6860
    %6893 = vst.msk [vmem:[%s145 + $0xc4] sm:$0xf] %vm22, %v6861
    %6894 = vst.msk [vmem:[%s145 + $0xc8] sm:$0xf] %vm22, %v6862
    %6895 = vst.msk [vmem:[%s145 + $0xd4] sm:$0xf] %vm22, %v6863
    %6896 = vst.msk [vmem:[%s145 + $0xd8] sm:$0xf] %vm22, %v6864
    %6897 = vst.msk [vmem:[%s145 + $0xe4] sm:$0xf] %vm22, %v6865
    %6898 = vst.msk [vmem:[%s145 + $0xe8] sm:$0xf] %vm22, %v6866
    %6899 = vst.msk [vmem:[%s145 + $0xf4] sm:$0xf] %vm22, %v6867
    %6900 = vst.msk [vmem:[%s145 + $0xf8] sm:$0xf] %vm22, %v6868
    %v6901 = vld [vmem:[#allocation2] sm:$0x8]
    %v6902 = vld [vmem:[#allocation2 + $0x4] sm:$0xf]
    %v6903 = vld [vmem:[#allocation2 + $0x8] sm:$0xf]
    %v6904 = vld [vmem:[#allocation2 + $0x10] sm:$0x8]
    %v6905 = vld [vmem:[#allocation2 + $0x14] sm:$0xf]
    %v6906 = vld [vmem:[#allocation2 + $0x18] sm:$0xf]
    %v6907 = vld [vmem:[#allocation2 + $0x20] sm:$0x8]
    %v6908 = vld [vmem:[#allocation2 + $0x24] sm:$0xf]
    %v6909 = vld [vmem:[#allocation2 + $0x28] sm:$0xf]
    %v6910 = vld [vmem:[#allocation2 + $0x30] sm:$0x8]
    %v6911 = vld [vmem:[#allocation2 + $0x34] sm:$0xf]
    %v6912 = vld [vmem:[#allocation2 + $0x38] sm:$0xf]
    %v6913 = vld [vmem:[#allocation2 + $0x40] sm:$0x8]
    %v6914 = vld [vmem:[#allocation2 + $0x44] sm:$0xf]
    %v6915 = vld [vmem:[#allocation2 + $0x48] sm:$0xf]
    %v6916 = vld [vmem:[#allocation2 + $0x50] sm:$0x8]
    %v6917 = vld [vmem:[#allocation2 + $0x54] sm:$0xf]
    %v6918 = vld [vmem:[#allocation2 + $0x58] sm:$0xf]
    %v6919 = vld [vmem:[#allocation2 + $0x60] sm:$0x8]
    %v6920 = vld [vmem:[#allocation2 + $0x64] sm:$0xf]
    %v6921 = vld [vmem:[#allocation2 + $0x68] sm:$0xf]
    %v6922 = vld [vmem:[#allocation2 + $0x70] sm:$0x8]
    %v6923 = vld [vmem:[#allocation2 + $0x74] sm:$0xf]
    %v6924 = vld [vmem:[#allocation2 + $0x78] sm:$0xf]
    %v6925 = vld [vmem:[#allocation2 + $0x80] sm:$0x8]
    %v6926 = vld [vmem:[#allocation2 + $0x84] sm:$0xf]
    %v6927 = vld [vmem:[#allocation2 + $0x88] sm:$0xf]
    %v6928 = vld [vmem:[#allocation2 + $0x90] sm:$0x8]
    %v6929 = vld [vmem:[#allocation2 + $0x94] sm:$0xf]
    %v6930 = vld [vmem:[#allocation2 + $0x98] sm:$0xf]
    %v6931 = vld [vmem:[#allocation2 + $0xa0] sm:$0x8]
    %v6932 = vld [vmem:[#allocation2 + $0xa4] sm:$0xf]
    %v6933 = vld [vmem:[#allocation2 + $0xa8] sm:$0xf]
    %v6934 = vld [vmem:[#allocation2 + $0xb0] sm:$0x8]
    %v6935 = vld [vmem:[#allocation2 + $0xb4] sm:$0xf]
    %v6936 = vld [vmem:[#allocation2 + $0xb8] sm:$0xf]
    %v6937 = vld [vmem:[#allocation2 + $0xc0] sm:$0x8]
    %v6938 = vld [vmem:[#allocation2 + $0xc4] sm:$0xf]
    %v6939 = vld [vmem:[#allocation2 + $0xc8] sm:$0xf]
    %v6940 = vld [vmem:[#allocation2 + $0xd0] sm:$0x8]
    %v6941 = vld [vmem:[#allocation2 + $0xd4] sm:$0xf]
    %v6942 = vld [vmem:[#allocation2 + $0xd8] sm:$0xf]
    %v6943 = vld [vmem:[#allocation2 + $0xe0] sm:$0x8]
    %v6944 = vld [vmem:[#allocation2 + $0xe4] sm:$0xf]
    %v6945 = vld [vmem:[#allocation2 + $0xe8] sm:$0xf]
    %v6946 = vld [vmem:[#allocation2 + $0xf0] sm:$0x8]
    %v6947 = vld [vmem:[#allocation2 + $0xf4] sm:$0xf]
    %v6948 = vld [vmem:[#allocation2 + $0xf8] sm:$0xf]
    %v6950 = vshrl.u32 %v6901, 16
    %v6952 = vrot.slane %v6950, 7
    %v6953 = vrot.slane %v6952, 4
    %v6955 = vshrl.u32 %v6902, 16
    %v6957 = vrot.slane %v6955, 7
    %v6958 = vshll.u32 %v6902, 16
    %v6960 = vor.u32 %v6957, %v6958
    %v6961 = vsel %vm228, %v6953, %v6960
    %v6962 = vrot.slane %v6957, 4
    %v6964 = vshrl.u32 %v6903, 16
    %v6966 = vrot.slane %v6964, 7
    %v6967 = vshll.u32 %v6903, 16
    %v6969 = vor.u32 %v6966, %v6967
    %v6970 = vsel %vm228, %v6962, %v6969
    %v6972 = vshrl.u32 %v6904, 16
    %v6974 = vrot.slane %v6972, 7
    %v6975 = vrot.slane %v6974, 4
    %v6977 = vshrl.u32 %v6905, 16
    %v6979 = vrot.slane %v6977, 7
    %v6980 = vshll.u32 %v6905, 16
    %v6982 = vor.u32 %v6979, %v6980
    %v6983 = vsel %vm228, %v6975, %v6982
    %v6984 = vrot.slane %v6979, 4
    %v6986 = vshrl.u32 %v6906, 16
    %v6988 = vrot.slane %v6986, 7
    %v6989 = vshll.u32 %v6906, 16
    %v6991 = vor.u32 %v6988, %v6989
    %v6992 = vsel %vm228, %v6984, %v6991
    %v6994 = vshrl.u32 %v6907, 16
    %v6996 = vrot.slane %v6994, 7
    %v6997 = vrot.slane %v6996, 4
    %v6999 = vshrl.u32 %v6908, 16
    %v7001 = vrot.slane %v6999, 7
    %v7002 = vshll.u32 %v6908, 16
    %v7004 = vor.u32 %v7001, %v7002
    %v7005 = vsel %vm228, %v6997, %v7004
    %v7006 = vrot.slane %v7001, 4
    %v7008 = vshrl.u32 %v6909, 16
    %v7010 = vrot.slane %v7008, 7
    %v7011 = vshll.u32 %v6909, 16
    %v7013 = vor.u32 %v7010, %v7011
    %v7014 = vsel %vm228, %v7006, %v7013
    %v7016 = vshrl.u32 %v6910, 16
    %v7018 = vrot.slane %v7016, 7
    %v7019 = vrot.slane %v7018, 4
    %v7021 = vshrl.u32 %v6911, 16
    %v7023 = vrot.slane %v7021, 7
    %v7024 = vshll.u32 %v6911, 16
    %v7026 = vor.u32 %v7023, %v7024
    %v7027 = vsel %vm228, %v7019, %v7026
    %v7028 = vrot.slane %v7023, 4
    %v7030 = vshrl.u32 %v6912, 16
    %v7032 = vrot.slane %v7030, 7
    %v7033 = vshll.u32 %v6912, 16
    %v7035 = vor.u32 %v7032, %v7033
    %v7036 = vsel %vm228, %v7028, %v7035
    %v7038 = vshrl.u32 %v6913, 16
    %v7040 = vrot.slane %v7038, 7
    %v7041 = vrot.slane %v7040, 4
    %v7043 = vshrl.u32 %v6914, 16
    %v7045 = vrot.slane %v7043, 7
    %v7046 = vshll.u32 %v6914, 16
    %v7048 = vor.u32 %v7045, %v7046
    %v7049 = vsel %vm228, %v7041, %v7048
    %v7050 = vrot.slane %v7045, 4
    %v7052 = vshrl.u32 %v6915, 16
    %v7054 = vrot.slane %v7052, 7
    %v7055 = vshll.u32 %v6915, 16
    %v7057 = vor.u32 %v7054, %v7055
    %v7058 = vsel %vm228, %v7050, %v7057
    %v7060 = vshrl.u32 %v6916, 16
    %v7062 = vrot.slane %v7060, 7
    %v7063 = vrot.slane %v7062, 4
    %v7065 = vshrl.u32 %v6917, 16
    %v7067 = vrot.slane %v7065, 7
    %v7068 = vshll.u32 %v6917, 16
    %v7070 = vor.u32 %v7067, %v7068
    %v7071 = vsel %vm228, %v7063, %v7070
    %v7072 = vrot.slane %v7067, 4
    %v7074 = vshrl.u32 %v6918, 16
    %v7076 = vrot.slane %v7074, 7
    %v7077 = vshll.u32 %v6918, 16
    %v7079 = vor.u32 %v7076, %v7077
    %v7080 = vsel %vm228, %v7072, %v7079
    %v7082 = vshrl.u32 %v6919, 16
    %v7084 = vrot.slane %v7082, 7
    %v7085 = vrot.slane %v7084, 4
    %v7087 = vshrl.u32 %v6920, 16
    %v7089 = vrot.slane %v7087, 7
    %v7090 = vshll.u32 %v6920, 16
    %v7092 = vor.u32 %v7089, %v7090
    %v7093 = vsel %vm228, %v7085, %v7092
    %v7094 = vrot.slane %v7089, 4
    %v7096 = vshrl.u32 %v6921, 16
    %v7098 = vrot.slane %v7096, 7
    %v7099 = vshll.u32 %v6921, 16
    %v7101 = vor.u32 %v7098, %v7099
    %v7102 = vsel %vm228, %v7094, %v7101
    %v7104 = vshrl.u32 %v6922, 16
    %v7106 = vrot.slane %v7104, 7
    %v7107 = vrot.slane %v7106, 4
    %v7109 = vshrl.u32 %v6923, 16
    %v7111 = vrot.slane %v7109, 7
    %v7112 = vshll.u32 %v6923, 16
    %v7114 = vor.u32 %v7111, %v7112
    %v7115 = vsel %vm228, %v7107, %v7114
    %v7116 = vrot.slane %v7111, 4
    %v7118 = vshrl.u32 %v6924, 16
    %v7120 = vrot.slane %v7118, 7
    %v7121 = vshll.u32 %v6924, 16
    %v7123 = vor.u32 %v7120, %v7121
    %v7124 = vsel %vm228, %v7116, %v7123
    %v7126 = vshrl.u32 %v6925, 16
    %v7128 = vrot.slane %v7126, 7
    %v7129 = vrot.slane %v7128, 4
    %v7131 = vshrl.u32 %v6926, 16
    %v7133 = vrot.slane %v7131, 7
    %v7134 = vshll.u32 %v6926, 16
    %v7136 = vor.u32 %v7133, %v7134
    %v7137 = vsel %vm228, %v7129, %v7136
    %v7138 = vrot.slane %v7133, 4
    %v7140 = vshrl.u32 %v6927, 16
    %v7142 = vrot.slane %v7140, 7
    %v7143 = vshll.u32 %v6927, 16
    %v7145 = vor.u32 %v7142, %v7143
    %v7146 = vsel %vm228, %v7138, %v7145
    %v7148 = vshrl.u32 %v6928, 16
    %v7150 = vrot.slane %v7148, 7
    %v7151 = vrot.slane %v7150, 4
    %v7153 = vshrl.u32 %v6929, 16
    %v7155 = vrot.slane %v7153, 7
    %v7156 = vshll.u32 %v6929, 16
    %v7158 = vor.u32 %v7155, %v7156
    %v7159 = vsel %vm228, %v7151, %v7158
    %v7160 = vrot.slane %v7155, 4
    %v7162 = vshrl.u32 %v6930, 16
    %v7164 = vrot.slane %v7162, 7
    %v7165 = vshll.u32 %v6930, 16
    %v7167 = vor.u32 %v7164, %v7165
    %v7168 = vsel %vm228, %v7160, %v7167
    %v7170 = vshrl.u32 %v6931, 16
    %v7172 = vrot.slane %v7170, 7
    %v7173 = vrot.slane %v7172, 4
    %v7175 = vshrl.u32 %v6932, 16
    %v7177 = vrot.slane %v7175, 7
    %v7178 = vshll.u32 %v6932, 16
    %v7180 = vor.u32 %v7177, %v7178
    %v7181 = vsel %vm228, %v7173, %v7180
    %v7182 = vrot.slane %v7177, 4
    %v7184 = vshrl.u32 %v6933, 16
    %v7186 = vrot.slane %v7184, 7
    %v7187 = vshll.u32 %v6933, 16
    %v7189 = vor.u32 %v7186, %v7187
    %v7190 = vsel %vm228, %v7182, %v7189
    %v7192 = vshrl.u32 %v6934, 16
    %v7194 = vrot.slane %v7192, 7
    %v7195 = vrot.slane %v7194, 4
    %v7197 = vshrl.u32 %v6935, 16
    %v7199 = vrot.slane %v7197, 7
    %v7200 = vshll.u32 %v6935, 16
    %v7202 = vor.u32 %v7199, %v7200
    %v7203 = vsel %vm228, %v7195, %v7202
    %v7204 = vrot.slane %v7199, 4
    %v7206 = vshrl.u32 %v6936, 16
    %v7208 = vrot.slane %v7206, 7
    %v7209 = vshll.u32 %v6936, 16
    %v7211 = vor.u32 %v7208, %v7209
    %v7212 = vsel %vm228, %v7204, %v7211
    %v7214 = vshrl.u32 %v6937, 16
    %v7216 = vrot.slane %v7214, 7
    %v7217 = vrot.slane %v7216, 4
    %v7219 = vshrl.u32 %v6938, 16
    %v7221 = vrot.slane %v7219, 7
    %v7222 = vshll.u32 %v6938, 16
    %v7224 = vor.u32 %v7221, %v7222
    %v7225 = vsel %vm228, %v7217, %v7224
    %v7226 = vrot.slane %v7221, 4
    %v7228 = vshrl.u32 %v6939, 16
    %v7230 = vrot.slane %v7228, 7
    %v7231 = vshll.u32 %v6939, 16
    %v7233 = vor.u32 %v7230, %v7231
    %v7234 = vsel %vm228, %v7226, %v7233
    %v7236 = vshrl.u32 %v6940, 16
    %v7238 = vrot.slane %v7236, 7
    %v7239 = vrot.slane %v7238, 4
    %v7241 = vshrl.u32 %v6941, 16
    %v7243 = vrot.slane %v7241, 7
    %v7244 = vshll.u32 %v6941, 16
    %v7246 = vor.u32 %v7243, %v7244
    %v7247 = vsel %vm228, %v7239, %v7246
    %v7248 = vrot.slane %v7243, 4
    %v7250 = vshrl.u32 %v6942, 16
    %v7252 = vrot.slane %v7250, 7
    %v7253 = vshll.u32 %v6942, 16
    %v7255 = vor.u32 %v7252, %v7253
    %v7256 = vsel %vm228, %v7248, %v7255
    %v7258 = vshrl.u32 %v6943, 16
    %v7260 = vrot.slane %v7258, 7
    %v7261 = vrot.slane %v7260, 4
    %v7263 = vshrl.u32 %v6944, 16
    %v7265 = vrot.slane %v7263, 7
    %v7266 = vshll.u32 %v6944, 16
    %v7268 = vor.u32 %v7265, %v7266
    %v7269 = vsel %vm228, %v7261, %v7268
    %v7270 = vrot.slane %v7265, 4
    %v7272 = vshrl.u32 %v6945, 16
    %v7274 = vrot.slane %v7272, 7
    %v7275 = vshll.u32 %v6945, 16
    %v7277 = vor.u32 %v7274, %v7275
    %v7278 = vsel %vm228, %v7270, %v7277
    %v7280 = vshrl.u32 %v6946, 16
    %v7282 = vrot.slane %v7280, 7
    %v7283 = vrot.slane %v7282, 4
    %v7285 = vshrl.u32 %v6947, 16
    %v7287 = vrot.slane %v7285, 7
    %v7288 = vshll.u32 %v6947, 16
    %v7290 = vor.u32 %v7287, %v7288
    %v7291 = vsel %vm228, %v7283, %v7290
    %v7292 = vrot.slane %v7287, 4
    %v7294 = vshrl.u32 %v6948, 16
    %v7296 = vrot.slane %v7294, 7
    %v7297 = vshll.u32 %v6948, 16
    %v7299 = vor.u32 %v7296, %v7297
    %v7300 = vsel %vm228, %v7292, %v7299
    %v7301 = vld [vmem:[#allocation2 + $0xc] sm:$0x1]
    %v7302 = vld [vmem:[#allocation2 + $0x1c] sm:$0x1]
    %v7303 = vld [vmem:[#allocation2 + $0x2c] sm:$0x1]
    %v7304 = vld [vmem:[#allocation2 + $0x3c] sm:$0x1]
    %v7305 = vld [vmem:[#allocation2 + $0x4c] sm:$0x1]
    %v7306 = vld [vmem:[#allocation2 + $0x5c] sm:$0x1]
    %v7307 = vld [vmem:[#allocation2 + $0x6c] sm:$0x1]
    %v7308 = vld [vmem:[#allocation2 + $0x7c] sm:$0x1]
    %v7309 = vld [vmem:[#allocation2 + $0x8c] sm:$0x1]
    %v7310 = vld [vmem:[#allocation2 + $0x9c] sm:$0x1]
    %v7311 = vld [vmem:[#allocation2 + $0xac] sm:$0x1]
    %v7312 = vld [vmem:[#allocation2 + $0xbc] sm:$0x1]
    %v7313 = vld [vmem:[#allocation2 + $0xcc] sm:$0x1]
    %v7314 = vld [vmem:[#allocation2 + $0xdc] sm:$0x1]
    %v7315 = vld [vmem:[#allocation2 + $0xec] sm:$0x1]
    %v7316 = vld [vmem:[#allocation2 + $0xfc] sm:$0x1]
    %v7317 = vrot.slane %v6955, 4
    %v7318 = vrot.slane %v6958, 5
    %v7319 = vor.u32 %v7317, %v7318
    %v7320 = vrot.slane %v7319, 4
    %v7321 = vrot.slane %v6967, 5
    %v7322 = vsel %vm599, %v7320, %v7321
    %v7323 = vrot.slane %v6964, 4
    %v7324 = vor.u32 %v7323, %v7321
    %v7325 = vrot.slane %v7324, 4
    %v7327 = vshll.u32 %v7301, 16
    %v7329 = vrot.slane %v7327, 5
    %v7330 = vsel %vm599, %v7325, %v7329
    %v7331 = vrot.slane %v6977, 4
    %v7332 = vrot.slane %v6980, 5
    %v7333 = vor.u32 %v7331, %v7332
    %v7334 = vrot.slane %v7333, 4
    %v7335 = vrot.slane %v6989, 5
    %v7336 = vsel %vm599, %v7334, %v7335
    %v7337 = vrot.slane %v6986, 4
    %v7338 = vor.u32 %v7337, %v7335
    %v7339 = vrot.slane %v7338, 4
    %v7341 = vshll.u32 %v7302, 16
    %v7343 = vrot.slane %v7341, 5
    %v7344 = vsel %vm599, %v7339, %v7343
    %v7345 = vrot.slane %v6999, 4
    %v7346 = vrot.slane %v7002, 5
    %v7347 = vor.u32 %v7345, %v7346
    %v7348 = vrot.slane %v7347, 4
    %v7349 = vrot.slane %v7011, 5
    %v7350 = vsel %vm599, %v7348, %v7349
    %v7351 = vrot.slane %v7008, 4
    %v7352 = vor.u32 %v7351, %v7349
    %v7353 = vrot.slane %v7352, 4
    %v7355 = vshll.u32 %v7303, 16
    %v7357 = vrot.slane %v7355, 5
    %v7358 = vsel %vm599, %v7353, %v7357
    %v7359 = vrot.slane %v7021, 4
    %v7360 = vrot.slane %v7024, 5
    %v7361 = vor.u32 %v7359, %v7360
    %v7362 = vrot.slane %v7361, 4
    %v7363 = vrot.slane %v7033, 5
    %v7364 = vsel %vm599, %v7362, %v7363
    %v7365 = vrot.slane %v7030, 4
    %v7366 = vor.u32 %v7365, %v7363
    %v7367 = vrot.slane %v7366, 4
    %v7369 = vshll.u32 %v7304, 16
    %v7371 = vrot.slane %v7369, 5
    %v7372 = vsel %vm599, %v7367, %v7371
    %v7373 = vrot.slane %v7043, 4
    %v7374 = vrot.slane %v7046, 5
    %v7375 = vor.u32 %v7373, %v7374
    %v7376 = vrot.slane %v7375, 4
    %v7377 = vrot.slane %v7055, 5
    %v7378 = vsel %vm599, %v7376, %v7377
    %v7379 = vrot.slane %v7052, 4
    %v7380 = vor.u32 %v7379, %v7377
    %v7381 = vrot.slane %v7380, 4
    %v7383 = vshll.u32 %v7305, 16
    %v7385 = vrot.slane %v7383, 5
    %v7386 = vsel %vm599, %v7381, %v7385
    %v7387 = vrot.slane %v7065, 4
    %v7388 = vrot.slane %v7068, 5
    %v7389 = vor.u32 %v7387, %v7388
    %v7390 = vrot.slane %v7389, 4
    %v7391 = vrot.slane %v7077, 5
    %v7392 = vsel %vm599, %v7390, %v7391
    %v7393 = vrot.slane %v7074, 4
    %v7394 = vor.u32 %v7393, %v7391
    %v7395 = vrot.slane %v7394, 4
    %v7397 = vshll.u32 %v7306, 16
    %v7399 = vrot.slane %v7397, 5
    %v7400 = vsel %vm599, %v7395, %v7399
    %v7401 = vrot.slane %v7087, 4
    %v7402 = vrot.slane %v7090, 5
    %v7403 = vor.u32 %v7401, %v7402
    %v7404 = vrot.slane %v7403, 4
    %v7405 = vrot.slane %v7099, 5
    %v7406 = vsel %vm599, %v7404, %v7405
    %v7407 = vrot.slane %v7096, 4
    %v7408 = vor.u32 %v7407, %v7405
    %v7409 = vrot.slane %v7408, 4
    %v7411 = vshll.u32 %v7307, 16
    %v7413 = vrot.slane %v7411, 5
    %v7414 = vsel %vm599, %v7409, %v7413
    %v7415 = vrot.slane %v7109, 4
    %v7416 = vrot.slane %v7112, 5
    %v7417 = vor.u32 %v7415, %v7416
    %v7418 = vrot.slane %v7417, 4
    %v7419 = vrot.slane %v7121, 5
    %v7420 = vsel %vm599, %v7418, %v7419
    %v7421 = vrot.slane %v7118, 4
    %v7422 = vor.u32 %v7421, %v7419
    %v7423 = vrot.slane %v7422, 4
    %v7425 = vshll.u32 %v7308, 16
    %v7427 = vrot.slane %v7425, 5
    %v7428 = vsel %vm599, %v7423, %v7427
    %v7429 = vrot.slane %v7131, 4
    %v7430 = vrot.slane %v7134, 5
    %v7431 = vor.u32 %v7429, %v7430
    %v7432 = vrot.slane %v7431, 4
    %v7433 = vrot.slane %v7143, 5
    %v7434 = vsel %vm599, %v7432, %v7433
    %v7435 = vrot.slane %v7140, 4
    %v7436 = vor.u32 %v7435, %v7433
    %v7437 = vrot.slane %v7436, 4
    %v7439 = vshll.u32 %v7309, 16
    %v7441 = vrot.slane %v7439, 5
    %v7442 = vsel %vm599, %v7437, %v7441
    %v7443 = vrot.slane %v7153, 4
    %v7444 = vrot.slane %v7156, 5
    %v7445 = vor.u32 %v7443, %v7444
    %v7446 = vrot.slane %v7445, 4
    %v7447 = vrot.slane %v7165, 5
    %v7448 = vsel %vm599, %v7446, %v7447
    %v7449 = vrot.slane %v7162, 4
    %v7450 = vor.u32 %v7449, %v7447
    %v7451 = vrot.slane %v7450, 4
    %v7453 = vshll.u32 %v7310, 16
    %v7455 = vrot.slane %v7453, 5
    %v7456 = vsel %vm599, %v7451, %v7455
    %v7457 = vrot.slane %v7175, 4
    %v7458 = vrot.slane %v7178, 5
    %v7459 = vor.u32 %v7457, %v7458
    %v7460 = vrot.slane %v7459, 4
    %v7461 = vrot.slane %v7187, 5
    %v7462 = vsel %vm599, %v7460, %v7461
    %v7463 = vrot.slane %v7184, 4
    %v7464 = vor.u32 %v7463, %v7461
    %v7465 = vrot.slane %v7464, 4
    %v7467 = vshll.u32 %v7311, 16
    %v7469 = vrot.slane %v7467, 5
    %v7470 = vsel %vm599, %v7465, %v7469
    %v7471 = vrot.slane %v7197, 4
    %v7472 = vrot.slane %v7200, 5
    %v7473 = vor.u32 %v7471, %v7472
    %v7474 = vrot.slane %v7473, 4
    %v7475 = vrot.slane %v7209, 5
    %v7476 = vsel %vm599, %v7474, %v7475
    %v7477 = vrot.slane %v7206, 4
    %v7478 = vor.u32 %v7477, %v7475
    %v7479 = vrot.slane %v7478, 4
    %v7481 = vshll.u32 %v7312, 16
    %v7483 = vrot.slane %v7481, 5
    %v7484 = vsel %vm599, %v7479, %v7483
    %v7485 = vrot.slane %v7219, 4
    %v7486 = vrot.slane %v7222, 5
    %v7487 = vor.u32 %v7485, %v7486
    %v7488 = vrot.slane %v7487, 4
    %v7489 = vrot.slane %v7231, 5
    %v7490 = vsel %vm599, %v7488, %v7489
    %v7491 = vrot.slane %v7228, 4
    %v7492 = vor.u32 %v7491, %v7489
    %v7493 = vrot.slane %v7492, 4
    %v7495 = vshll.u32 %v7313, 16
    %v7497 = vrot.slane %v7495, 5
    %v7498 = vsel %vm599, %v7493, %v7497
    %v7499 = vrot.slane %v7241, 4
    %v7500 = vrot.slane %v7244, 5
    %v7501 = vor.u32 %v7499, %v7500
    %v7502 = vrot.slane %v7501, 4
    %v7503 = vrot.slane %v7253, 5
    %v7504 = vsel %vm599, %v7502, %v7503
    %v7505 = vrot.slane %v7250, 4
    %v7506 = vor.u32 %v7505, %v7503
    %v7507 = vrot.slane %v7506, 4
    %v7509 = vshll.u32 %v7314, 16
    %v7511 = vrot.slane %v7509, 5
    %v7512 = vsel %vm599, %v7507, %v7511
    %v7513 = vrot.slane %v7263, 4
    %v7514 = vrot.slane %v7266, 5
    %v7515 = vor.u32 %v7513, %v7514
    %v7516 = vrot.slane %v7515, 4
    %v7517 = vrot.slane %v7275, 5
    %v7518 = vsel %vm599, %v7516, %v7517
    %v7519 = vrot.slane %v7272, 4
    %v7520 = vor.u32 %v7519, %v7517
    %v7521 = vrot.slane %v7520, 4
    %v7523 = vshll.u32 %v7315, 16
    %v7525 = vrot.slane %v7523, 5
    %v7526 = vsel %vm599, %v7521, %v7525
    %v7527 = vrot.slane %v7285, 4
    %v7528 = vrot.slane %v7288, 5
    %v7529 = vor.u32 %v7527, %v7528
    %v7530 = vrot.slane %v7529, 4
    %v7531 = vrot.slane %v7297, 5
    %v7532 = vsel %vm599, %v7530, %v7531
    %v7533 = vrot.slane %v7294, 4
    %v7534 = vor.u32 %v7533, %v7531
    %v7535 = vrot.slane %v7534, 4
    %v7537 = vshll.u32 %v7316, 16
    %v7539 = vrot.slane %v7537, 5
    %v7540 = vsel %vm599, %v7535, %v7539
    %v7541 = vld [vmem:[%s145] sm:$0x8]
    %v7542 = vld [vmem:[%s145 + $0x4] sm:$0xf]
    %v7543 = vld [vmem:[%s145 + $0x8] sm:$0xf]
    %v7544 = vld [vmem:[%s145 + $0x10] sm:$0x8]
    %v7545 = vld [vmem:[%s145 + $0x14] sm:$0xf]
    %v7546 = vld [vmem:[%s145 + $0x18] sm:$0xf]
    %v7547 = vld [vmem:[%s145 + $0x20] sm:$0x8]
    %v7548 = vld [vmem:[%s145 + $0x24] sm:$0xf]
    %v7549 = vld [vmem:[%s145 + $0x28] sm:$0xf]
    %v7550 = vld [vmem:[%s145 + $0x30] sm:$0x8]
    %v7551 = vld [vmem:[%s145 + $0x34] sm:$0xf]
    %v7552 = vld [vmem:[%s145 + $0x38] sm:$0xf]
    %v7553 = vld [vmem:[%s145 + $0x40] sm:$0x8]
    %v7554 = vld [vmem:[%s145 + $0x44] sm:$0xf]
    %v7555 = vld [vmem:[%s145 + $0x48] sm:$0xf]
    %v7556 = vld [vmem:[%s145 + $0x50] sm:$0x8]
    %v7557 = vld [vmem:[%s145 + $0x54] sm:$0xf]
    %v7558 = vld [vmem:[%s145 + $0x58] sm:$0xf]
    %v7559 = vld [vmem:[%s145 + $0x60] sm:$0x8]
    %v7560 = vld [vmem:[%s145 + $0x64] sm:$0xf]
    %v7561 = vld [vmem:[%s145 + $0x68] sm:$0xf]
    %v7562 = vld [vmem:[%s145 + $0x70] sm:$0x8]
    %v7563 = vld [vmem:[%s145 + $0x74] sm:$0xf]
    %v7564 = vld [vmem:[%s145 + $0x78] sm:$0xf]
    %v7565 = vld [vmem:[%s145 + $0x80] sm:$0x8]
    %v7566 = vld [vmem:[%s145 + $0x84] sm:$0xf]
    %v7567 = vld [vmem:[%s145 + $0x88] sm:$0xf]
    %v7568 = vld [vmem:[%s145 + $0x90] sm:$0x8]
    %v7569 = vld [vmem:[%s145 + $0x94] sm:$0xf]
    %v7570 = vld [vmem:[%s145 + $0x98] sm:$0xf]
    %v7571 = vld [vmem:[%s145 + $0xa0] sm:$0x8]
    %v7572 = vld [vmem:[%s145 + $0xa4] sm:$0xf]
    %v7573 = vld [vmem:[%s145 + $0xa8] sm:$0xf]
    %v7574 = vld [vmem:[%s145 + $0xb0] sm:$0x8]
    %v7575 = vld [vmem:[%s145 + $0xb4] sm:$0xf]
    %v7576 = vld [vmem:[%s145 + $0xb8] sm:$0xf]
    %v7577 = vld [vmem:[%s145 + $0xc0] sm:$0x8]
    %v7578 = vld [vmem:[%s145 + $0xc4] sm:$0xf]
    %v7579 = vld [vmem:[%s145 + $0xc8] sm:$0xf]
    %v7580 = vld [vmem:[%s145 + $0xd0] sm:$0x8]
    %v7581 = vld [vmem:[%s145 + $0xd4] sm:$0xf]
    %v7582 = vld [vmem:[%s145 + $0xd8] sm:$0xf]
    %v7583 = vld [vmem:[%s145 + $0xe0] sm:$0x8]
    %v7584 = vld [vmem:[%s145 + $0xe4] sm:$0xf]
    %v7585 = vld [vmem:[%s145 + $0xe8] sm:$0xf]
    %v7586 = vld [vmem:[%s145 + $0xf0] sm:$0x8]
    %v7587 = vld [vmem:[%s145 + $0xf4] sm:$0xf]
    %v7588 = vld [vmem:[%s145 + $0xf8] sm:$0xf]
    %v7590 = vshrl.u32 %v7541, 16
    %v7592 = vrot.slane %v7590, 7
    %v7593 = vrot.slane %v7592, 4
    %v7595 = vshrl.u32 %v7542, 16
    %v7597 = vrot.slane %v7595, 7
    %v7598 = vshll.u32 %v7542, 16
    %v7600 = vor.u32 %v7597, %v7598
    %v7601 = vsel %vm228, %v7593, %v7600
    %v7602 = vrot.slane %v7597, 4
    %v7604 = vshrl.u32 %v7543, 16
    %v7606 = vrot.slane %v7604, 7
    %v7607 = vshll.u32 %v7543, 16
    %v7609 = vor.u32 %v7606, %v7607
    %v7610 = vsel %vm228, %v7602, %v7609
    %v7612 = vshrl.u32 %v7544, 16
    %v7614 = vrot.slane %v7612, 7
    %v7615 = vrot.slane %v7614, 4
    %v7617 = vshrl.u32 %v7545, 16
    %v7619 = vrot.slane %v7617, 7
    %v7620 = vshll.u32 %v7545, 16
    %v7622 = vor.u32 %v7619, %v7620
    %v7623 = vsel %vm228, %v7615, %v7622
    %v7624 = vrot.slane %v7619, 4
    %v7626 = vshrl.u32 %v7546, 16
    %v7628 = vrot.slane %v7626, 7
    %v7629 = vshll.u32 %v7546, 16
    %v7631 = vor.u32 %v7628, %v7629
    %v7632 = vsel %vm228, %v7624, %v7631
    %v7634 = vshrl.u32 %v7547, 16
    %v7636 = vrot.slane %v7634, 7
    %v7637 = vrot.slane %v7636, 4
    %v7639 = vshrl.u32 %v7548, 16
    %v7641 = vrot.slane %v7639, 7
    %v7642 = vshll.u32 %v7548, 16
    %v7644 = vor.u32 %v7641, %v7642
    %v7645 = vsel %vm228, %v7637, %v7644
    %v7646 = vrot.slane %v7641, 4
    %v7648 = vshrl.u32 %v7549, 16
    %v7650 = vrot.slane %v7648, 7
    %v7651 = vshll.u32 %v7549, 16
    %v7653 = vor.u32 %v7650, %v7651
    %v7654 = vsel %vm228, %v7646, %v7653
    %v7656 = vshrl.u32 %v7550, 16
    %v7658 = vrot.slane %v7656, 7
    %v7659 = vrot.slane %v7658, 4
    %v7661 = vshrl.u32 %v7551, 16
    %v7663 = vrot.slane %v7661, 7
    %v7664 = vshll.u32 %v7551, 16
    %v7666 = vor.u32 %v7663, %v7664
    %v7667 = vsel %vm228, %v7659, %v7666
    %v7668 = vrot.slane %v7663, 4
    %v7670 = vshrl.u32 %v7552, 16
    %v7672 = vrot.slane %v7670, 7
    %v7673 = vshll.u32 %v7552, 16
    %v7675 = vor.u32 %v7672, %v7673
    %v7676 = vsel %vm228, %v7668, %v7675
    %v7678 = vshrl.u32 %v7553, 16
    %v7680 = vrot.slane %v7678, 7
    %v7681 = vrot.slane %v7680, 4
    %v7683 = vshrl.u32 %v7554, 16
    %v7685 = vrot.slane %v7683, 7
    %v7686 = vshll.u32 %v7554, 16
    %v7688 = vor.u32 %v7685, %v7686
    %v7689 = vsel %vm228, %v7681, %v7688
    %v7690 = vrot.slane %v7685, 4
    %v7692 = vshrl.u32 %v7555, 16
    %v7694 = vrot.slane %v7692, 7
    %v7695 = vshll.u32 %v7555, 16
    %v7697 = vor.u32 %v7694, %v7695
    %v7698 = vsel %vm228, %v7690, %v7697
    %v7700 = vshrl.u32 %v7556, 16
    %v7702 = vrot.slane %v7700, 7
    %v7703 = vrot.slane %v7702, 4
    %v7705 = vshrl.u32 %v7557, 16
    %v7707 = vrot.slane %v7705, 7
    %v7708 = vshll.u32 %v7557, 16
    %v7710 = vor.u32 %v7707, %v7708
    %v7711 = vsel %vm228, %v7703, %v7710
    %v7712 = vrot.slane %v7707, 4
    %v7714 = vshrl.u32 %v7558, 16
    %v7716 = vrot.slane %v7714, 7
    %v7717 = vshll.u32 %v7558, 16
    %v7719 = vor.u32 %v7716, %v7717
    %v7720 = vsel %vm228, %v7712, %v7719
    %v7722 = vshrl.u32 %v7559, 16
    %v7724 = vrot.slane %v7722, 7
    %v7725 = vrot.slane %v7724, 4
    %v7727 = vshrl.u32 %v7560, 16
    %v7729 = vrot.slane %v7727, 7
    %v7730 = vshll.u32 %v7560, 16
    %v7732 = vor.u32 %v7729, %v7730
    %v7733 = vsel %vm228, %v7725, %v7732
    %v7734 = vrot.slane %v7729, 4
    %v7736 = vshrl.u32 %v7561, 16
    %v7738 = vrot.slane %v7736, 7
    %v7739 = vshll.u32 %v7561, 16
    %v7741 = vor.u32 %v7738, %v7739
    %v7742 = vsel %vm228, %v7734, %v7741
    %v7744 = vshrl.u32 %v7562, 16
    %v7746 = vrot.slane %v7744, 7
    %v7747 = vrot.slane %v7746, 4
    %v7749 = vshrl.u32 %v7563, 16
    %v7751 = vrot.slane %v7749, 7
    %v7752 = vshll.u32 %v7563, 16
    %v7754 = vor.u32 %v7751, %v7752
    %v7755 = vsel %vm228, %v7747, %v7754
    %v7756 = vrot.slane %v7751, 4
    %v7758 = vshrl.u32 %v7564, 16
    %v7760 = vrot.slane %v7758, 7
    %v7761 = vshll.u32 %v7564, 16
    %v7763 = vor.u32 %v7760, %v7761
    %v7764 = vsel %vm228, %v7756, %v7763
    %v7766 = vshrl.u32 %v7565, 16
    %v7768 = vrot.slane %v7766, 7
    %v7769 = vrot.slane %v7768, 4
    %v7771 = vshrl.u32 %v7566, 16
    %v7773 = vrot.slane %v7771, 7
    %v7774 = vshll.u32 %v7566, 16
    %v7776 = vor.u32 %v7773, %v7774
    %v7777 = vsel %vm228, %v7769, %v7776
    %v7778 = vrot.slane %v7773, 4
    %v7780 = vshrl.u32 %v7567, 16
    %v7782 = vrot.slane %v7780, 7
    %v7783 = vshll.u32 %v7567, 16
    %v7785 = vor.u32 %v7782, %v7783
    %v7786 = vsel %vm228, %v7778, %v7785
    %v7788 = vshrl.u32 %v7568, 16
    %v7790 = vrot.slane %v7788, 7
    %v7791 = vrot.slane %v7790, 4
    %v7793 = vshrl.u32 %v7569, 16
    %v7795 = vrot.slane %v7793, 7
    %v7796 = vshll.u32 %v7569, 16
    %v7798 = vor.u32 %v7795, %v7796
    %v7799 = vsel %vm228, %v7791, %v7798
    %v7800 = vrot.slane %v7795, 4
    %v7802 = vshrl.u32 %v7570, 16
    %v7804 = vrot.slane %v7802, 7
    %v7805 = vshll.u32 %v7570, 16
    %v7807 = vor.u32 %v7804, %v7805
    %v7808 = vsel %vm228, %v7800, %v7807
    %v7810 = vshrl.u32 %v7571, 16
    %v7812 = vrot.slane %v7810, 7
    %v7813 = vrot.slane %v7812, 4
    %v7815 = vshrl.u32 %v7572, 16
    %v7817 = vrot.slane %v7815, 7
    %v7818 = vshll.u32 %v7572, 16
    %v7820 = vor.u32 %v7817, %v7818
    %v7821 = vsel %vm228, %v7813, %v7820
    %v7822 = vrot.slane %v7817, 4
    %v7824 = vshrl.u32 %v7573, 16
    %v7826 = vrot.slane %v7824, 7
    %v7827 = vshll.u32 %v7573, 16
    %v7829 = vor.u32 %v7826, %v7827
    %v7830 = vsel %vm228, %v7822, %v7829
    %v7832 = vshrl.u32 %v7574, 16
    %v7834 = vrot.slane %v7832, 7
    %v7835 = vrot.slane %v7834, 4
    %v7837 = vshrl.u32 %v7575, 16
    %v7839 = vrot.slane %v7837, 7
    %v7840 = vshll.u32 %v7575, 16
    %v7842 = vor.u32 %v7839, %v7840
    %v7843 = vsel %vm228, %v7835, %v7842
    %v7844 = vrot.slane %v7839, 4
    %v7846 = vshrl.u32 %v7576, 16
    %v7848 = vrot.slane %v7846, 7
    %v7849 = vshll.u32 %v7576, 16
    %v7851 = vor.u32 %v7848, %v7849
    %v7852 = vsel %vm228, %v7844, %v7851
    %v7854 = vshrl.u32 %v7577, 16
    %v7856 = vrot.slane %v7854, 7
    %v7857 = vrot.slane %v7856, 4
    %v7859 = vshrl.u32 %v7578, 16
    %v7861 = vrot.slane %v7859, 7
    %v7862 = vshll.u32 %v7578, 16
    %v7864 = vor.u32 %v7861, %v7862
    %v7865 = vsel %vm228, %v7857, %v7864
    %v7866 = vrot.slane %v7861, 4
    %v7868 = vshrl.u32 %v7579, 16
    %v7870 = vrot.slane %v7868, 7
    %v7871 = vshll.u32 %v7579, 16
    %v7873 = vor.u32 %v7870, %v7871
    %v7874 = vsel %vm228, %v7866, %v7873
    %v7876 = vshrl.u32 %v7580, 16
    %v7878 = vrot.slane %v7876, 7
    %v7879 = vrot.slane %v7878, 4
    %v7881 = vshrl.u32 %v7581, 16
    %v7883 = vrot.slane %v7881, 7
    %v7884 = vshll.u32 %v7581, 16
    %v7886 = vor.u32 %v7883, %v7884
    %v7887 = vsel %vm228, %v7879, %v7886
    %v7888 = vrot.slane %v7883, 4
    %v7890 = vshrl.u32 %v7582, 16
    %v7892 = vrot.slane %v7890, 7
    %v7893 = vshll.u32 %v7582, 16
    %v7895 = vor.u32 %v7892, %v7893
    %v7896 = vsel %vm228, %v7888, %v7895
    %v7898 = vshrl.u32 %v7583, 16
    %v7900 = vrot.slane %v7898, 7
    %v7901 = vrot.slane %v7900, 4
    %v7903 = vshrl.u32 %v7584, 16
    %v7905 = vrot.slane %v7903, 7
    %v7906 = vshll.u32 %v7584, 16
    %v7908 = vor.u32 %v7905, %v7906
    %v7909 = vsel %vm228, %v7901, %v7908
    %v7910 = vrot.slane %v7905, 4
    %v7912 = vshrl.u32 %v7585, 16
    %v7914 = vrot.slane %v7912, 7
    %v7915 = vshll.u32 %v7585, 16
    %v7917 = vor.u32 %v7914, %v7915
    %v7918 = vsel %vm228, %v7910, %v7917
    %v7920 = vshrl.u32 %v7586, 16
    %v7922 = vrot.slane %v7920, 7
    %v7923 = vrot.slane %v7922, 4
    %v7925 = vshrl.u32 %v7587, 16
    %v7927 = vrot.slane %v7925, 7
    %v7928 = vshll.u32 %v7587, 16
    %v7930 = vor.u32 %v7927, %v7928
    %v7931 = vsel %vm228, %v7923, %v7930
    %v7932 = vrot.slane %v7927, 4
    %v7934 = vshrl.u32 %v7588, 16
    %v7936 = vrot.slane %v7934, 7
    %v7937 = vshll.u32 %v7588, 16
    %v7939 = vor.u32 %v7936, %v7937
    %v7940 = vsel %vm228, %v7932, %v7939
    %v7941 = vld [vmem:[%s145 + $0xc] sm:$0x1]
    %v7942 = vld [vmem:[%s145 + $0x1c] sm:$0x1]
    %v7943 = vld [vmem:[%s145 + $0x2c] sm:$0x1]
    %v7944 = vld [vmem:[%s145 + $0x3c] sm:$0x1]
    %v7945 = vld [vmem:[%s145 + $0x4c] sm:$0x1]
    %v7946 = vld [vmem:[%s145 + $0x5c] sm:$0x1]
    %v7947 = vld [vmem:[%s145 + $0x6c] sm:$0x1]
    %v7948 = vld [vmem:[%s145 + $0x7c] sm:$0x1]
    %v7949 = vld [vmem:[%s145 + $0x8c] sm:$0x1]
    %v7950 = vld [vmem:[%s145 + $0x9c] sm:$0x1]
    %v7951 = vld [vmem:[%s145 + $0xac] sm:$0x1]
    %v7952 = vld [vmem:[%s145 + $0xbc] sm:$0x1]
    %v7953 = vld [vmem:[%s145 + $0xcc] sm:$0x1]
    %v7954 = vld [vmem:[%s145 + $0xdc] sm:$0x1]
    %v7955 = vld [vmem:[%s145 + $0xec] sm:$0x1]
    %v7956 = vld [vmem:[%s145 + $0xfc] sm:$0x1]
    %v7957 = vrot.slane %v7595, 4
    %v7958 = vrot.slane %v7598, 5
    %v7959 = vor.u32 %v7957, %v7958
    %v7960 = vrot.slane %v7959, 4
    %v7961 = vrot.slane %v7607, 5
    %v7962 = vsel %vm599, %v7960, %v7961
    %v7963 = vrot.slane %v7604, 4
    %v7964 = vor.u32 %v7963, %v7961
    %v7965 = vrot.slane %v7964, 4
    %v7967 = vshll.u32 %v7941, 16
    %v7969 = vrot.slane %v7967, 5
    %v7970 = vsel %vm599, %v7965, %v7969
    %v7971 = vrot.slane %v7617, 4
    %v7972 = vrot.slane %v7620, 5
    %v7973 = vor.u32 %v7971, %v7972
    %v7974 = vrot.slane %v7973, 4
    %v7975 = vrot.slane %v7629, 5
    %v7976 = vsel %vm599, %v7974, %v7975
    %v7977 = vrot.slane %v7626, 4
    %v7978 = vor.u32 %v7977, %v7975
    %v7979 = vrot.slane %v7978, 4
    %v7981 = vshll.u32 %v7942, 16
    %v7983 = vrot.slane %v7981, 5
    %v7984 = vsel %vm599, %v7979, %v7983
    %v7985 = vrot.slane %v7639, 4
    %v7986 = vrot.slane %v7642, 5
    %v7987 = vor.u32 %v7985, %v7986
    %v7988 = vrot.slane %v7987, 4
    %v7989 = vrot.slane %v7651, 5
    %v7990 = vsel %vm599, %v7988, %v7989
    %v7991 = vrot.slane %v7648, 4
    %v7992 = vor.u32 %v7991, %v7989
    %v7993 = vrot.slane %v7992, 4
    %v7995 = vshll.u32 %v7943, 16
    %v7997 = vrot.slane %v7995, 5
    %v7998 = vsel %vm599, %v7993, %v7997
    %v7999 = vrot.slane %v7661, 4
    %v8000 = vrot.slane %v7664, 5
    %v8001 = vor.u32 %v7999, %v8000
    %v8002 = vrot.slane %v8001, 4
    %v8003 = vrot.slane %v7673, 5
    %v8004 = vsel %vm599, %v8002, %v8003
    %v8005 = vrot.slane %v7670, 4
    %v8006 = vor.u32 %v8005, %v8003
    %v8007 = vrot.slane %v8006, 4
    %v8009 = vshll.u32 %v7944, 16
    %v8011 = vrot.slane %v8009, 5
    %v8012 = vsel %vm599, %v8007, %v8011
    %v8013 = vrot.slane %v7683, 4
    %v8014 = vrot.slane %v7686, 5
    %v8015 = vor.u32 %v8013, %v8014
    %v8016 = vrot.slane %v8015, 4
    %v8017 = vrot.slane %v7695, 5
    %v8018 = vsel %vm599, %v8016, %v8017
    %v8019 = vrot.slane %v7692, 4
    %v8020 = vor.u32 %v8019, %v8017
    %v8021 = vrot.slane %v8020, 4
    %v8023 = vshll.u32 %v7945, 16
    %v8025 = vrot.slane %v8023, 5
    %v8026 = vsel %vm599, %v8021, %v8025
    %v8027 = vrot.slane %v7705, 4
    %v8028 = vrot.slane %v7708, 5
    %v8029 = vor.u32 %v8027, %v8028
    %v8030 = vrot.slane %v8029, 4
    %v8031 = vrot.slane %v7717, 5
    %v8032 = vsel %vm599, %v8030, %v8031
    %v8033 = vrot.slane %v7714, 4
    %v8034 = vor.u32 %v8033, %v8031
    %v8035 = vrot.slane %v8034, 4
    %v8037 = vshll.u32 %v7946, 16
    %v8039 = vrot.slane %v8037, 5
    %v8040 = vsel %vm599, %v8035, %v8039
    %v8041 = vrot.slane %v7727, 4
    %v8042 = vrot.slane %v7730, 5
    %v8043 = vor.u32 %v8041, %v8042
    %v8044 = vrot.slane %v8043, 4
    %v8045 = vrot.slane %v7739, 5
    %v8046 = vsel %vm599, %v8044, %v8045
    %v8047 = vrot.slane %v7736, 4
    %v8048 = vor.u32 %v8047, %v8045
    %v8049 = vrot.slane %v8048, 4
    %v8051 = vshll.u32 %v7947, 16
    %v8053 = vrot.slane %v8051, 5
    %v8054 = vsel %vm599, %v8049, %v8053
    %v8055 = vrot.slane %v7749, 4
    %v8056 = vrot.slane %v7752, 5
    %v8057 = vor.u32 %v8055, %v8056
    %v8058 = vrot.slane %v8057, 4
    %v8059 = vrot.slane %v7761, 5
    %v8060 = vsel %vm599, %v8058, %v8059
    %v8061 = vrot.slane %v7758, 4
    %v8062 = vor.u32 %v8061, %v8059
    %v8063 = vrot.slane %v8062, 4
    %v8065 = vshll.u32 %v7948, 16
    %v8067 = vrot.slane %v8065, 5
    %v8068 = vsel %vm599, %v8063, %v8067
    %v8069 = vrot.slane %v7771, 4
    %v8070 = vrot.slane %v7774, 5
    %v8071 = vor.u32 %v8069, %v8070
    %v8072 = vrot.slane %v8071, 4
    %v8073 = vrot.slane %v7783, 5
    %v8074 = vsel %vm599, %v8072, %v8073
    %v8075 = vrot.slane %v7780, 4
    %v8076 = vor.u32 %v8075, %v8073
    %v8077 = vrot.slane %v8076, 4
    %v8079 = vshll.u32 %v7949, 16
    %v8081 = vrot.slane %v8079, 5
    %v8082 = vsel %vm599, %v8077, %v8081
    %v8083 = vrot.slane %v7793, 4
    %v8084 = vrot.slane %v7796, 5
    %v8085 = vor.u32 %v8083, %v8084
    %v8086 = vrot.slane %v8085, 4
    %v8087 = vrot.slane %v7805, 5
    %v8088 = vsel %vm599, %v8086, %v8087
    %v8089 = vrot.slane %v7802, 4
    %v8090 = vor.u32 %v8089, %v8087
    %v8091 = vrot.slane %v8090, 4
    %v8093 = vshll.u32 %v7950, 16
    %v8095 = vrot.slane %v8093, 5
    %v8096 = vsel %vm599, %v8091, %v8095
    %v8097 = vrot.slane %v7815, 4
    %v8098 = vrot.slane %v7818, 5
    %v8099 = vor.u32 %v8097, %v8098
    %v8100 = vrot.slane %v8099, 4
    %v8101 = vrot.slane %v7827, 5
    %v8102 = vsel %vm599, %v8100, %v8101
    %v8103 = vrot.slane %v7824, 4
    %v8104 = vor.u32 %v8103, %v8101
    %v8105 = vrot.slane %v8104, 4
    %v8107 = vshll.u32 %v7951, 16
    %v8109 = vrot.slane %v8107, 5
    %v8110 = vsel %vm599, %v8105, %v8109
    %v8111 = vrot.slane %v7837, 4
    %v8112 = vrot.slane %v7840, 5
    %v8113 = vor.u32 %v8111, %v8112
    %v8114 = vrot.slane %v8113, 4
    %v8115 = vrot.slane %v7849, 5
    %v8116 = vsel %vm599, %v8114, %v8115
    %v8117 = vrot.slane %v7846, 4
    %v8118 = vor.u32 %v8117, %v8115
    %v8119 = vrot.slane %v8118, 4
    %v8121 = vshll.u32 %v7952, 16
    %v8123 = vrot.slane %v8121, 5
    %v8124 = vsel %vm599, %v8119, %v8123
    %v8125 = vrot.slane %v7859, 4
    %v8126 = vrot.slane %v7862, 5
    %v8127 = vor.u32 %v8125, %v8126
    %v8128 = vrot.slane %v8127, 4
    %v8129 = vrot.slane %v7871, 5
    %v8130 = vsel %vm599, %v8128, %v8129
    %v8131 = vrot.slane %v7868, 4
    %v8132 = vor.u32 %v8131, %v8129
    %v8133 = vrot.slane %v8132, 4
    %v8135 = vshll.u32 %v7953, 16
    %v8137 = vrot.slane %v8135, 5
    %v8138 = vsel %vm599, %v8133, %v8137
    %v8139 = vrot.slane %v7881, 4
    %v8140 = vrot.slane %v7884, 5
    %v8141 = vor.u32 %v8139, %v8140
    %v8142 = vrot.slane %v8141, 4
    %v8143 = vrot.slane %v7893, 5
    %v8144 = vsel %vm599, %v8142, %v8143
    %v8145 = vrot.slane %v7890, 4
    %v8146 = vor.u32 %v8145, %v8143
    %v8147 = vrot.slane %v8146, 4
    %v8149 = vshll.u32 %v7954, 16
    %v8151 = vrot.slane %v8149, 5
    %v8152 = vsel %vm599, %v8147, %v8151
    %v8153 = vrot.slane %v7903, 4
    %v8154 = vrot.slane %v7906, 5
    %v8155 = vor.u32 %v8153, %v8154
    %v8156 = vrot.slane %v8155, 4
    %v8157 = vrot.slane %v7915, 5
    %v8158 = vsel %vm599, %v8156, %v8157
    %v8159 = vrot.slane %v7912, 4
    %v8160 = vor.u32 %v8159, %v8157
    %v8161 = vrot.slane %v8160, 4
    %v8163 = vshll.u32 %v7955, 16
    %v8165 = vrot.slane %v8163, 5
    %v8166 = vsel %vm599, %v8161, %v8165
    %v8167 = vrot.slane %v7925, 4
    %v8168 = vrot.slane %v7928, 5
    %v8169 = vor.u32 %v8167, %v8168
    %v8170 = vrot.slane %v8169, 4
    %v8171 = vrot.slane %v7937, 5
    %v8172 = vsel %vm599, %v8170, %v8171
    %v8173 = vrot.slane %v7934, 4
    %v8174 = vor.u32 %v8173, %v8171
    %v8175 = vrot.slane %v8174, 4
    %v8177 = vshll.u32 %v7956, 16
    %v8179 = vrot.slane %v8177, 5
    %v8180 = vsel %vm599, %v8175, %v8179
    %v8181 = vld [vmem:[%s1464] sm:$0x8]
    %v8182 = vld [vmem:[%s1464 + $0x4] sm:$0xf]
    %v8183 = vld [vmem:[%s1464 + $0x8] sm:$0xf]
    %v8184 = vld [vmem:[%s1464 + $0x10] sm:$0x8]
    %v8185 = vld [vmem:[%s1464 + $0x14] sm:$0xf]
    %v8186 = vld [vmem:[%s1464 + $0x18] sm:$0xf]
    %v8187 = vld [vmem:[%s1464 + $0x20] sm:$0x8]
    %v8188 = vld [vmem:[%s1464 + $0x24] sm:$0xf]
    %v8189 = vld [vmem:[%s1464 + $0x28] sm:$0xf]
    %v8190 = vld [vmem:[%s1464 + $0x30] sm:$0x8]
    %v8191 = vld [vmem:[%s1464 + $0x34] sm:$0xf]
    %v8192 = vld [vmem:[%s1464 + $0x38] sm:$0xf]
    %v8193 = vld [vmem:[%s1464 + $0x40] sm:$0x8]
    %v8194 = vld [vmem:[%s1464 + $0x44] sm:$0xf]
    %v8195 = vld [vmem:[%s1464 + $0x48] sm:$0xf]
    %v8196 = vld [vmem:[%s1464 + $0x50] sm:$0x8]
    %v8197 = vld [vmem:[%s1464 + $0x54] sm:$0xf]
    %v8198 = vld [vmem:[%s1464 + $0x58] sm:$0xf]
    %v8199 = vld [vmem:[%s1464 + $0x60] sm:$0x8]
    %v8200 = vld [vmem:[%s1464 + $0x64] sm:$0xf]
    %v8201 = vld [vmem:[%s1464 + $0x68] sm:$0xf]
    %v8202 = vld [vmem:[%s1464 + $0x70] sm:$0x8]
    %v8203 = vld [vmem:[%s1464 + $0x74] sm:$0xf]
    %v8204 = vld [vmem:[%s1464 + $0x78] sm:$0xf]
    %v8205 = vld [vmem:[%s1464 + $0x80] sm:$0x8]
    %v8206 = vld [vmem:[%s1464 + $0x84] sm:$0xf]
    %v8207 = vld [vmem:[%s1464 + $0x88] sm:$0xf]
    %v8208 = vld [vmem:[%s1464 + $0x90] sm:$0x8]
    %v8209 = vld [vmem:[%s1464 + $0x94] sm:$0xf]
    %v8210 = vld [vmem:[%s1464 + $0x98] sm:$0xf]
    %v8211 = vld [vmem:[%s1464 + $0xa0] sm:$0x8]
    %v8212 = vld [vmem:[%s1464 + $0xa4] sm:$0xf]
    %v8213 = vld [vmem:[%s1464 + $0xa8] sm:$0xf]
    %v8214 = vld [vmem:[%s1464 + $0xb0] sm:$0x8]
    %v8215 = vld [vmem:[%s1464 + $0xb4] sm:$0xf]
    %v8216 = vld [vmem:[%s1464 + $0xb8] sm:$0xf]
    %v8217 = vld [vmem:[%s1464 + $0xc0] sm:$0x8]
    %v8218 = vld [vmem:[%s1464 + $0xc4] sm:$0xf]
    %v8219 = vld [vmem:[%s1464 + $0xc8] sm:$0xf]
    %v8220 = vld [vmem:[%s1464 + $0xd0] sm:$0x8]
    %v8221 = vld [vmem:[%s1464 + $0xd4] sm:$0xf]
    %v8222 = vld [vmem:[%s1464 + $0xd8] sm:$0xf]
    %v8223 = vld [vmem:[%s1464 + $0xe0] sm:$0x8]
    %v8224 = vld [vmem:[%s1464 + $0xe4] sm:$0xf]
    %v8225 = vld [vmem:[%s1464 + $0xe8] sm:$0xf]
    %v8226 = vld [vmem:[%s1464 + $0xf0] sm:$0x8]
    %v8227 = vld [vmem:[%s1464 + $0xf4] sm:$0xf]
    %v8228 = vld [vmem:[%s1464 + $0xf8] sm:$0xf]
    %v8230 = vshrl.u32 %v8181, 16
    %v8232 = vrot.slane %v8230, 7
    %v8233 = vrot.slane %v8232, 4
    %v8235 = vshrl.u32 %v8182, 16
    %v8237 = vrot.slane %v8235, 7
    %v8238 = vshll.u32 %v8182, 16
    %v8240 = vor.u32 %v8237, %v8238
    %v8241 = vsel %vm228, %v8233, %v8240
    %v8242 = vrot.slane %v8237, 4
    %v8244 = vshrl.u32 %v8183, 16
    %v8246 = vrot.slane %v8244, 7
    %v8247 = vshll.u32 %v8183, 16
    %v8249 = vor.u32 %v8246, %v8247
    %v8250 = vsel %vm228, %v8242, %v8249
    %v8252 = vshrl.u32 %v8184, 16
    %v8254 = vrot.slane %v8252, 7
    %v8255 = vrot.slane %v8254, 4
    %v8257 = vshrl.u32 %v8185, 16
    %v8259 = vrot.slane %v8257, 7
    %v8260 = vshll.u32 %v8185, 16
    %v8262 = vor.u32 %v8259, %v8260
    %v8263 = vsel %vm228, %v8255, %v8262
    %v8264 = vrot.slane %v8259, 4
    %v8266 = vshrl.u32 %v8186, 16
    %v8268 = vrot.slane %v8266, 7
    %v8269 = vshll.u32 %v8186, 16
    %v8271 = vor.u32 %v8268, %v8269
    %v8272 = vsel %vm228, %v8264, %v8271
    %v8274 = vshrl.u32 %v8187, 16
    %v8276 = vrot.slane %v8274, 7
    %v8277 = vrot.slane %v8276, 4
    %v8279 = vshrl.u32 %v8188, 16
    %v8281 = vrot.slane %v8279, 7
    %v8282 = vshll.u32 %v8188, 16
    %v8284 = vor.u32 %v8281, %v8282
    %v8285 = vsel %vm228, %v8277, %v8284
    %v8286 = vrot.slane %v8281, 4
    %v8288 = vshrl.u32 %v8189, 16
    %v8290 = vrot.slane %v8288, 7
    %v8291 = vshll.u32 %v8189, 16
    %v8293 = vor.u32 %v8290, %v8291
    %v8294 = vsel %vm228, %v8286, %v8293
    %v8296 = vshrl.u32 %v8190, 16
    %v8298 = vrot.slane %v8296, 7
    %v8299 = vrot.slane %v8298, 4
    %v8301 = vshrl.u32 %v8191, 16
    %v8303 = vrot.slane %v8301, 7
    %v8304 = vshll.u32 %v8191, 16
    %v8306 = vor.u32 %v8303, %v8304
    %v8307 = vsel %vm228, %v8299, %v8306
    %v8308 = vrot.slane %v8303, 4
    %v8310 = vshrl.u32 %v8192, 16
    %v8312 = vrot.slane %v8310, 7
    %v8313 = vshll.u32 %v8192, 16
    %v8315 = vor.u32 %v8312, %v8313
    %v8316 = vsel %vm228, %v8308, %v8315
    %v8318 = vshrl.u32 %v8193, 16
    %v8320 = vrot.slane %v8318, 7
    %v8321 = vrot.slane %v8320, 4
    %v8323 = vshrl.u32 %v8194, 16
    %v8325 = vrot.slane %v8323, 7
    %v8326 = vshll.u32 %v8194, 16
    %v8328 = vor.u32 %v8325, %v8326
    %v8329 = vsel %vm228, %v8321, %v8328
    %v8330 = vrot.slane %v8325, 4
    %v8332 = vshrl.u32 %v8195, 16
    %v8334 = vrot.slane %v8332, 7
    %v8335 = vshll.u32 %v8195, 16
    %v8337 = vor.u32 %v8334, %v8335
    %v8338 = vsel %vm228, %v8330, %v8337
    %v8340 = vshrl.u32 %v8196, 16
    %v8342 = vrot.slane %v8340, 7
    %v8343 = vrot.slane %v8342, 4
    %v8345 = vshrl.u32 %v8197, 16
    %v8347 = vrot.slane %v8345, 7
    %v8348 = vshll.u32 %v8197, 16
    %v8350 = vor.u32 %v8347, %v8348
    %v8351 = vsel %vm228, %v8343, %v8350
    %v8352 = vrot.slane %v8347, 4
    %v8354 = vshrl.u32 %v8198, 16
    %v8356 = vrot.slane %v8354, 7
    %v8357 = vshll.u32 %v8198, 16
    %v8359 = vor.u32 %v8356, %v8357
    %v8360 = vsel %vm228, %v8352, %v8359
    %v8362 = vshrl.u32 %v8199, 16
    %v8364 = vrot.slane %v8362, 7
    %v8365 = vrot.slane %v8364, 4
    %v8367 = vshrl.u32 %v8200, 16
    %v8369 = vrot.slane %v8367, 7
    %v8370 = vshll.u32 %v8200, 16
    %v8372 = vor.u32 %v8369, %v8370
    %v8373 = vsel %vm228, %v8365, %v8372
    %v8374 = vrot.slane %v8369, 4
    %v8376 = vshrl.u32 %v8201, 16
    %v8378 = vrot.slane %v8376, 7
    %v8379 = vshll.u32 %v8201, 16
    %v8381 = vor.u32 %v8378, %v8379
    %v8382 = vsel %vm228, %v8374, %v8381
    %v8384 = vshrl.u32 %v8202, 16
    %v8386 = vrot.slane %v8384, 7
    %v8387 = vrot.slane %v8386, 4
    %v8389 = vshrl.u32 %v8203, 16
    %v8391 = vrot.slane %v8389, 7
    %v8392 = vshll.u32 %v8203, 16
    %v8394 = vor.u32 %v8391, %v8392
    %v8395 = vsel %vm228, %v8387, %v8394
    %v8396 = vrot.slane %v8391, 4
    %v8398 = vshrl.u32 %v8204, 16
    %v8400 = vrot.slane %v8398, 7
    %v8401 = vshll.u32 %v8204, 16
    %v8403 = vor.u32 %v8400, %v8401
    %v8404 = vsel %vm228, %v8396, %v8403
    %v8406 = vshrl.u32 %v8205, 16
    %v8408 = vrot.slane %v8406, 7
    %v8409 = vrot.slane %v8408, 4
    %v8411 = vshrl.u32 %v8206, 16
    %v8413 = vrot.slane %v8411, 7
    %v8414 = vshll.u32 %v8206, 16
    %v8416 = vor.u32 %v8413, %v8414
    %v8417 = vsel %vm228, %v8409, %v8416
    %v8418 = vrot.slane %v8413, 4
    %v8420 = vshrl.u32 %v8207, 16
    %v8422 = vrot.slane %v8420, 7
    %v8423 = vshll.u32 %v8207, 16
    %v8425 = vor.u32 %v8422, %v8423
    %v8426 = vsel %vm228, %v8418, %v8425
    %v8428 = vshrl.u32 %v8208, 16
    %v8430 = vrot.slane %v8428, 7
    %v8431 = vrot.slane %v8430, 4
    %v8433 = vshrl.u32 %v8209, 16
    %v8435 = vrot.slane %v8433, 7
    %v8436 = vshll.u32 %v8209, 16
    %v8438 = vor.u32 %v8435, %v8436
    %v8439 = vsel %vm228, %v8431, %v8438
    %v8440 = vrot.slane %v8435, 4
    %v8442 = vshrl.u32 %v8210, 16
    %v8444 = vrot.slane %v8442, 7
    %v8445 = vshll.u32 %v8210, 16
    %v8447 = vor.u32 %v8444, %v8445
    %v8448 = vsel %vm228, %v8440, %v8447
    %v8450 = vshrl.u32 %v8211, 16
    %v8452 = vrot.slane %v8450, 7
    %v8453 = vrot.slane %v8452, 4
    %v8455 = vshrl.u32 %v8212, 16
    %v8457 = vrot.slane %v8455, 7
    %v8458 = vshll.u32 %v8212, 16
    %v8460 = vor.u32 %v8457, %v8458
    %v8461 = vsel %vm228, %v8453, %v8460
    %v8462 = vrot.slane %v8457, 4
    %v8464 = vshrl.u32 %v8213, 16
    %v8466 = vrot.slane %v8464, 7
    %v8467 = vshll.u32 %v8213, 16
    %v8469 = vor.u32 %v8466, %v8467
    %v8470 = vsel %vm228, %v8462, %v8469
    %v8472 = vshrl.u32 %v8214, 16
    %v8474 = vrot.slane %v8472, 7
    %v8475 = vrot.slane %v8474, 4
    %v8477 = vshrl.u32 %v8215, 16
    %v8479 = vrot.slane %v8477, 7
    %v8480 = vshll.u32 %v8215, 16
    %v8482 = vor.u32 %v8479, %v8480
    %v8483 = vsel %vm228, %v8475, %v8482
    %v8484 = vrot.slane %v8479, 4
    %v8486 = vshrl.u32 %v8216, 16
    %v8488 = vrot.slane %v8486, 7
    %v8489 = vshll.u32 %v8216, 16
    %v8491 = vor.u32 %v8488, %v8489
    %v8492 = vsel %vm228, %v8484, %v8491
    %v8494 = vshrl.u32 %v8217, 16
    %v8496 = vrot.slane %v8494, 7
    %v8497 = vrot.slane %v8496, 4
    %v8499 = vshrl.u32 %v8218, 16
    %v8501 = vrot.slane %v8499, 7
    %v8502 = vshll.u32 %v8218, 16
    %v8504 = vor.u32 %v8501, %v8502
    %v8505 = vsel %vm228, %v8497, %v8504
    %v8506 = vrot.slane %v8501, 4
    %v8508 = vshrl.u32 %v8219, 16
    %v8510 = vrot.slane %v8508, 7
    %v8511 = vshll.u32 %v8219, 16
    %v8513 = vor.u32 %v8510, %v8511
    %v8514 = vsel %vm228, %v8506, %v8513
    %v8516 = vshrl.u32 %v8220, 16
    %v8518 = vrot.slane %v8516, 7
    %v8519 = vrot.slane %v8518, 4
    %v8521 = vshrl.u32 %v8221, 16
    %v8523 = vrot.slane %v8521, 7
    %v8524 = vshll.u32 %v8221, 16
    %v8526 = vor.u32 %v8523, %v8524
    %v8527 = vsel %vm228, %v8519, %v8526
    %v8528 = vrot.slane %v8523, 4
    %v8530 = vshrl.u32 %v8222, 16
    %v8532 = vrot.slane %v8530, 7
    %v8533 = vshll.u32 %v8222, 16
    %v8535 = vor.u32 %v8532, %v8533
    %v8536 = vsel %vm228, %v8528, %v8535
    %v8538 = vshrl.u32 %v8223, 16
    %v8540 = vrot.slane %v8538, 7
    %v8541 = vrot.slane %v8540, 4
    %v8543 = vshrl.u32 %v8224, 16
    %v8545 = vrot.slane %v8543, 7
    %v8546 = vshll.u32 %v8224, 16
    %v8548 = vor.u32 %v8545, %v8546
    %v8549 = vsel %vm228, %v8541, %v8548
    %v8550 = vrot.slane %v8545, 4
    %v8552 = vshrl.u32 %v8225, 16
    %v8554 = vrot.slane %v8552, 7
    %v8555 = vshll.u32 %v8225, 16
    %v8557 = vor.u32 %v8554, %v8555
    %v8558 = vsel %vm228, %v8550, %v8557
    %v8560 = vshrl.u32 %v8226, 16
    %v8562 = vrot.slane %v8560, 7
    %v8563 = vrot.slane %v8562, 4
    %v8565 = vshrl.u32 %v8227, 16
    %v8567 = vrot.slane %v8565, 7
    %v8568 = vshll.u32 %v8227, 16
    %v8570 = vor.u32 %v8567, %v8568
    %v8571 = vsel %vm228, %v8563, %v8570
    %v8572 = vrot.slane %v8567, 4
    %v8574 = vshrl.u32 %v8228, 16
    %v8576 = vrot.slane %v8574, 7
    %v8577 = vshll.u32 %v8228, 16
    %v8579 = vor.u32 %v8576, %v8577
    %v8580 = vsel %vm228, %v8572, %v8579
    %v8581 = vld [vmem:[%s1464 + $0xc] sm:$0x1]
    %v8582 = vld [vmem:[%s1464 + $0x1c] sm:$0x1]
    %v8583 = vld [vmem:[%s1464 + $0x2c] sm:$0x1]
    %v8584 = vld [vmem:[%s1464 + $0x3c] sm:$0x1]
    %v8585 = vld [vmem:[%s1464 + $0x4c] sm:$0x1]
    %v8586 = vld [vmem:[%s1464 + $0x5c] sm:$0x1]
    %v8587 = vld [vmem:[%s1464 + $0x6c] sm:$0x1]
    %v8588 = vld [vmem:[%s1464 + $0x7c] sm:$0x1]
    %v8589 = vld [vmem:[%s1464 + $0x8c] sm:$0x1]
    %v8590 = vld [vmem:[%s1464 + $0x9c] sm:$0x1]
    %v8591 = vld [vmem:[%s1464 + $0xac] sm:$0x1]
    %v8592 = vld [vmem:[%s1464 + $0xbc] sm:$0x1]
    %v8593 = vld [vmem:[%s1464 + $0xcc] sm:$0x1]
    %v8594 = vld [vmem:[%s1464 + $0xdc] sm:$0x1]
    %v8595 = vld [vmem:[%s1464 + $0xec] sm:$0x1]
    %v8596 = vld [vmem:[%s1464 + $0xfc] sm:$0x1]
    %v8597 = vrot.slane %v8235, 4
    %v8598 = vrot.slane %v8238, 5
    %v8599 = vor.u32 %v8597, %v8598
    %v8600 = vrot.slane %v8599, 4
    %v8601 = vrot.slane %v8247, 5
    %v8602 = vsel %vm599, %v8600, %v8601
    %v8603 = vrot.slane %v8244, 4
    %v8604 = vor.u32 %v8603, %v8601
    %v8605 = vrot.slane %v8604, 4
    %v8607 = vshll.u32 %v8581, 16
    %v8609 = vrot.slane %v8607, 5
    %v8610 = vsel %vm599, %v8605, %v8609
    %v8611 = vrot.slane %v8257, 4
    %v8612 = vrot.slane %v8260, 5
    %v8613 = vor.u32 %v8611, %v8612
    %v8614 = vrot.slane %v8613, 4
    %v8615 = vrot.slane %v8269, 5
    %v8616 = vsel %vm599, %v8614, %v8615
    %v8617 = vrot.slane %v8266, 4
    %v8618 = vor.u32 %v8617, %v8615
    %v8619 = vrot.slane %v8618, 4
    %v8621 = vshll.u32 %v8582, 16
    %v8623 = vrot.slane %v8621, 5
    %v8624 = vsel %vm599, %v8619, %v8623
    %v8625 = vrot.slane %v8279, 4
    %v8626 = vrot.slane %v8282, 5
    %v8627 = vor.u32 %v8625, %v8626
    %v8628 = vrot.slane %v8627, 4
    %v8629 = vrot.slane %v8291, 5
    %v8630 = vsel %vm599, %v8628, %v8629
    %v8631 = vrot.slane %v8288, 4
    %v8632 = vor.u32 %v8631, %v8629
    %v8633 = vrot.slane %v8632, 4
    %v8635 = vshll.u32 %v8583, 16
    %v8637 = vrot.slane %v8635, 5
    %v8638 = vsel %vm599, %v8633, %v8637
    %v8639 = vrot.slane %v8301, 4
    %v8640 = vrot.slane %v8304, 5
    %v8641 = vor.u32 %v8639, %v8640
    %v8642 = vrot.slane %v8641, 4
    %v8643 = vrot.slane %v8313, 5
    %v8644 = vsel %vm599, %v8642, %v8643
    %v8645 = vrot.slane %v8310, 4
    %v8646 = vor.u32 %v8645, %v8643
    %v8647 = vrot.slane %v8646, 4
    %v8649 = vshll.u32 %v8584, 16
    %v8651 = vrot.slane %v8649, 5
    %v8652 = vsel %vm599, %v8647, %v8651
    %v8653 = vrot.slane %v8323, 4
    %v8654 = vrot.slane %v8326, 5
    %v8655 = vor.u32 %v8653, %v8654
    %v8656 = vrot.slane %v8655, 4
    %v8657 = vrot.slane %v8335, 5
    %v8658 = vsel %vm599, %v8656, %v8657
    %v8659 = vrot.slane %v8332, 4
    %v8660 = vor.u32 %v8659, %v8657
    %v8661 = vrot.slane %v8660, 4
    %v8663 = vshll.u32 %v8585, 16
    %v8665 = vrot.slane %v8663, 5
    %v8666 = vsel %vm599, %v8661, %v8665
    %v8667 = vrot.slane %v8345, 4
    %v8668 = vrot.slane %v8348, 5
    %v8669 = vor.u32 %v8667, %v8668
    %v8670 = vrot.slane %v8669, 4
    %v8671 = vrot.slane %v8357, 5
    %v8672 = vsel %vm599, %v8670, %v8671
    %v8673 = vrot.slane %v8354, 4
    %v8674 = vor.u32 %v8673, %v8671
    %v8675 = vrot.slane %v8674, 4
    %v8677 = vshll.u32 %v8586, 16
    %v8679 = vrot.slane %v8677, 5
    %v8680 = vsel %vm599, %v8675, %v8679
    %v8681 = vrot.slane %v8367, 4
    %v8682 = vrot.slane %v8370, 5
    %v8683 = vor.u32 %v8681, %v8682
    %v8684 = vrot.slane %v8683, 4
    %v8685 = vrot.slane %v8379, 5
    %v8686 = vsel %vm599, %v8684, %v8685
    %v8687 = vrot.slane %v8376, 4
    %v8688 = vor.u32 %v8687, %v8685
    %v8689 = vrot.slane %v8688, 4
    %v8691 = vshll.u32 %v8587, 16
    %v8693 = vrot.slane %v8691, 5
    %v8694 = vsel %vm599, %v8689, %v8693
    %v8695 = vrot.slane %v8389, 4
    %v8696 = vrot.slane %v8392, 5
    %v8697 = vor.u32 %v8695, %v8696
    %v8698 = vrot.slane %v8697, 4
    %v8699 = vrot.slane %v8401, 5
    %v8700 = vsel %vm599, %v8698, %v8699
    %v8701 = vrot.slane %v8398, 4
    %v8702 = vor.u32 %v8701, %v8699
    %v8703 = vrot.slane %v8702, 4
    %v8705 = vshll.u32 %v8588, 16
    %v8707 = vrot.slane %v8705, 5
    %v8708 = vsel %vm599, %v8703, %v8707
    %v8709 = vrot.slane %v8411, 4
    %v8710 = vrot.slane %v8414, 5
    %v8711 = vor.u32 %v8709, %v8710
    %v8712 = vrot.slane %v8711, 4
    %v8713 = vrot.slane %v8423, 5
    %v8714 = vsel %vm599, %v8712, %v8713
    %v8715 = vrot.slane %v8420, 4
    %v8716 = vor.u32 %v8715, %v8713
    %v8717 = vrot.slane %v8716, 4
    %v8719 = vshll.u32 %v8589, 16
    %v8721 = vrot.slane %v8719, 5
    %v8722 = vsel %vm599, %v8717, %v8721
    %v8723 = vrot.slane %v8433, 4
    %v8724 = vrot.slane %v8436, 5
    %v8725 = vor.u32 %v8723, %v8724
    %v8726 = vrot.slane %v8725, 4
    %v8727 = vrot.slane %v8445, 5
    %v8728 = vsel %vm599, %v8726, %v8727
    %v8729 = vrot.slane %v8442, 4
    %v8730 = vor.u32 %v8729, %v8727
    %v8731 = vrot.slane %v8730, 4
    %v8733 = vshll.u32 %v8590, 16
    %v8735 = vrot.slane %v8733, 5
    %v8736 = vsel %vm599, %v8731, %v8735
    %v8737 = vrot.slane %v8455, 4
    %v8738 = vrot.slane %v8458, 5
    %v8739 = vor.u32 %v8737, %v8738
    %v8740 = vrot.slane %v8739, 4
    %v8741 = vrot.slane %v8467, 5
    %v8742 = vsel %vm599, %v8740, %v8741
    %v8743 = vrot.slane %v8464, 4
    %v8744 = vor.u32 %v8743, %v8741
    %v8745 = vrot.slane %v8744, 4
    %v8747 = vshll.u32 %v8591, 16
    %v8749 = vrot.slane %v8747, 5
    %v8750 = vsel %vm599, %v8745, %v8749
    %v8751 = vrot.slane %v8477, 4
    %v8752 = vrot.slane %v8480, 5
    %v8753 = vor.u32 %v8751, %v8752
    %v8754 = vrot.slane %v8753, 4
    %v8755 = vrot.slane %v8489, 5
    %v8756 = vsel %vm599, %v8754, %v8755
    %v8757 = vrot.slane %v8486, 4
    %v8758 = vor.u32 %v8757, %v8755
    %v8759 = vrot.slane %v8758, 4
    %v8761 = vshll.u32 %v8592, 16
    %v8763 = vrot.slane %v8761, 5
    %v8764 = vsel %vm599, %v8759, %v8763
    %v8765 = vrot.slane %v8499, 4
    %v8766 = vrot.slane %v8502, 5
    %v8767 = vor.u32 %v8765, %v8766
    %v8768 = vrot.slane %v8767, 4
    %v8769 = vrot.slane %v8511, 5
    %v8770 = vsel %vm599, %v8768, %v8769
    %v8771 = vrot.slane %v8508, 4
    %v8772 = vor.u32 %v8771, %v8769
    %v8773 = vrot.slane %v8772, 4
    %v8775 = vshll.u32 %v8593, 16
    %v8777 = vrot.slane %v8775, 5
    %v8778 = vsel %vm599, %v8773, %v8777
    %v8779 = vrot.slane %v8521, 4
    %v8780 = vrot.slane %v8524, 5
    %v8781 = vor.u32 %v8779, %v8780
    %v8782 = vrot.slane %v8781, 4
    %v8783 = vrot.slane %v8533, 5
    %v8784 = vsel %vm599, %v8782, %v8783
    %v8785 = vrot.slane %v8530, 4
    %v8786 = vor.u32 %v8785, %v8783
    %v8787 = vrot.slane %v8786, 4
    %v8789 = vshll.u32 %v8594, 16
    %v8791 = vrot.slane %v8789, 5
    %v8792 = vsel %vm599, %v8787, %v8791
    %v8793 = vrot.slane %v8543, 4
    %v8794 = vrot.slane %v8546, 5
    %v8795 = vor.u32 %v8793, %v8794
    %v8796 = vrot.slane %v8795, 4
    %v8797 = vrot.slane %v8555, 5
    %v8798 = vsel %vm599, %v8796, %v8797
    %v8799 = vrot.slane %v8552, 4
    %v8800 = vor.u32 %v8799, %v8797
    %v8801 = vrot.slane %v8800, 4
    %v8803 = vshll.u32 %v8595, 16
    %v8805 = vrot.slane %v8803, 5
    %v8806 = vsel %vm599, %v8801, %v8805
    %v8807 = vrot.slane %v8565, 4
    %v8808 = vrot.slane %v8568, 5
    %v8809 = vor.u32 %v8807, %v8808
    %v8810 = vrot.slane %v8809, 4
    %v8811 = vrot.slane %v8577, 5
    %v8812 = vsel %vm599, %v8810, %v8811
    %v8813 = vrot.slane %v8574, 4
    %v8814 = vor.u32 %v8813, %v8811
    %v8815 = vrot.slane %v8814, 4
    %v8817 = vshll.u32 %v8596, 16
    %v8819 = vrot.slane %v8817, 5
    %v8820 = vsel %vm599, %v8815, %v8819
    %v8821 = vunpack.c.l.b16 %v6961
    %v8822 = vunpack.c.l.b16 %v6970
    %v8823 = vunpack.c.l.b16 %v6983
    %v8824 = vunpack.c.l.b16 %v6992
    %v8825 = vunpack.c.l.b16 %v7005
    %v8826 = vunpack.c.l.b16 %v7014
    %v8827 = vunpack.c.l.b16 %v7027
    %v8828 = vunpack.c.l.b16 %v7036
    %v8829 = vunpack.c.l.b16 %v7049
    %v8830 = vunpack.c.l.b16 %v7058
    %v8831 = vunpack.c.l.b16 %v7071
    %v8832 = vunpack.c.l.b16 %v7080
    %v8833 = vunpack.c.l.b16 %v7093
    %v8834 = vunpack.c.l.b16 %v7102
    %v8835 = vunpack.c.l.b16 %v7115
    %v8836 = vunpack.c.l.b16 %v7124
    %v8837 = vunpack.c.l.b16 %v7137
    %v8838 = vunpack.c.l.b16 %v7146
    %v8839 = vunpack.c.l.b16 %v7159
    %v8840 = vunpack.c.l.b16 %v7168
    %v8841 = vunpack.c.l.b16 %v7181
    %v8842 = vunpack.c.l.b16 %v7190
    %v8843 = vunpack.c.l.b16 %v7203
    %v8844 = vunpack.c.l.b16 %v7212
    %v8845 = vunpack.c.l.b16 %v7225
    %v8846 = vunpack.c.l.b16 %v7234
    %v8847 = vunpack.c.l.b16 %v7247
    %v8848 = vunpack.c.l.b16 %v7256
    %v8849 = vunpack.c.l.b16 %v7269
    %v8850 = vunpack.c.l.b16 %v7278
    %v8851 = vunpack.c.l.b16 %v7291
    %v8852 = vunpack.c.l.b16 %v7300
    %v8853 = vpack.c.b16 %v8822, %v8821
    %v8854 = vpack.c.b16 %v8824, %v8823
    %v8855 = vpack.c.b16 %v8826, %v8825
    %v8856 = vpack.c.b16 %v8828, %v8827
    %v8857 = vpack.c.b16 %v8830, %v8829
    %v8858 = vpack.c.b16 %v8832, %v8831
    %v8859 = vpack.c.b16 %v8834, %v8833
    %v8860 = vpack.c.b16 %v8836, %v8835
    %v8861 = vpack.c.b16 %v8838, %v8837
    %v8862 = vpack.c.b16 %v8840, %v8839
    %v8863 = vpack.c.b16 %v8842, %v8841
    %v8864 = vpack.c.b16 %v8844, %v8843
    %v8865 = vpack.c.b16 %v8846, %v8845
    %v8866 = vpack.c.b16 %v8848, %v8847
    %v8867 = vpack.c.b16 %v8850, %v8849
    %v8868 = vpack.c.b16 %v8852, %v8851
    %v8901 = vunpack.c.l.b16 %v6902
    %v8902 = vunpack.c.l.b16 %v6903
    %v8903 = vunpack.c.l.b16 %v6905
    %v8904 = vunpack.c.l.b16 %v6906
    %v8905 = vunpack.c.l.b16 %v6908
    %v8906 = vunpack.c.l.b16 %v6909
    %v8907 = vunpack.c.l.b16 %v6911
    %v8908 = vunpack.c.l.b16 %v6912
    %v8909 = vunpack.c.l.b16 %v6914
    %v8910 = vunpack.c.l.b16 %v6915
    %v8911 = vunpack.c.l.b16 %v6917
    %v8912 = vunpack.c.l.b16 %v6918
    %v8913 = vunpack.c.l.b16 %v6920
    %v8914 = vunpack.c.l.b16 %v6921
    %v8915 = vunpack.c.l.b16 %v6923
    %v8916 = vunpack.c.l.b16 %v6924
    %v8917 = vunpack.c.l.b16 %v6926
    %v8918 = vunpack.c.l.b16 %v6927
    %v8919 = vunpack.c.l.b16 %v6929
    %v8920 = vunpack.c.l.b16 %v6930
    %v8921 = vunpack.c.l.b16 %v6932
    %v8922 = vunpack.c.l.b16 %v6933
    %v8923 = vunpack.c.l.b16 %v6935
    %v8924 = vunpack.c.l.b16 %v6936
    %v8925 = vunpack.c.l.b16 %v6938
    %v8926 = vunpack.c.l.b16 %v6939
    %v8927 = vunpack.c.l.b16 %v6941
    %v8928 = vunpack.c.l.b16 %v6942
    %v8929 = vunpack.c.l.b16 %v6944
    %v8930 = vunpack.c.l.b16 %v6945
    %v8931 = vunpack.c.l.b16 %v6947
    %v8932 = vunpack.c.l.b16 %v6948
    %v8933 = vpack.c.b16 %v8902, %v8901
    %v8934 = vpack.c.b16 %v8904, %v8903
    %v8935 = vpack.c.b16 %v8906, %v8905
    %v8936 = vpack.c.b16 %v8908, %v8907
    %v8937 = vpack.c.b16 %v8910, %v8909
    %v8938 = vpack.c.b16 %v8912, %v8911
    %v8939 = vpack.c.b16 %v8914, %v8913
    %v8940 = vpack.c.b16 %v8916, %v8915
    %v8941 = vpack.c.b16 %v8918, %v8917
    %v8942 = vpack.c.b16 %v8920, %v8919
    %v8943 = vpack.c.b16 %v8922, %v8921
    %v8944 = vpack.c.b16 %v8924, %v8923
    %v8945 = vpack.c.b16 %v8926, %v8925
    %v8946 = vpack.c.b16 %v8928, %v8927
    %v8947 = vpack.c.b16 %v8930, %v8929
    %v8948 = vpack.c.b16 %v8932, %v8931
    %8949 = vrot.lane.b32.xlu0 %v8933, 4
    %v8950 = vpop.permute.xlu0 %8949
    %8951 = vrot.lane.b32.xlu0 %v8934, 4
    %v8952 = vpop.permute.xlu0 %8951
    %8953 = vrot.lane.b32.xlu0 %v8935, 4
    %v8954 = vpop.permute.xlu0 %8953
    %8955 = vrot.lane.b32.xlu0 %v8936, 4
    %v8956 = vpop.permute.xlu0 %8955
    %8957 = vrot.lane.b32.xlu0 %v8937, 4
    %v8958 = vpop.permute.xlu0 %8957
    %8959 = vrot.lane.b32.xlu0 %v8938, 4
    %v8960 = vpop.permute.xlu0 %8959
    %8961 = vrot.lane.b32.xlu0 %v8939, 4
    %v8962 = vpop.permute.xlu0 %8961
    %8963 = vrot.lane.b32.xlu0 %v8940, 4
    %v8964 = vpop.permute.xlu0 %8963
    %8965 = vrot.lane.b32.xlu0 %v8941, 4
    %v8966 = vpop.permute.xlu0 %8965
    %8967 = vrot.lane.b32.xlu0 %v8942, 4
    %v8968 = vpop.permute.xlu0 %8967
    %8969 = vrot.lane.b32.xlu0 %v8943, 4
    %v8970 = vpop.permute.xlu0 %8969
    %8971 = vrot.lane.b32.xlu0 %v8944, 4
    %v8972 = vpop.permute.xlu0 %8971
    %8973 = vrot.lane.b32.xlu0 %v8945, 4
    %v8974 = vpop.permute.xlu0 %8973
    %8975 = vrot.lane.b32.xlu0 %v8946, 4
    %v8976 = vpop.permute.xlu0 %8975
    %8977 = vrot.lane.b32.xlu0 %v8947, 4
    %v8978 = vpop.permute.xlu0 %8977
    %8979 = vrot.lane.b32.xlu0 %v8948, 4
    %v8980 = vpop.permute.xlu0 %8979
    %v8981 = vunpack.c.l.b16 %v7322
    %v8982 = vunpack.c.l.b16 %v7330
    %v8983 = vunpack.c.l.b16 %v7336
    %v8984 = vunpack.c.l.b16 %v7344
    %v8985 = vunpack.c.l.b16 %v7350
    %v8986 = vunpack.c.l.b16 %v7358
    %v8987 = vunpack.c.l.b16 %v7364
    %v8988 = vunpack.c.l.b16 %v7372
    %v8989 = vunpack.c.l.b16 %v7378
    %v8990 = vunpack.c.l.b16 %v7386
    %v8991 = vunpack.c.l.b16 %v7392
    %v8992 = vunpack.c.l.b16 %v7400
    %v8993 = vunpack.c.l.b16 %v7406
    %v8994 = vunpack.c.l.b16 %v7414
    %v8995 = vunpack.c.l.b16 %v7420
    %v8996 = vunpack.c.l.b16 %v7428
    %v8997 = vunpack.c.l.b16 %v7434
    %v8998 = vunpack.c.l.b16 %v7442
    %v8999 = vunpack.c.l.b16 %v7448
    %v9000 = vunpack.c.l.b16 %v7456
    %v9001 = vunpack.c.l.b16 %v7462
    %v9002 = vunpack.c.l.b16 %v7470
    %v9003 = vunpack.c.l.b16 %v7476
    %v9004 = vunpack.c.l.b16 %v7484
    %v9005 = vunpack.c.l.b16 %v7490
    %v9006 = vunpack.c.l.b16 %v7498
    %v9007 = vunpack.c.l.b16 %v7504
    %v9008 = vunpack.c.l.b16 %v7512
    %v9009 = vunpack.c.l.b16 %v7518
    %v9010 = vunpack.c.l.b16 %v7526
    %v9011 = vunpack.c.l.b16 %v7532
    %v9012 = vunpack.c.l.b16 %v7540
    %v9013 = vpack.c.b16 %v8982, %v8981
    %v9014 = vpack.c.b16 %v8984, %v8983
    %v9015 = vpack.c.b16 %v8986, %v8985
    %v9016 = vpack.c.b16 %v8988, %v8987
    %v9017 = vpack.c.b16 %v8990, %v8989
    %v9018 = vpack.c.b16 %v8992, %v8991
    %v9019 = vpack.c.b16 %v8994, %v8993
    %v9020 = vpack.c.b16 %v8996, %v8995
    %v9021 = vpack.c.b16 %v8998, %v8997
    %v9022 = vpack.c.b16 %v9000, %v8999
    %v9023 = vpack.c.b16 %v9002, %v9001
    %v9024 = vpack.c.b16 %v9004, %v9003
    %v9025 = vpack.c.b16 %v9006, %v9005
    %v9026 = vpack.c.b16 %v9008, %v9007
    %v9027 = vpack.c.b16 %v9010, %v9009
    %v9028 = vpack.c.b16 %v9012, %v9011
    %9029 = vrot.lane.b32.xlu0 %v9013, 8
    %v9030 = vpop.permute.xlu0 %9029
    %9031 = vrot.lane.b32.xlu0 %v9014, 8
    %v9032 = vpop.permute.xlu0 %9031
    %9033 = vrot.lane.b32.xlu0 %v9015, 8
    %v9034 = vpop.permute.xlu0 %9033
    %9035 = vrot.lane.b32.xlu0 %v9016, 8
    %v9036 = vpop.permute.xlu0 %9035
    %9037 = vrot.lane.b32.xlu0 %v9017, 8
    %v9038 = vpop.permute.xlu0 %9037
    %9039 = vrot.lane.b32.xlu0 %v9018, 8
    %v9040 = vpop.permute.xlu0 %9039
    %9041 = vrot.lane.b32.xlu0 %v9019, 8
    %v9042 = vpop.permute.xlu0 %9041
    %9043 = vrot.lane.b32.xlu0 %v9020, 8
    %v9044 = vpop.permute.xlu0 %9043
    %9045 = vrot.lane.b32.xlu0 %v9021, 8
    %v9046 = vpop.permute.xlu0 %9045
    %9047 = vrot.lane.b32.xlu0 %v9022, 8
    %v9048 = vpop.permute.xlu0 %9047
    %9049 = vrot.lane.b32.xlu0 %v9023, 8
    %v9050 = vpop.permute.xlu0 %9049
    %9051 = vrot.lane.b32.xlu0 %v9024, 8
    %v9052 = vpop.permute.xlu0 %9051
    %9053 = vrot.lane.b32.xlu0 %v9025, 8
    %v9054 = vpop.permute.xlu0 %9053
    %9055 = vrot.lane.b32.xlu0 %v9026, 8
    %v9056 = vpop.permute.xlu0 %9055
    %9057 = vrot.lane.b32.xlu0 %v9027, 8
    %v9058 = vpop.permute.xlu0 %9057
    %9059 = vrot.lane.b32.xlu0 %v9028, 8
    %v9060 = vpop.permute.xlu0 %9059
    %v9061 = vunpack.c.l.b16 %v7601
    %v9062 = vunpack.c.l.b16 %v7610
    %v9063 = vunpack.c.l.b16 %v7623
    %v9064 = vunpack.c.l.b16 %v7632
    %v9065 = vunpack.c.l.b16 %v7645
    %v9066 = vunpack.c.l.b16 %v7654
    %v9067 = vunpack.c.l.b16 %v7667
    %v9068 = vunpack.c.l.b16 %v7676
    %v9069 = vunpack.c.l.b16 %v7689
    %v9070 = vunpack.c.l.b16 %v7698
    %v9071 = vunpack.c.l.b16 %v7711
    %v9072 = vunpack.c.l.b16 %v7720
    %v9073 = vunpack.c.l.b16 %v7733
    %v9074 = vunpack.c.l.b16 %v7742
    %v9075 = vunpack.c.l.b16 %v7755
    %v9076 = vunpack.c.l.b16 %v7764
    %v9077 = vunpack.c.l.b16 %v7777
    %v9078 = vunpack.c.l.b16 %v7786
    %v9079 = vunpack.c.l.b16 %v7799
    %v9080 = vunpack.c.l.b16 %v7808
    %v9081 = vunpack.c.l.b16 %v7821
    %v9082 = vunpack.c.l.b16 %v7830
    %v9083 = vunpack.c.l.b16 %v7843
    %v9084 = vunpack.c.l.b16 %v7852
    %v9085 = vunpack.c.l.b16 %v7865
    %v9086 = vunpack.c.l.b16 %v7874
    %v9087 = vunpack.c.l.b16 %v7887
    %v9088 = vunpack.c.l.b16 %v7896
    %v9089 = vunpack.c.l.b16 %v7909
    %v9090 = vunpack.c.l.b16 %v7918
    %v9091 = vunpack.c.l.b16 %v7931
    %v9092 = vunpack.c.l.b16 %v7940
    %v9093 = vpack.c.b16 %v9062, %v9061
    %v9094 = vpack.c.b16 %v9064, %v9063
    %v9095 = vpack.c.b16 %v9066, %v9065
    %v9096 = vpack.c.b16 %v9068, %v9067
    %v9097 = vpack.c.b16 %v9070, %v9069
    %v9098 = vpack.c.b16 %v9072, %v9071
    %v9099 = vpack.c.b16 %v9074, %v9073
    %v9100 = vpack.c.b16 %v9076, %v9075
    %v9101 = vpack.c.b16 %v9078, %v9077
    %v9102 = vpack.c.b16 %v9080, %v9079
    %v9103 = vpack.c.b16 %v9082, %v9081
    %v9104 = vpack.c.b16 %v9084, %v9083
    %v9105 = vpack.c.b16 %v9086, %v9085
    %v9106 = vpack.c.b16 %v9088, %v9087
    %v9107 = vpack.c.b16 %v9090, %v9089
    %v9108 = vpack.c.b16 %v9092, %v9091
    %9109 = vrot.lane.b32.xlu0 %v9093, 12
    %v9110 = vpop.permute.xlu0 %9109
    %9111 = vrot.lane.b32.xlu0 %v9094, 12
    %v9112 = vpop.permute.xlu0 %9111
    %9113 = vrot.lane.b32.xlu0 %v9095, 12
    %v9114 = vpop.permute.xlu0 %9113
    %9115 = vrot.lane.b32.xlu0 %v9096, 12
    %v9116 = vpop.permute.xlu0 %9115
    %9117 = vrot.lane.b32.xlu0 %v9097, 12
    %v9118 = vpop.permute.xlu0 %9117
    %9119 = vrot.lane.b32.xlu0 %v9098, 12
    %v9120 = vpop.permute.xlu0 %9119
    %9121 = vrot.lane.b32.xlu0 %v9099, 12
    %v9122 = vpop.permute.xlu0 %9121
    %9123 = vrot.lane.b32.xlu0 %v9100, 12
    %v9124 = vpop.permute.xlu0 %9123
    %9125 = vrot.lane.b32.xlu0 %v9101, 12
    %v9126 = vpop.permute.xlu0 %9125
    %9127 = vrot.lane.b32.xlu0 %v9102, 12
    %v9128 = vpop.permute.xlu0 %9127
    %9129 = vrot.lane.b32.xlu0 %v9103, 12
    %v9130 = vpop.permute.xlu0 %9129
    %9131 = vrot.lane.b32.xlu0 %v9104, 12
    %v9132 = vpop.permute.xlu0 %9131
    %9133 = vrot.lane.b32.xlu0 %v9105, 12
    %v9134 = vpop.permute.xlu0 %9133
    %9135 = vrot.lane.b32.xlu0 %v9106, 12
    %v9136 = vpop.permute.xlu0 %9135
    %9137 = vrot.lane.b32.xlu0 %v9107, 12
    %v9138 = vpop.permute.xlu0 %9137
    %9139 = vrot.lane.b32.xlu0 %v9108, 12
    %v9140 = vpop.permute.xlu0 %9139
    %v9173 = vunpack.c.l.b16 %v7542
    %v9174 = vunpack.c.l.b16 %v7543
    %v9175 = vunpack.c.l.b16 %v7545
    %v9176 = vunpack.c.l.b16 %v7546
    %v9177 = vunpack.c.l.b16 %v7548
    %v9178 = vunpack.c.l.b16 %v7549
    %v9179 = vunpack.c.l.b16 %v7551
    %v9180 = vunpack.c.l.b16 %v7552
    %v9181 = vunpack.c.l.b16 %v7554
    %v9182 = vunpack.c.l.b16 %v7555
    %v9183 = vunpack.c.l.b16 %v7557
    %v9184 = vunpack.c.l.b16 %v7558
    %v9185 = vunpack.c.l.b16 %v7560
    %v9186 = vunpack.c.l.b16 %v7561
    %v9187 = vunpack.c.l.b16 %v7563
    %v9188 = vunpack.c.l.b16 %v7564
    %v9189 = vunpack.c.l.b16 %v7566
    %v9190 = vunpack.c.l.b16 %v7567
    %v9191 = vunpack.c.l.b16 %v7569
    %v9192 = vunpack.c.l.b16 %v7570
    %v9193 = vunpack.c.l.b16 %v7572
    %v9194 = vunpack.c.l.b16 %v7573
    %v9195 = vunpack.c.l.b16 %v7575
    %v9196 = vunpack.c.l.b16 %v7576
    %v9197 = vunpack.c.l.b16 %v7578
    %v9198 = vunpack.c.l.b16 %v7579
    %v9199 = vunpack.c.l.b16 %v7581
    %v9200 = vunpack.c.l.b16 %v7582
    %v9201 = vunpack.c.l.b16 %v7584
    %v9202 = vunpack.c.l.b16 %v7585
    %v9203 = vunpack.c.l.b16 %v7587
    %v9204 = vunpack.c.l.b16 %v7588
    %v9205 = vpack.c.b16 %v9174, %v9173
    %v9206 = vpack.c.b16 %v9176, %v9175
    %v9207 = vpack.c.b16 %v9178, %v9177
    %v9208 = vpack.c.b16 %v9180, %v9179
    %v9209 = vpack.c.b16 %v9182, %v9181
    %v9210 = vpack.c.b16 %v9184, %v9183
    %v9211 = vpack.c.b16 %v9186, %v9185
    %v9212 = vpack.c.b16 %v9188, %v9187
    %v9213 = vpack.c.b16 %v9190, %v9189
    %v9214 = vpack.c.b16 %v9192, %v9191
    %v9215 = vpack.c.b16 %v9194, %v9193
    %v9216 = vpack.c.b16 %v9196, %v9195
    %v9217 = vpack.c.b16 %v9198, %v9197
    %v9218 = vpack.c.b16 %v9200, %v9199
    %v9219 = vpack.c.b16 %v9202, %v9201
    %v9220 = vpack.c.b16 %v9204, %v9203
    %9221 = vrot.lane.b32.xlu0 %v9205, 16
    %v9222 = vpop.permute.xlu0 %9221
    %9223 = vrot.lane.b32.xlu0 %v9206, 16
    %v9224 = vpop.permute.xlu0 %9223
    %9225 = vrot.lane.b32.xlu0 %v9207, 16
    %v9226 = vpop.permute.xlu0 %9225
    %9227 = vrot.lane.b32.xlu0 %v9208, 16
    %v9228 = vpop.permute.xlu0 %9227
    %9229 = vrot.lane.b32.xlu0 %v9209, 16
    %v9230 = vpop.permute.xlu0 %9229
    %9231 = vrot.lane.b32.xlu0 %v9210, 16
    %v9232 = vpop.permute.xlu0 %9231
    %9233 = vrot.lane.b32.xlu0 %v9211, 16
    %v9234 = vpop.permute.xlu0 %9233
    %9235 = vrot.lane.b32.xlu0 %v9212, 16
    %v9236 = vpop.permute.xlu0 %9235
    %9237 = vrot.lane.b32.xlu0 %v9213, 16
    %v9238 = vpop.permute.xlu0 %9237
    %9239 = vrot.lane.b32.xlu0 %v9214, 16
    %v9240 = vpop.permute.xlu0 %9239
    %9241 = vrot.lane.b32.xlu0 %v9215, 16
    %v9242 = vpop.permute.xlu0 %9241
    %9243 = vrot.lane.b32.xlu0 %v9216, 16
    %v9244 = vpop.permute.xlu0 %9243
    %9245 = vrot.lane.b32.xlu0 %v9217, 16
    %v9246 = vpop.permute.xlu0 %9245
    %9247 = vrot.lane.b32.xlu0 %v9218, 16
    %v9248 = vpop.permute.xlu0 %9247
    %9249 = vrot.lane.b32.xlu0 %v9219, 16
    %v9250 = vpop.permute.xlu0 %9249
    %9251 = vrot.lane.b32.xlu0 %v9220, 16
    %v9252 = vpop.permute.xlu0 %9251
    %v9253 = vunpack.c.l.b16 %v7962
    %v9254 = vunpack.c.l.b16 %v7970
    %v9255 = vunpack.c.l.b16 %v7976
    %v9256 = vunpack.c.l.b16 %v7984
    %v9257 = vunpack.c.l.b16 %v7990
    %v9258 = vunpack.c.l.b16 %v7998
    %v9259 = vunpack.c.l.b16 %v8004
    %v9260 = vunpack.c.l.b16 %v8012
    %v9261 = vunpack.c.l.b16 %v8018
    %v9262 = vunpack.c.l.b16 %v8026
    %v9263 = vunpack.c.l.b16 %v8032
    %v9264 = vunpack.c.l.b16 %v8040
    %v9265 = vunpack.c.l.b16 %v8046
    %v9266 = vunpack.c.l.b16 %v8054
    %v9267 = vunpack.c.l.b16 %v8060
    %v9268 = vunpack.c.l.b16 %v8068
    %v9269 = vunpack.c.l.b16 %v8074
    %v9270 = vunpack.c.l.b16 %v8082
    %v9271 = vunpack.c.l.b16 %v8088
    %v9272 = vunpack.c.l.b16 %v8096
    %v9273 = vunpack.c.l.b16 %v8102
    %v9274 = vunpack.c.l.b16 %v8110
    %v9275 = vunpack.c.l.b16 %v8116
    %v9276 = vunpack.c.l.b16 %v8124
    %v9277 = vunpack.c.l.b16 %v8130
    %v9278 = vunpack.c.l.b16 %v8138
    %v9279 = vunpack.c.l.b16 %v8144
    %v9280 = vunpack.c.l.b16 %v8152
    %v9281 = vunpack.c.l.b16 %v8158
    %v9282 = vunpack.c.l.b16 %v8166
    %v9283 = vunpack.c.l.b16 %v8172
    %v9284 = vunpack.c.l.b16 %v8180
    %v9285 = vpack.c.b16 %v9254, %v9253
    %v9286 = vpack.c.b16 %v9256, %v9255
    %v9287 = vpack.c.b16 %v9258, %v9257
    %v9288 = vpack.c.b16 %v9260, %v9259
    %v9289 = vpack.c.b16 %v9262, %v9261
    %v9290 = vpack.c.b16 %v9264, %v9263
    %v9291 = vpack.c.b16 %v9266, %v9265
    %v9292 = vpack.c.b16 %v9268, %v9267
    %v9293 = vpack.c.b16 %v9270, %v9269
    %v9294 = vpack.c.b16 %v9272, %v9271
    %v9295 = vpack.c.b16 %v9274, %v9273
    %v9296 = vpack.c.b16 %v9276, %v9275
    %v9297 = vpack.c.b16 %v9278, %v9277
    %v9298 = vpack.c.b16 %v9280, %v9279
    %v9299 = vpack.c.b16 %v9282, %v9281
    %v9300 = vpack.c.b16 %v9284, %v9283
    %9301 = vrot.lane.b32.xlu0 %v9285, 20
    %v9302 = vpop.permute.xlu0 %9301
    %9303 = vrot.lane.b32.xlu0 %v9286, 20
    %v9304 = vpop.permute.xlu0 %9303
    %9305 = vrot.lane.b32.xlu0 %v9287, 20
    %v9306 = vpop.permute.xlu0 %9305
    %9307 = vrot.lane.b32.xlu0 %v9288, 20
    %v9308 = vpop.permute.xlu0 %9307
    %9309 = vrot.lane.b32.xlu0 %v9289, 20
    %v9310 = vpop.permute.xlu0 %9309
    %9311 = vrot.lane.b32.xlu0 %v9290, 20
    %v9312 = vpop.permute.xlu0 %9311
    %9313 = vrot.lane.b32.xlu0 %v9291, 20
    %v9314 = vpop.permute.xlu0 %9313
    %9315 = vrot.lane.b32.xlu0 %v9292, 20
    %v9316 = vpop.permute.xlu0 %9315
    %9317 = vrot.lane.b32.xlu0 %v9293, 20
    %v9318 = vpop.permute.xlu0 %9317
    %9319 = vrot.lane.b32.xlu0 %v9294, 20
    %v9320 = vpop.permute.xlu0 %9319
    %9321 = vrot.lane.b32.xlu0 %v9295, 20
    %v9322 = vpop.permute.xlu0 %9321
    %9323 = vrot.lane.b32.xlu0 %v9296, 20
    %v9324 = vpop.permute.xlu0 %9323
    %9325 = vrot.lane.b32.xlu0 %v9297, 20
    %v9326 = vpop.permute.xlu0 %9325
    %9327 = vrot.lane.b32.xlu0 %v9298, 20
    %v9328 = vpop.permute.xlu0 %9327
    %9329 = vrot.lane.b32.xlu0 %v9299, 20
    %v9330 = vpop.permute.xlu0 %9329
    %9331 = vrot.lane.b32.xlu0 %v9300, 20
    %v9332 = vpop.permute.xlu0 %9331
    %v9333 = vunpack.c.l.b16 %v8241
    %v9334 = vunpack.c.l.b16 %v8250
    %v9335 = vunpack.c.l.b16 %v8263
    %v9336 = vunpack.c.l.b16 %v8272
    %v9337 = vunpack.c.l.b16 %v8285
    %v9338 = vunpack.c.l.b16 %v8294
    %v9339 = vunpack.c.l.b16 %v8307
    %v9340 = vunpack.c.l.b16 %v8316
    %v9341 = vunpack.c.l.b16 %v8329
    %v9342 = vunpack.c.l.b16 %v8338
    %v9343 = vunpack.c.l.b16 %v8351
    %v9344 = vunpack.c.l.b16 %v8360
    %v9345 = vunpack.c.l.b16 %v8373
    %v9346 = vunpack.c.l.b16 %v8382
    %v9347 = vunpack.c.l.b16 %v8395
    %v9348 = vunpack.c.l.b16 %v8404
    %v9349 = vunpack.c.l.b16 %v8417
    %v9350 = vunpack.c.l.b16 %v8426
    %v9351 = vunpack.c.l.b16 %v8439
    %v9352 = vunpack.c.l.b16 %v8448
    %v9353 = vunpack.c.l.b16 %v8461
    %v9354 = vunpack.c.l.b16 %v8470
    %v9355 = vunpack.c.l.b16 %v8483
    %v9356 = vunpack.c.l.b16 %v8492
    %v9357 = vunpack.c.l.b16 %v8505
    %v9358 = vunpack.c.l.b16 %v8514
    %v9359 = vunpack.c.l.b16 %v8527
    %v9360 = vunpack.c.l.b16 %v8536
    %v9361 = vunpack.c.l.b16 %v8549
    %v9362 = vunpack.c.l.b16 %v8558
    %v9363 = vunpack.c.l.b16 %v8571
    %v9364 = vunpack.c.l.b16 %v8580
    %v9365 = vpack.c.b16 %v9334, %v9333
    %v9366 = vpack.c.b16 %v9336, %v9335
    %v9367 = vpack.c.b16 %v9338, %v9337
    %v9368 = vpack.c.b16 %v9340, %v9339
    %v9369 = vpack.c.b16 %v9342, %v9341
    %v9370 = vpack.c.b16 %v9344, %v9343
    %v9371 = vpack.c.b16 %v9346, %v9345
    %v9372 = vpack.c.b16 %v9348, %v9347
    %v9373 = vpack.c.b16 %v9350, %v9349
    %v9374 = vpack.c.b16 %v9352, %v9351
    %v9375 = vpack.c.b16 %v9354, %v9353
    %v9376 = vpack.c.b16 %v9356, %v9355
    %v9377 = vpack.c.b16 %v9358, %v9357
    %v9378 = vpack.c.b16 %v9360, %v9359
    %v9379 = vpack.c.b16 %v9362, %v9361
    %v9380 = vpack.c.b16 %v9364, %v9363
    %9381 = vrot.lane.b32.xlu0 %v9365, 24
    %v9382 = vpop.permute.xlu0 %9381
    %9383 = vrot.lane.b32.xlu0 %v9366, 24
    %v9384 = vpop.permute.xlu0 %9383
    %9385 = vrot.lane.b32.xlu0 %v9367, 24
    %v9386 = vpop.permute.xlu0 %9385
    %9387 = vrot.lane.b32.xlu0 %v9368, 24
    %v9388 = vpop.permute.xlu0 %9387
    %9389 = vrot.lane.b32.xlu0 %v9369, 24
    %v9390 = vpop.permute.xlu0 %9389
    %9391 = vrot.lane.b32.xlu0 %v9370, 24
    %v9392 = vpop.permute.xlu0 %9391
    %9393 = vrot.lane.b32.xlu0 %v9371, 24
    %v9394 = vpop.permute.xlu0 %9393
    %9395 = vrot.lane.b32.xlu0 %v9372, 24
    %v9396 = vpop.permute.xlu0 %9395
    %9397 = vrot.lane.b32.xlu0 %v9373, 24
    %v9398 = vpop.permute.xlu0 %9397
    %9399 = vrot.lane.b32.xlu0 %v9374, 24
    %v9400 = vpop.permute.xlu0 %9399
    %9401 = vrot.lane.b32.xlu0 %v9375, 24
    %v9402 = vpop.permute.xlu0 %9401
    %9403 = vrot.lane.b32.xlu0 %v9376, 24
    %v9404 = vpop.permute.xlu0 %9403
    %9405 = vrot.lane.b32.xlu0 %v9377, 24
    %v9406 = vpop.permute.xlu0 %9405
    %9407 = vrot.lane.b32.xlu0 %v9378, 24
    %v9408 = vpop.permute.xlu0 %9407
    %9409 = vrot.lane.b32.xlu0 %v9379, 24
    %v9410 = vpop.permute.xlu0 %9409
    %9411 = vrot.lane.b32.xlu0 %v9380, 24
    %v9412 = vpop.permute.xlu0 %9411
    %v9445 = vunpack.c.l.b16 %v8182
    %v9446 = vunpack.c.l.b16 %v8183
    %v9447 = vunpack.c.l.b16 %v8185
    %v9448 = vunpack.c.l.b16 %v8186
    %v9449 = vunpack.c.l.b16 %v8188
    %v9450 = vunpack.c.l.b16 %v8189
    %v9451 = vunpack.c.l.b16 %v8191
    %v9452 = vunpack.c.l.b16 %v8192
    %v9453 = vunpack.c.l.b16 %v8194
    %v9454 = vunpack.c.l.b16 %v8195
    %v9455 = vunpack.c.l.b16 %v8197
    %v9456 = vunpack.c.l.b16 %v8198
    %v9457 = vunpack.c.l.b16 %v8200
    %v9458 = vunpack.c.l.b16 %v8201
    %v9459 = vunpack.c.l.b16 %v8203
    %v9460 = vunpack.c.l.b16 %v8204
    %v9461 = vunpack.c.l.b16 %v8206
    %v9462 = vunpack.c.l.b16 %v8207
    %v9463 = vunpack.c.l.b16 %v8209
    %v9464 = vunpack.c.l.b16 %v8210
    %v9465 = vunpack.c.l.b16 %v8212
    %v9466 = vunpack.c.l.b16 %v8213
    %v9467 = vunpack.c.l.b16 %v8215
    %v9468 = vunpack.c.l.b16 %v8216
    %v9469 = vunpack.c.l.b16 %v8218
    %v9470 = vunpack.c.l.b16 %v8219
    %v9471 = vunpack.c.l.b16 %v8221
    %v9472 = vunpack.c.l.b16 %v8222
    %v9473 = vunpack.c.l.b16 %v8224
    %v9474 = vunpack.c.l.b16 %v8225
    %v9475 = vunpack.c.l.b16 %v8227
    %v9476 = vunpack.c.l.b16 %v8228
    %v9477 = vpack.c.b16 %v9446, %v9445
    %v9478 = vpack.c.b16 %v9448, %v9447
    %v9479 = vpack.c.b16 %v9450, %v9449
    %v9480 = vpack.c.b16 %v9452, %v9451
    %v9481 = vpack.c.b16 %v9454, %v9453
    %v9482 = vpack.c.b16 %v9456, %v9455
    %v9483 = vpack.c.b16 %v9458, %v9457
    %v9484 = vpack.c.b16 %v9460, %v9459
    %v9485 = vpack.c.b16 %v9462, %v9461
    %v9486 = vpack.c.b16 %v9464, %v9463
    %v9487 = vpack.c.b16 %v9466, %v9465
    %v9488 = vpack.c.b16 %v9468, %v9467
    %v9489 = vpack.c.b16 %v9470, %v9469
    %v9490 = vpack.c.b16 %v9472, %v9471
    %v9491 = vpack.c.b16 %v9474, %v9473
    %v9492 = vpack.c.b16 %v9476, %v9475
    %9493 = vrot.lane.b32.xlu0 %v9477, 28
    %v9494 = vpop.permute.xlu0 %9493
    %9495 = vrot.lane.b32.xlu0 %v9478, 28
    %v9496 = vpop.permute.xlu0 %9495
    %9497 = vrot.lane.b32.xlu0 %v9479, 28
    %v9498 = vpop.permute.xlu0 %9497
    %9499 = vrot.lane.b32.xlu0 %v9480, 28
    %v9500 = vpop.permute.xlu0 %9499
    %9501 = vrot.lane.b32.xlu0 %v9481, 28
    %v9502 = vpop.permute.xlu0 %9501
    %9503 = vrot.lane.b32.xlu0 %v9482, 28
    %v9504 = vpop.permute.xlu0 %9503
    %9505 = vrot.lane.b32.xlu0 %v9483, 28
    %v9506 = vpop.permute.xlu0 %9505
    %9507 = vrot.lane.b32.xlu0 %v9484, 28
    %v9508 = vpop.permute.xlu0 %9507
    %9509 = vrot.lane.b32.xlu0 %v9485, 28
    %v9510 = vpop.permute.xlu0 %9509
    %9511 = vrot.lane.b32.xlu0 %v9486, 28
    %v9512 = vpop.permute.xlu0 %9511
    %9513 = vrot.lane.b32.xlu0 %v9487, 28
    %v9514 = vpop.permute.xlu0 %9513
    %9515 = vrot.lane.b32.xlu0 %v9488, 28
    %v9516 = vpop.permute.xlu0 %9515
    %9517 = vrot.lane.b32.xlu0 %v9489, 28
    %v9518 = vpop.permute.xlu0 %9517
    %9519 = vrot.lane.b32.xlu0 %v9490, 28
    %v9520 = vpop.permute.xlu0 %9519
    %9521 = vrot.lane.b32.xlu0 %v9491, 28
    %v9522 = vpop.permute.xlu0 %9521
    %9523 = vrot.lane.b32.xlu0 %v9492, 28
    %v9524 = vpop.permute.xlu0 %9523
    %v9525 = vunpack.c.l.b16 %v8602
    %v9526 = vunpack.c.l.b16 %v8610
    %v9527 = vunpack.c.l.b16 %v8616
    %v9528 = vunpack.c.l.b16 %v8624
    %v9529 = vunpack.c.l.b16 %v8630
    %v9530 = vunpack.c.l.b16 %v8638
    %v9531 = vunpack.c.l.b16 %v8644
    %v9532 = vunpack.c.l.b16 %v8652
    %v9533 = vunpack.c.l.b16 %v8658
    %v9534 = vunpack.c.l.b16 %v8666
    %v9535 = vunpack.c.l.b16 %v8672
    %v9536 = vunpack.c.l.b16 %v8680
    %v9537 = vunpack.c.l.b16 %v8686
    %v9538 = vunpack.c.l.b16 %v8694
    %v9539 = vunpack.c.l.b16 %v8700
    %v9540 = vunpack.c.l.b16 %v8708
    %v9541 = vunpack.c.l.b16 %v8714
    %v9542 = vunpack.c.l.b16 %v8722
    %v9543 = vunpack.c.l.b16 %v8728
    %v9544 = vunpack.c.l.b16 %v8736
    %v9545 = vunpack.c.l.b16 %v8742
    %v9546 = vunpack.c.l.b16 %v8750
    %v9547 = vunpack.c.l.b16 %v8756
    %v9548 = vunpack.c.l.b16 %v8764
    %v9549 = vunpack.c.l.b16 %v8770
    %v9550 = vunpack.c.l.b16 %v8778
    %v9551 = vunpack.c.l.b16 %v8784
    %v9552 = vunpack.c.l.b16 %v8792
    %v9553 = vunpack.c.l.b16 %v8798
    %v9554 = vunpack.c.l.b16 %v8806
    %v9555 = vunpack.c.l.b16 %v8812
    %v9556 = vunpack.c.l.b16 %v8820
    %v9557 = vpack.c.b16 %v9526, %v9525
    %v9558 = vpack.c.b16 %v9528, %v9527
    %v9559 = vpack.c.b16 %v9530, %v9529
    %v9560 = vpack.c.b16 %v9532, %v9531
    %v9561 = vpack.c.b16 %v9534, %v9533
    %v9562 = vpack.c.b16 %v9536, %v9535
    %v9563 = vpack.c.b16 %v9538, %v9537
    %v9564 = vpack.c.b16 %v9540, %v9539
    %v9565 = vpack.c.b16 %v9542, %v9541
    %v9566 = vpack.c.b16 %v9544, %v9543
    %v9567 = vpack.c.b16 %v9546, %v9545
    %v9568 = vpack.c.b16 %v9548, %v9547
    %v9569 = vpack.c.b16 %v9550, %v9549
    %v9570 = vpack.c.b16 %v9552, %v9551
    %v9571 = vpack.c.b16 %v9554, %v9553
    %v9572 = vpack.c.b16 %v9556, %v9555
    %9573 = vrot.lane.b32.xlu0 %v9557, 32
    %v9574 = vpop.permute.xlu0 %9573
    %9575 = vrot.lane.b32.xlu0 %v9558, 32
    %v9576 = vpop.permute.xlu0 %9575
    %9577 = vrot.lane.b32.xlu0 %v9559, 32
    %v9578 = vpop.permute.xlu0 %9577
    %9579 = vrot.lane.b32.xlu0 %v9560, 32
    %v9580 = vpop.permute.xlu0 %9579
    %9581 = vrot.lane.b32.xlu0 %v9561, 32
    %v9582 = vpop.permute.xlu0 %9581
    %9583 = vrot.lane.b32.xlu0 %v9562, 32
    %v9584 = vpop.permute.xlu0 %9583
    %9585 = vrot.lane.b32.xlu0 %v9563, 32
    %v9586 = vpop.permute.xlu0 %9585
    %9587 = vrot.lane.b32.xlu0 %v9564, 32
    %v9588 = vpop.permute.xlu0 %9587
    %9589 = vrot.lane.b32.xlu0 %v9565, 32
    %v9590 = vpop.permute.xlu0 %9589
    %9591 = vrot.lane.b32.xlu0 %v9566, 32
    %v9592 = vpop.permute.xlu0 %9591
    %9593 = vrot.lane.b32.xlu0 %v9567, 32
    %v9594 = vpop.permute.xlu0 %9593
    %9595 = vrot.lane.b32.xlu0 %v9568, 32
    %v9596 = vpop.permute.xlu0 %9595
    %9597 = vrot.lane.b32.xlu0 %v9569, 32
    %v9598 = vpop.permute.xlu0 %9597
    %9599 = vrot.lane.b32.xlu0 %v9570, 32
    %v9600 = vpop.permute.xlu0 %9599
    %9601 = vrot.lane.b32.xlu0 %v9571, 32
    %v9602 = vpop.permute.xlu0 %9601
    %9603 = vrot.lane.b32.xlu0 %v9572, 32
    %v9604 = vpop.permute.xlu0 %9603
    %v9607 = vsel %vm2889, %v8853, %v8950
    %v9610 = vsel %vm2889, %v8854, %v8952
    %v9613 = vsel %vm2889, %v8855, %v8954
    %v9616 = vsel %vm2889, %v8856, %v8956
    %v9619 = vsel %vm2889, %v8857, %v8958
    %v9622 = vsel %vm2889, %v8858, %v8960
    %v9625 = vsel %vm2889, %v8859, %v8962
    %v9628 = vsel %vm2889, %v8860, %v8964
    %v9631 = vsel %vm2889, %v8861, %v8966
    %v9634 = vsel %vm2889, %v8862, %v8968
    %v9637 = vsel %vm2889, %v8863, %v8970
    %v9640 = vsel %vm2889, %v8864, %v8972
    %v9643 = vsel %vm2889, %v8865, %v8974
    %v9646 = vsel %vm2889, %v8866, %v8976
    %v9649 = vsel %vm2889, %v8867, %v8978
    %v9652 = vsel %vm2889, %v8868, %v8980
    %v9654 = vsel %vm2938, %v9607, %v9030
    %v9656 = vsel %vm2938, %v9610, %v9032
    %v9658 = vsel %vm2938, %v9613, %v9034
    %v9660 = vsel %vm2938, %v9616, %v9036
    %v9662 = vsel %vm2938, %v9619, %v9038
    %v9664 = vsel %vm2938, %v9622, %v9040
    %v9666 = vsel %vm2938, %v9625, %v9042
    %v9668 = vsel %vm2938, %v9628, %v9044
    %v9670 = vsel %vm2938, %v9631, %v9046
    %v9672 = vsel %vm2938, %v9634, %v9048
    %v9674 = vsel %vm2938, %v9637, %v9050
    %v9676 = vsel %vm2938, %v9640, %v9052
    %v9678 = vsel %vm2938, %v9643, %v9054
    %v9680 = vsel %vm2938, %v9646, %v9056
    %v9682 = vsel %vm2938, %v9649, %v9058
    %v9684 = vsel %vm2938, %v9652, %v9060
    %v9686 = vsel %vm2971, %v9654, %v9110
    %v9688 = vsel %vm2971, %v9656, %v9112
    %v9690 = vsel %vm2971, %v9658, %v9114
    %v9692 = vsel %vm2971, %v9660, %v9116
    %v9694 = vsel %vm2971, %v9662, %v9118
    %v9696 = vsel %vm2971, %v9664, %v9120
    %v9698 = vsel %vm2971, %v9666, %v9122
    %v9700 = vsel %vm2971, %v9668, %v9124
    %v9702 = vsel %vm2971, %v9670, %v9126
    %v9704 = vsel %vm2971, %v9672, %v9128
    %v9706 = vsel %vm2971, %v9674, %v9130
    %v9708 = vsel %vm2971, %v9676, %v9132
    %v9710 = vsel %vm2971, %v9678, %v9134
    %v9712 = vsel %vm2971, %v9680, %v9136
    %v9714 = vsel %vm2971, %v9682, %v9138
    %v9716 = vsel %vm2971, %v9684, %v9140
    %v9718 = vsel %vm3004, %v9686, %v9222
    %v9720 = vsel %vm3004, %v9688, %v9224
    %v9722 = vsel %vm3004, %v9690, %v9226
    %v9724 = vsel %vm3004, %v9692, %v9228
    %v9726 = vsel %vm3004, %v9694, %v9230
    %v9728 = vsel %vm3004, %v9696, %v9232
    %v9730 = vsel %vm3004, %v9698, %v9234
    %v9732 = vsel %vm3004, %v9700, %v9236
    %v9734 = vsel %vm3004, %v9702, %v9238
    %v9736 = vsel %vm3004, %v9704, %v9240
    %v9738 = vsel %vm3004, %v9706, %v9242
    %v9740 = vsel %vm3004, %v9708, %v9244
    %v9742 = vsel %vm3004, %v9710, %v9246
    %v9744 = vsel %vm3004, %v9712, %v9248
    %v9746 = vsel %vm3004, %v9714, %v9250
    %v9748 = vsel %vm3004, %v9716, %v9252
    %v9750 = vsel %vm3037, %v9718, %v9302
    %v9752 = vsel %vm3037, %v9720, %v9304
    %v9754 = vsel %vm3037, %v9722, %v9306
    %v9756 = vsel %vm3037, %v9724, %v9308
    %v9758 = vsel %vm3037, %v9726, %v9310
    %v9760 = vsel %vm3037, %v9728, %v9312
    %v9762 = vsel %vm3037, %v9730, %v9314
    %v9764 = vsel %vm3037, %v9732, %v9316
    %v9766 = vsel %vm3037, %v9734, %v9318
    %v9768 = vsel %vm3037, %v9736, %v9320
    %v9770 = vsel %vm3037, %v9738, %v9322
    %v9772 = vsel %vm3037, %v9740, %v9324
    %v9774 = vsel %vm3037, %v9742, %v9326
    %v9776 = vsel %vm3037, %v9744, %v9328
    %v9778 = vsel %vm3037, %v9746, %v9330
    %v9780 = vsel %vm3037, %v9748, %v9332
    %v9782 = vsel %vm3070, %v9750, %v9382
    %v9784 = vsel %vm3070, %v9752, %v9384
    %v9786 = vsel %vm3070, %v9754, %v9386
    %v9788 = vsel %vm3070, %v9756, %v9388
    %v9790 = vsel %vm3070, %v9758, %v9390
    %v9792 = vsel %vm3070, %v9760, %v9392
    %v9794 = vsel %vm3070, %v9762, %v9394
    %v9796 = vsel %vm3070, %v9764, %v9396
    %v9798 = vsel %vm3070, %v9766, %v9398
    %v9800 = vsel %vm3070, %v9768, %v9400
    %v9802 = vsel %vm3070, %v9770, %v9402
    %v9804 = vsel %vm3070, %v9772, %v9404
    %v9806 = vsel %vm3070, %v9774, %v9406
    %v9808 = vsel %vm3070, %v9776, %v9408
    %v9810 = vsel %vm3070, %v9778, %v9410
    %v9812 = vsel %vm3070, %v9780, %v9412
    %v9814 = vsel %vm3103, %v9782, %v9494
    %v9816 = vsel %vm3103, %v9784, %v9496
    %v9818 = vsel %vm3103, %v9786, %v9498
    %v9820 = vsel %vm3103, %v9788, %v9500
    %v9822 = vsel %vm3103, %v9790, %v9502
    %v9824 = vsel %vm3103, %v9792, %v9504
    %v9826 = vsel %vm3103, %v9794, %v9506
    %v9828 = vsel %vm3103, %v9796, %v9508
    %v9830 = vsel %vm3103, %v9798, %v9510
    %v9832 = vsel %vm3103, %v9800, %v9512
    %v9834 = vsel %vm3103, %v9802, %v9514
    %v9836 = vsel %vm3103, %v9804, %v9516
    %v9838 = vsel %vm3103, %v9806, %v9518
    %v9840 = vsel %vm3103, %v9808, %v9520
    %v9842 = vsel %vm3103, %v9810, %v9522
    %v9844 = vsel %vm3103, %v9812, %v9524
    %v9846 = vsel %vm3136, %v9814, %v9574
    %v9848 = vsel %vm3136, %v9816, %v9576
    %v9850 = vsel %vm3136, %v9818, %v9578
    %v9852 = vsel %vm3136, %v9820, %v9580
    %v9854 = vsel %vm3136, %v9822, %v9582
    %v9856 = vsel %vm3136, %v9824, %v9584
    %v9858 = vsel %vm3136, %v9826, %v9586
    %v9860 = vsel %vm3136, %v9828, %v9588
    %v9862 = vsel %vm3136, %v9830, %v9590
    %v9864 = vsel %vm3136, %v9832, %v9592
    %v9866 = vsel %vm3136, %v9834, %v9594
    %v9868 = vsel %vm3136, %v9836, %v9596
    %v9870 = vsel %vm3136, %v9838, %v9598
    %v9872 = vsel %vm3136, %v9840, %v9600
    %v9874 = vsel %vm3136, %v9842, %v9602
    %v9876 = vsel %vm3136, %v9844, %v9604
    %v9877 = vld [vmem:[%s1] sm:$0xf]
    %v9878 = vld [vmem:[%s1 + $0x4] sm:$0xf]
    %v9879 = vld [vmem:[%s1 + $0x8] sm:$0xf]
    %v9880 = vld [vmem:[%s1 + $0xc] sm:$0xf]
    %v9881 = vld [vmem:[%s1 + $0x10] sm:$0x3]
    %v9882 = vld [vmem:[%s2] sm:$0x1]
    %v9884 = vperm.slane %v9882, 0
    %v9891 = vunpack.c.l.b16 %v9877
    %v9892 = vunpack.c.l.b16 %v9878
    %v9893 = vunpack.c.l.b16 %v9879
    %v9894 = vunpack.c.l.b16 %v9880
    %v9895 = vunpack.c.l.b16 %v9881
    %v9896 = vpack.c.b16 %v9892, %v9891
    %v9897 = vpack.c.b16 %v9894, %v9893
    %v9898 = vpack.c.b16 %v9895, %v9895
    %v9901 = vsel %vm3193, %v9846, 0
    %v9903 = vsel %vm3193, %v9848, 0
    %v9905 = vsel %vm3193, %v9850, 0
    %v9907 = vsel %vm3193, %v9852, 0
    %v9909 = vsel %vm3193, %v9854, 0
    %v9911 = vsel %vm3193, %v9856, 0
    %v9913 = vsel %vm3193, %v9858, 0
    %v9915 = vsel %vm3193, %v9860, 0
    %v9917 = vsel %vm3193, %v9862, 0
    %v9919 = vsel %vm3193, %v9864, 0
    %v9921 = vsel %vm3193, %v9866, 0
    %v9923 = vsel %vm3193, %v9868, 0
    %v9925 = vsel %vm3193, %v9870, 0
    %v9927 = vsel %vm3193, %v9872, 0
    %v9929 = vsel %vm3193, %v9874, 0
    %v9931 = vsel %vm3193, %v9876, 0
    %v9934 = vsel %vm3226, %v9898, 0
    %9936 = vmatpush.bf16.msra.mxu0 0
    %9937 = vmatpush.bf16.msra.mxu0 0
    %9938 = vmatpush.bf16.msra.mxu0 0
    %9939 = vmatpush.bf16.msra.mxu0 0
    %9940 = vmatpush.bf16.msra.mxu0 0
    %9941 = vmatpush.bf16.msra.mxu0 %v9934
    %9942 = vmatpush.bf16.msra.mxu0 %v9897
    %9943 = vmatpush.bf16.msra.mxu0 %v9896
    %9944 = vmatmul.bf16.gmra.mxu0 %v9901
    %v9945 = vpop.f32.mrf.mxu0
    %v9946 = vadd.f32 %v9884, %v9945
    %v9947 = vpop.f32.mrf.mxu0
    %v9948 = vadd.f32 %v9884, %v9947
    %9949 = vmatmul.bf16.gmra.mxu0 %v9903
    %v9950 = vpop.f32.mrf.mxu0
    %v9951 = vadd.f32 %v9884, %v9950
    %v9952 = vpop.f32.mrf.mxu0
    %v9953 = vadd.f32 %v9884, %v9952
    %9954 = vmatmul.bf16.gmra.mxu0 %v9905
    %v9955 = vpop.f32.mrf.mxu0
    %v9956 = vadd.f32 %v9884, %v9955
    %v9957 = vpop.f32.mrf.mxu0
    %v9958 = vadd.f32 %v9884, %v9957
    %9959 = vmatmul.bf16.gmra.mxu0 %v9907
    %v9960 = vpop.f32.mrf.mxu0
    %v9961 = vadd.f32 %v9884, %v9960
    %v9962 = vpop.f32.mrf.mxu0
    %v9963 = vadd.f32 %v9884, %v9962
    %9964 = vmatmul.bf16.gmra.mxu0 %v9909
    %v9965 = vpop.f32.mrf.mxu0
    %v9966 = vadd.f32 %v9884, %v9965
    %v9967 = vpop.f32.mrf.mxu0
    %v9968 = vadd.f32 %v9884, %v9967
    %9969 = vmatmul.bf16.gmra.mxu0 %v9911
    %v9970 = vpop.f32.mrf.mxu0
    %v9971 = vadd.f32 %v9884, %v9970
    %v9972 = vpop.f32.mrf.mxu0
    %v9973 = vadd.f32 %v9884, %v9972
    %9974 = vmatmul.bf16.gmra.mxu0 %v9913
    %v9975 = vpop.f32.mrf.mxu0
    %v9976 = vadd.f32 %v9884, %v9975
    %v9977 = vpop.f32.mrf.mxu0
    %v9978 = vadd.f32 %v9884, %v9977
    %9979 = vmatmul.bf16.gmra.mxu0 %v9915
    %v9980 = vpop.f32.mrf.mxu0
    %v9981 = vadd.f32 %v9884, %v9980
    %v9982 = vpop.f32.mrf.mxu0
    %v9983 = vadd.f32 %v9884, %v9982
    %9984 = vmatmul.bf16.gmra.mxu0 %v9917
    %v9985 = vpop.f32.mrf.mxu0
    %v9986 = vadd.f32 %v9884, %v9985
    %v9987 = vpop.f32.mrf.mxu0
    %v9988 = vadd.f32 %v9884, %v9987
    %9989 = vmatmul.bf16.gmra.mxu0 %v9919
    %v9990 = vpop.f32.mrf.mxu0
    %v9991 = vadd.f32 %v9884, %v9990
    %v9992 = vpop.f32.mrf.mxu0
    %v9993 = vadd.f32 %v9884, %v9992
    %9994 = vmatmul.bf16.gmra.mxu0 %v9921
    %v9995 = vpop.f32.mrf.mxu0
    %v9996 = vadd.f32 %v9884, %v9995
    %v9997 = vpop.f32.mrf.mxu0
    %v9998 = vadd.f32 %v9884, %v9997
    %9999 = vmatmul.bf16.gmra.mxu0 %v9923
    %v10000 = vpop.f32.mrf.mxu0
    %v10001 = vadd.f32 %v9884, %v10000
    %v10002 = vpop.f32.mrf.mxu0
    %v10003 = vadd.f32 %v9884, %v10002
    %10004 = vmatmul.bf16.gmra.mxu0 %v9925
    %v10005 = vpop.f32.mrf.mxu0
    %v10006 = vadd.f32 %v9884, %v10005
    %v10007 = vpop.f32.mrf.mxu0
    %v10008 = vadd.f32 %v9884, %v10007
    %10009 = vmatmul.bf16.gmra.mxu0 %v9927
    %v10010 = vpop.f32.mrf.mxu0
    %v10011 = vadd.f32 %v9884, %v10010
    %v10012 = vpop.f32.mrf.mxu0
    %v10013 = vadd.f32 %v9884, %v10012
    %10014 = vmatmul.bf16.gmra.mxu0 %v9929
    %v10015 = vpop.f32.mrf.mxu0
    %v10016 = vadd.f32 %v9884, %v10015
    %v10017 = vpop.f32.mrf.mxu0
    %v10018 = vadd.f32 %v9884, %v10017
    %10019 = vmatmul.bf16.gmra.mxu0 %v9931
    %v10020 = vpop.f32.mrf.mxu0
    %v10021 = vadd.f32 %v9884, %v10020
    %v10022 = vpop.f32.mrf.mxu0
    %v10023 = vadd.f32 %v9884, %v10022
    %10024 = vdwg.mxu0
    %vm10025 = vcmp.gt.f32.partialorder %v9946, 0.0
    %vm10026 = vcmp.gt.f32.partialorder %v9948, 0.0
    %vm10027 = vcmp.gt.f32.partialorder %v9951, 0.0
    %vm10028 = vcmp.gt.f32.partialorder %v9953, 0.0
    %vm10029 = vcmp.gt.f32.partialorder %v9956, 0.0
    %vm10030 = vcmp.gt.f32.partialorder %v9958, 0.0
    %vm10031 = vcmp.gt.f32.partialorder %v9961, 0.0
    %vm10032 = vcmp.gt.f32.partialorder %v9963, 0.0
    %vm10033 = vcmp.gt.f32.partialorder %v9966, 0.0
    %vm10034 = vcmp.gt.f32.partialorder %v9968, 0.0
    %vm10035 = vcmp.gt.f32.partialorder %v9971, 0.0
    %vm10036 = vcmp.gt.f32.partialorder %v9973, 0.0
    %vm10037 = vcmp.gt.f32.partialorder %v9976, 0.0
    %vm10038 = vcmp.gt.f32.partialorder %v9978, 0.0
    %vm10039 = vcmp.gt.f32.partialorder %v9981, 0.0
    %vm10040 = vcmp.gt.f32.partialorder %v9983, 0.0
    %vm10041 = vcmp.gt.f32.partialorder %v9986, 0.0
    %vm10042 = vcmp.gt.f32.partialorder %v9988, 0.0
    %vm10043 = vcmp.gt.f32.partialorder %v9991, 0.0
    %vm10044 = vcmp.gt.f32.partialorder %v9993, 0.0
    %vm10045 = vcmp.gt.f32.partialorder %v9996, 0.0
    %vm10046 = vcmp.gt.f32.partialorder %v9998, 0.0
    %vm10047 = vcmp.gt.f32.partialorder %v10001, 0.0
    %vm10048 = vcmp.gt.f32.partialorder %v10003, 0.0
    %vm10049 = vcmp.gt.f32.partialorder %v10006, 0.0
    %vm10050 = vcmp.gt.f32.partialorder %v10008, 0.0
    %vm10051 = vcmp.gt.f32.partialorder %v10011, 0.0
    %vm10052 = vcmp.gt.f32.partialorder %v10013, 0.0
    %vm10053 = vcmp.gt.f32.partialorder %v10016, 0.0
    %vm10054 = vcmp.gt.f32.partialorder %v10018, 0.0
    %vm10055 = vcmp.gt.f32.partialorder %v10021, 0.0
    %vm10056 = vcmp.gt.f32.partialorder %v10023, 0.0
    %v10057 = vmul.f32 %v9946, 0.2
    %v10058 = vmul.f32 %v9948, 0.2
    %v10059 = vmul.f32 %v9951, 0.2
    %v10060 = vmul.f32 %v9953, 0.2
    %v10061 = vmul.f32 %v9956, 0.2
    %v10062 = vmul.f32 %v9958, 0.2
    %v10063 = vmul.f32 %v9961, 0.2
    %v10064 = vmul.f32 %v9963, 0.2
    %v10065 = vmul.f32 %v9966, 0.2
    %v10066 = vmul.f32 %v9968, 0.2
    %v10067 = vmul.f32 %v9971, 0.2
    %v10068 = vmul.f32 %v9973, 0.2
    %v10069 = vmul.f32 %v9976, 0.2
    %v10070 = vmul.f32 %v9978, 0.2
    %v10071 = vmul.f32 %v9981, 0.2
    %v10072 = vmul.f32 %v9983, 0.2
    %v10073 = vmul.f32 %v9986, 0.2
    %v10074 = vmul.f32 %v9988, 0.2
    %v10075 = vmul.f32 %v9991, 0.2
    %v10076 = vmul.f32 %v9993, 0.2
    %v10077 = vmul.f32 %v9996, 0.2
    %v10078 = vmul.f32 %v9998, 0.2
    %v10079 = vmul.f32 %v10001, 0.2
    %v10080 = vmul.f32 %v10003, 0.2
    %v10081 = vmul.f32 %v10006, 0.2
    %v10082 = vmul.f32 %v10008, 0.2
    %v10083 = vmul.f32 %v10011, 0.2
    %v10084 = vmul.f32 %v10013, 0.2
    %v10085 = vmul.f32 %v10016, 0.2
    %v10086 = vmul.f32 %v10018, 0.2
    %v10087 = vmul.f32 %v10021, 0.2
    %v10088 = vmul.f32 %v10023, 0.2
    %v10089 = vsel %vm10025, %v9946, %v10057
    %v10090 = vsel %vm10026, %v9948, %v10058
    %v10091 = vsel %vm10027, %v9951, %v10059
    %v10092 = vsel %vm10028, %v9953, %v10060
    %v10093 = vsel %vm10029, %v9956, %v10061
    %v10094 = vsel %vm10030, %v9958, %v10062
    %v10095 = vsel %vm10031, %v9961, %v10063
    %v10096 = vsel %vm10032, %v9963, %v10064
    %v10097 = vsel %vm10033, %v9966, %v10065
    %v10098 = vsel %vm10034, %v9968, %v10066
    %v10099 = vsel %vm10035, %v9971, %v10067
    %v10100 = vsel %vm10036, %v9973, %v10068
    %v10101 = vsel %vm10037, %v9976, %v10069
    %v10102 = vsel %vm10038, %v9978, %v10070
    %v10103 = vsel %vm10039, %v9981, %v10071
    %v10104 = vsel %vm10040, %v9983, %v10072
    %v10105 = vsel %vm10041, %v9986, %v10073
    %v10106 = vsel %vm10042, %v9988, %v10074
    %v10107 = vsel %vm10043, %v9991, %v10075
    %v10108 = vsel %vm10044, %v9993, %v10076
    %v10109 = vsel %vm10045, %v9996, %v10077
    %v10110 = vsel %vm10046, %v9998, %v10078
    %v10111 = vsel %vm10047, %v10001, %v10079
    %v10112 = vsel %vm10048, %v10003, %v10080
    %v10113 = vsel %vm10049, %v10006, %v10081
    %v10114 = vsel %vm10050, %v10008, %v10082
    %v10115 = vsel %vm10051, %v10011, %v10083
    %v10116 = vsel %vm10052, %v10013, %v10084
    %v10117 = vsel %vm10053, %v10016, %v10085
    %v10118 = vsel %vm10054, %v10018, %v10086
    %v10119 = vsel %vm10055, %v10021, %v10087
    %v10120 = vsel %vm10056, %v10023, %v10088
    %v10121 = vpack.c.bf16 %v10089, %v10089
    %v10122 = vpack.c.bf16 %v10090, %v10090
    %v10123 = vpack.c.bf16 %v10091, %v10091
    %v10124 = vpack.c.bf16 %v10092, %v10092
    %v10125 = vpack.c.bf16 %v10093, %v10093
    %v10126 = vpack.c.bf16 %v10094, %v10094
    %v10127 = vpack.c.bf16 %v10095, %v10095
    %v10128 = vpack.c.bf16 %v10096, %v10096
    %v10129 = vpack.c.bf16 %v10097, %v10097
    %v10130 = vpack.c.bf16 %v10098, %v10098
    %v10131 = vpack.c.bf16 %v10099, %v10099
    %v10132 = vpack.c.bf16 %v10100, %v10100
    %v10133 = vpack.c.bf16 %v10101, %v10101
    %v10134 = vpack.c.bf16 %v10102, %v10102
    %v10135 = vpack.c.bf16 %v10103, %v10103
    %v10136 = vpack.c.bf16 %v10104, %v10104
    %v10137 = vpack.c.bf16 %v10105, %v10105
    %v10138 = vpack.c.bf16 %v10106, %v10106
    %v10139 = vpack.c.bf16 %v10107, %v10107
    %v10140 = vpack.c.bf16 %v10108, %v10108
    %v10141 = vpack.c.bf16 %v10109, %v10109
    %v10142 = vpack.c.bf16 %v10110, %v10110
    %v10143 = vpack.c.bf16 %v10111, %v10111
    %v10144 = vpack.c.bf16 %v10112, %v10112
    %v10145 = vpack.c.bf16 %v10113, %v10113
    %v10146 = vpack.c.bf16 %v10114, %v10114
    %v10147 = vpack.c.bf16 %v10115, %v10115
    %v10148 = vpack.c.bf16 %v10116, %v10116
    %v10149 = vpack.c.bf16 %v10117, %v10117
    %v10150 = vpack.c.bf16 %v10118, %v10118
    %v10151 = vpack.c.bf16 %v10119, %v10119
    %v10152 = vpack.c.bf16 %v10120, %v10120
    %10153 = vst.msk [vmem:[%s3447 + $0x4] sm:$0xf] %vm22, %v10121
    %10154 = vst.msk [vmem:[%s3447 + $0x8] sm:$0xf] %vm22, %v10122
    %10155 = vst.msk [vmem:[%s3447 + $0x14] sm:$0xf] %vm22, %v10123
    %10156 = vst.msk [vmem:[%s3447 + $0x18] sm:$0xf] %vm22, %v10124
    %10157 = vst.msk [vmem:[%s3447 + $0x24] sm:$0xf] %vm22, %v10125
    %10158 = vst.msk [vmem:[%s3447 + $0x28] sm:$0xf] %vm22, %v10126
    %10159 = vst.msk [vmem:[%s3447 + $0x34] sm:$0xf] %vm22, %v10127
    %10160 = vst.msk [vmem:[%s3447 + $0x38] sm:$0xf] %vm22, %v10128
    %10161 = vst.msk [vmem:[%s3447 + $0x44] sm:$0xf] %vm22, %v10129
    %10162 = vst.msk [vmem:[%s3447 + $0x48] sm:$0xf] %vm22, %v10130
    %10163 = vst.msk [vmem:[%s3447 + $0x54] sm:$0xf] %vm22, %v10131
    %10164 = vst.msk [vmem:[%s3447 + $0x58] sm:$0xf] %vm22, %v10132
    %10165 = vst.msk [vmem:[%s3447 + $0x64] sm:$0xf] %vm22, %v10133
    %10166 = vst.msk [vmem:[%s3447 + $0x68] sm:$0xf] %vm22, %v10134
    %10167 = vst.msk [vmem:[%s3447 + $0x74] sm:$0xf] %vm22, %v10135
    %10168 = vst.msk [vmem:[%s3447 + $0x78] sm:$0xf] %vm22, %v10136
    %10169 = vst.msk [vmem:[%s3447 + $0x84] sm:$0xf] %vm22, %v10137
    %10170 = vst.msk [vmem:[%s3447 + $0x88] sm:$0xf] %vm22, %v10138
    %10171 = vst.msk [vmem:[%s3447 + $0x94] sm:$0xf] %vm22, %v10139
    %10172 = vst.msk [vmem:[%s3447 + $0x98] sm:$0xf] %vm22, %v10140
    %10173 = vst.msk [vmem:[%s3447 + $0xa4] sm:$0xf] %vm22, %v10141
    %10174 = vst.msk [vmem:[%s3447 + $0xa8] sm:$0xf] %vm22, %v10142
    %10175 = vst.msk [vmem:[%s3447 + $0xb4] sm:$0xf] %vm22, %v10143
    %10176 = vst.msk [vmem:[%s3447 + $0xb8] sm:$0xf] %vm22, %v10144
    %10177 = vst.msk [vmem:[%s3447 + $0xc4] sm:$0xf] %vm22, %v10145
    %10178 = vst.msk [vmem:[%s3447 + $0xc8] sm:$0xf] %vm22, %v10146
    %10179 = vst.msk [vmem:[%s3447 + $0xd4] sm:$0xf] %vm22, %v10147
    %10180 = vst.msk [vmem:[%s3447 + $0xd8] sm:$0xf] %vm22, %v10148
    %10181 = vst.msk [vmem:[%s3447 + $0xe4] sm:$0xf] %vm22, %v10149
    %10182 = vst.msk [vmem:[%s3447 + $0xe8] sm:$0xf] %vm22, %v10150
    %10183 = vst.msk [vmem:[%s3447 + $0xf4] sm:$0xf] %vm22, %v10151
    %10184 = vst.msk [vmem:[%s3447 + $0xf8] sm:$0xf] %vm22, %v10152
    %v10185 = vld [vmem:[#allocation3] sm:$0x8]
    %v10186 = vld [vmem:[#allocation3 + $0x4] sm:$0xf]
    %v10187 = vld [vmem:[#allocation3 + $0x8] sm:$0xf]
    %v10188 = vld [vmem:[#allocation3 + $0x10] sm:$0x8]
    %v10189 = vld [vmem:[#allocation3 + $0x14] sm:$0xf]
    %v10190 = vld [vmem:[#allocation3 + $0x18] sm:$0xf]
    %v10191 = vld [vmem:[#allocation3 + $0x20] sm:$0x8]
    %v10192 = vld [vmem:[#allocation3 + $0x24] sm:$0xf]
    %v10193 = vld [vmem:[#allocation3 + $0x28] sm:$0xf]
    %v10194 = vld [vmem:[#allocation3 + $0x30] sm:$0x8]
    %v10195 = vld [vmem:[#allocation3 + $0x34] sm:$0xf]
    %v10196 = vld [vmem:[#allocation3 + $0x38] sm:$0xf]
    %v10197 = vld [vmem:[#allocation3 + $0x40] sm:$0x8]
    %v10198 = vld [vmem:[#allocation3 + $0x44] sm:$0xf]
    %v10199 = vld [vmem:[#allocation3 + $0x48] sm:$0xf]
    %v10200 = vld [vmem:[#allocation3 + $0x50] sm:$0x8]
    %v10201 = vld [vmem:[#allocation3 + $0x54] sm:$0xf]
    %v10202 = vld [vmem:[#allocation3 + $0x58] sm:$0xf]
    %v10203 = vld [vmem:[#allocation3 + $0x60] sm:$0x8]
    %v10204 = vld [vmem:[#allocation3 + $0x64] sm:$0xf]
    %v10205 = vld [vmem:[#allocation3 + $0x68] sm:$0xf]
    %v10206 = vld [vmem:[#allocation3 + $0x70] sm:$0x8]
    %v10207 = vld [vmem:[#allocation3 + $0x74] sm:$0xf]
    %v10208 = vld [vmem:[#allocation3 + $0x78] sm:$0xf]
    %v10209 = vld [vmem:[#allocation3 + $0x80] sm:$0x8]
    %v10210 = vld [vmem:[#allocation3 + $0x84] sm:$0xf]
    %v10211 = vld [vmem:[#allocation3 + $0x88] sm:$0xf]
    %v10212 = vld [vmem:[#allocation3 + $0x90] sm:$0x8]
    %v10213 = vld [vmem:[#allocation3 + $0x94] sm:$0xf]
    %v10214 = vld [vmem:[#allocation3 + $0x98] sm:$0xf]
    %v10215 = vld [vmem:[#allocation3 + $0xa0] sm:$0x8]
    %v10216 = vld [vmem:[#allocation3 + $0xa4] sm:$0xf]
    %v10217 = vld [vmem:[#allocation3 + $0xa8] sm:$0xf]
    %v10218 = vld [vmem:[#allocation3 + $0xb0] sm:$0x8]
    %v10219 = vld [vmem:[#allocation3 + $0xb4] sm:$0xf]
    %v10220 = vld [vmem:[#allocation3 + $0xb8] sm:$0xf]
    %v10221 = vld [vmem:[#allocation3 + $0xc0] sm:$0x8]
    %v10222 = vld [vmem:[#allocation3 + $0xc4] sm:$0xf]
    %v10223 = vld [vmem:[#allocation3 + $0xc8] sm:$0xf]
    %v10224 = vld [vmem:[#allocation3 + $0xd0] sm:$0x8]
    %v10225 = vld [vmem:[#allocation3 + $0xd4] sm:$0xf]
    %v10226 = vld [vmem:[#allocation3 + $0xd8] sm:$0xf]
    %v10227 = vld [vmem:[#allocation3 + $0xe0] sm:$0x8]
    %v10228 = vld [vmem:[#allocation3 + $0xe4] sm:$0xf]
    %v10229 = vld [vmem:[#allocation3 + $0xe8] sm:$0xf]
    %v10230 = vld [vmem:[#allocation3 + $0xf0] sm:$0x8]
    %v10231 = vld [vmem:[#allocation3 + $0xf4] sm:$0xf]
    %v10232 = vld [vmem:[#allocation3 + $0xf8] sm:$0xf]
    %v10234 = vshrl.u32 %v10185, 16
    %v10236 = vrot.slane %v10234, 7
    %v10237 = vrot.slane %v10236, 4
    %v10239 = vshrl.u32 %v10186, 16
    %v10241 = vrot.slane %v10239, 7
    %v10242 = vshll.u32 %v10186, 16
    %v10244 = vor.u32 %v10241, %v10242
    %v10245 = vsel %vm228, %v10237, %v10244
    %v10246 = vrot.slane %v10241, 4
    %v10248 = vshrl.u32 %v10187, 16
    %v10250 = vrot.slane %v10248, 7
    %v10251 = vshll.u32 %v10187, 16
    %v10253 = vor.u32 %v10250, %v10251
    %v10254 = vsel %vm228, %v10246, %v10253
    %v10256 = vshrl.u32 %v10188, 16
    %v10258 = vrot.slane %v10256, 7
    %v10259 = vrot.slane %v10258, 4
    %v10261 = vshrl.u32 %v10189, 16
    %v10263 = vrot.slane %v10261, 7
    %v10264 = vshll.u32 %v10189, 16
    %v10266 = vor.u32 %v10263, %v10264
    %v10267 = vsel %vm228, %v10259, %v10266
    %v10268 = vrot.slane %v10263, 4
    %v10270 = vshrl.u32 %v10190, 16
    %v10272 = vrot.slane %v10270, 7
    %v10273 = vshll.u32 %v10190, 16
    %v10275 = vor.u32 %v10272, %v10273
    %v10276 = vsel %vm228, %v10268, %v10275
    %v10278 = vshrl.u32 %v10191, 16
    %v10280 = vrot.slane %v10278, 7
    %v10281 = vrot.slane %v10280, 4
    %v10283 = vshrl.u32 %v10192, 16
    %v10285 = vrot.slane %v10283, 7
    %v10286 = vshll.u32 %v10192, 16
    %v10288 = vor.u32 %v10285, %v10286
    %v10289 = vsel %vm228, %v10281, %v10288
    %v10290 = vrot.slane %v10285, 4
    %v10292 = vshrl.u32 %v10193, 16
    %v10294 = vrot.slane %v10292, 7
    %v10295 = vshll.u32 %v10193, 16
    %v10297 = vor.u32 %v10294, %v10295
    %v10298 = vsel %vm228, %v10290, %v10297
    %v10300 = vshrl.u32 %v10194, 16
    %v10302 = vrot.slane %v10300, 7
    %v10303 = vrot.slane %v10302, 4
    %v10305 = vshrl.u32 %v10195, 16
    %v10307 = vrot.slane %v10305, 7
    %v10308 = vshll.u32 %v10195, 16
    %v10310 = vor.u32 %v10307, %v10308
    %v10311 = vsel %vm228, %v10303, %v10310
    %v10312 = vrot.slane %v10307, 4
    %v10314 = vshrl.u32 %v10196, 16
    %v10316 = vrot.slane %v10314, 7
    %v10317 = vshll.u32 %v10196, 16
    %v10319 = vor.u32 %v10316, %v10317
    %v10320 = vsel %vm228, %v10312, %v10319
    %v10322 = vshrl.u32 %v10197, 16
    %v10324 = vrot.slane %v10322, 7
    %v10325 = vrot.slane %v10324, 4
    %v10327 = vshrl.u32 %v10198, 16
    %v10329 = vrot.slane %v10327, 7
    %v10330 = vshll.u32 %v10198, 16
    %v10332 = vor.u32 %v10329, %v10330
    %v10333 = vsel %vm228, %v10325, %v10332
    %v10334 = vrot.slane %v10329, 4
    %v10336 = vshrl.u32 %v10199, 16
    %v10338 = vrot.slane %v10336, 7
    %v10339 = vshll.u32 %v10199, 16
    %v10341 = vor.u32 %v10338, %v10339
    %v10342 = vsel %vm228, %v10334, %v10341
    %v10344 = vshrl.u32 %v10200, 16
    %v10346 = vrot.slane %v10344, 7
    %v10347 = vrot.slane %v10346, 4
    %v10349 = vshrl.u32 %v10201, 16
    %v10351 = vrot.slane %v10349, 7
    %v10352 = vshll.u32 %v10201, 16
    %v10354 = vor.u32 %v10351, %v10352
    %v10355 = vsel %vm228, %v10347, %v10354
    %v10356 = vrot.slane %v10351, 4
    %v10358 = vshrl.u32 %v10202, 16
    %v10360 = vrot.slane %v10358, 7
    %v10361 = vshll.u32 %v10202, 16
    %v10363 = vor.u32 %v10360, %v10361
    %v10364 = vsel %vm228, %v10356, %v10363
    %v10366 = vshrl.u32 %v10203, 16
    %v10368 = vrot.slane %v10366, 7
    %v10369 = vrot.slane %v10368, 4
    %v10371 = vshrl.u32 %v10204, 16
    %v10373 = vrot.slane %v10371, 7
    %v10374 = vshll.u32 %v10204, 16
    %v10376 = vor.u32 %v10373, %v10374
    %v10377 = vsel %vm228, %v10369, %v10376
    %v10378 = vrot.slane %v10373, 4
    %v10380 = vshrl.u32 %v10205, 16
    %v10382 = vrot.slane %v10380, 7
    %v10383 = vshll.u32 %v10205, 16
    %v10385 = vor.u32 %v10382, %v10383
    %v10386 = vsel %vm228, %v10378, %v10385
    %v10388 = vshrl.u32 %v10206, 16
    %v10390 = vrot.slane %v10388, 7
    %v10391 = vrot.slane %v10390, 4
    %v10393 = vshrl.u32 %v10207, 16
    %v10395 = vrot.slane %v10393, 7
    %v10396 = vshll.u32 %v10207, 16
    %v10398 = vor.u32 %v10395, %v10396
    %v10399 = vsel %vm228, %v10391, %v10398
    %v10400 = vrot.slane %v10395, 4
    %v10402 = vshrl.u32 %v10208, 16
    %v10404 = vrot.slane %v10402, 7
    %v10405 = vshll.u32 %v10208, 16
    %v10407 = vor.u32 %v10404, %v10405
    %v10408 = vsel %vm228, %v10400, %v10407
    %v10410 = vshrl.u32 %v10209, 16
    %v10412 = vrot.slane %v10410, 7
    %v10413 = vrot.slane %v10412, 4
    %v10415 = vshrl.u32 %v10210, 16
    %v10417 = vrot.slane %v10415, 7
    %v10418 = vshll.u32 %v10210, 16
    %v10420 = vor.u32 %v10417, %v10418
    %v10421 = vsel %vm228, %v10413, %v10420
    %v10422 = vrot.slane %v10417, 4
    %v10424 = vshrl.u32 %v10211, 16
    %v10426 = vrot.slane %v10424, 7
    %v10427 = vshll.u32 %v10211, 16
    %v10429 = vor.u32 %v10426, %v10427
    %v10430 = vsel %vm228, %v10422, %v10429
    %v10432 = vshrl.u32 %v10212, 16
    %v10434 = vrot.slane %v10432, 7
    %v10435 = vrot.slane %v10434, 4
    %v10437 = vshrl.u32 %v10213, 16
    %v10439 = vrot.slane %v10437, 7
    %v10440 = vshll.u32 %v10213, 16
    %v10442 = vor.u32 %v10439, %v10440
    %v10443 = vsel %vm228, %v10435, %v10442
    %v10444 = vrot.slane %v10439, 4
    %v10446 = vshrl.u32 %v10214, 16
    %v10448 = vrot.slane %v10446, 7
    %v10449 = vshll.u32 %v10214, 16
    %v10451 = vor.u32 %v10448, %v10449
    %v10452 = vsel %vm228, %v10444, %v10451
    %v10454 = vshrl.u32 %v10215, 16
    %v10456 = vrot.slane %v10454, 7
    %v10457 = vrot.slane %v10456, 4
    %v10459 = vshrl.u32 %v10216, 16
    %v10461 = vrot.slane %v10459, 7
    %v10462 = vshll.u32 %v10216, 16
    %v10464 = vor.u32 %v10461, %v10462
    %v10465 = vsel %vm228, %v10457, %v10464
    %v10466 = vrot.slane %v10461, 4
    %v10468 = vshrl.u32 %v10217, 16
    %v10470 = vrot.slane %v10468, 7
    %v10471 = vshll.u32 %v10217, 16
    %v10473 = vor.u32 %v10470, %v10471
    %v10474 = vsel %vm228, %v10466, %v10473
    %v10476 = vshrl.u32 %v10218, 16
    %v10478 = vrot.slane %v10476, 7
    %v10479 = vrot.slane %v10478, 4
    %v10481 = vshrl.u32 %v10219, 16
    %v10483 = vrot.slane %v10481, 7
    %v10484 = vshll.u32 %v10219, 16
    %v10486 = vor.u32 %v10483, %v10484
    %v10487 = vsel %vm228, %v10479, %v10486
    %v10488 = vrot.slane %v10483, 4
    %v10490 = vshrl.u32 %v10220, 16
    %v10492 = vrot.slane %v10490, 7
    %v10493 = vshll.u32 %v10220, 16
    %v10495 = vor.u32 %v10492, %v10493
    %v10496 = vsel %vm228, %v10488, %v10495
    %v10498 = vshrl.u32 %v10221, 16
    %v10500 = vrot.slane %v10498, 7
    %v10501 = vrot.slane %v10500, 4
    %v10503 = vshrl.u32 %v10222, 16
    %v10505 = vrot.slane %v10503, 7
    %v10506 = vshll.u32 %v10222, 16
    %v10508 = vor.u32 %v10505, %v10506
    %v10509 = vsel %vm228, %v10501, %v10508
    %v10510 = vrot.slane %v10505, 4
    %v10512 = vshrl.u32 %v10223, 16
    %v10514 = vrot.slane %v10512, 7
    %v10515 = vshll.u32 %v10223, 16
    %v10517 = vor.u32 %v10514, %v10515
    %v10518 = vsel %vm228, %v10510, %v10517
    %v10520 = vshrl.u32 %v10224, 16
    %v10522 = vrot.slane %v10520, 7
    %v10523 = vrot.slane %v10522, 4
    %v10525 = vshrl.u32 %v10225, 16
    %v10527 = vrot.slane %v10525, 7
    %v10528 = vshll.u32 %v10225, 16
    %v10530 = vor.u32 %v10527, %v10528
    %v10531 = vsel %vm228, %v10523, %v10530
    %v10532 = vrot.slane %v10527, 4
    %v10534 = vshrl.u32 %v10226, 16
    %v10536 = vrot.slane %v10534, 7
    %v10537 = vshll.u32 %v10226, 16
    %v10539 = vor.u32 %v10536, %v10537
    %v10540 = vsel %vm228, %v10532, %v10539
    %v10542 = vshrl.u32 %v10227, 16
    %v10544 = vrot.slane %v10542, 7
    %v10545 = vrot.slane %v10544, 4
    %v10547 = vshrl.u32 %v10228, 16
    %v10549 = vrot.slane %v10547, 7
    %v10550 = vshll.u32 %v10228, 16
    %v10552 = vor.u32 %v10549, %v10550
    %v10553 = vsel %vm228, %v10545, %v10552
    %v10554 = vrot.slane %v10549, 4
    %v10556 = vshrl.u32 %v10229, 16
    %v10558 = vrot.slane %v10556, 7
    %v10559 = vshll.u32 %v10229, 16
    %v10561 = vor.u32 %v10558, %v10559
    %v10562 = vsel %vm228, %v10554, %v10561
    %v10564 = vshrl.u32 %v10230, 16
    %v10566 = vrot.slane %v10564, 7
    %v10567 = vrot.slane %v10566, 4
    %v10569 = vshrl.u32 %v10231, 16
    %v10571 = vrot.slane %v10569, 7
    %v10572 = vshll.u32 %v10231, 16
    %v10574 = vor.u32 %v10571, %v10572
    %v10575 = vsel %vm228, %v10567, %v10574
    %v10576 = vrot.slane %v10571, 4
    %v10578 = vshrl.u32 %v10232, 16
    %v10580 = vrot.slane %v10578, 7
    %v10581 = vshll.u32 %v10232, 16
    %v10583 = vor.u32 %v10580, %v10581
    %v10584 = vsel %vm228, %v10576, %v10583
    %v10585 = vld [vmem:[#allocation3 + $0xc] sm:$0x1]
    %v10586 = vld [vmem:[#allocation3 + $0x1c] sm:$0x1]
    %v10587 = vld [vmem:[#allocation3 + $0x2c] sm:$0x1]
    %v10588 = vld [vmem:[#allocation3 + $0x3c] sm:$0x1]
    %v10589 = vld [vmem:[#allocation3 + $0x4c] sm:$0x1]
    %v10590 = vld [vmem:[#allocation3 + $0x5c] sm:$0x1]
    %v10591 = vld [vmem:[#allocation3 + $0x6c] sm:$0x1]
    %v10592 = vld [vmem:[#allocation3 + $0x7c] sm:$0x1]
    %v10593 = vld [vmem:[#allocation3 + $0x8c] sm:$0x1]
    %v10594 = vld [vmem:[#allocation3 + $0x9c] sm:$0x1]
    %v10595 = vld [vmem:[#allocation3 + $0xac] sm:$0x1]
    %v10596 = vld [vmem:[#allocation3 + $0xbc] sm:$0x1]
    %v10597 = vld [vmem:[#allocation3 + $0xcc] sm:$0x1]
    %v10598 = vld [vmem:[#allocation3 + $0xdc] sm:$0x1]
    %v10599 = vld [vmem:[#allocation3 + $0xec] sm:$0x1]
    %v10600 = vld [vmem:[#allocation3 + $0xfc] sm:$0x1]
    %v10601 = vrot.slane %v10239, 4
    %v10602 = vrot.slane %v10242, 5
    %v10603 = vor.u32 %v10601, %v10602
    %v10604 = vrot.slane %v10603, 4
    %v10605 = vrot.slane %v10251, 5
    %v10606 = vsel %vm599, %v10604, %v10605
    %v10607 = vrot.slane %v10248, 4
    %v10608 = vor.u32 %v10607, %v10605
    %v10609 = vrot.slane %v10608, 4
    %v10611 = vshll.u32 %v10585, 16
    %v10613 = vrot.slane %v10611, 5
    %v10614 = vsel %vm599, %v10609, %v10613
    %v10615 = vrot.slane %v10261, 4
    %v10616 = vrot.slane %v10264, 5
    %v10617 = vor.u32 %v10615, %v10616
    %v10618 = vrot.slane %v10617, 4
    %v10619 = vrot.slane %v10273, 5
    %v10620 = vsel %vm599, %v10618, %v10619
    %v10621 = vrot.slane %v10270, 4
    %v10622 = vor.u32 %v10621, %v10619
    %v10623 = vrot.slane %v10622, 4
    %v10625 = vshll.u32 %v10586, 16
    %v10627 = vrot.slane %v10625, 5
    %v10628 = vsel %vm599, %v10623, %v10627
    %v10629 = vrot.slane %v10283, 4
    %v10630 = vrot.slane %v10286, 5
    %v10631 = vor.u32 %v10629, %v10630
    %v10632 = vrot.slane %v10631, 4
    %v10633 = vrot.slane %v10295, 5
    %v10634 = vsel %vm599, %v10632, %v10633
    %v10635 = vrot.slane %v10292, 4
    %v10636 = vor.u32 %v10635, %v10633
    %v10637 = vrot.slane %v10636, 4
    %v10639 = vshll.u32 %v10587, 16
    %v10641 = vrot.slane %v10639, 5
    %v10642 = vsel %vm599, %v10637, %v10641
    %v10643 = vrot.slane %v10305, 4
    %v10644 = vrot.slane %v10308, 5
    %v10645 = vor.u32 %v10643, %v10644
    %v10646 = vrot.slane %v10645, 4
    %v10647 = vrot.slane %v10317, 5
    %v10648 = vsel %vm599, %v10646, %v10647
    %v10649 = vrot.slane %v10314, 4
    %v10650 = vor.u32 %v10649, %v10647
    %v10651 = vrot.slane %v10650, 4
    %v10653 = vshll.u32 %v10588, 16
    %v10655 = vrot.slane %v10653, 5
    %v10656 = vsel %vm599, %v10651, %v10655
    %v10657 = vrot.slane %v10327, 4
    %v10658 = vrot.slane %v10330, 5
    %v10659 = vor.u32 %v10657, %v10658
    %v10660 = vrot.slane %v10659, 4
    %v10661 = vrot.slane %v10339, 5
    %v10662 = vsel %vm599, %v10660, %v10661
    %v10663 = vrot.slane %v10336, 4
    %v10664 = vor.u32 %v10663, %v10661
    %v10665 = vrot.slane %v10664, 4
    %v10667 = vshll.u32 %v10589, 16
    %v10669 = vrot.slane %v10667, 5
    %v10670 = vsel %vm599, %v10665, %v10669
    %v10671 = vrot.slane %v10349, 4
    %v10672 = vrot.slane %v10352, 5
    %v10673 = vor.u32 %v10671, %v10672
    %v10674 = vrot.slane %v10673, 4
    %v10675 = vrot.slane %v10361, 5
    %v10676 = vsel %vm599, %v10674, %v10675
    %v10677 = vrot.slane %v10358, 4
    %v10678 = vor.u32 %v10677, %v10675
    %v10679 = vrot.slane %v10678, 4
    %v10681 = vshll.u32 %v10590, 16
    %v10683 = vrot.slane %v10681, 5
    %v10684 = vsel %vm599, %v10679, %v10683
    %v10685 = vrot.slane %v10371, 4
    %v10686 = vrot.slane %v10374, 5
    %v10687 = vor.u32 %v10685, %v10686
    %v10688 = vrot.slane %v10687, 4
    %v10689 = vrot.slane %v10383, 5
    %v10690 = vsel %vm599, %v10688, %v10689
    %v10691 = vrot.slane %v10380, 4
    %v10692 = vor.u32 %v10691, %v10689
    %v10693 = vrot.slane %v10692, 4
    %v10695 = vshll.u32 %v10591, 16
    %v10697 = vrot.slane %v10695, 5
    %v10698 = vsel %vm599, %v10693, %v10697
    %v10699 = vrot.slane %v10393, 4
    %v10700 = vrot.slane %v10396, 5
    %v10701 = vor.u32 %v10699, %v10700
    %v10702 = vrot.slane %v10701, 4
    %v10703 = vrot.slane %v10405, 5
    %v10704 = vsel %vm599, %v10702, %v10703
    %v10705 = vrot.slane %v10402, 4
    %v10706 = vor.u32 %v10705, %v10703
    %v10707 = vrot.slane %v10706, 4
    %v10709 = vshll.u32 %v10592, 16
    %v10711 = vrot.slane %v10709, 5
    %v10712 = vsel %vm599, %v10707, %v10711
    %v10713 = vrot.slane %v10415, 4
    %v10714 = vrot.slane %v10418, 5
    %v10715 = vor.u32 %v10713, %v10714
    %v10716 = vrot.slane %v10715, 4
    %v10717 = vrot.slane %v10427, 5
    %v10718 = vsel %vm599, %v10716, %v10717
    %v10719 = vrot.slane %v10424, 4
    %v10720 = vor.u32 %v10719, %v10717
    %v10721 = vrot.slane %v10720, 4
    %v10723 = vshll.u32 %v10593, 16
    %v10725 = vrot.slane %v10723, 5
    %v10726 = vsel %vm599, %v10721, %v10725
    %v10727 = vrot.slane %v10437, 4
    %v10728 = vrot.slane %v10440, 5
    %v10729 = vor.u32 %v10727, %v10728
    %v10730 = vrot.slane %v10729, 4
    %v10731 = vrot.slane %v10449, 5
    %v10732 = vsel %vm599, %v10730, %v10731
    %v10733 = vrot.slane %v10446, 4
    %v10734 = vor.u32 %v10733, %v10731
    %v10735 = vrot.slane %v10734, 4
    %v10737 = vshll.u32 %v10594, 16
    %v10739 = vrot.slane %v10737, 5
    %v10740 = vsel %vm599, %v10735, %v10739
    %v10741 = vrot.slane %v10459, 4
    %v10742 = vrot.slane %v10462, 5
    %v10743 = vor.u32 %v10741, %v10742
    %v10744 = vrot.slane %v10743, 4
    %v10745 = vrot.slane %v10471, 5
    %v10746 = vsel %vm599, %v10744, %v10745
    %v10747 = vrot.slane %v10468, 4
    %v10748 = vor.u32 %v10747, %v10745
    %v10749 = vrot.slane %v10748, 4
    %v10751 = vshll.u32 %v10595, 16
    %v10753 = vrot.slane %v10751, 5
    %v10754 = vsel %vm599, %v10749, %v10753
    %v10755 = vrot.slane %v10481, 4
    %v10756 = vrot.slane %v10484, 5
    %v10757 = vor.u32 %v10755, %v10756
    %v10758 = vrot.slane %v10757, 4
    %v10759 = vrot.slane %v10493, 5
    %v10760 = vsel %vm599, %v10758, %v10759
    %v10761 = vrot.slane %v10490, 4
    %v10762 = vor.u32 %v10761, %v10759
    %v10763 = vrot.slane %v10762, 4
    %v10765 = vshll.u32 %v10596, 16
    %v10767 = vrot.slane %v10765, 5
    %v10768 = vsel %vm599, %v10763, %v10767
    %v10769 = vrot.slane %v10503, 4
    %v10770 = vrot.slane %v10506, 5
    %v10771 = vor.u32 %v10769, %v10770
    %v10772 = vrot.slane %v10771, 4
    %v10773 = vrot.slane %v10515, 5
    %v10774 = vsel %vm599, %v10772, %v10773
    %v10775 = vrot.slane %v10512, 4
    %v10776 = vor.u32 %v10775, %v10773
    %v10777 = vrot.slane %v10776, 4
    %v10779 = vshll.u32 %v10597, 16
    %v10781 = vrot.slane %v10779, 5
    %v10782 = vsel %vm599, %v10777, %v10781
    %v10783 = vrot.slane %v10525, 4
    %v10784 = vrot.slane %v10528, 5
    %v10785 = vor.u32 %v10783, %v10784
    %v10786 = vrot.slane %v10785, 4
    %v10787 = vrot.slane %v10537, 5
    %v10788 = vsel %vm599, %v10786, %v10787
    %v10789 = vrot.slane %v10534, 4
    %v10790 = vor.u32 %v10789, %v10787
    %v10791 = vrot.slane %v10790, 4
    %v10793 = vshll.u32 %v10598, 16
    %v10795 = vrot.slane %v10793, 5
    %v10796 = vsel %vm599, %v10791, %v10795
    %v10797 = vrot.slane %v10547, 4
    %v10798 = vrot.slane %v10550, 5
    %v10799 = vor.u32 %v10797, %v10798
    %v10800 = vrot.slane %v10799, 4
    %v10801 = vrot.slane %v10559, 5
    %v10802 = vsel %vm599, %v10800, %v10801
    %v10803 = vrot.slane %v10556, 4
    %v10804 = vor.u32 %v10803, %v10801
    %v10805 = vrot.slane %v10804, 4
    %v10807 = vshll.u32 %v10599, 16
    %v10809 = vrot.slane %v10807, 5
    %v10810 = vsel %vm599, %v10805, %v10809
    %v10811 = vrot.slane %v10569, 4
    %v10812 = vrot.slane %v10572, 5
    %v10813 = vor.u32 %v10811, %v10812
    %v10814 = vrot.slane %v10813, 4
    %v10815 = vrot.slane %v10581, 5
    %v10816 = vsel %vm599, %v10814, %v10815
    %v10817 = vrot.slane %v10578, 4
    %v10818 = vor.u32 %v10817, %v10815
    %v10819 = vrot.slane %v10818, 4
    %v10821 = vshll.u32 %v10600, 16
    %v10823 = vrot.slane %v10821, 5
    %v10824 = vsel %vm599, %v10819, %v10823
    %v10825 = vld [vmem:[%s3447] sm:$0x8]
    %v10826 = vld [vmem:[%s3447 + $0x4] sm:$0xf]
    %v10827 = vld [vmem:[%s3447 + $0x8] sm:$0xf]
    %v10828 = vld [vmem:[%s3447 + $0x10] sm:$0x8]
    %v10829 = vld [vmem:[%s3447 + $0x14] sm:$0xf]
    %v10830 = vld [vmem:[%s3447 + $0x18] sm:$0xf]
    %v10831 = vld [vmem:[%s3447 + $0x20] sm:$0x8]
    %v10832 = vld [vmem:[%s3447 + $0x24] sm:$0xf]
    %v10833 = vld [vmem:[%s3447 + $0x28] sm:$0xf]
    %v10834 = vld [vmem:[%s3447 + $0x30] sm:$0x8]
    %v10835 = vld [vmem:[%s3447 + $0x34] sm:$0xf]
    %v10836 = vld [vmem:[%s3447 + $0x38] sm:$0xf]
    %v10837 = vld [vmem:[%s3447 + $0x40] sm:$0x8]
    %v10838 = vld [vmem:[%s3447 + $0x44] sm:$0xf]
    %v10839 = vld [vmem:[%s3447 + $0x48] sm:$0xf]
    %v10840 = vld [vmem:[%s3447 + $0x50] sm:$0x8]
    %v10841 = vld [vmem:[%s3447 + $0x54] sm:$0xf]
    %v10842 = vld [vmem:[%s3447 + $0x58] sm:$0xf]
    %v10843 = vld [vmem:[%s3447 + $0x60] sm:$0x8]
    %v10844 = vld [vmem:[%s3447 + $0x64] sm:$0xf]
    %v10845 = vld [vmem:[%s3447 + $0x68] sm:$0xf]
    %v10846 = vld [vmem:[%s3447 + $0x70] sm:$0x8]
    %v10847 = vld [vmem:[%s3447 + $0x74] sm:$0xf]
    %v10848 = vld [vmem:[%s3447 + $0x78] sm:$0xf]
    %v10849 = vld [vmem:[%s3447 + $0x80] sm:$0x8]
    %v10850 = vld [vmem:[%s3447 + $0x84] sm:$0xf]
    %v10851 = vld [vmem:[%s3447 + $0x88] sm:$0xf]
    %v10852 = vld [vmem:[%s3447 + $0x90] sm:$0x8]
    %v10853 = vld [vmem:[%s3447 + $0x94] sm:$0xf]
    %v10854 = vld [vmem:[%s3447 + $0x98] sm:$0xf]
    %v10855 = vld [vmem:[%s3447 + $0xa0] sm:$0x8]
    %v10856 = vld [vmem:[%s3447 + $0xa4] sm:$0xf]
    %v10857 = vld [vmem:[%s3447 + $0xa8] sm:$0xf]
    %v10858 = vld [vmem:[%s3447 + $0xb0] sm:$0x8]
    %v10859 = vld [vmem:[%s3447 + $0xb4] sm:$0xf]
    %v10860 = vld [vmem:[%s3447 + $0xb8] sm:$0xf]
    %v10861 = vld [vmem:[%s3447 + $0xc0] sm:$0x8]
    %v10862 = vld [vmem:[%s3447 + $0xc4] sm:$0xf]
    %v10863 = vld [vmem:[%s3447 + $0xc8] sm:$0xf]
    %v10864 = vld [vmem:[%s3447 + $0xd0] sm:$0x8]
    %v10865 = vld [vmem:[%s3447 + $0xd4] sm:$0xf]
    %v10866 = vld [vmem:[%s3447 + $0xd8] sm:$0xf]
    %v10867 = vld [vmem:[%s3447 + $0xe0] sm:$0x8]
    %v10868 = vld [vmem:[%s3447 + $0xe4] sm:$0xf]
    %v10869 = vld [vmem:[%s3447 + $0xe8] sm:$0xf]
    %v10870 = vld [vmem:[%s3447 + $0xf0] sm:$0x8]
    %v10871 = vld [vmem:[%s3447 + $0xf4] sm:$0xf]
    %v10872 = vld [vmem:[%s3447 + $0xf8] sm:$0xf]
    %v10874 = vshrl.u32 %v10825, 16
    %v10876 = vrot.slane %v10874, 7
    %v10877 = vrot.slane %v10876, 4
    %v10879 = vshrl.u32 %v10826, 16
    %v10881 = vrot.slane %v10879, 7
    %v10882 = vshll.u32 %v10826, 16
    %v10884 = vor.u32 %v10881, %v10882
    %v10885 = vsel %vm228, %v10877, %v10884
    %v10886 = vrot.slane %v10881, 4
    %v10888 = vshrl.u32 %v10827, 16
    %v10890 = vrot.slane %v10888, 7
    %v10891 = vshll.u32 %v10827, 16
    %v10893 = vor.u32 %v10890, %v10891
    %v10894 = vsel %vm228, %v10886, %v10893
    %v10896 = vshrl.u32 %v10828, 16
    %v10898 = vrot.slane %v10896, 7
    %v10899 = vrot.slane %v10898, 4
    %v10901 = vshrl.u32 %v10829, 16
    %v10903 = vrot.slane %v10901, 7
    %v10904 = vshll.u32 %v10829, 16
    %v10906 = vor.u32 %v10903, %v10904
    %v10907 = vsel %vm228, %v10899, %v10906
    %v10908 = vrot.slane %v10903, 4
    %v10910 = vshrl.u32 %v10830, 16
    %v10912 = vrot.slane %v10910, 7
    %v10913 = vshll.u32 %v10830, 16
    %v10915 = vor.u32 %v10912, %v10913
    %v10916 = vsel %vm228, %v10908, %v10915
    %v10918 = vshrl.u32 %v10831, 16
    %v10920 = vrot.slane %v10918, 7
    %v10921 = vrot.slane %v10920, 4
    %v10923 = vshrl.u32 %v10832, 16
    %v10925 = vrot.slane %v10923, 7
    %v10926 = vshll.u32 %v10832, 16
    %v10928 = vor.u32 %v10925, %v10926
    %v10929 = vsel %vm228, %v10921, %v10928
    %v10930 = vrot.slane %v10925, 4
    %v10932 = vshrl.u32 %v10833, 16
    %v10934 = vrot.slane %v10932, 7
    %v10935 = vshll.u32 %v10833, 16
    %v10937 = vor.u32 %v10934, %v10935
    %v10938 = vsel %vm228, %v10930, %v10937
    %v10940 = vshrl.u32 %v10834, 16
    %v10942 = vrot.slane %v10940, 7
    %v10943 = vrot.slane %v10942, 4
    %v10945 = vshrl.u32 %v10835, 16
    %v10947 = vrot.slane %v10945, 7
    %v10948 = vshll.u32 %v10835, 16
    %v10950 = vor.u32 %v10947, %v10948
    %v10951 = vsel %vm228, %v10943, %v10950
    %v10952 = vrot.slane %v10947, 4
    %v10954 = vshrl.u32 %v10836, 16
    %v10956 = vrot.slane %v10954, 7
    %v10957 = vshll.u32 %v10836, 16
    %v10959 = vor.u32 %v10956, %v10957
    %v10960 = vsel %vm228, %v10952, %v10959
    %v10962 = vshrl.u32 %v10837, 16
    %v10964 = vrot.slane %v10962, 7
    %v10965 = vrot.slane %v10964, 4
    %v10967 = vshrl.u32 %v10838, 16
    %v10969 = vrot.slane %v10967, 7
    %v10970 = vshll.u32 %v10838, 16
    %v10972 = vor.u32 %v10969, %v10970
    %v10973 = vsel %vm228, %v10965, %v10972
    %v10974 = vrot.slane %v10969, 4
    %v10976 = vshrl.u32 %v10839, 16
    %v10978 = vrot.slane %v10976, 7
    %v10979 = vshll.u32 %v10839, 16
    %v10981 = vor.u32 %v10978, %v10979
    %v10982 = vsel %vm228, %v10974, %v10981
    %v10984 = vshrl.u32 %v10840, 16
    %v10986 = vrot.slane %v10984, 7
    %v10987 = vrot.slane %v10986, 4
    %v10989 = vshrl.u32 %v10841, 16
    %v10991 = vrot.slane %v10989, 7
    %v10992 = vshll.u32 %v10841, 16
    %v10994 = vor.u32 %v10991, %v10992
    %v10995 = vsel %vm228, %v10987, %v10994
    %v10996 = vrot.slane %v10991, 4
    %v10998 = vshrl.u32 %v10842, 16
    %v11000 = vrot.slane %v10998, 7
    %v11001 = vshll.u32 %v10842, 16
    %v11003 = vor.u32 %v11000, %v11001
    %v11004 = vsel %vm228, %v10996, %v11003
    %v11006 = vshrl.u32 %v10843, 16
    %v11008 = vrot.slane %v11006, 7
    %v11009 = vrot.slane %v11008, 4
    %v11011 = vshrl.u32 %v10844, 16
    %v11013 = vrot.slane %v11011, 7
    %v11014 = vshll.u32 %v10844, 16
    %v11016 = vor.u32 %v11013, %v11014
    %v11017 = vsel %vm228, %v11009, %v11016
    %v11018 = vrot.slane %v11013, 4
    %v11020 = vshrl.u32 %v10845, 16
    %v11022 = vrot.slane %v11020, 7
    %v11023 = vshll.u32 %v10845, 16
    %v11025 = vor.u32 %v11022, %v11023
    %v11026 = vsel %vm228, %v11018, %v11025
    %v11028 = vshrl.u32 %v10846, 16
    %v11030 = vrot.slane %v11028, 7
    %v11031 = vrot.slane %v11030, 4
    %v11033 = vshrl.u32 %v10847, 16
    %v11035 = vrot.slane %v11033, 7
    %v11036 = vshll.u32 %v10847, 16
    %v11038 = vor.u32 %v11035, %v11036
    %v11039 = vsel %vm228, %v11031, %v11038
    %v11040 = vrot.slane %v11035, 4
    %v11042 = vshrl.u32 %v10848, 16
    %v11044 = vrot.slane %v11042, 7
    %v11045 = vshll.u32 %v10848, 16
    %v11047 = vor.u32 %v11044, %v11045
    %v11048 = vsel %vm228, %v11040, %v11047
    %v11050 = vshrl.u32 %v10849, 16
    %v11052 = vrot.slane %v11050, 7
    %v11053 = vrot.slane %v11052, 4
    %v11055 = vshrl.u32 %v10850, 16
    %v11057 = vrot.slane %v11055, 7
    %v11058 = vshll.u32 %v10850, 16
    %v11060 = vor.u32 %v11057, %v11058
    %v11061 = vsel %vm228, %v11053, %v11060
    %v11062 = vrot.slane %v11057, 4
    %v11064 = vshrl.u32 %v10851, 16
    %v11066 = vrot.slane %v11064, 7
    %v11067 = vshll.u32 %v10851, 16
    %v11069 = vor.u32 %v11066, %v11067
    %v11070 = vsel %vm228, %v11062, %v11069
    %v11072 = vshrl.u32 %v10852, 16
    %v11074 = vrot.slane %v11072, 7
    %v11075 = vrot.slane %v11074, 4
    %v11077 = vshrl.u32 %v10853, 16
    %v11079 = vrot.slane %v11077, 7
    %v11080 = vshll.u32 %v10853, 16
    %v11082 = vor.u32 %v11079, %v11080
    %v11083 = vsel %vm228, %v11075, %v11082
    %v11084 = vrot.slane %v11079, 4
    %v11086 = vshrl.u32 %v10854, 16
    %v11088 = vrot.slane %v11086, 7
    %v11089 = vshll.u32 %v10854, 16
    %v11091 = vor.u32 %v11088, %v11089
    %v11092 = vsel %vm228, %v11084, %v11091
    %v11094 = vshrl.u32 %v10855, 16
    %v11096 = vrot.slane %v11094, 7
    %v11097 = vrot.slane %v11096, 4
    %v11099 = vshrl.u32 %v10856, 16
    %v11101 = vrot.slane %v11099, 7
    %v11102 = vshll.u32 %v10856, 16
    %v11104 = vor.u32 %v11101, %v11102
    %v11105 = vsel %vm228, %v11097, %v11104
    %v11106 = vrot.slane %v11101, 4
    %v11108 = vshrl.u32 %v10857, 16
    %v11110 = vrot.slane %v11108, 7
    %v11111 = vshll.u32 %v10857, 16
    %v11113 = vor.u32 %v11110, %v11111
    %v11114 = vsel %vm228, %v11106, %v11113
    %v11116 = vshrl.u32 %v10858, 16
    %v11118 = vrot.slane %v11116, 7
    %v11119 = vrot.slane %v11118, 4
    %v11121 = vshrl.u32 %v10859, 16
    %v11123 = vrot.slane %v11121, 7
    %v11124 = vshll.u32 %v10859, 16
    %v11126 = vor.u32 %v11123, %v11124
    %v11127 = vsel %vm228, %v11119, %v11126
    %v11128 = vrot.slane %v11123, 4
    %v11130 = vshrl.u32 %v10860, 16
    %v11132 = vrot.slane %v11130, 7
    %v11133 = vshll.u32 %v10860, 16
    %v11135 = vor.u32 %v11132, %v11133
    %v11136 = vsel %vm228, %v11128, %v11135
    %v11138 = vshrl.u32 %v10861, 16
    %v11140 = vrot.slane %v11138, 7
    %v11141 = vrot.slane %v11140, 4
    %v11143 = vshrl.u32 %v10862, 16
    %v11145 = vrot.slane %v11143, 7
    %v11146 = vshll.u32 %v10862, 16
    %v11148 = vor.u32 %v11145, %v11146
    %v11149 = vsel %vm228, %v11141, %v11148
    %v11150 = vrot.slane %v11145, 4
    %v11152 = vshrl.u32 %v10863, 16
    %v11154 = vrot.slane %v11152, 7
    %v11155 = vshll.u32 %v10863, 16
    %v11157 = vor.u32 %v11154, %v11155
    %v11158 = vsel %vm228, %v11150, %v11157
    %v11160 = vshrl.u32 %v10864, 16
    %v11162 = vrot.slane %v11160, 7
    %v11163 = vrot.slane %v11162, 4
    %v11165 = vshrl.u32 %v10865, 16
    %v11167 = vrot.slane %v11165, 7
    %v11168 = vshll.u32 %v10865, 16
    %v11170 = vor.u32 %v11167, %v11168
    %v11171 = vsel %vm228, %v11163, %v11170
    %v11172 = vrot.slane %v11167, 4
    %v11174 = vshrl.u32 %v10866, 16
    %v11176 = vrot.slane %v11174, 7
    %v11177 = vshll.u32 %v10866, 16
    %v11179 = vor.u32 %v11176, %v11177
    %v11180 = vsel %vm228, %v11172, %v11179
    %v11182 = vshrl.u32 %v10867, 16
    %v11184 = vrot.slane %v11182, 7
    %v11185 = vrot.slane %v11184, 4
    %v11187 = vshrl.u32 %v10868, 16
    %v11189 = vrot.slane %v11187, 7
    %v11190 = vshll.u32 %v10868, 16
    %v11192 = vor.u32 %v11189, %v11190
    %v11193 = vsel %vm228, %v11185, %v11192
    %v11194 = vrot.slane %v11189, 4
    %v11196 = vshrl.u32 %v10869, 16
    %v11198 = vrot.slane %v11196, 7
    %v11199 = vshll.u32 %v10869, 16
    %v11201 = vor.u32 %v11198, %v11199
    %v11202 = vsel %vm228, %v11194, %v11201
    %v11204 = vshrl.u32 %v10870, 16
    %v11206 = vrot.slane %v11204, 7
    %v11207 = vrot.slane %v11206, 4
    %v11209 = vshrl.u32 %v10871, 16
    %v11211 = vrot.slane %v11209, 7
    %v11212 = vshll.u32 %v10871, 16
    %v11214 = vor.u32 %v11211, %v11212
    %v11215 = vsel %vm228, %v11207, %v11214
    %v11216 = vrot.slane %v11211, 4
    %v11218 = vshrl.u32 %v10872, 16
    %v11220 = vrot.slane %v11218, 7
    %v11221 = vshll.u32 %v10872, 16
    %v11223 = vor.u32 %v11220, %v11221
    %v11224 = vsel %vm228, %v11216, %v11223
    %v11225 = vld [vmem:[%s3447 + $0xc] sm:$0x1]
    %v11226 = vld [vmem:[%s3447 + $0x1c] sm:$0x1]
    %v11227 = vld [vmem:[%s3447 + $0x2c] sm:$0x1]
    %v11228 = vld [vmem:[%s3447 + $0x3c] sm:$0x1]
    %v11229 = vld [vmem:[%s3447 + $0x4c] sm:$0x1]
    %v11230 = vld [vmem:[%s3447 + $0x5c] sm:$0x1]
    %v11231 = vld [vmem:[%s3447 + $0x6c] sm:$0x1]
    %v11232 = vld [vmem:[%s3447 + $0x7c] sm:$0x1]
    %v11233 = vld [vmem:[%s3447 + $0x8c] sm:$0x1]
    %v11234 = vld [vmem:[%s3447 + $0x9c] sm:$0x1]
    %v11235 = vld [vmem:[%s3447 + $0xac] sm:$0x1]
    %v11236 = vld [vmem:[%s3447 + $0xbc] sm:$0x1]
    %v11237 = vld [vmem:[%s3447 + $0xcc] sm:$0x1]
    %v11238 = vld [vmem:[%s3447 + $0xdc] sm:$0x1]
    %v11239 = vld [vmem:[%s3447 + $0xec] sm:$0x1]
    %v11240 = vld [vmem:[%s3447 + $0xfc] sm:$0x1]
    %v11241 = vrot.slane %v10879, 4
    %v11242 = vrot.slane %v10882, 5
    %v11243 = vor.u32 %v11241, %v11242
    %v11244 = vrot.slane %v11243, 4
    %v11245 = vrot.slane %v10891, 5
    %v11246 = vsel %vm599, %v11244, %v11245
    %v11247 = vrot.slane %v10888, 4
    %v11248 = vor.u32 %v11247, %v11245
    %v11249 = vrot.slane %v11248, 4
    %v11251 = vshll.u32 %v11225, 16
    %v11253 = vrot.slane %v11251, 5
    %v11254 = vsel %vm599, %v11249, %v11253
    %v11255 = vrot.slane %v10901, 4
    %v11256 = vrot.slane %v10904, 5
    %v11257 = vor.u32 %v11255, %v11256
    %v11258 = vrot.slane %v11257, 4
    %v11259 = vrot.slane %v10913, 5
    %v11260 = vsel %vm599, %v11258, %v11259
    %v11261 = vrot.slane %v10910, 4
    %v11262 = vor.u32 %v11261, %v11259
    %v11263 = vrot.slane %v11262, 4
    %v11265 = vshll.u32 %v11226, 16
    %v11267 = vrot.slane %v11265, 5
    %v11268 = vsel %vm599, %v11263, %v11267
    %v11269 = vrot.slane %v10923, 4
    %v11270 = vrot.slane %v10926, 5
    %v11271 = vor.u32 %v11269, %v11270
    %v11272 = vrot.slane %v11271, 4
    %v11273 = vrot.slane %v10935, 5
    %v11274 = vsel %vm599, %v11272, %v11273
    %v11275 = vrot.slane %v10932, 4
    %v11276 = vor.u32 %v11275, %v11273
    %v11277 = vrot.slane %v11276, 4
    %v11279 = vshll.u32 %v11227, 16
    %v11281 = vrot.slane %v11279, 5
    %v11282 = vsel %vm599, %v11277, %v11281
    %v11283 = vrot.slane %v10945, 4
    %v11284 = vrot.slane %v10948, 5
    %v11285 = vor.u32 %v11283, %v11284
    %v11286 = vrot.slane %v11285, 4
    %v11287 = vrot.slane %v10957, 5
    %v11288 = vsel %vm599, %v11286, %v11287
    %v11289 = vrot.slane %v10954, 4
    %v11290 = vor.u32 %v11289, %v11287
    %v11291 = vrot.slane %v11290, 4
    %v11293 = vshll.u32 %v11228, 16
    %v11295 = vrot.slane %v11293, 5
    %v11296 = vsel %vm599, %v11291, %v11295
    %v11297 = vrot.slane %v10967, 4
    %v11298 = vrot.slane %v10970, 5
    %v11299 = vor.u32 %v11297, %v11298
    %v11300 = vrot.slane %v11299, 4
    %v11301 = vrot.slane %v10979, 5
    %v11302 = vsel %vm599, %v11300, %v11301
    %v11303 = vrot.slane %v10976, 4
    %v11304 = vor.u32 %v11303, %v11301
    %v11305 = vrot.slane %v11304, 4
    %v11307 = vshll.u32 %v11229, 16
    %v11309 = vrot.slane %v11307, 5
    %v11310 = vsel %vm599, %v11305, %v11309
    %v11311 = vrot.slane %v10989, 4
    %v11312 = vrot.slane %v10992, 5
    %v11313 = vor.u32 %v11311, %v11312
    %v11314 = vrot.slane %v11313, 4
    %v11315 = vrot.slane %v11001, 5
    %v11316 = vsel %vm599, %v11314, %v11315
    %v11317 = vrot.slane %v10998, 4
    %v11318 = vor.u32 %v11317, %v11315
    %v11319 = vrot.slane %v11318, 4
    %v11321 = vshll.u32 %v11230, 16
    %v11323 = vrot.slane %v11321, 5
    %v11324 = vsel %vm599, %v11319, %v11323
    %v11325 = vrot.slane %v11011, 4
    %v11326 = vrot.slane %v11014, 5
    %v11327 = vor.u32 %v11325, %v11326
    %v11328 = vrot.slane %v11327, 4
    %v11329 = vrot.slane %v11023, 5
    %v11330 = vsel %vm599, %v11328, %v11329
    %v11331 = vrot.slane %v11020, 4
    %v11332 = vor.u32 %v11331, %v11329
    %v11333 = vrot.slane %v11332, 4
    %v11335 = vshll.u32 %v11231, 16
    %v11337 = vrot.slane %v11335, 5
    %v11338 = vsel %vm599, %v11333, %v11337
    %v11339 = vrot.slane %v11033, 4
    %v11340 = vrot.slane %v11036, 5
    %v11341 = vor.u32 %v11339, %v11340
    %v11342 = vrot.slane %v11341, 4
    %v11343 = vrot.slane %v11045, 5
    %v11344 = vsel %vm599, %v11342, %v11343
    %v11345 = vrot.slane %v11042, 4
    %v11346 = vor.u32 %v11345, %v11343
    %v11347 = vrot.slane %v11346, 4
    %v11349 = vshll.u32 %v11232, 16
    %v11351 = vrot.slane %v11349, 5
    %v11352 = vsel %vm599, %v11347, %v11351
    %v11353 = vrot.slane %v11055, 4
    %v11354 = vrot.slane %v11058, 5
    %v11355 = vor.u32 %v11353, %v11354
    %v11356 = vrot.slane %v11355, 4
    %v11357 = vrot.slane %v11067, 5
    %v11358 = vsel %vm599, %v11356, %v11357
    %v11359 = vrot.slane %v11064, 4
    %v11360 = vor.u32 %v11359, %v11357
    %v11361 = vrot.slane %v11360, 4
    %v11363 = vshll.u32 %v11233, 16
    %v11365 = vrot.slane %v11363, 5
    %v11366 = vsel %vm599, %v11361, %v11365
    %v11367 = vrot.slane %v11077, 4
    %v11368 = vrot.slane %v11080, 5
    %v11369 = vor.u32 %v11367, %v11368
    %v11370 = vrot.slane %v11369, 4
    %v11371 = vrot.slane %v11089, 5
    %v11372 = vsel %vm599, %v11370, %v11371
    %v11373 = vrot.slane %v11086, 4
    %v11374 = vor.u32 %v11373, %v11371
    %v11375 = vrot.slane %v11374, 4
    %v11377 = vshll.u32 %v11234, 16
    %v11379 = vrot.slane %v11377, 5
    %v11380 = vsel %vm599, %v11375, %v11379
    %v11381 = vrot.slane %v11099, 4
    %v11382 = vrot.slane %v11102, 5
    %v11383 = vor.u32 %v11381, %v11382
    %v11384 = vrot.slane %v11383, 4
    %v11385 = vrot.slane %v11111, 5
    %v11386 = vsel %vm599, %v11384, %v11385
    %v11387 = vrot.slane %v11108, 4
    %v11388 = vor.u32 %v11387, %v11385
    %v11389 = vrot.slane %v11388, 4
    %v11391 = vshll.u32 %v11235, 16
    %v11393 = vrot.slane %v11391, 5
    %v11394 = vsel %vm599, %v11389, %v11393
    %v11395 = vrot.slane %v11121, 4
    %v11396 = vrot.slane %v11124, 5
    %v11397 = vor.u32 %v11395, %v11396
    %v11398 = vrot.slane %v11397, 4
    %v11399 = vrot.slane %v11133, 5
    %v11400 = vsel %vm599, %v11398, %v11399
    %v11401 = vrot.slane %v11130, 4
    %v11402 = vor.u32 %v11401, %v11399
    %v11403 = vrot.slane %v11402, 4
    %v11405 = vshll.u32 %v11236, 16
    %v11407 = vrot.slane %v11405, 5
    %v11408 = vsel %vm599, %v11403, %v11407
    %v11409 = vrot.slane %v11143, 4
    %v11410 = vrot.slane %v11146, 5
    %v11411 = vor.u32 %v11409, %v11410
    %v11412 = vrot.slane %v11411, 4
    %v11413 = vrot.slane %v11155, 5
    %v11414 = vsel %vm599, %v11412, %v11413
    %v11415 = vrot.slane %v11152, 4
    %v11416 = vor.u32 %v11415, %v11413
    %v11417 = vrot.slane %v11416, 4
    %v11419 = vshll.u32 %v11237, 16
    %v11421 = vrot.slane %v11419, 5
    %v11422 = vsel %vm599, %v11417, %v11421
    %v11423 = vrot.slane %v11165, 4
    %v11424 = vrot.slane %v11168, 5
    %v11425 = vor.u32 %v11423, %v11424
    %v11426 = vrot.slane %v11425, 4
    %v11427 = vrot.slane %v11177, 5
    %v11428 = vsel %vm599, %v11426, %v11427
    %v11429 = vrot.slane %v11174, 4
    %v11430 = vor.u32 %v11429, %v11427
    %v11431 = vrot.slane %v11430, 4
    %v11433 = vshll.u32 %v11238, 16
    %v11435 = vrot.slane %v11433, 5
    %v11436 = vsel %vm599, %v11431, %v11435
    %v11437 = vrot.slane %v11187, 4
    %v11438 = vrot.slane %v11190, 5
    %v11439 = vor.u32 %v11437, %v11438
    %v11440 = vrot.slane %v11439, 4
    %v11441 = vrot.slane %v11199, 5
    %v11442 = vsel %vm599, %v11440, %v11441
    %v11443 = vrot.slane %v11196, 4
    %v11444 = vor.u32 %v11443, %v11441
    %v11445 = vrot.slane %v11444, 4
    %v11447 = vshll.u32 %v11239, 16
    %v11449 = vrot.slane %v11447, 5
    %v11450 = vsel %vm599, %v11445, %v11449
    %v11451 = vrot.slane %v11209, 4
    %v11452 = vrot.slane %v11212, 5
    %v11453 = vor.u32 %v11451, %v11452
    %v11454 = vrot.slane %v11453, 4
    %v11455 = vrot.slane %v11221, 5
    %v11456 = vsel %vm599, %v11454, %v11455
    %v11457 = vrot.slane %v11218, 4
    %v11458 = vor.u32 %v11457, %v11455
    %v11459 = vrot.slane %v11458, 4
    %v11461 = vshll.u32 %v11240, 16
    %v11463 = vrot.slane %v11461, 5
    %v11464 = vsel %vm599, %v11459, %v11463
    %v11465 = vld [vmem:[%s4760] sm:$0x8]
    %v11466 = vld [vmem:[%s4760 + $0x4] sm:$0xf]
    %v11467 = vld [vmem:[%s4760 + $0x8] sm:$0xf]
    %v11468 = vld [vmem:[%s4760 + $0x10] sm:$0x8]
    %v11469 = vld [vmem:[%s4760 + $0x14] sm:$0xf]
    %v11470 = vld [vmem:[%s4760 + $0x18] sm:$0xf]
    %v11471 = vld [vmem:[%s4760 + $0x20] sm:$0x8]
    %v11472 = vld [vmem:[%s4760 + $0x24] sm:$0xf]
    %v11473 = vld [vmem:[%s4760 + $0x28] sm:$0xf]
    %v11474 = vld [vmem:[%s4760 + $0x30] sm:$0x8]
    %v11475 = vld [vmem:[%s4760 + $0x34] sm:$0xf]
    %v11476 = vld [vmem:[%s4760 + $0x38] sm:$0xf]
    %v11477 = vld [vmem:[%s4760 + $0x40] sm:$0x8]
    %v11478 = vld [vmem:[%s4760 + $0x44] sm:$0xf]
    %v11479 = vld [vmem:[%s4760 + $0x48] sm:$0xf]
    %v11480 = vld [vmem:[%s4760 + $0x50] sm:$0x8]
    %v11481 = vld [vmem:[%s4760 + $0x54] sm:$0xf]
    %v11482 = vld [vmem:[%s4760 + $0x58] sm:$0xf]
    %v11483 = vld [vmem:[%s4760 + $0x60] sm:$0x8]
    %v11484 = vld [vmem:[%s4760 + $0x64] sm:$0xf]
    %v11485 = vld [vmem:[%s4760 + $0x68] sm:$0xf]
    %v11486 = vld [vmem:[%s4760 + $0x70] sm:$0x8]
    %v11487 = vld [vmem:[%s4760 + $0x74] sm:$0xf]
    %v11488 = vld [vmem:[%s4760 + $0x78] sm:$0xf]
    %v11489 = vld [vmem:[%s4760 + $0x80] sm:$0x8]
    %v11490 = vld [vmem:[%s4760 + $0x84] sm:$0xf]
    %v11491 = vld [vmem:[%s4760 + $0x88] sm:$0xf]
    %v11492 = vld [vmem:[%s4760 + $0x90] sm:$0x8]
    %v11493 = vld [vmem:[%s4760 + $0x94] sm:$0xf]
    %v11494 = vld [vmem:[%s4760 + $0x98] sm:$0xf]
    %v11495 = vld [vmem:[%s4760 + $0xa0] sm:$0x8]
    %v11496 = vld [vmem:[%s4760 + $0xa4] sm:$0xf]
    %v11497 = vld [vmem:[%s4760 + $0xa8] sm:$0xf]
    %v11498 = vld [vmem:[%s4760 + $0xb0] sm:$0x8]
    %v11499 = vld [vmem:[%s4760 + $0xb4] sm:$0xf]
    %v11500 = vld [vmem:[%s4760 + $0xb8] sm:$0xf]
    %v11501 = vld [vmem:[%s4760 + $0xc0] sm:$0x8]
    %v11502 = vld [vmem:[%s4760 + $0xc4] sm:$0xf]
    %v11503 = vld [vmem:[%s4760 + $0xc8] sm:$0xf]
    %v11504 = vld [vmem:[%s4760 + $0xd0] sm:$0x8]
    %v11505 = vld [vmem:[%s4760 + $0xd4] sm:$0xf]
    %v11506 = vld [vmem:[%s4760 + $0xd8] sm:$0xf]
    %v11507 = vld [vmem:[%s4760 + $0xe0] sm:$0x8]
    %v11508 = vld [vmem:[%s4760 + $0xe4] sm:$0xf]
    %v11509 = vld [vmem:[%s4760 + $0xe8] sm:$0xf]
    %v11510 = vld [vmem:[%s4760 + $0xf0] sm:$0x8]
    %v11511 = vld [vmem:[%s4760 + $0xf4] sm:$0xf]
    %v11512 = vld [vmem:[%s4760 + $0xf8] sm:$0xf]
    %v11514 = vshrl.u32 %v11465, 16
    %v11516 = vrot.slane %v11514, 7
    %v11517 = vrot.slane %v11516, 4
    %v11519 = vshrl.u32 %v11466, 16
    %v11521 = vrot.slane %v11519, 7
    %v11522 = vshll.u32 %v11466, 16
    %v11524 = vor.u32 %v11521, %v11522
    %v11525 = vsel %vm228, %v11517, %v11524
    %v11526 = vrot.slane %v11521, 4
    %v11528 = vshrl.u32 %v11467, 16
    %v11530 = vrot.slane %v11528, 7
    %v11531 = vshll.u32 %v11467, 16
    %v11533 = vor.u32 %v11530, %v11531
    %v11534 = vsel %vm228, %v11526, %v11533
    %v11536 = vshrl.u32 %v11468, 16
    %v11538 = vrot.slane %v11536, 7
    %v11539 = vrot.slane %v11538, 4
    %v11541 = vshrl.u32 %v11469, 16
    %v11543 = vrot.slane %v11541, 7
    %v11544 = vshll.u32 %v11469, 16
    %v11546 = vor.u32 %v11543, %v11544
    %v11547 = vsel %vm228, %v11539, %v11546
    %v11548 = vrot.slane %v11543, 4
    %v11550 = vshrl.u32 %v11470, 16
    %v11552 = vrot.slane %v11550, 7
    %v11553 = vshll.u32 %v11470, 16
    %v11555 = vor.u32 %v11552, %v11553
    %v11556 = vsel %vm228, %v11548, %v11555
    %v11558 = vshrl.u32 %v11471, 16
    %v11560 = vrot.slane %v11558, 7
    %v11561 = vrot.slane %v11560, 4
    %v11563 = vshrl.u32 %v11472, 16
    %v11565 = vrot.slane %v11563, 7
    %v11566 = vshll.u32 %v11472, 16
    %v11568 = vor.u32 %v11565, %v11566
    %v11569 = vsel %vm228, %v11561, %v11568
    %v11570 = vrot.slane %v11565, 4
    %v11572 = vshrl.u32 %v11473, 16
    %v11574 = vrot.slane %v11572, 7
    %v11575 = vshll.u32 %v11473, 16
    %v11577 = vor.u32 %v11574, %v11575
    %v11578 = vsel %vm228, %v11570, %v11577
    %v11580 = vshrl.u32 %v11474, 16
    %v11582 = vrot.slane %v11580, 7
    %v11583 = vrot.slane %v11582, 4
    %v11585 = vshrl.u32 %v11475, 16
    %v11587 = vrot.slane %v11585, 7
    %v11588 = vshll.u32 %v11475, 16
    %v11590 = vor.u32 %v11587, %v11588
    %v11591 = vsel %vm228, %v11583, %v11590
    %v11592 = vrot.slane %v11587, 4
    %v11594 = vshrl.u32 %v11476, 16
    %v11596 = vrot.slane %v11594, 7
    %v11597 = vshll.u32 %v11476, 16
    %v11599 = vor.u32 %v11596, %v11597
    %v11600 = vsel %vm228, %v11592, %v11599
    %v11602 = vshrl.u32 %v11477, 16
    %v11604 = vrot.slane %v11602, 7
    %v11605 = vrot.slane %v11604, 4
    %v11607 = vshrl.u32 %v11478, 16
    %v11609 = vrot.slane %v11607, 7
    %v11610 = vshll.u32 %v11478, 16
    %v11612 = vor.u32 %v11609, %v11610
    %v11613 = vsel %vm228, %v11605, %v11612
    %v11614 = vrot.slane %v11609, 4
    %v11616 = vshrl.u32 %v11479, 16
    %v11618 = vrot.slane %v11616, 7
    %v11619 = vshll.u32 %v11479, 16
    %v11621 = vor.u32 %v11618, %v11619
    %v11622 = vsel %vm228, %v11614, %v11621
    %v11624 = vshrl.u32 %v11480, 16
    %v11626 = vrot.slane %v11624, 7
    %v11627 = vrot.slane %v11626, 4
    %v11629 = vshrl.u32 %v11481, 16
    %v11631 = vrot.slane %v11629, 7
    %v11632 = vshll.u32 %v11481, 16
    %v11634 = vor.u32 %v11631, %v11632
    %v11635 = vsel %vm228, %v11627, %v11634
    %v11636 = vrot.slane %v11631, 4
    %v11638 = vshrl.u32 %v11482, 16
    %v11640 = vrot.slane %v11638, 7
    %v11641 = vshll.u32 %v11482, 16
    %v11643 = vor.u32 %v11640, %v11641
    %v11644 = vsel %vm228, %v11636, %v11643
    %v11646 = vshrl.u32 %v11483, 16
    %v11648 = vrot.slane %v11646, 7
    %v11649 = vrot.slane %v11648, 4
    %v11651 = vshrl.u32 %v11484, 16
    %v11653 = vrot.slane %v11651, 7
    %v11654 = vshll.u32 %v11484, 16
    %v11656 = vor.u32 %v11653, %v11654
    %v11657 = vsel %vm228, %v11649, %v11656
    %v11658 = vrot.slane %v11653, 4
    %v11660 = vshrl.u32 %v11485, 16
    %v11662 = vrot.slane %v11660, 7
    %v11663 = vshll.u32 %v11485, 16
    %v11665 = vor.u32 %v11662, %v11663
    %v11666 = vsel %vm228, %v11658, %v11665
    %v11668 = vshrl.u32 %v11486, 16
    %v11670 = vrot.slane %v11668, 7
    %v11671 = vrot.slane %v11670, 4
    %v11673 = vshrl.u32 %v11487, 16
    %v11675 = vrot.slane %v11673, 7
    %v11676 = vshll.u32 %v11487, 16
    %v11678 = vor.u32 %v11675, %v11676
    %v11679 = vsel %vm228, %v11671, %v11678
    %v11680 = vrot.slane %v11675, 4
    %v11682 = vshrl.u32 %v11488, 16
    %v11684 = vrot.slane %v11682, 7
    %v11685 = vshll.u32 %v11488, 16
    %v11687 = vor.u32 %v11684, %v11685
    %v11688 = vsel %vm228, %v11680, %v11687
    %v11690 = vshrl.u32 %v11489, 16
    %v11692 = vrot.slane %v11690, 7
    %v11693 = vrot.slane %v11692, 4
    %v11695 = vshrl.u32 %v11490, 16
    %v11697 = vrot.slane %v11695, 7
    %v11698 = vshll.u32 %v11490, 16
    %v11700 = vor.u32 %v11697, %v11698
    %v11701 = vsel %vm228, %v11693, %v11700
    %v11702 = vrot.slane %v11697, 4
    %v11704 = vshrl.u32 %v11491, 16
    %v11706 = vrot.slane %v11704, 7
    %v11707 = vshll.u32 %v11491, 16
    %v11709 = vor.u32 %v11706, %v11707
    %v11710 = vsel %vm228, %v11702, %v11709
    %v11712 = vshrl.u32 %v11492, 16
    %v11714 = vrot.slane %v11712, 7
    %v11715 = vrot.slane %v11714, 4
    %v11717 = vshrl.u32 %v11493, 16
    %v11719 = vrot.slane %v11717, 7
    %v11720 = vshll.u32 %v11493, 16
    %v11722 = vor.u32 %v11719, %v11720
    %v11723 = vsel %vm228, %v11715, %v11722
    %v11724 = vrot.slane %v11719, 4
    %v11726 = vshrl.u32 %v11494, 16
    %v11728 = vrot.slane %v11726, 7
    %v11729 = vshll.u32 %v11494, 16
    %v11731 = vor.u32 %v11728, %v11729
    %v11732 = vsel %vm228, %v11724, %v11731
    %v11734 = vshrl.u32 %v11495, 16
    %v11736 = vrot.slane %v11734, 7
    %v11737 = vrot.slane %v11736, 4
    %v11739 = vshrl.u32 %v11496, 16
    %v11741 = vrot.slane %v11739, 7
    %v11742 = vshll.u32 %v11496, 16
    %v11744 = vor.u32 %v11741, %v11742
    %v11745 = vsel %vm228, %v11737, %v11744
    %v11746 = vrot.slane %v11741, 4
    %v11748 = vshrl.u32 %v11497, 16
    %v11750 = vrot.slane %v11748, 7
    %v11751 = vshll.u32 %v11497, 16
    %v11753 = vor.u32 %v11750, %v11751
    %v11754 = vsel %vm228, %v11746, %v11753
    %v11756 = vshrl.u32 %v11498, 16
    %v11758 = vrot.slane %v11756, 7
    %v11759 = vrot.slane %v11758, 4
    %v11761 = vshrl.u32 %v11499, 16
    %v11763 = vrot.slane %v11761, 7
    %v11764 = vshll.u32 %v11499, 16
    %v11766 = vor.u32 %v11763, %v11764
    %v11767 = vsel %vm228, %v11759, %v11766
    %v11768 = vrot.slane %v11763, 4
    %v11770 = vshrl.u32 %v11500, 16
    %v11772 = vrot.slane %v11770, 7
    %v11773 = vshll.u32 %v11500, 16
    %v11775 = vor.u32 %v11772, %v11773
    %v11776 = vsel %vm228, %v11768, %v11775
    %v11778 = vshrl.u32 %v11501, 16
    %v11780 = vrot.slane %v11778, 7
    %v11781 = vrot.slane %v11780, 4
    %v11783 = vshrl.u32 %v11502, 16
    %v11785 = vrot.slane %v11783, 7
    %v11786 = vshll.u32 %v11502, 16
    %v11788 = vor.u32 %v11785, %v11786
    %v11789 = vsel %vm228, %v11781, %v11788
    %v11790 = vrot.slane %v11785, 4
    %v11792 = vshrl.u32 %v11503, 16
    %v11794 = vrot.slane %v11792, 7
    %v11795 = vshll.u32 %v11503, 16
    %v11797 = vor.u32 %v11794, %v11795
    %v11798 = vsel %vm228, %v11790, %v11797
    %v11800 = vshrl.u32 %v11504, 16
    %v11802 = vrot.slane %v11800, 7
    %v11803 = vrot.slane %v11802, 4
    %v11805 = vshrl.u32 %v11505, 16
    %v11807 = vrot.slane %v11805, 7
    %v11808 = vshll.u32 %v11505, 16
    %v11810 = vor.u32 %v11807, %v11808
    %v11811 = vsel %vm228, %v11803, %v11810
    %v11812 = vrot.slane %v11807, 4
    %v11814 = vshrl.u32 %v11506, 16
    %v11816 = vrot.slane %v11814, 7
    %v11817 = vshll.u32 %v11506, 16
    %v11819 = vor.u32 %v11816, %v11817
    %v11820 = vsel %vm228, %v11812, %v11819
    %v11822 = vshrl.u32 %v11507, 16
    %v11824 = vrot.slane %v11822, 7
    %v11825 = vrot.slane %v11824, 4
    %v11827 = vshrl.u32 %v11508, 16
    %v11829 = vrot.slane %v11827, 7
    %v11830 = vshll.u32 %v11508, 16
    %v11832 = vor.u32 %v11829, %v11830
    %v11833 = vsel %vm228, %v11825, %v11832
    %v11834 = vrot.slane %v11829, 4
    %v11836 = vshrl.u32 %v11509, 16
    %v11838 = vrot.slane %v11836, 7
    %v11839 = vshll.u32 %v11509, 16
    %v11841 = vor.u32 %v11838, %v11839
    %v11842 = vsel %vm228, %v11834, %v11841
    %v11844 = vshrl.u32 %v11510, 16
    %v11846 = vrot.slane %v11844, 7
    %v11847 = vrot.slane %v11846, 4
    %v11849 = vshrl.u32 %v11511, 16
    %v11851 = vrot.slane %v11849, 7
    %v11852 = vshll.u32 %v11511, 16
    %v11854 = vor.u32 %v11851, %v11852
    %v11855 = vsel %vm228, %v11847, %v11854
    %v11856 = vrot.slane %v11851, 4
    %v11858 = vshrl.u32 %v11512, 16
    %v11860 = vrot.slane %v11858, 7
    %v11861 = vshll.u32 %v11512, 16
    %v11863 = vor.u32 %v11860, %v11861
    %v11864 = vsel %vm228, %v11856, %v11863
    %v11865 = vld [vmem:[%s4760 + $0xc] sm:$0x1]
    %v11866 = vld [vmem:[%s4760 + $0x1c] sm:$0x1]
    %v11867 = vld [vmem:[%s4760 + $0x2c] sm:$0x1]
    %v11868 = vld [vmem:[%s4760 + $0x3c] sm:$0x1]
    %v11869 = vld [vmem:[%s4760 + $0x4c] sm:$0x1]
    %v11870 = vld [vmem:[%s4760 + $0x5c] sm:$0x1]
    %v11871 = vld [vmem:[%s4760 + $0x6c] sm:$0x1]
    %v11872 = vld [vmem:[%s4760 + $0x7c] sm:$0x1]
    %v11873 = vld [vmem:[%s4760 + $0x8c] sm:$0x1]
    %v11874 = vld [vmem:[%s4760 + $0x9c] sm:$0x1]
    %v11875 = vld [vmem:[%s4760 + $0xac] sm:$0x1]
    %v11876 = vld [vmem:[%s4760 + $0xbc] sm:$0x1]
    %v11877 = vld [vmem:[%s4760 + $0xcc] sm:$0x1]
    %v11878 = vld [vmem:[%s4760 + $0xdc] sm:$0x1]
    %v11879 = vld [vmem:[%s4760 + $0xec] sm:$0x1]
    %v11880 = vld [vmem:[%s4760 + $0xfc] sm:$0x1]
    %v11881 = vrot.slane %v11519, 4
    %v11882 = vrot.slane %v11522, 5
    %v11883 = vor.u32 %v11881, %v11882
    %v11884 = vrot.slane %v11883, 4
    %v11885 = vrot.slane %v11531, 5
    %v11886 = vsel %vm599, %v11884, %v11885
    %v11887 = vrot.slane %v11528, 4
    %v11888 = vor.u32 %v11887, %v11885
    %v11889 = vrot.slane %v11888, 4
    %v11891 = vshll.u32 %v11865, 16
    %v11893 = vrot.slane %v11891, 5
    %v11894 = vsel %vm599, %v11889, %v11893
    %v11895 = vrot.slane %v11541, 4
    %v11896 = vrot.slane %v11544, 5
    %v11897 = vor.u32 %v11895, %v11896
    %v11898 = vrot.slane %v11897, 4
    %v11899 = vrot.slane %v11553, 5
    %v11900 = vsel %vm599, %v11898, %v11899
    %v11901 = vrot.slane %v11550, 4
    %v11902 = vor.u32 %v11901, %v11899
    %v11903 = vrot.slane %v11902, 4
    %v11905 = vshll.u32 %v11866, 16
    %v11907 = vrot.slane %v11905, 5
    %v11908 = vsel %vm599, %v11903, %v11907
    %v11909 = vrot.slane %v11563, 4
    %v11910 = vrot.slane %v11566, 5
    %v11911 = vor.u32 %v11909, %v11910
    %v11912 = vrot.slane %v11911, 4
    %v11913 = vrot.slane %v11575, 5
    %v11914 = vsel %vm599, %v11912, %v11913
    %v11915 = vrot.slane %v11572, 4
    %v11916 = vor.u32 %v11915, %v11913
    %v11917 = vrot.slane %v11916, 4
    %v11919 = vshll.u32 %v11867, 16
    %v11921 = vrot.slane %v11919, 5
    %v11922 = vsel %vm599, %v11917, %v11921
    %v11923 = vrot.slane %v11585, 4
    %v11924 = vrot.slane %v11588, 5
    %v11925 = vor.u32 %v11923, %v11924
    %v11926 = vrot.slane %v11925, 4
    %v11927 = vrot.slane %v11597, 5
    %v11928 = vsel %vm599, %v11926, %v11927
    %v11929 = vrot.slane %v11594, 4
    %v11930 = vor.u32 %v11929, %v11927
    %v11931 = vrot.slane %v11930, 4
    %v11933 = vshll.u32 %v11868, 16
    %v11935 = vrot.slane %v11933, 5
    %v11936 = vsel %vm599, %v11931, %v11935
    %v11937 = vrot.slane %v11607, 4
    %v11938 = vrot.slane %v11610, 5
    %v11939 = vor.u32 %v11937, %v11938
    %v11940 = vrot.slane %v11939, 4
    %v11941 = vrot.slane %v11619, 5
    %v11942 = vsel %vm599, %v11940, %v11941
    %v11943 = vrot.slane %v11616, 4
    %v11944 = vor.u32 %v11943, %v11941
    %v11945 = vrot.slane %v11944, 4
    %v11947 = vshll.u32 %v11869, 16
    %v11949 = vrot.slane %v11947, 5
    %v11950 = vsel %vm599, %v11945, %v11949
    %v11951 = vrot.slane %v11629, 4
    %v11952 = vrot.slane %v11632, 5
    %v11953 = vor.u32 %v11951, %v11952
    %v11954 = vrot.slane %v11953, 4
    %v11955 = vrot.slane %v11641, 5
    %v11956 = vsel %vm599, %v11954, %v11955
    %v11957 = vrot.slane %v11638, 4
    %v11958 = vor.u32 %v11957, %v11955
    %v11959 = vrot.slane %v11958, 4
    %v11961 = vshll.u32 %v11870, 16
    %v11963 = vrot.slane %v11961, 5
    %v11964 = vsel %vm599, %v11959, %v11963
    %v11965 = vrot.slane %v11651, 4
    %v11966 = vrot.slane %v11654, 5
    %v11967 = vor.u32 %v11965, %v11966
    %v11968 = vrot.slane %v11967, 4
    %v11969 = vrot.slane %v11663, 5
    %v11970 = vsel %vm599, %v11968, %v11969
    %v11971 = vrot.slane %v11660, 4
    %v11972 = vor.u32 %v11971, %v11969
    %v11973 = vrot.slane %v11972, 4
    %v11975 = vshll.u32 %v11871, 16
    %v11977 = vrot.slane %v11975, 5
    %v11978 = vsel %vm599, %v11973, %v11977
    %v11979 = vrot.slane %v11673, 4
    %v11980 = vrot.slane %v11676, 5
    %v11981 = vor.u32 %v11979, %v11980
    %v11982 = vrot.slane %v11981, 4
    %v11983 = vrot.slane %v11685, 5
    %v11984 = vsel %vm599, %v11982, %v11983
    %v11985 = vrot.slane %v11682, 4
    %v11986 = vor.u32 %v11985, %v11983
    %v11987 = vrot.slane %v11986, 4
    %v11989 = vshll.u32 %v11872, 16
    %v11991 = vrot.slane %v11989, 5
    %v11992 = vsel %vm599, %v11987, %v11991
    %v11993 = vrot.slane %v11695, 4
    %v11994 = vrot.slane %v11698, 5
    %v11995 = vor.u32 %v11993, %v11994
    %v11996 = vrot.slane %v11995, 4
    %v11997 = vrot.slane %v11707, 5
    %v11998 = vsel %vm599, %v11996, %v11997
    %v11999 = vrot.slane %v11704, 4
    %v12000 = vor.u32 %v11999, %v11997
    %v12001 = vrot.slane %v12000, 4
    %v12003 = vshll.u32 %v11873, 16
    %v12005 = vrot.slane %v12003, 5
    %v12006 = vsel %vm599, %v12001, %v12005
    %v12007 = vrot.slane %v11717, 4
    %v12008 = vrot.slane %v11720, 5
    %v12009 = vor.u32 %v12007, %v12008
    %v12010 = vrot.slane %v12009, 4
    %v12011 = vrot.slane %v11729, 5
    %v12012 = vsel %vm599, %v12010, %v12011
    %v12013 = vrot.slane %v11726, 4
    %v12014 = vor.u32 %v12013, %v12011
    %v12015 = vrot.slane %v12014, 4
    %v12017 = vshll.u32 %v11874, 16
    %v12019 = vrot.slane %v12017, 5
    %v12020 = vsel %vm599, %v12015, %v12019
    %v12021 = vrot.slane %v11739, 4
    %v12022 = vrot.slane %v11742, 5
    %v12023 = vor.u32 %v12021, %v12022
    %v12024 = vrot.slane %v12023, 4
    %v12025 = vrot.slane %v11751, 5
    %v12026 = vsel %vm599, %v12024, %v12025
    %v12027 = vrot.slane %v11748, 4
    %v12028 = vor.u32 %v12027, %v12025
    %v12029 = vrot.slane %v12028, 4
    %v12031 = vshll.u32 %v11875, 16
    %v12033 = vrot.slane %v12031, 5
    %v12034 = vsel %vm599, %v12029, %v12033
    %v12035 = vrot.slane %v11761, 4
    %v12036 = vrot.slane %v11764, 5
    %v12037 = vor.u32 %v12035, %v12036
    %v12038 = vrot.slane %v12037, 4
    %v12039 = vrot.slane %v11773, 5
    %v12040 = vsel %vm599, %v12038, %v12039
    %v12041 = vrot.slane %v11770, 4
    %v12042 = vor.u32 %v12041, %v12039
    %v12043 = vrot.slane %v12042, 4
    %v12045 = vshll.u32 %v11876, 16
    %v12047 = vrot.slane %v12045, 5
    %v12048 = vsel %vm599, %v12043, %v12047
    %v12049 = vrot.slane %v11783, 4
    %v12050 = vrot.slane %v11786, 5
    %v12051 = vor.u32 %v12049, %v12050
    %v12052 = vrot.slane %v12051, 4
    %v12053 = vrot.slane %v11795, 5
    %v12054 = vsel %vm599, %v12052, %v12053
    %v12055 = vrot.slane %v11792, 4
    %v12056 = vor.u32 %v12055, %v12053
    %v12057 = vrot.slane %v12056, 4
    %v12059 = vshll.u32 %v11877, 16
    %v12061 = vrot.slane %v12059, 5
    %v12062 = vsel %vm599, %v12057, %v12061
    %v12063 = vrot.slane %v11805, 4
    %v12064 = vrot.slane %v11808, 5
    %v12065 = vor.u32 %v12063, %v12064
    %v12066 = vrot.slane %v12065, 4
    %v12067 = vrot.slane %v11817, 5
    %v12068 = vsel %vm599, %v12066, %v12067
    %v12069 = vrot.slane %v11814, 4
    %v12070 = vor.u32 %v12069, %v12067
    %v12071 = vrot.slane %v12070, 4
    %v12073 = vshll.u32 %v11878, 16
    %v12075 = vrot.slane %v12073, 5
    %v12076 = vsel %vm599, %v12071, %v12075
    %v12077 = vrot.slane %v11827, 4
    %v12078 = vrot.slane %v11830, 5
    %v12079 = vor.u32 %v12077, %v12078
    %v12080 = vrot.slane %v12079, 4
    %v12081 = vrot.slane %v11839, 5
    %v12082 = vsel %vm599, %v12080, %v12081
    %v12083 = vrot.slane %v11836, 4
    %v12084 = vor.u32 %v12083, %v12081
    %v12085 = vrot.slane %v12084, 4
    %v12087 = vshll.u32 %v11879, 16
    %v12089 = vrot.slane %v12087, 5
    %v12090 = vsel %vm599, %v12085, %v12089
    %v12091 = vrot.slane %v11849, 4
    %v12092 = vrot.slane %v11852, 5
    %v12093 = vor.u32 %v12091, %v12092
    %v12094 = vrot.slane %v12093, 4
    %v12095 = vrot.slane %v11861, 5
    %v12096 = vsel %vm599, %v12094, %v12095
    %v12097 = vrot.slane %v11858, 4
    %v12098 = vor.u32 %v12097, %v12095
    %v12099 = vrot.slane %v12098, 4
    %v12101 = vshll.u32 %v11880, 16
    %v12103 = vrot.slane %v12101, 5
    %v12104 = vsel %vm599, %v12099, %v12103
    %v12105 = vunpack.c.l.b16 %v10245
    %v12106 = vunpack.c.l.b16 %v10254
    %v12107 = vunpack.c.l.b16 %v10267
    %v12108 = vunpack.c.l.b16 %v10276
    %v12109 = vunpack.c.l.b16 %v10289
    %v12110 = vunpack.c.l.b16 %v10298
    %v12111 = vunpack.c.l.b16 %v10311
    %v12112 = vunpack.c.l.b16 %v10320
    %v12113 = vunpack.c.l.b16 %v10333
    %v12114 = vunpack.c.l.b16 %v10342
    %v12115 = vunpack.c.l.b16 %v10355
    %v12116 = vunpack.c.l.b16 %v10364
    %v12117 = vunpack.c.l.b16 %v10377
    %v12118 = vunpack.c.l.b16 %v10386
    %v12119 = vunpack.c.l.b16 %v10399
    %v12120 = vunpack.c.l.b16 %v10408
    %v12121 = vunpack.c.l.b16 %v10421
    %v12122 = vunpack.c.l.b16 %v10430
    %v12123 = vunpack.c.l.b16 %v10443
    %v12124 = vunpack.c.l.b16 %v10452
    %v12125 = vunpack.c.l.b16 %v10465
    %v12126 = vunpack.c.l.b16 %v10474
    %v12127 = vunpack.c.l.b16 %v10487
    %v12128 = vunpack.c.l.b16 %v10496
    %v12129 = vunpack.c.l.b16 %v10509
    %v12130 = vunpack.c.l.b16 %v10518
    %v12131 = vunpack.c.l.b16 %v10531
    %v12132 = vunpack.c.l.b16 %v10540
    %v12133 = vunpack.c.l.b16 %v10553
    %v12134 = vunpack.c.l.b16 %v10562
    %v12135 = vunpack.c.l.b16 %v10575
    %v12136 = vunpack.c.l.b16 %v10584
    %v12137 = vpack.c.b16 %v12106, %v12105
    %v12138 = vpack.c.b16 %v12108, %v12107
    %v12139 = vpack.c.b16 %v12110, %v12109
    %v12140 = vpack.c.b16 %v12112, %v12111
    %v12141 = vpack.c.b16 %v12114, %v12113
    %v12142 = vpack.c.b16 %v12116, %v12115
    %v12143 = vpack.c.b16 %v12118, %v12117
    %v12144 = vpack.c.b16 %v12120, %v12119
    %v12145 = vpack.c.b16 %v12122, %v12121
    %v12146 = vpack.c.b16 %v12124, %v12123
    %v12147 = vpack.c.b16 %v12126, %v12125
    %v12148 = vpack.c.b16 %v12128, %v12127
    %v12149 = vpack.c.b16 %v12130, %v12129
    %v12150 = vpack.c.b16 %v12132, %v12131
    %v12151 = vpack.c.b16 %v12134, %v12133
    %v12152 = vpack.c.b16 %v12136, %v12135
    %v12185 = vunpack.c.l.b16 %v10186
    %v12186 = vunpack.c.l.b16 %v10187
    %v12187 = vunpack.c.l.b16 %v10189
    %v12188 = vunpack.c.l.b16 %v10190
    %v12189 = vunpack.c.l.b16 %v10192
    %v12190 = vunpack.c.l.b16 %v10193
    %v12191 = vunpack.c.l.b16 %v10195
    %v12192 = vunpack.c.l.b16 %v10196
    %v12193 = vunpack.c.l.b16 %v10198
    %v12194 = vunpack.c.l.b16 %v10199
    %v12195 = vunpack.c.l.b16 %v10201
    %v12196 = vunpack.c.l.b16 %v10202
    %v12197 = vunpack.c.l.b16 %v10204
    %v12198 = vunpack.c.l.b16 %v10205
    %v12199 = vunpack.c.l.b16 %v10207
    %v12200 = vunpack.c.l.b16 %v10208
    %v12201 = vunpack.c.l.b16 %v10210
    %v12202 = vunpack.c.l.b16 %v10211
    %v12203 = vunpack.c.l.b16 %v10213
    %v12204 = vunpack.c.l.b16 %v10214
    %v12205 = vunpack.c.l.b16 %v10216
    %v12206 = vunpack.c.l.b16 %v10217
    %v12207 = vunpack.c.l.b16 %v10219
    %v12208 = vunpack.c.l.b16 %v10220
    %v12209 = vunpack.c.l.b16 %v10222
    %v12210 = vunpack.c.l.b16 %v10223
    %v12211 = vunpack.c.l.b16 %v10225
    %v12212 = vunpack.c.l.b16 %v10226
    %v12213 = vunpack.c.l.b16 %v10228
    %v12214 = vunpack.c.l.b16 %v10229
    %v12215 = vunpack.c.l.b16 %v10231
    %v12216 = vunpack.c.l.b16 %v10232
    %v12217 = vpack.c.b16 %v12186, %v12185
    %v12218 = vpack.c.b16 %v12188, %v12187
    %v12219 = vpack.c.b16 %v12190, %v12189
    %v12220 = vpack.c.b16 %v12192, %v12191
    %v12221 = vpack.c.b16 %v12194, %v12193
    %v12222 = vpack.c.b16 %v12196, %v12195
    %v12223 = vpack.c.b16 %v12198, %v12197
    %v12224 = vpack.c.b16 %v12200, %v12199
    %v12225 = vpack.c.b16 %v12202, %v12201
    %v12226 = vpack.c.b16 %v12204, %v12203
    %v12227 = vpack.c.b16 %v12206, %v12205
    %v12228 = vpack.c.b16 %v12208, %v12207
    %v12229 = vpack.c.b16 %v12210, %v12209
    %v12230 = vpack.c.b16 %v12212, %v12211
    %v12231 = vpack.c.b16 %v12214, %v12213
    %v12232 = vpack.c.b16 %v12216, %v12215
    %12233 = vrot.lane.b32.xlu0 %v12217, 4
    %v12234 = vpop.permute.xlu0 %12233
    %12235 = vrot.lane.b32.xlu0 %v12218, 4
    %v12236 = vpop.permute.xlu0 %12235
    %12237 = vrot.lane.b32.xlu0 %v12219, 4
    %v12238 = vpop.permute.xlu0 %12237
    %12239 = vrot.lane.b32.xlu0 %v12220, 4
    %v12240 = vpop.permute.xlu0 %12239
    %12241 = vrot.lane.b32.xlu0 %v12221, 4
    %v12242 = vpop.permute.xlu0 %12241
    %12243 = vrot.lane.b32.xlu0 %v12222, 4
    %v12244 = vpop.permute.xlu0 %12243
    %12245 = vrot.lane.b32.xlu0 %v12223, 4
    %v12246 = vpop.permute.xlu0 %12245
    %12247 = vrot.lane.b32.xlu0 %v12224, 4
    %v12248 = vpop.permute.xlu0 %12247
    %12249 = vrot.lane.b32.xlu0 %v12225, 4
    %v12250 = vpop.permute.xlu0 %12249
    %12251 = vrot.lane.b32.xlu0 %v12226, 4
    %v12252 = vpop.permute.xlu0 %12251
    %12253 = vrot.lane.b32.xlu0 %v12227, 4
    %v12254 = vpop.permute.xlu0 %12253
    %12255 = vrot.lane.b32.xlu0 %v12228, 4
    %v12256 = vpop.permute.xlu0 %12255
    %12257 = vrot.lane.b32.xlu0 %v12229, 4
    %v12258 = vpop.permute.xlu0 %12257
    %12259 = vrot.lane.b32.xlu0 %v12230, 4
    %v12260 = vpop.permute.xlu0 %12259
    %12261 = vrot.lane.b32.xlu0 %v12231, 4
    %v12262 = vpop.permute.xlu0 %12261
    %12263 = vrot.lane.b32.xlu0 %v12232, 4
    %v12264 = vpop.permute.xlu0 %12263
    %v12265 = vunpack.c.l.b16 %v10606
    %v12266 = vunpack.c.l.b16 %v10614
    %v12267 = vunpack.c.l.b16 %v10620
    %v12268 = vunpack.c.l.b16 %v10628
    %v12269 = vunpack.c.l.b16 %v10634
    %v12270 = vunpack.c.l.b16 %v10642
    %v12271 = vunpack.c.l.b16 %v10648
    %v12272 = vunpack.c.l.b16 %v10656
    %v12273 = vunpack.c.l.b16 %v10662
    %v12274 = vunpack.c.l.b16 %v10670
    %v12275 = vunpack.c.l.b16 %v10676
    %v12276 = vunpack.c.l.b16 %v10684
    %v12277 = vunpack.c.l.b16 %v10690
    %v12278 = vunpack.c.l.b16 %v10698
    %v12279 = vunpack.c.l.b16 %v10704
    %v12280 = vunpack.c.l.b16 %v10712
    %v12281 = vunpack.c.l.b16 %v10718
    %v12282 = vunpack.c.l.b16 %v10726
    %v12283 = vunpack.c.l.b16 %v10732
    %v12284 = vunpack.c.l.b16 %v10740
    %v12285 = vunpack.c.l.b16 %v10746
    %v12286 = vunpack.c.l.b16 %v10754
    %v12287 = vunpack.c.l.b16 %v10760
    %v12288 = vunpack.c.l.b16 %v10768
    %v12289 = vunpack.c.l.b16 %v10774
    %v12290 = vunpack.c.l.b16 %v10782
    %v12291 = vunpack.c.l.b16 %v10788
    %v12292 = vunpack.c.l.b16 %v10796
    %v12293 = vunpack.c.l.b16 %v10802
    %v12294 = vunpack.c.l.b16 %v10810
    %v12295 = vunpack.c.l.b16 %v10816
    %v12296 = vunpack.c.l.b16 %v10824
    %v12297 = vpack.c.b16 %v12266, %v12265
    %v12298 = vpack.c.b16 %v12268, %v12267
    %v12299 = vpack.c.b16 %v12270, %v12269
    %v12300 = vpack.c.b16 %v12272, %v12271
    %v12301 = vpack.c.b16 %v12274, %v12273
    %v12302 = vpack.c.b16 %v12276, %v12275
    %v12303 = vpack.c.b16 %v12278, %v12277
    %v12304 = vpack.c.b16 %v12280, %v12279
    %v12305 = vpack.c.b16 %v12282, %v12281
    %v12306 = vpack.c.b16 %v12284, %v12283
    %v12307 = vpack.c.b16 %v12286, %v12285
    %v12308 = vpack.c.b16 %v12288, %v12287
    %v12309 = vpack.c.b16 %v12290, %v12289
    %v12310 = vpack.c.b16 %v12292, %v12291
    %v12311 = vpack.c.b16 %v12294, %v12293
    %v12312 = vpack.c.b16 %v12296, %v12295
    %12313 = vrot.lane.b32.xlu0 %v12297, 8
    %v12314 = vpop.permute.xlu0 %12313
    %12315 = vrot.lane.b32.xlu0 %v12298, 8
    %v12316 = vpop.permute.xlu0 %12315
    %12317 = vrot.lane.b32.xlu0 %v12299, 8
    %v12318 = vpop.permute.xlu0 %12317
    %12319 = vrot.lane.b32.xlu0 %v12300, 8
    %v12320 = vpop.permute.xlu0 %12319
    %12321 = vrot.lane.b32.xlu0 %v12301, 8
    %v12322 = vpop.permute.xlu0 %12321
    %12323 = vrot.lane.b32.xlu0 %v12302, 8
    %v12324 = vpop.permute.xlu0 %12323
    %12325 = vrot.lane.b32.xlu0 %v12303, 8
    %v12326 = vpop.permute.xlu0 %12325
    %12327 = vrot.lane.b32.xlu0 %v12304, 8
    %v12328 = vpop.permute.xlu0 %12327
    %12329 = vrot.lane.b32.xlu0 %v12305, 8
    %v12330 = vpop.permute.xlu0 %12329
    %12331 = vrot.lane.b32.xlu0 %v12306, 8
    %v12332 = vpop.permute.xlu0 %12331
    %12333 = vrot.lane.b32.xlu0 %v12307, 8
    %v12334 = vpop.permute.xlu0 %12333
    %12335 = vrot.lane.b32.xlu0 %v12308, 8
    %v12336 = vpop.permute.xlu0 %12335
    %12337 = vrot.lane.b32.xlu0 %v12309, 8
    %v12338 = vpop.permute.xlu0 %12337
    %12339 = vrot.lane.b32.xlu0 %v12310, 8
    %v12340 = vpop.permute.xlu0 %12339
    %12341 = vrot.lane.b32.xlu0 %v12311, 8
    %v12342 = vpop.permute.xlu0 %12341
    %12343 = vrot.lane.b32.xlu0 %v12312, 8
    %v12344 = vpop.permute.xlu0 %12343
    %v12345 = vunpack.c.l.b16 %v10885
    %v12346 = vunpack.c.l.b16 %v10894
    %v12347 = vunpack.c.l.b16 %v10907
    %v12348 = vunpack.c.l.b16 %v10916
    %v12349 = vunpack.c.l.b16 %v10929
    %v12350 = vunpack.c.l.b16 %v10938
    %v12351 = vunpack.c.l.b16 %v10951
    %v12352 = vunpack.c.l.b16 %v10960
    %v12353 = vunpack.c.l.b16 %v10973
    %v12354 = vunpack.c.l.b16 %v10982
    %v12355 = vunpack.c.l.b16 %v10995
    %v12356 = vunpack.c.l.b16 %v11004
    %v12357 = vunpack.c.l.b16 %v11017
    %v12358 = vunpack.c.l.b16 %v11026
    %v12359 = vunpack.c.l.b16 %v11039
    %v12360 = vunpack.c.l.b16 %v11048
    %v12361 = vunpack.c.l.b16 %v11061
    %v12362 = vunpack.c.l.b16 %v11070
    %v12363 = vunpack.c.l.b16 %v11083
    %v12364 = vunpack.c.l.b16 %v11092
    %v12365 = vunpack.c.l.b16 %v11105
    %v12366 = vunpack.c.l.b16 %v11114
    %v12367 = vunpack.c.l.b16 %v11127
    %v12368 = vunpack.c.l.b16 %v11136
    %v12369 = vunpack.c.l.b16 %v11149
    %v12370 = vunpack.c.l.b16 %v11158
    %v12371 = vunpack.c.l.b16 %v11171
    %v12372 = vunpack.c.l.b16 %v11180
    %v12373 = vunpack.c.l.b16 %v11193
    %v12374 = vunpack.c.l.b16 %v11202
    %v12375 = vunpack.c.l.b16 %v11215
    %v12376 = vunpack.c.l.b16 %v11224
    %v12377 = vpack.c.b16 %v12346, %v12345
    %v12378 = vpack.c.b16 %v12348, %v12347
    %v12379 = vpack.c.b16 %v12350, %v12349
    %v12380 = vpack.c.b16 %v12352, %v12351
    %v12381 = vpack.c.b16 %v12354, %v12353
    %v12382 = vpack.c.b16 %v12356, %v12355
    %v12383 = vpack.c.b16 %v12358, %v12357
    %v12384 = vpack.c.b16 %v12360, %v12359
    %v12385 = vpack.c.b16 %v12362, %v12361
    %v12386 = vpack.c.b16 %v12364, %v12363
    %v12387 = vpack.c.b16 %v12366, %v12365
    %v12388 = vpack.c.b16 %v12368, %v12367
    %v12389 = vpack.c.b16 %v12370, %v12369
    %v12390 = vpack.c.b16 %v12372, %v12371
    %v12391 = vpack.c.b16 %v12374, %v12373
    %v12392 = vpack.c.b16 %v12376, %v12375
    %12393 = vrot.lane.b32.xlu0 %v12377, 12
    %v12394 = vpop.permute.xlu0 %12393
    %12395 = vrot.lane.b32.xlu0 %v12378, 12
    %v12396 = vpop.permute.xlu0 %12395
    %12397 = vrot.lane.b32.xlu0 %v12379, 12
    %v12398 = vpop.permute.xlu0 %12397
    %12399 = vrot.lane.b32.xlu0 %v12380, 12
    %v12400 = vpop.permute.xlu0 %12399
    %12401 = vrot.lane.b32.xlu0 %v12381, 12
    %v12402 = vpop.permute.xlu0 %12401
    %12403 = vrot.lane.b32.xlu0 %v12382, 12
    %v12404 = vpop.permute.xlu0 %12403
    %12405 = vrot.lane.b32.xlu0 %v12383, 12
    %v12406 = vpop.permute.xlu0 %12405
    %12407 = vrot.lane.b32.xlu0 %v12384, 12
    %v12408 = vpop.permute.xlu0 %12407
    %12409 = vrot.lane.b32.xlu0 %v12385, 12
    %v12410 = vpop.permute.xlu0 %12409
    %12411 = vrot.lane.b32.xlu0 %v12386, 12
    %v12412 = vpop.permute.xlu0 %12411
    %12413 = vrot.lane.b32.xlu0 %v12387, 12
    %v12414 = vpop.permute.xlu0 %12413
    %12415 = vrot.lane.b32.xlu0 %v12388, 12
    %v12416 = vpop.permute.xlu0 %12415
    %12417 = vrot.lane.b32.xlu0 %v12389, 12
    %v12418 = vpop.permute.xlu0 %12417
    %12419 = vrot.lane.b32.xlu0 %v12390, 12
    %v12420 = vpop.permute.xlu0 %12419
    %12421 = vrot.lane.b32.xlu0 %v12391, 12
    %v12422 = vpop.permute.xlu0 %12421
    %12423 = vrot.lane.b32.xlu0 %v12392, 12
    %v12424 = vpop.permute.xlu0 %12423
    %v12457 = vunpack.c.l.b16 %v10826
    %v12458 = vunpack.c.l.b16 %v10827
    %v12459 = vunpack.c.l.b16 %v10829
    %v12460 = vunpack.c.l.b16 %v10830
    %v12461 = vunpack.c.l.b16 %v10832
    %v12462 = vunpack.c.l.b16 %v10833
    %v12463 = vunpack.c.l.b16 %v10835
    %v12464 = vunpack.c.l.b16 %v10836
    %v12465 = vunpack.c.l.b16 %v10838
    %v12466 = vunpack.c.l.b16 %v10839
    %v12467 = vunpack.c.l.b16 %v10841
    %v12468 = vunpack.c.l.b16 %v10842
    %v12469 = vunpack.c.l.b16 %v10844
    %v12470 = vunpack.c.l.b16 %v10845
    %v12471 = vunpack.c.l.b16 %v10847
    %v12472 = vunpack.c.l.b16 %v10848
    %v12473 = vunpack.c.l.b16 %v10850
    %v12474 = vunpack.c.l.b16 %v10851
    %v12475 = vunpack.c.l.b16 %v10853
    %v12476 = vunpack.c.l.b16 %v10854
    %v12477 = vunpack.c.l.b16 %v10856
    %v12478 = vunpack.c.l.b16 %v10857
    %v12479 = vunpack.c.l.b16 %v10859
    %v12480 = vunpack.c.l.b16 %v10860
    %v12481 = vunpack.c.l.b16 %v10862
    %v12482 = vunpack.c.l.b16 %v10863
    %v12483 = vunpack.c.l.b16 %v10865
    %v12484 = vunpack.c.l.b16 %v10866
    %v12485 = vunpack.c.l.b16 %v10868
    %v12486 = vunpack.c.l.b16 %v10869
    %v12487 = vunpack.c.l.b16 %v10871
    %v12488 = vunpack.c.l.b16 %v10872
    %v12489 = vpack.c.b16 %v12458, %v12457
    %v12490 = vpack.c.b16 %v12460, %v12459
    %v12491 = vpack.c.b16 %v12462, %v12461
    %v12492 = vpack.c.b16 %v12464, %v12463
    %v12493 = vpack.c.b16 %v12466, %v12465
    %v12494 = vpack.c.b16 %v12468, %v12467
    %v12495 = vpack.c.b16 %v12470, %v12469
    %v12496 = vpack.c.b16 %v12472, %v12471
    %v12497 = vpack.c.b16 %v12474, %v12473
    %v12498 = vpack.c.b16 %v12476, %v12475
    %v12499 = vpack.c.b16 %v12478, %v12477
    %v12500 = vpack.c.b16 %v12480, %v12479
    %v12501 = vpack.c.b16 %v12482, %v12481
    %v12502 = vpack.c.b16 %v12484, %v12483
    %v12503 = vpack.c.b16 %v12486, %v12485
    %v12504 = vpack.c.b16 %v12488, %v12487
    %12505 = vrot.lane.b32.xlu0 %v12489, 16
    %v12506 = vpop.permute.xlu0 %12505
    %12507 = vrot.lane.b32.xlu0 %v12490, 16
    %v12508 = vpop.permute.xlu0 %12507
    %12509 = vrot.lane.b32.xlu0 %v12491, 16
    %v12510 = vpop.permute.xlu0 %12509
    %12511 = vrot.lane.b32.xlu0 %v12492, 16
    %v12512 = vpop.permute.xlu0 %12511
    %12513 = vrot.lane.b32.xlu0 %v12493, 16
    %v12514 = vpop.permute.xlu0 %12513
    %12515 = vrot.lane.b32.xlu0 %v12494, 16
    %v12516 = vpop.permute.xlu0 %12515
    %12517 = vrot.lane.b32.xlu0 %v12495, 16
    %v12518 = vpop.permute.xlu0 %12517
    %12519 = vrot.lane.b32.xlu0 %v12496, 16
    %v12520 = vpop.permute.xlu0 %12519
    %12521 = vrot.lane.b32.xlu0 %v12497, 16
    %v12522 = vpop.permute.xlu0 %12521
    %12523 = vrot.lane.b32.xlu0 %v12498, 16
    %v12524 = vpop.permute.xlu0 %12523
    %12525 = vrot.lane.b32.xlu0 %v12499, 16
    %v12526 = vpop.permute.xlu0 %12525
    %12527 = vrot.lane.b32.xlu0 %v12500, 16
    %v12528 = vpop.permute.xlu0 %12527
    %12529 = vrot.lane.b32.xlu0 %v12501, 16
    %v12530 = vpop.permute.xlu0 %12529
    %12531 = vrot.lane.b32.xlu0 %v12502, 16
    %v12532 = vpop.permute.xlu0 %12531
    %12533 = vrot.lane.b32.xlu0 %v12503, 16
    %v12534 = vpop.permute.xlu0 %12533
    %12535 = vrot.lane.b32.xlu0 %v12504, 16
    %v12536 = vpop.permute.xlu0 %12535
    %v12537 = vunpack.c.l.b16 %v11246
    %v12538 = vunpack.c.l.b16 %v11254
    %v12539 = vunpack.c.l.b16 %v11260
    %v12540 = vunpack.c.l.b16 %v11268
    %v12541 = vunpack.c.l.b16 %v11274
    %v12542 = vunpack.c.l.b16 %v11282
    %v12543 = vunpack.c.l.b16 %v11288
    %v12544 = vunpack.c.l.b16 %v11296
    %v12545 = vunpack.c.l.b16 %v11302
    %v12546 = vunpack.c.l.b16 %v11310
    %v12547 = vunpack.c.l.b16 %v11316
    %v12548 = vunpack.c.l.b16 %v11324
    %v12549 = vunpack.c.l.b16 %v11330
    %v12550 = vunpack.c.l.b16 %v11338
    %v12551 = vunpack.c.l.b16 %v11344
    %v12552 = vunpack.c.l.b16 %v11352
    %v12553 = vunpack.c.l.b16 %v11358
    %v12554 = vunpack.c.l.b16 %v11366
    %v12555 = vunpack.c.l.b16 %v11372
    %v12556 = vunpack.c.l.b16 %v11380
    %v12557 = vunpack.c.l.b16 %v11386
    %v12558 = vunpack.c.l.b16 %v11394
    %v12559 = vunpack.c.l.b16 %v11400
    %v12560 = vunpack.c.l.b16 %v11408
    %v12561 = vunpack.c.l.b16 %v11414
    %v12562 = vunpack.c.l.b16 %v11422
    %v12563 = vunpack.c.l.b16 %v11428
    %v12564 = vunpack.c.l.b16 %v11436
    %v12565 = vunpack.c.l.b16 %v11442
    %v12566 = vunpack.c.l.b16 %v11450
    %v12567 = vunpack.c.l.b16 %v11456
    %v12568 = vunpack.c.l.b16 %v11464
    %v12569 = vpack.c.b16 %v12538, %v12537
    %v12570 = vpack.c.b16 %v12540, %v12539
    %v12571 = vpack.c.b16 %v12542, %v12541
    %v12572 = vpack.c.b16 %v12544, %v12543
    %v12573 = vpack.c.b16 %v12546, %v12545
    %v12574 = vpack.c.b16 %v12548, %v12547
    %v12575 = vpack.c.b16 %v12550, %v12549
    %v12576 = vpack.c.b16 %v12552, %v12551
    %v12577 = vpack.c.b16 %v12554, %v12553
    %v12578 = vpack.c.b16 %v12556, %v12555
    %v12579 = vpack.c.b16 %v12558, %v12557
    %v12580 = vpack.c.b16 %v12560, %v12559
    %v12581 = vpack.c.b16 %v12562, %v12561
    %v12582 = vpack.c.b16 %v12564, %v12563
    %v12583 = vpack.c.b16 %v12566, %v12565
    %v12584 = vpack.c.b16 %v12568, %v12567
    %12585 = vrot.lane.b32.xlu0 %v12569, 20
    %v12586 = vpop.permute.xlu0 %12585
    %12587 = vrot.lane.b32.xlu0 %v12570, 20
    %v12588 = vpop.permute.xlu0 %12587
    %12589 = vrot.lane.b32.xlu0 %v12571, 20
    %v12590 = vpop.permute.xlu0 %12589
    %12591 = vrot.lane.b32.xlu0 %v12572, 20
    %v12592 = vpop.permute.xlu0 %12591
    %12593 = vrot.lane.b32.xlu0 %v12573, 20
    %v12594 = vpop.permute.xlu0 %12593
    %12595 = vrot.lane.b32.xlu0 %v12574, 20
    %v12596 = vpop.permute.xlu0 %12595
    %12597 = vrot.lane.b32.xlu0 %v12575, 20
    %v12598 = vpop.permute.xlu0 %12597
    %12599 = vrot.lane.b32.xlu0 %v12576, 20
    %v12600 = vpop.permute.xlu0 %12599
    %12601 = vrot.lane.b32.xlu0 %v12577, 20
    %v12602 = vpop.permute.xlu0 %12601
    %12603 = vrot.lane.b32.xlu0 %v12578, 20
    %v12604 = vpop.permute.xlu0 %12603
    %12605 = vrot.lane.b32.xlu0 %v12579, 20
    %v12606 = vpop.permute.xlu0 %12605
    %12607 = vrot.lane.b32.xlu0 %v12580, 20
    %v12608 = vpop.permute.xlu0 %12607
    %12609 = vrot.lane.b32.xlu0 %v12581, 20
    %v12610 = vpop.permute.xlu0 %12609
    %12611 = vrot.lane.b32.xlu0 %v12582, 20
    %v12612 = vpop.permute.xlu0 %12611
    %12613 = vrot.lane.b32.xlu0 %v12583, 20
    %v12614 = vpop.permute.xlu0 %12613
    %12615 = vrot.lane.b32.xlu0 %v12584, 20
    %v12616 = vpop.permute.xlu0 %12615
    %v12617 = vunpack.c.l.b16 %v11525
    %v12618 = vunpack.c.l.b16 %v11534
    %v12619 = vunpack.c.l.b16 %v11547
    %v12620 = vunpack.c.l.b16 %v11556
    %v12621 = vunpack.c.l.b16 %v11569
    %v12622 = vunpack.c.l.b16 %v11578
    %v12623 = vunpack.c.l.b16 %v11591
    %v12624 = vunpack.c.l.b16 %v11600
    %v12625 = vunpack.c.l.b16 %v11613
    %v12626 = vunpack.c.l.b16 %v11622
    %v12627 = vunpack.c.l.b16 %v11635
    %v12628 = vunpack.c.l.b16 %v11644
    %v12629 = vunpack.c.l.b16 %v11657
    %v12630 = vunpack.c.l.b16 %v11666
    %v12631 = vunpack.c.l.b16 %v11679
    %v12632 = vunpack.c.l.b16 %v11688
    %v12633 = vunpack.c.l.b16 %v11701
    %v12634 = vunpack.c.l.b16 %v11710
    %v12635 = vunpack.c.l.b16 %v11723
    %v12636 = vunpack.c.l.b16 %v11732
    %v12637 = vunpack.c.l.b16 %v11745
    %v12638 = vunpack.c.l.b16 %v11754
    %v12639 = vunpack.c.l.b16 %v11767
    %v12640 = vunpack.c.l.b16 %v11776
    %v12641 = vunpack.c.l.b16 %v11789
    %v12642 = vunpack.c.l.b16 %v11798
    %v12643 = vunpack.c.l.b16 %v11811
    %v12644 = vunpack.c.l.b16 %v11820
    %v12645 = vunpack.c.l.b16 %v11833
    %v12646 = vunpack.c.l.b16 %v11842
    %v12647 = vunpack.c.l.b16 %v11855
    %v12648 = vunpack.c.l.b16 %v11864
    %v12649 = vpack.c.b16 %v12618, %v12617
    %v12650 = vpack.c.b16 %v12620, %v12619
    %v12651 = vpack.c.b16 %v12622, %v12621
    %v12652 = vpack.c.b16 %v12624, %v12623
    %v12653 = vpack.c.b16 %v12626, %v12625
    %v12654 = vpack.c.b16 %v12628, %v12627
    %v12655 = vpack.c.b16 %v12630, %v12629
    %v12656 = vpack.c.b16 %v12632, %v12631
    %v12657 = vpack.c.b16 %v12634, %v12633
    %v12658 = vpack.c.b16 %v12636, %v12635
    %v12659 = vpack.c.b16 %v12638, %v12637
    %v12660 = vpack.c.b16 %v12640, %v12639
    %v12661 = vpack.c.b16 %v12642, %v12641
    %v12662 = vpack.c.b16 %v12644, %v12643
    %v12663 = vpack.c.b16 %v12646, %v12645
    %v12664 = vpack.c.b16 %v12648, %v12647
    %12665 = vrot.lane.b32.xlu0 %v12649, 24
    %v12666 = vpop.permute.xlu0 %12665
    %12667 = vrot.lane.b32.xlu0 %v12650, 24
    %v12668 = vpop.permute.xlu0 %12667
    %12669 = vrot.lane.b32.xlu0 %v12651, 24
    %v12670 = vpop.permute.xlu0 %12669
    %12671 = vrot.lane.b32.xlu0 %v12652, 24
    %v12672 = vpop.permute.xlu0 %12671
    %12673 = vrot.lane.b32.xlu0 %v12653, 24
    %v12674 = vpop.permute.xlu0 %12673
    %12675 = vrot.lane.b32.xlu0 %v12654, 24
    %v12676 = vpop.permute.xlu0 %12675
    %12677 = vrot.lane.b32.xlu0 %v12655, 24
    %v12678 = vpop.permute.xlu0 %12677
    %12679 = vrot.lane.b32.xlu0 %v12656, 24
    %v12680 = vpop.permute.xlu0 %12679
    %12681 = vrot.lane.b32.xlu0 %v12657, 24
    %v12682 = vpop.permute.xlu0 %12681
    %12683 = vrot.lane.b32.xlu0 %v12658, 24
    %v12684 = vpop.permute.xlu0 %12683
    %12685 = vrot.lane.b32.xlu0 %v12659, 24
    %v12686 = vpop.permute.xlu0 %12685
    %12687 = vrot.lane.b32.xlu0 %v12660, 24
    %v12688 = vpop.permute.xlu0 %12687
    %12689 = vrot.lane.b32.xlu0 %v12661, 24
    %v12690 = vpop.permute.xlu0 %12689
    %12691 = vrot.lane.b32.xlu0 %v12662, 24
    %v12692 = vpop.permute.xlu0 %12691
    %12693 = vrot.lane.b32.xlu0 %v12663, 24
    %v12694 = vpop.permute.xlu0 %12693
    %12695 = vrot.lane.b32.xlu0 %v12664, 24
    %v12696 = vpop.permute.xlu0 %12695
    %v12729 = vunpack.c.l.b16 %v11466
    %v12730 = vunpack.c.l.b16 %v11467
    %v12731 = vunpack.c.l.b16 %v11469
    %v12732 = vunpack.c.l.b16 %v11470
    %v12733 = vunpack.c.l.b16 %v11472
    %v12734 = vunpack.c.l.b16 %v11473
    %v12735 = vunpack.c.l.b16 %v11475
    %v12736 = vunpack.c.l.b16 %v11476
    %v12737 = vunpack.c.l.b16 %v11478
    %v12738 = vunpack.c.l.b16 %v11479
    %v12739 = vunpack.c.l.b16 %v11481
    %v12740 = vunpack.c.l.b16 %v11482
    %v12741 = vunpack.c.l.b16 %v11484
    %v12742 = vunpack.c.l.b16 %v11485
    %v12743 = vunpack.c.l.b16 %v11487
    %v12744 = vunpack.c.l.b16 %v11488
    %v12745 = vunpack.c.l.b16 %v11490
    %v12746 = vunpack.c.l.b16 %v11491
    %v12747 = vunpack.c.l.b16 %v11493
    %v12748 = vunpack.c.l.b16 %v11494
    %v12749 = vunpack.c.l.b16 %v11496
    %v12750 = vunpack.c.l.b16 %v11497
    %v12751 = vunpack.c.l.b16 %v11499
    %v12752 = vunpack.c.l.b16 %v11500
    %v12753 = vunpack.c.l.b16 %v11502
    %v12754 = vunpack.c.l.b16 %v11503
    %v12755 = vunpack.c.l.b16 %v11505
    %v12756 = vunpack.c.l.b16 %v11506
    %v12757 = vunpack.c.l.b16 %v11508
    %v12758 = vunpack.c.l.b16 %v11509
    %v12759 = vunpack.c.l.b16 %v11511
    %v12760 = vunpack.c.l.b16 %v11512
    %v12761 = vpack.c.b16 %v12730, %v12729
    %v12762 = vpack.c.b16 %v12732, %v12731
    %v12763 = vpack.c.b16 %v12734, %v12733
    %v12764 = vpack.c.b16 %v12736, %v12735
    %v12765 = vpack.c.b16 %v12738, %v12737
    %v12766 = vpack.c.b16 %v12740, %v12739
    %v12767 = vpack.c.b16 %v12742, %v12741
    %v12768 = vpack.c.b16 %v12744, %v12743
    %v12769 = vpack.c.b16 %v12746, %v12745
    %v12770 = vpack.c.b16 %v12748, %v12747
    %v12771 = vpack.c.b16 %v12750, %v12749
    %v12772 = vpack.c.b16 %v12752, %v12751
    %v12773 = vpack.c.b16 %v12754, %v12753
    %v12774 = vpack.c.b16 %v12756, %v12755
    %v12775 = vpack.c.b16 %v12758, %v12757
    %v12776 = vpack.c.b16 %v12760, %v12759
    %12777 = vrot.lane.b32.xlu0 %v12761, 28
    %v12778 = vpop.permute.xlu0 %12777
    %12779 = vrot.lane.b32.xlu0 %v12762, 28
    %v12780 = vpop.permute.xlu0 %12779
    %12781 = vrot.lane.b32.xlu0 %v12763, 28
    %v12782 = vpop.permute.xlu0 %12781
    %12783 = vrot.lane.b32.xlu0 %v12764, 28
    %v12784 = vpop.permute.xlu0 %12783
    %12785 = vrot.lane.b32.xlu0 %v12765, 28
    %v12786 = vpop.permute.xlu0 %12785
    %12787 = vrot.lane.b32.xlu0 %v12766, 28
    %v12788 = vpop.permute.xlu0 %12787
    %12789 = vrot.lane.b32.xlu0 %v12767, 28
    %v12790 = vpop.permute.xlu0 %12789
    %12791 = vrot.lane.b32.xlu0 %v12768, 28
    %v12792 = vpop.permute.xlu0 %12791
    %12793 = vrot.lane.b32.xlu0 %v12769, 28
    %v12794 = vpop.permute.xlu0 %12793
    %12795 = vrot.lane.b32.xlu0 %v12770, 28
    %v12796 = vpop.permute.xlu0 %12795
    %12797 = vrot.lane.b32.xlu0 %v12771, 28
    %v12798 = vpop.permute.xlu0 %12797
    %12799 = vrot.lane.b32.xlu0 %v12772, 28
    %v12800 = vpop.permute.xlu0 %12799
    %12801 = vrot.lane.b32.xlu0 %v12773, 28
    %v12802 = vpop.permute.xlu0 %12801
    %12803 = vrot.lane.b32.xlu0 %v12774, 28
    %v12804 = vpop.permute.xlu0 %12803
    %12805 = vrot.lane.b32.xlu0 %v12775, 28
    %v12806 = vpop.permute.xlu0 %12805
    %12807 = vrot.lane.b32.xlu0 %v12776, 28
    %v12808 = vpop.permute.xlu0 %12807
    %v12809 = vunpack.c.l.b16 %v11886
    %v12810 = vunpack.c.l.b16 %v11894
    %v12811 = vunpack.c.l.b16 %v11900
    %v12812 = vunpack.c.l.b16 %v11908
    %v12813 = vunpack.c.l.b16 %v11914
    %v12814 = vunpack.c.l.b16 %v11922
    %v12815 = vunpack.c.l.b16 %v11928
    %v12816 = vunpack.c.l.b16 %v11936
    %v12817 = vunpack.c.l.b16 %v11942
    %v12818 = vunpack.c.l.b16 %v11950
    %v12819 = vunpack.c.l.b16 %v11956
    %v12820 = vunpack.c.l.b16 %v11964
    %v12821 = vunpack.c.l.b16 %v11970
    %v12822 = vunpack.c.l.b16 %v11978
    %v12823 = vunpack.c.l.b16 %v11984
    %v12824 = vunpack.c.l.b16 %v11992
    %v12825 = vunpack.c.l.b16 %v11998
    %v12826 = vunpack.c.l.b16 %v12006
    %v12827 = vunpack.c.l.b16 %v12012
    %v12828 = vunpack.c.l.b16 %v12020
    %v12829 = vunpack.c.l.b16 %v12026
    %v12830 = vunpack.c.l.b16 %v12034
    %v12831 = vunpack.c.l.b16 %v12040
    %v12832 = vunpack.c.l.b16 %v12048
    %v12833 = vunpack.c.l.b16 %v12054
    %v12834 = vunpack.c.l.b16 %v12062
    %v12835 = vunpack.c.l.b16 %v12068
    %v12836 = vunpack.c.l.b16 %v12076
    %v12837 = vunpack.c.l.b16 %v12082
    %v12838 = vunpack.c.l.b16 %v12090
    %v12839 = vunpack.c.l.b16 %v12096
    %v12840 = vunpack.c.l.b16 %v12104
    %v12841 = vpack.c.b16 %v12810, %v12809
    %v12842 = vpack.c.b16 %v12812, %v12811
    %v12843 = vpack.c.b16 %v12814, %v12813
    %v12844 = vpack.c.b16 %v12816, %v12815
    %v12845 = vpack.c.b16 %v12818, %v12817
    %v12846 = vpack.c.b16 %v12820, %v12819
    %v12847 = vpack.c.b16 %v12822, %v12821
    %v12848 = vpack.c.b16 %v12824, %v12823
    %v12849 = vpack.c.b16 %v12826, %v12825
    %v12850 = vpack.c.b16 %v12828, %v12827
    %v12851 = vpack.c.b16 %v12830, %v12829
    %v12852 = vpack.c.b16 %v12832, %v12831
    %v12853 = vpack.c.b16 %v12834, %v12833
    %v12854 = vpack.c.b16 %v12836, %v12835
    %v12855 = vpack.c.b16 %v12838, %v12837
    %v12856 = vpack.c.b16 %v12840, %v12839
    %12857 = vrot.lane.b32.xlu0 %v12841, 32
    %v12858 = vpop.permute.xlu0 %12857
    %12859 = vrot.lane.b32.xlu0 %v12842, 32
    %v12860 = vpop.permute.xlu0 %12859
    %12861 = vrot.lane.b32.xlu0 %v12843, 32
    %v12862 = vpop.permute.xlu0 %12861
    %12863 = vrot.lane.b32.xlu0 %v12844, 32
    %v12864 = vpop.permute.xlu0 %12863
    %12865 = vrot.lane.b32.xlu0 %v12845, 32
    %v12866 = vpop.permute.xlu0 %12865
    %12867 = vrot.lane.b32.xlu0 %v12846, 32
    %v12868 = vpop.permute.xlu0 %12867
    %12869 = vrot.lane.b32.xlu0 %v12847, 32
    %v12870 = vpop.permute.xlu0 %12869
    %12871 = vrot.lane.b32.xlu0 %v12848, 32
    %v12872 = vpop.permute.xlu0 %12871
    %12873 = vrot.lane.b32.xlu0 %v12849, 32
    %v12874 = vpop.permute.xlu0 %12873
    %12875 = vrot.lane.b32.xlu0 %v12850, 32
    %v12876 = vpop.permute.xlu0 %12875
    %12877 = vrot.lane.b32.xlu0 %v12851, 32
    %v12878 = vpop.permute.xlu0 %12877
    %12879 = vrot.lane.b32.xlu0 %v12852, 32
    %v12880 = vpop.permute.xlu0 %12879
    %12881 = vrot.lane.b32.xlu0 %v12853, 32
    %v12882 = vpop.permute.xlu0 %12881
    %12883 = vrot.lane.b32.xlu0 %v12854, 32
    %v12884 = vpop.permute.xlu0 %12883
    %12885 = vrot.lane.b32.xlu0 %v12855, 32
    %v12886 = vpop.permute.xlu0 %12885
    %12887 = vrot.lane.b32.xlu0 %v12856, 32
    %v12888 = vpop.permute.xlu0 %12887
    %v12891 = vsel %vm2889, %v12137, %v12234
    %v12894 = vsel %vm2889, %v12138, %v12236
    %v12897 = vsel %vm2889, %v12139, %v12238
    %v12900 = vsel %vm2889, %v12140, %v12240
    %v12903 = vsel %vm2889, %v12141, %v12242
    %v12906 = vsel %vm2889, %v12142, %v12244
    %v12909 = vsel %vm2889, %v12143, %v12246
    %v12912 = vsel %vm2889, %v12144, %v12248
    %v12915 = vsel %vm2889, %v12145, %v12250
    %v12918 = vsel %vm2889, %v12146, %v12252
    %v12921 = vsel %vm2889, %v12147, %v12254
    %v12924 = vsel %vm2889, %v12148, %v12256
    %v12927 = vsel %vm2889, %v12149, %v12258
    %v12930 = vsel %vm2889, %v12150, %v12260
    %v12933 = vsel %vm2889, %v12151, %v12262
    %v12936 = vsel %vm2889, %v12152, %v12264
    %v12938 = vsel %vm2938, %v12891, %v12314
    %v12940 = vsel %vm2938, %v12894, %v12316
    %v12942 = vsel %vm2938, %v12897, %v12318
    %v12944 = vsel %vm2938, %v12900, %v12320
    %v12946 = vsel %vm2938, %v12903, %v12322
    %v12948 = vsel %vm2938, %v12906, %v12324
    %v12950 = vsel %vm2938, %v12909, %v12326
    %v12952 = vsel %vm2938, %v12912, %v12328
    %v12954 = vsel %vm2938, %v12915, %v12330
    %v12956 = vsel %vm2938, %v12918, %v12332
    %v12958 = vsel %vm2938, %v12921, %v12334
    %v12960 = vsel %vm2938, %v12924, %v12336
    %v12962 = vsel %vm2938, %v12927, %v12338
    %v12964 = vsel %vm2938, %v12930, %v12340
    %v12966 = vsel %vm2938, %v12933, %v12342
    %v12968 = vsel %vm2938, %v12936, %v12344
    %v12970 = vsel %vm2971, %v12938, %v12394
    %v12972 = vsel %vm2971, %v12940, %v12396
    %v12974 = vsel %vm2971, %v12942, %v12398
    %v12976 = vsel %vm2971, %v12944, %v12400
    %v12978 = vsel %vm2971, %v12946, %v12402
    %v12980 = vsel %vm2971, %v12948, %v12404
    %v12982 = vsel %vm2971, %v12950, %v12406
    %v12984 = vsel %vm2971, %v12952, %v12408
    %v12986 = vsel %vm2971, %v12954, %v12410
    %v12988 = vsel %vm2971, %v12956, %v12412
    %v12990 = vsel %vm2971, %v12958, %v12414
    %v12992 = vsel %vm2971, %v12960, %v12416
    %v12994 = vsel %vm2971, %v12962, %v12418
    %v12996 = vsel %vm2971, %v12964, %v12420
    %v12998 = vsel %vm2971, %v12966, %v12422
    %v13000 = vsel %vm2971, %v12968, %v12424
    %v13002 = vsel %vm3004, %v12970, %v12506
    %v13004 = vsel %vm3004, %v12972, %v12508
    %v13006 = vsel %vm3004, %v12974, %v12510
    %v13008 = vsel %vm3004, %v12976, %v12512
    %v13010 = vsel %vm3004, %v12978, %v12514
    %v13012 = vsel %vm3004, %v12980, %v12516
    %v13014 = vsel %vm3004, %v12982, %v12518
    %v13016 = vsel %vm3004, %v12984, %v12520
    %v13018 = vsel %vm3004, %v12986, %v12522
    %v13020 = vsel %vm3004, %v12988, %v12524
    %v13022 = vsel %vm3004, %v12990, %v12526
    %v13024 = vsel %vm3004, %v12992, %v12528
    %v13026 = vsel %vm3004, %v12994, %v12530
    %v13028 = vsel %vm3004, %v12996, %v12532
    %v13030 = vsel %vm3004, %v12998, %v12534
    %v13032 = vsel %vm3004, %v13000, %v12536
    %v13034 = vsel %vm3037, %v13002, %v12586
    %v13036 = vsel %vm3037, %v13004, %v12588
    %v13038 = vsel %vm3037, %v13006, %v12590
    %v13040 = vsel %vm3037, %v13008, %v12592
    %v13042 = vsel %vm3037, %v13010, %v12594
    %v13044 = vsel %vm3037, %v13012, %v12596
    %v13046 = vsel %vm3037, %v13014, %v12598
    %v13048 = vsel %vm3037, %v13016, %v12600
    %v13050 = vsel %vm3037, %v13018, %v12602
    %v13052 = vsel %vm3037, %v13020, %v12604
    %v13054 = vsel %vm3037, %v13022, %v12606
    %v13056 = vsel %vm3037, %v13024, %v12608
    %v13058 = vsel %vm3037, %v13026, %v12610
    %v13060 = vsel %vm3037, %v13028, %v12612
    %v13062 = vsel %vm3037, %v13030, %v12614
    %v13064 = vsel %vm3037, %v13032, %v12616
    %v13066 = vsel %vm3070, %v13034, %v12666
    %v13068 = vsel %vm3070, %v13036, %v12668
    %v13070 = vsel %vm3070, %v13038, %v12670
    %v13072 = vsel %vm3070, %v13040, %v12672
    %v13074 = vsel %vm3070, %v13042, %v12674
    %v13076 = vsel %vm3070, %v13044, %v12676
    %v13078 = vsel %vm3070, %v13046, %v12678
    %v13080 = vsel %vm3070, %v13048, %v12680
    %v13082 = vsel %vm3070, %v13050, %v12682
    %v13084 = vsel %vm3070, %v13052, %v12684
    %v13086 = vsel %vm3070, %v13054, %v12686
    %v13088 = vsel %vm3070, %v13056, %v12688
    %v13090 = vsel %vm3070, %v13058, %v12690
    %v13092 = vsel %vm3070, %v13060, %v12692
    %v13094 = vsel %vm3070, %v13062, %v12694
    %v13096 = vsel %vm3070, %v13064, %v12696
    %v13098 = vsel %vm3103, %v13066, %v12778
    %v13100 = vsel %vm3103, %v13068, %v12780
    %v13102 = vsel %vm3103, %v13070, %v12782
    %v13104 = vsel %vm3103, %v13072, %v12784
    %v13106 = vsel %vm3103, %v13074, %v12786
    %v13108 = vsel %vm3103, %v13076, %v12788
    %v13110 = vsel %vm3103, %v13078, %v12790
    %v13112 = vsel %vm3103, %v13080, %v12792
    %v13114 = vsel %vm3103, %v13082, %v12794
    %v13116 = vsel %vm3103, %v13084, %v12796
    %v13118 = vsel %vm3103, %v13086, %v12798
    %v13120 = vsel %vm3103, %v13088, %v12800
    %v13122 = vsel %vm3103, %v13090, %v12802
    %v13124 = vsel %vm3103, %v13092, %v12804
    %v13126 = vsel %vm3103, %v13094, %v12806
    %v13128 = vsel %vm3103, %v13096, %v12808
    %v13130 = vsel %vm3136, %v13098, %v12858
    %v13132 = vsel %vm3136, %v13100, %v12860
    %v13134 = vsel %vm3136, %v13102, %v12862
    %v13136 = vsel %vm3136, %v13104, %v12864
    %v13138 = vsel %vm3136, %v13106, %v12866
    %v13140 = vsel %vm3136, %v13108, %v12868
    %v13142 = vsel %vm3136, %v13110, %v12870
    %v13144 = vsel %vm3136, %v13112, %v12872
    %v13146 = vsel %vm3136, %v13114, %v12874
    %v13148 = vsel %vm3136, %v13116, %v12876
    %v13150 = vsel %vm3136, %v13118, %v12878
    %v13152 = vsel %vm3136, %v13120, %v12880
    %v13154 = vsel %vm3136, %v13122, %v12882
    %v13156 = vsel %vm3136, %v13124, %v12884
    %v13158 = vsel %vm3136, %v13126, %v12886
    %v13160 = vsel %vm3136, %v13128, %v12888
    %v13161 = vld [vmem:[%s3] sm:$0xf]
    %v13162 = vld [vmem:[%s3 + $0x4] sm:$0xf]
    %v13163 = vld [vmem:[%s3 + $0x8] sm:$0xf]
    %v13164 = vld [vmem:[%s3 + $0xc] sm:$0xf]
    %v13165 = vld [vmem:[%s3 + $0x10] sm:$0x3]
    %v13166 = vld [vmem:[%s4] sm:$0x1]
    %v13168 = vperm.slane %v13166, 0
    %v13175 = vunpack.c.l.b16 %v13161
    %v13176 = vunpack.c.l.b16 %v13162
    %v13177 = vunpack.c.l.b16 %v13163
    %v13178 = vunpack.c.l.b16 %v13164
    %v13179 = vunpack.c.l.b16 %v13165
    %v13180 = vpack.c.b16 %v13176, %v13175
    %v13181 = vpack.c.b16 %v13178, %v13177
    %v13182 = vpack.c.b16 %v13179, %v13179
    %v13185 = vsel %vm3193, %v13130, 0
    %v13187 = vsel %vm3193, %v13132, 0
    %v13189 = vsel %vm3193, %v13134, 0
    %v13191 = vsel %vm3193, %v13136, 0
    %v13193 = vsel %vm3193, %v13138, 0
    %v13195 = vsel %vm3193, %v13140, 0
    %v13197 = vsel %vm3193, %v13142, 0
    %v13199 = vsel %vm3193, %v13144, 0
    %v13201 = vsel %vm3193, %v13146, 0
    %v13203 = vsel %vm3193, %v13148, 0
    %v13205 = vsel %vm3193, %v13150, 0
    %v13207 = vsel %vm3193, %v13152, 0
    %v13209 = vsel %vm3193, %v13154, 0
    %v13211 = vsel %vm3193, %v13156, 0
    %v13213 = vsel %vm3193, %v13158, 0
    %v13215 = vsel %vm3193, %v13160, 0
    %v13218 = vsel %vm3226, %v13182, 0
    %13220 = vmatpush.bf16.msra.mxu0 0
    %13221 = vmatpush.bf16.msra.mxu0 0
    %13222 = vmatpush.bf16.msra.mxu0 0
    %13223 = vmatpush.bf16.msra.mxu0 0
    %13224 = vmatpush.bf16.msra.mxu0 0
    %13225 = vmatpush.bf16.msra.mxu0 %v13218
    %13226 = vmatpush.bf16.msra.mxu0 %v13181
    %13227 = vmatpush.bf16.msra.mxu0 %v13180
    %13228 = vmatmul.bf16.gmra.mxu0 %v13185
    %v13229 = vpop.f32.mrf.mxu0
    %v13230 = vadd.f32 %v13168, %v13229
    %v13231 = vpop.f32.mrf.mxu0
    %v13232 = vadd.f32 %v13168, %v13231
    %13233 = vmatmul.bf16.gmra.mxu0 %v13187
    %v13234 = vpop.f32.mrf.mxu0
    %v13235 = vadd.f32 %v13168, %v13234
    %v13236 = vpop.f32.mrf.mxu0
    %v13237 = vadd.f32 %v13168, %v13236
    %13238 = vmatmul.bf16.gmra.mxu0 %v13189
    %v13239 = vpop.f32.mrf.mxu0
    %v13240 = vadd.f32 %v13168, %v13239
    %v13241 = vpop.f32.mrf.mxu0
    %v13242 = vadd.f32 %v13168, %v13241
    %13243 = vmatmul.bf16.gmra.mxu0 %v13191
    %v13244 = vpop.f32.mrf.mxu0
    %v13245 = vadd.f32 %v13168, %v13244
    %v13246 = vpop.f32.mrf.mxu0
    %v13247 = vadd.f32 %v13168, %v13246
    %13248 = vmatmul.bf16.gmra.mxu0 %v13193
    %v13249 = vpop.f32.mrf.mxu0
    %v13250 = vadd.f32 %v13168, %v13249
    %v13251 = vpop.f32.mrf.mxu0
    %v13252 = vadd.f32 %v13168, %v13251
    %13253 = vmatmul.bf16.gmra.mxu0 %v13195
    %v13254 = vpop.f32.mrf.mxu0
    %v13255 = vadd.f32 %v13168, %v13254
    %v13256 = vpop.f32.mrf.mxu0
    %v13257 = vadd.f32 %v13168, %v13256
    %13258 = vmatmul.bf16.gmra.mxu0 %v13197
    %v13259 = vpop.f32.mrf.mxu0
    %v13260 = vadd.f32 %v13168, %v13259
    %v13261 = vpop.f32.mrf.mxu0
    %v13262 = vadd.f32 %v13168, %v13261
    %13263 = vmatmul.bf16.gmra.mxu0 %v13199
    %v13264 = vpop.f32.mrf.mxu0
    %v13265 = vadd.f32 %v13168, %v13264
    %v13266 = vpop.f32.mrf.mxu0
    %v13267 = vadd.f32 %v13168, %v13266
    %13268 = vmatmul.bf16.gmra.mxu0 %v13201
    %v13269 = vpop.f32.mrf.mxu0
    %v13270 = vadd.f32 %v13168, %v13269
    %v13271 = vpop.f32.mrf.mxu0
    %v13272 = vadd.f32 %v13168, %v13271
    %13273 = vmatmul.bf16.gmra.mxu0 %v13203
    %v13274 = vpop.f32.mrf.mxu0
    %v13275 = vadd.f32 %v13168, %v13274
    %v13276 = vpop.f32.mrf.mxu0
    %v13277 = vadd.f32 %v13168, %v13276
    %13278 = vmatmul.bf16.gmra.mxu0 %v13205
    %v13279 = vpop.f32.mrf.mxu0
    %v13280 = vadd.f32 %v13168, %v13279
    %v13281 = vpop.f32.mrf.mxu0
    %v13282 = vadd.f32 %v13168, %v13281
    %13283 = vmatmul.bf16.gmra.mxu0 %v13207
    %v13284 = vpop.f32.mrf.mxu0
    %v13285 = vadd.f32 %v13168, %v13284
    %v13286 = vpop.f32.mrf.mxu0
    %v13287 = vadd.f32 %v13168, %v13286
    %13288 = vmatmul.bf16.gmra.mxu0 %v13209
    %v13289 = vpop.f32.mrf.mxu0
    %v13290 = vadd.f32 %v13168, %v13289
    %v13291 = vpop.f32.mrf.mxu0
    %v13292 = vadd.f32 %v13168, %v13291
    %13293 = vmatmul.bf16.gmra.mxu0 %v13211
    %v13294 = vpop.f32.mrf.mxu0
    %v13295 = vadd.f32 %v13168, %v13294
    %v13296 = vpop.f32.mrf.mxu0
    %v13297 = vadd.f32 %v13168, %v13296
    %13298 = vmatmul.bf16.gmra.mxu0 %v13213
    %v13299 = vpop.f32.mrf.mxu0
    %v13300 = vadd.f32 %v13168, %v13299
    %v13301 = vpop.f32.mrf.mxu0
    %v13302 = vadd.f32 %v13168, %v13301
    %13303 = vmatmul.bf16.gmra.mxu0 %v13215
    %v13304 = vpop.f32.mrf.mxu0
    %v13305 = vadd.f32 %v13168, %v13304
    %v13306 = vpop.f32.mrf.mxu0
    %v13307 = vadd.f32 %v13168, %v13306
    %13308 = vdwg.mxu0
    %vm13309 = vcmp.gt.f32.partialorder %v13230, 0.0
    %vm13310 = vcmp.gt.f32.partialorder %v13232, 0.0
    %vm13311 = vcmp.gt.f32.partialorder %v13235, 0.0
    %vm13312 = vcmp.gt.f32.partialorder %v13237, 0.0
    %vm13313 = vcmp.gt.f32.partialorder %v13240, 0.0
    %vm13314 = vcmp.gt.f32.partialorder %v13242, 0.0
    %vm13315 = vcmp.gt.f32.partialorder %v13245, 0.0
    %vm13316 = vcmp.gt.f32.partialorder %v13247, 0.0
    %vm13317 = vcmp.gt.f32.partialorder %v13250, 0.0
    %vm13318 = vcmp.gt.f32.partialorder %v13252, 0.0
    %vm13319 = vcmp.gt.f32.partialorder %v13255, 0.0
    %vm13320 = vcmp.gt.f32.partialorder %v13257, 0.0
    %vm13321 = vcmp.gt.f32.partialorder %v13260, 0.0
    %vm13322 = vcmp.gt.f32.partialorder %v13262, 0.0
    %vm13323 = vcmp.gt.f32.partialorder %v13265, 0.0
    %vm13324 = vcmp.gt.f32.partialorder %v13267, 0.0
    %vm13325 = vcmp.gt.f32.partialorder %v13270, 0.0
    %vm13326 = vcmp.gt.f32.partialorder %v13272, 0.0
    %vm13327 = vcmp.gt.f32.partialorder %v13275, 0.0
    %vm13328 = vcmp.gt.f32.partialorder %v13277, 0.0
    %vm13329 = vcmp.gt.f32.partialorder %v13280, 0.0
    %vm13330 = vcmp.gt.f32.partialorder %v13282, 0.0
    %vm13331 = vcmp.gt.f32.partialorder %v13285, 0.0
    %vm13332 = vcmp.gt.f32.partialorder %v13287, 0.0
    %vm13333 = vcmp.gt.f32.partialorder %v13290, 0.0
    %vm13334 = vcmp.gt.f32.partialorder %v13292, 0.0
    %vm13335 = vcmp.gt.f32.partialorder %v13295, 0.0
    %vm13336 = vcmp.gt.f32.partialorder %v13297, 0.0
    %vm13337 = vcmp.gt.f32.partialorder %v13300, 0.0
    %vm13338 = vcmp.gt.f32.partialorder %v13302, 0.0
    %vm13339 = vcmp.gt.f32.partialorder %v13305, 0.0
    %vm13340 = vcmp.gt.f32.partialorder %v13307, 0.0
    %v13341 = vmul.f32 %v13230, 0.2
    %v13342 = vmul.f32 %v13232, 0.2
    %v13343 = vmul.f32 %v13235, 0.2
    %v13344 = vmul.f32 %v13237, 0.2
    %v13345 = vmul.f32 %v13240, 0.2
    %v13346 = vmul.f32 %v13242, 0.2
    %v13347 = vmul.f32 %v13245, 0.2
    %v13348 = vmul.f32 %v13247, 0.2
    %v13349 = vmul.f32 %v13250, 0.2
    %v13350 = vmul.f32 %v13252, 0.2
    %v13351 = vmul.f32 %v13255, 0.2
    %v13352 = vmul.f32 %v13257, 0.2
    %v13353 = vmul.f32 %v13260, 0.2
    %v13354 = vmul.f32 %v13262, 0.2
    %v13355 = vmul.f32 %v13265, 0.2
    %v13356 = vmul.f32 %v13267, 0.2
    %v13357 = vmul.f32 %v13270, 0.2
    %v13358 = vmul.f32 %v13272, 0.2
    %v13359 = vmul.f32 %v13275, 0.2
    %v13360 = vmul.f32 %v13277, 0.2
    %v13361 = vmul.f32 %v13280, 0.2
    %v13362 = vmul.f32 %v13282, 0.2
    %v13363 = vmul.f32 %v13285, 0.2
    %v13364 = vmul.f32 %v13287, 0.2
    %v13365 = vmul.f32 %v13290, 0.2
    %v13366 = vmul.f32 %v13292, 0.2
    %v13367 = vmul.f32 %v13295, 0.2
    %v13368 = vmul.f32 %v13297, 0.2
    %v13369 = vmul.f32 %v13300, 0.2
    %v13370 = vmul.f32 %v13302, 0.2
    %v13371 = vmul.f32 %v13305, 0.2
    %v13372 = vmul.f32 %v13307, 0.2
    %v13373 = vsel %vm13309, %v13230, %v13341
    %v13374 = vsel %vm13310, %v13232, %v13342
    %v13375 = vsel %vm13311, %v13235, %v13343
    %v13376 = vsel %vm13312, %v13237, %v13344
    %v13377 = vsel %vm13313, %v13240, %v13345
    %v13378 = vsel %vm13314, %v13242, %v13346
    %v13379 = vsel %vm13315, %v13245, %v13347
    %v13380 = vsel %vm13316, %v13247, %v13348
    %v13381 = vsel %vm13317, %v13250, %v13349
    %v13382 = vsel %vm13318, %v13252, %v13350
    %v13383 = vsel %vm13319, %v13255, %v13351
    %v13384 = vsel %vm13320, %v13257, %v13352
    %v13385 = vsel %vm13321, %v13260, %v13353
    %v13386 = vsel %vm13322, %v13262, %v13354
    %v13387 = vsel %vm13323, %v13265, %v13355
    %v13388 = vsel %vm13324, %v13267, %v13356
    %v13389 = vsel %vm13325, %v13270, %v13357
    %v13390 = vsel %vm13326, %v13272, %v13358
    %v13391 = vsel %vm13327, %v13275, %v13359
    %v13392 = vsel %vm13328, %v13277, %v13360
    %v13393 = vsel %vm13329, %v13280, %v13361
    %v13394 = vsel %vm13330, %v13282, %v13362
    %v13395 = vsel %vm13331, %v13285, %v13363
    %v13396 = vsel %vm13332, %v13287, %v13364
    %v13397 = vsel %vm13333, %v13290, %v13365
    %v13398 = vsel %vm13334, %v13292, %v13366
    %v13399 = vsel %vm13335, %v13295, %v13367
    %v13400 = vsel %vm13336, %v13297, %v13368
    %v13401 = vsel %vm13337, %v13300, %v13369
    %v13402 = vsel %vm13338, %v13302, %v13370
    %v13403 = vsel %vm13339, %v13305, %v13371
    %v13404 = vsel %vm13340, %v13307, %v13372
    %13405 = vst.msk [vmem:[#allocation4] sm:$0xff] %vm2938, %v13373
    %13406 = vst.msk [vmem:[#allocation4 + $0x8] sm:$0xff] %vm2938, %v13374
    %13407 = vst.msk [vmem:[#allocation4 + $0x10] sm:$0xff] %vm2938, %v13375
    %13408 = vst.msk [vmem:[#allocation4 + $0x18] sm:$0xff] %vm2938, %v13376
    %13409 = vst.msk [vmem:[#allocation4 + $0x20] sm:$0xff] %vm2938, %v13377
    %13410 = vst.msk [vmem:[#allocation4 + $0x28] sm:$0xff] %vm2938, %v13378
    %13411 = vst.msk [vmem:[#allocation4 + $0x30] sm:$0xff] %vm2938, %v13379
    %13412 = vst.msk [vmem:[#allocation4 + $0x38] sm:$0xff] %vm2938, %v13380
    %13413 = vst.msk [vmem:[#allocation4 + $0x40] sm:$0xff] %vm2938, %v13381
    %13414 = vst.msk [vmem:[#allocation4 + $0x48] sm:$0xff] %vm2938, %v13382
    %13415 = vst.msk [vmem:[#allocation4 + $0x50] sm:$0xff] %vm2938, %v13383
    %13416 = vst.msk [vmem:[#allocation4 + $0x58] sm:$0xff] %vm2938, %v13384
    %13417 = vst.msk [vmem:[#allocation4 + $0x60] sm:$0xff] %vm2938, %v13385
    %13418 = vst.msk [vmem:[#allocation4 + $0x68] sm:$0xff] %vm2938, %v13386
    %13419 = vst.msk [vmem:[#allocation4 + $0x70] sm:$0xff] %vm2938, %v13387
    %13420 = vst.msk [vmem:[#allocation4 + $0x78] sm:$0xff] %vm2938, %v13388
    %13421 = vst.msk [vmem:[#allocation4 + $0x80] sm:$0xff] %vm2938, %v13389
    %13422 = vst.msk [vmem:[#allocation4 + $0x88] sm:$0xff] %vm2938, %v13390
    %13423 = vst.msk [vmem:[#allocation4 + $0x90] sm:$0xff] %vm2938, %v13391
    %13424 = vst.msk [vmem:[#allocation4 + $0x98] sm:$0xff] %vm2938, %v13392
    %13425 = vst.msk [vmem:[#allocation4 + $0xa0] sm:$0xff] %vm2938, %v13393
    %13426 = vst.msk [vmem:[#allocation4 + $0xa8] sm:$0xff] %vm2938, %v13394
    %13427 = vst.msk [vmem:[#allocation4 + $0xb0] sm:$0xff] %vm2938, %v13395
    %13428 = vst.msk [vmem:[#allocation4 + $0xb8] sm:$0xff] %vm2938, %v13396
    %13429 = vst.msk [vmem:[#allocation4 + $0xc0] sm:$0xff] %vm2938, %v13397
    %13430 = vst.msk [vmem:[#allocation4 + $0xc8] sm:$0xff] %vm2938, %v13398
    %13431 = vst.msk [vmem:[#allocation4 + $0xd0] sm:$0xff] %vm2938, %v13399
    %13432 = vst.msk [vmem:[#allocation4 + $0xd8] sm:$0xff] %vm2938, %v13400
    %13433 = vst.msk [vmem:[#allocation4 + $0xe0] sm:$0xff] %vm2938, %v13401
    %13434 = vst.msk [vmem:[#allocation4 + $0xe8] sm:$0xff] %vm2938, %v13402
    %13435 = vst.msk [vmem:[#allocation4 + $0xf0] sm:$0xff] %vm2938, %v13403
    %13436 = vst.msk [vmem:[#allocation4 + $0xf8] sm:$0xff] %vm2938, %v13404
    %v13437 = vld [vmem:[#allocation4] ss:$2 sm:$0xff]
    %v13438 = vld [vmem:[%s6734] ss:$2 sm:$0xff]
    %v13439 = vld [vmem:[%s6736] ss:$2 sm:$0xff]
    %v13440 = vld [vmem:[%s6738] ss:$2 sm:$0xff]
    %v13441 = vld [vmem:[%s6740] ss:$2 sm:$0xff]
    %v13442 = vld [vmem:[%s6742] ss:$2 sm:$0xff]
    %v13443 = vld [vmem:[%s6744] ss:$2 sm:$0xff]
    %v13444 = vld [vmem:[%s6746] ss:$2 sm:$0xff]
    %v13445 = vld [vmem:[%s6748] ss:$2 sm:$0xff]
    %v13446 = vld [vmem:[%s6750] ss:$2 sm:$0xff]
    %v13447 = vld [vmem:[%s6752] ss:$2 sm:$0xff]
    %v13448 = vld [vmem:[%s6754] ss:$2 sm:$0xff]
    %v13449 = vld [vmem:[%s6756] ss:$2 sm:$0xff]
    %v13450 = vld [vmem:[%s6758] ss:$2 sm:$0xff]
    %v13451 = vld [vmem:[%s6760] ss:$2 sm:$0xff]
    %v13452 = vld [vmem:[%s6762] ss:$2 sm:$0xff]
    %v13453 = vld [vmem:[%s6764] ss:$2 sm:$0xff]
    %v13454 = vld [vmem:[%s6766] ss:$2 sm:$0xff]
    %v13455 = vld [vmem:[%s6768] ss:$2 sm:$0xff]
    %v13456 = vld [vmem:[%s6770] ss:$2 sm:$0xff]
    %v13457 = vld [vmem:[%s6772] ss:$2 sm:$0xff]
    %v13458 = vld [vmem:[%s6774] ss:$2 sm:$0xff]
    %v13459 = vld [vmem:[%s6776] ss:$2 sm:$0xff]
    %v13460 = vld [vmem:[%s6778] ss:$2 sm:$0xff]
    %v13461 = vld [vmem:[%s6780] ss:$2 sm:$0xff]
    %v13462 = vld [vmem:[%s6782] ss:$2 sm:$0xff]
    %v13463 = vld [vmem:[%s6784] ss:$2 sm:$0xff]
    %v13464 = vld [vmem:[%s6786] ss:$2 sm:$0xff]
    %v13465 = vld [vmem:[%s6788] ss:$2 sm:$0xff]
    %v13466 = vld [vmem:[%s6790] ss:$2 sm:$0xff]
    %v13467 = vld [vmem:[%s6792] ss:$2 sm:$0xff]
    %v13468 = vld [vmem:[%s6794] ss:$2 sm:$0xff]
    %v13469 = vadd.f32 %v13437, %v13453
    %v13470 = vadd.f32 %v13438, %v13454
    %v13471 = vadd.f32 %v13439, %v13455
    %v13472 = vadd.f32 %v13440, %v13456
    %v13473 = vadd.f32 %v13441, %v13457
    %v13474 = vadd.f32 %v13442, %v13458
    %v13475 = vadd.f32 %v13443, %v13459
    %v13476 = vadd.f32 %v13444, %v13460
    %v13477 = vadd.f32 %v13445, %v13461
    %v13478 = vadd.f32 %v13446, %v13462
    %v13479 = vadd.f32 %v13447, %v13463
    %v13480 = vadd.f32 %v13448, %v13464
    %v13481 = vadd.f32 %v13449, %v13465
    %v13482 = vadd.f32 %v13450, %v13466
    %v13483 = vadd.f32 %v13451, %v13467
    %v13484 = vadd.f32 %v13452, %v13468
    %v13485 = vadd.f32 %v13469, %v13470
    %v13486 = vadd.f32 %v13471, %v13472
    %v13487 = vadd.f32 %v13473, %v13474
    %v13488 = vadd.f32 %v13475, %v13476
    %v13489 = vadd.f32 %v13477, %v13478
    %v13490 = vadd.f32 %v13479, %v13480
    %v13491 = vadd.f32 %v13481, %v13482
    %v13492 = vadd.f32 %v13483, %v13484
    %v13493 = vmul.f32 %v13485, 0.25
    %v13494 = vmul.f32 %v13486, 0.25
    %v13495 = vmul.f32 %v13487, 0.25
    %v13496 = vmul.f32 %v13488, 0.25
    %v13497 = vmul.f32 %v13489, 0.25
    %v13498 = vmul.f32 %v13490, 0.25
    %v13499 = vmul.f32 %v13491, 0.25
    %v13500 = vmul.f32 %v13492, 0.25
    %s13501 = scalar_lea.vmem [#allocation5], 64
    %13502 = vst.msk [vmem:[%s13501] sm:$0xff] %vm2938, %v13493
    %13503 = vst.msk [vmem:[%s13501 + $0x8] sm:$0xff] %vm2938, %v13494
    %13504 = vst.msk [vmem:[%s13501 + $0x10] sm:$0xff] %vm2938, %v13495
    %13505 = vst.msk [vmem:[%s13501 + $0x18] sm:$0xff] %vm2938, %v13496
    %13506 = vst.msk [vmem:[%s13501 + $0x20] sm:$0xff] %vm2938, %v13497
    %13507 = vst.msk [vmem:[%s13501 + $0x28] sm:$0xff] %vm2938, %v13498
    %13508 = vst.msk [vmem:[%s13501 + $0x30] sm:$0xff] %vm2938, %v13499
    %13509 = vst.msk [vmem:[%s13501 + $0x38] sm:$0xff] %vm2938, %v13500
    // Predicated region
    $region22: #{tpu_custom_call.1} parent=1 // pred_check
      _
    $region23: #{tpu_custom_call.1} parent=1 // pred_check_branch
      %13511 = sbr.rel (0) target = $region25
    $region24: #{tpu_custom_call.1} parent=1 // pred_region
      %13513 = vsyncadd [#allocation6], 0
      %s13514 = sshll.u32 [#allocation5], 4
      %s13515 = int_to_ptr.vmem [resolvable:$true] %s13514
      %s13516 = sshll.u32 %s5, 4
      %s13517 = int_to_ptr.hbm [resolvable:$true] %s13516
      %13522 = dma.vmem_to_hbm [thread:$0]  %s13515, 2048, %s13517, [#allocation6], 128, 128, 8
    $region25: #{tpu_custom_call.1} parent=1 // pred_fallthru
      _
    // Predicated region
    $region26: #{tpu_custom_call.1} parent=1 // pred_check
      _
    $region27: #{tpu_custom_call.1} parent=1 // pred_check_branch
      %13524 = sbr.rel (0) target = $region29
    $region28: #{tpu_custom_call.1} parent=1 // pred_region
      %13526 = dma.done [#allocation6], 2048
    $region29: #{tpu_custom_call.1} parent=1 // pred_fallthru
      _
    %13527 = vsyncpa [#allocation6], 1

</llo_original>
